<compile_context>
chip_gen: v6e
topology: v6e:2x2x1
jax: 0.10.0
libtpu: 0.0.40
codegen_flags: <defaults>
</compile_context>

<pallas_src>
import functools

import jax
import jax.numpy as jnp
from jax.experimental import pallas as pl
from jax.experimental.pallas import tpu as pltpu


# ----------------------------- small helpers --------------------------------


def _replicated_spec(shape):
    """BlockSpec handing the whole (small) array to every grid step."""
    nd = len(shape)
    return pl.BlockSpec(shape, lambda n, _nd=nd: (0,) * _nd)


def _in_relu(v, count, eps):
    """InstanceNorm (biased var, no affine) + ReLU over axis 0 (spatial)."""
    s1 = jnp.sum(v, axis=0, keepdims=True)
    s2 = jnp.sum(v * v, axis=0, keepdims=True)
    mean = s1 * (1.0 / count)
    var = jnp.maximum(s2 * (1.0 / count) - mean * mean, 0.0)
    return jnp.maximum((v - mean) * jax.lax.rsqrt(var + eps), 0.0)


def _double_in_relu(v, count, eps):
    """IN applied twice back-to-back (as in the reference bottleneck), folded
    into a single pass (second IN sees mean 0 and var = var/(var+eps)), ReLU."""
    s1 = jnp.sum(v, axis=0, keepdims=True)
    s2 = jnp.sum(v * v, axis=0, keepdims=True)
    mean = s1 * (1.0 / count)
    var = jnp.maximum(s2 * (1.0 / count) - mean * mean, 0.0)
    scale = jax.lax.rsqrt(var + eps) * jax.lax.rsqrt(var / (var + eps) + eps)
    return jnp.maximum((v - mean) * scale, 0.0)


# ------------------------------ fused kernel --------------------------------


def _fused_kernel(x_ref, w_ex_ref, wm_ref, w1_ref, b1_ref, g_ref, be_ref,
                  w2_ref, b2_ref, wb1_ref, wb2_ref, wb3_ref,
                  o_ref, pad_ref, *, H, W, dil, margin, c_mid, eps):
    HW = H * W
    CP = x_ref.shape[-1]
    fhw = float(HW)

    # ---- ex: 1x1 conv (lane-dense bf16 MXU matmul, f32 accumulation) -------
    h = jnp.dot(x_ref[...].astype(jnp.bfloat16), w_ex_ref[...],
                preferred_element_type=jnp.float32)              # (HW, CP)

    # ---- MSGCB (GCNet-style global context block, see TODO) ----------------
    logits = jnp.sum(h * wm_ref[...], axis=-1, keepdims=True)    # (HW, 1), VPU
    m = jnp.max(logits, axis=0, keepdims=True)
    p = jnp.exp(logits - m)
    p = p / jnp.sum(p, axis=0, keepdims=True)                    # softmax over HW
    context = jnp.sum(h * p, axis=0, keepdims=True)              # (1, CP)

    t = jnp.dot(context.astype(jnp.bfloat16), w1_ref[...],
                preferred_element_type=jnp.float32) + b1_ref[...]
    s1 = jnp.sum(t, axis=-1, keepdims=True)                      # LN over the
    s2 = jnp.sum(t * t, axis=-1, keepdims=True)                  # real channels
    mu = s1 * (1.0 / c_mid)
    var = jnp.maximum(s2 * (1.0 / c_mid) - mu * mu, 0.0)
    t = (t - mu) * jax.lax.rsqrt(var + eps) * g_ref[...] + be_ref[...]
    t = jnp.maximum(t, 0.0)
    add = jnp.dot(t.astype(jnp.bfloat16), w2_ref[...],
                  preferred_element_type=jnp.float32) + b2_ref[...]
    out_gc = h + add                                             # (HW, CP)

    # ---- dc bottleneck (fully fused) ----------------------------------------
    a = _in_relu(out_gc, fhw, eps)                               # IN + ReLU
    b = jnp.dot(a.astype(jnp.bfloat16), wb1_ref[...],
                preferred_element_type=jnp.float32)              # 1x1 conv
    c = _double_in_relu(b, fhw, eps)                             # IN, IN, ReLU

    # 3x3 dilated conv (pad=dil, dilation=dil) as 9 shifted matmuls over a
    # zero-margined flat spatial buffer kept in VMEM (no im2col in HBM).
    pad_ref[...] = jnp.zeros(pad_ref.shape, jnp.float32)
    pad_ref[margin:margin + HW, :] = c
    w_idx = jax.lax.broadcasted_iota(jnp.int32, (HW, CP), 0) % W
    acc = jnp.zeros((HW, CP), jnp.float32)
    for ky in range(3):
        for kx in range(3):
            dy = (ky - 1) * dil
            dx = (kx - 1) * dil
            off = margin + dy * W + dx                           # static offset
            win = pad_ref[off:off + HW, :]
            if dx != 0:  # column wrap mask; row overflow lands in zero margins
                valid = jnp.logical_and(w_idx + dx >= 0, w_idx + dx < W)
                win = jnp.where(valid, win, 0.0)
            acc = acc + jnp.dot(win.astype(jnp.bfloat16),
                                wb2_ref[ky * 3 + kx],
                                preferred_element_type=jnp.float32)

    e = _in_relu(acc, fhw, eps)                                  # IN + ReLU
    f = jnp.dot(e.astype(jnp.bfloat16), wb3_ref[...],
                preferred_element_type=jnp.float32)              # 1x1 conv

    # ---- residual: dc(out_gc) + out_gc (fused epilogue) ----------------------
    o_ref[...] = (f + out_gc).astype(o_ref.dtype)


# ------------------------------ model wrapper --------------------------------


def rn_msgcb_u2_v2(x_nchw, params, eps=1e-5):
    """Forward pass. Input/output are NCHW (PyTorch convention)."""
    N, Cin, H, W = x_nchw.shape
    mid = params["w_ex"].shape[1]
    mid4 = params["w_b1"].shape[1]
    out_ch = params["w_b3"].shape[1]
    HW = H * W
    dil = 2

    CP = ((max(Cin, mid, out_ch) + 127) // 128) * 128   # 128-lane padded width

    # NCHW -> (N, H*W, C), channels zero-padded to the lane-dense width.
    x = jnp.transpose(x_nchw, (0, 2, 3, 1)).astype(jnp.float32).reshape(N, HW, Cin)
    x = jnp.pad(x, ((0, 0), (0, 0), (0, CP - Cin)))

    def pad_w(w):                       # (Cin, Cout) -> (CP, CP) bf16
        kin, kout = w.shape
        return jnp.pad(w, ((0, CP - kin), (0, CP - kout))).astype(jnp.bfloat16)

    def pad_v(v):                       # (1, C) -> (1, CP) f32
        return jnp.pad(v, ((0, 0), (0, CP - v.shape[1]))).astype(jnp.float32)

    w_ex = pad_w(params["w_ex"])
    wm = pad_v(params["gcb_wm"])
    w1 = pad_w(params["gcb_w1"])
    b1 = pad_v(params["gcb_b1"])
    gamma = pad_v(params["gcb_gamma"])
    beta = pad_v(params["gcb_beta"])
    w2 = pad_w(params["gcb_w2"])
    b2 = pad_v(params["gcb_b2"])
    w_b1 = pad_w(params["w_b1"])
    w_b2 = jnp.pad(params["w_b2"],
                   ((0, 0), (0, CP - mid4), (0, CP - mid4))).astype(jnp.bfloat16)
    w_b3 = pad_w(params["w_b3"])

    margin = ((dil * W + dil + 7) // 8) * 8     # zero margin for the conv taps

    kernel = functools.partial(_fused_kernel, H=H, W=W, dil=dil, margin=margin,
                               c_mid=float(mid), eps=eps)

    inputs = (x, w_ex, wm, w1, b1, gamma, beta, w2, b2, w_b1, w_b2, w_b3)
    in_specs = [pl.BlockSpec((None, HW, CP), lambda n: (n, 0, 0))]
    in_specs += [_replicated_spec(a.shape) for a in inputs[1:]]

    out = pl.pallas_call(
        kernel,
        out_shape=jax.ShapeDtypeStruct((N, HW, CP), jnp.float32),
        grid=(N,),
        in_specs=in_specs,
        out_specs=pl.BlockSpec((None, HW, CP), lambda n: (n, 0, 0)),
        scratch_shapes=[pltpu.VMEM((HW + 2 * margin, CP), jnp.float32)],
        compiler_params=pltpu.CompilerParams(
            dimension_semantics=("parallel",),
            vmem_limit_bytes=32 * 1024 * 1024),
    )(*inputs)

    out = out[:, :, :out_ch].reshape(N, H, W, out_ch)
    return jnp.transpose(out, (0, 3, 1, 2))                       # -> NCHW


# ------------------------------ params / main --------------------------------


def init_params(key, in_ch, mid_ch, out_ch):
    ks = jax.random.split(key, 7)
    mid4 = mid_ch // 4

    def nrm(k, shape, scale=0.1):
        return jax.random.normal(k, shape, jnp.float32) * scale

    return dict(
        # self.ex: Conv2d(in_ch, mid_ch, k=1, s=1, bias=False), stored (Cin, Cout)
        w_ex=nrm(ks[0], (in_ch, mid_ch)),
        # MSGCB (GCNet-style assumption): mask-conv weight as a (1, C) row,
        # channel-add branch conv weights as (Cin, Cout), LN affine params.
        gcb_wm=nrm(ks[1], (1, mid_ch)),
        gcb_w1=nrm(ks[2], (mid_ch, mid_ch)),
        gcb_b1=jnp.zeros((1, mid_ch), jnp.float32),
        gcb_gamma=jnp.ones((1, mid_ch), jnp.float32),
        gcb_beta=jnp.zeros((1, mid_ch), jnp.float32),
        gcb_w2=nrm(ks[3], (mid_ch, mid_ch)),
        gcb_b2=jnp.zeros((1, mid_ch), jnp.float32),
        # self.dc convs (all bias=False)
        w_b1=nrm(ks[4], (mid_ch, mid4)),                  # 1x1
        # 3x3 dilated conv, tap-major: w_b2[ky*3+kx, ci, co] == torch_w[co, ci, ky, kx]
        w_b2=nrm(ks[5], (9, mid4, mid4)),
        w_b3=nrm(ks[6], (mid4, out_ch)),                  # 1x1
    )


if __name__ == "__main__":
    key = jax.random.PRNGKey(0)
    k_x, k_p = jax.random.split(key)

    in_ch, mid_ch, out_ch = 4, 32, 32
    x = jax.random.normal(k_x, (2, in_ch, 16, 16), jnp.float32)   # NCHW
    params = init_params(k_p, in_ch, mid_ch, out_ch)

    fwd = jax.jit(rn_msgcb_u2_v2)
    y = jax.block_until_ready(fwd(x, params))
    assert y.shape == (2, out_ch, 16, 16), y.shape
    print("KERNEL_OK")
</pallas_src>

<mosaic_0001>
module attributes {stable_mosaic.version = 11 : i64} {
  func.func @_fused_kernel(%arg0: i32, %arg1: memref<1x256x128xf32, #tpu.memory_space<vmem>>, %arg2: memref<128x128xbf16, #tpu.memory_space<vmem>>, %arg3: memref<1x128xf32, #tpu.memory_space<vmem>>, %arg4: memref<128x128xbf16, #tpu.memory_space<vmem>>, %arg5: memref<1x128xf32, #tpu.memory_space<vmem>>, %arg6: memref<1x128xf32, #tpu.memory_space<vmem>>, %arg7: memref<1x128xf32, #tpu.memory_space<vmem>>, %arg8: memref<128x128xbf16, #tpu.memory_space<vmem>>, %arg9: memref<1x128xf32, #tpu.memory_space<vmem>>, %arg10: memref<128x128xbf16, #tpu.memory_space<vmem>>, %arg11: memref<9x128x128xbf16, #tpu.memory_space<vmem>>, %arg12: memref<128x128xbf16, #tpu.memory_space<vmem>>, %arg13: memref<1x256x128xf32, #tpu.memory_space<vmem>>, %arg14: memref<336x128xf32, #tpu.memory_space<vmem>>) attributes {dimension_semantics = [#tpu.dimension_semantics<parallel>], iteration_bounds = array<i64: 2>, scalar_prefetch = 0 : i64, scratch_operands = 1 : i64, tpu.core_type = #tpu.core_type<tc>, window_params = [{transform_indices = @transform_0, window_bounds = array<i64: 1, 256, 128>}, {pipeline_mode = #tpu.pipeline_mode<synchronous>, transform_indices = @transform_1, window_bounds = array<i64: 128, 128>}, {pipeline_mode = #tpu.pipeline_mode<synchronous>, transform_indices = @transform_2, window_bounds = array<i64: 1, 128>}, {pipeline_mode = #tpu.pipeline_mode<synchronous>, transform_indices = @transform_3, window_bounds = array<i64: 128, 128>}, {pipeline_mode = #tpu.pipeline_mode<synchronous>, transform_indices = @transform_4, window_bounds = array<i64: 1, 128>}, {pipeline_mode = #tpu.pipeline_mode<synchronous>, transform_indices = @transform_5, window_bounds = array<i64: 1, 128>}, {pipeline_mode = #tpu.pipeline_mode<synchronous>, transform_indices = @transform_6, window_bounds = array<i64: 1, 128>}, {pipeline_mode = #tpu.pipeline_mode<synchronous>, transform_indices = @transform_7, window_bounds = array<i64: 128, 128>}, {pipeline_mode = #tpu.pipeline_mode<synchronous>, transform_indices = @transform_8, window_bounds = array<i64: 1, 128>}, {pipeline_mode = #tpu.pipeline_mode<synchronous>, transform_indices = @transform_9, window_bounds = array<i64: 128, 128>}, {pipeline_mode = #tpu.pipeline_mode<synchronous>, transform_indices = @transform_10, window_bounds = array<i64: 9, 128, 128>}, {pipeline_mode = #tpu.pipeline_mode<synchronous>, transform_indices = @transform_11, window_bounds = array<i64: 128, 128>}, {transform_indices = @transform_12, window_bounds = array<i64: 1, 256, 128>}]} {
    %c0 = arith.constant 0 : index
    %c0_0 = arith.constant 0 : index
    %c0_1 = arith.constant 0 : index
    %0 = vector.load %arg1[%c0, %c0_0, %c0_1] : memref<1x256x128xf32, #tpu.memory_space<vmem>>, vector<1x256x128xf32>
    %1 = vector.shape_cast %0 : vector<1x256x128xf32> to vector<256x128xf32>
    %2 = arith.truncf %1 : vector<256x128xf32> to vector<256x128xbf16>
    %c0_2 = arith.constant 0 : index
    %c0_3 = arith.constant 0 : index
    %3 = vector.load %arg2[%c0_2, %c0_3] : memref<128x128xbf16, #tpu.memory_space<vmem>>, vector<128x128xbf16>
    %cst = arith.constant dense<0.000000e+00> : vector<256x128xf32>
    %4 = tpu.matmul %2, %3, %cst {dimension_numbers = #tpu.dot_dimension_numbers<[1], [0], [0], [1], [0, 0, 1, 1], [], []>} : vector<256x128xbf16>, vector<128x128xbf16>, vector<256x128xf32> -> vector<256x128xf32>
    %c0_4 = arith.constant 0 : index
    %c0_5 = arith.constant 0 : index
    %5 = vector.load %arg3[%c0_4, %c0_5] : memref<1x128xf32, #tpu.memory_space<vmem>>, vector<1x128xf32>
    %6 = vector.broadcast %5 : vector<1x128xf32> to vector<256x128xf32>
    %7 = arith.mulf %4, %6 : vector<256x128xf32>
    %cst_6 = arith.constant dense<0.000000e+00> : vector<256xf32>
    %8 = vector.multi_reduction <add>, %7, %cst_6 [1] : vector<256x128xf32> to vector<256xf32>
    %9 = vector.shape_cast %8 : vector<256xf32> to vector<256x1xf32>
    %cst_7 = arith.constant dense<0xFF800000> : vector<1xf32>
    %10 = vector.multi_reduction <maximumf>, %9, %cst_7 [0] : vector<256x1xf32> to vector<1xf32>
    %11 = vector.shape_cast %10 : vector<1xf32> to vector<1x1xf32>
    %12 = vector.broadcast %11 : vector<1x1xf32> to vector<256x1xf32>
    %13 = arith.subf %9, %12 : vector<256x1xf32>
    %14 = math.exp %13 : vector<256x1xf32>
    %cst_8 = arith.constant dense<0.000000e+00> : vector<1xf32>
    %15 = vector.multi_reduction <add>, %14, %cst_8 [0] : vector<256x1xf32> to vector<1xf32>
    %16 = vector.shape_cast %15 : vector<1xf32> to vector<1x1xf32>
    %17 = vector.broadcast %16 : vector<1x1xf32> to vector<256x1xf32>
    %18 = arith.divf %14, %17 : vector<256x1xf32>
    %19 = vector.broadcast %18 : vector<256x1xf32> to vector<256x128xf32>
    %20 = arith.mulf %4, %19 : vector<256x128xf32>
    %cst_9 = arith.constant dense<0.000000e+00> : vector<128xf32>
    %21 = vector.multi_reduction <add>, %20, %cst_9 [0] : vector<256x128xf32> to vector<128xf32>
    %22 = vector.shape_cast %21 : vector<128xf32> to vector<1x128xf32>
    %23 = arith.truncf %22 : vector<1x128xf32> to vector<1x128xbf16>
    %c0_10 = arith.constant 0 : index
    %c0_11 = arith.constant 0 : index
    %24 = vector.load %arg4[%c0_10, %c0_11] : memref<128x128xbf16, #tpu.memory_space<vmem>>, vector<128x128xbf16>
    %cst_12 = arith.constant dense<0.000000e+00> : vector<1x128xf32>
    %25 = tpu.matmul %23, %24, %cst_12 {dimension_numbers = #tpu.dot_dimension_numbers<[1], [0], [0], [1], [0, 0, 1, 1], [], []>} : vector<1x128xbf16>, vector<128x128xbf16>, vector<1x128xf32> -> vector<1x128xf32>
    %c0_13 = arith.constant 0 : index
    %c0_14 = arith.constant 0 : index
    %26 = vector.load %arg5[%c0_13, %c0_14] : memref<1x128xf32, #tpu.memory_space<vmem>>, vector<1x128xf32>
    %27 = arith.addf %25, %26 : vector<1x128xf32>
    %cst_15 = arith.constant dense<0.000000e+00> : vector<1xf32>
    %28 = vector.multi_reduction <add>, %27, %cst_15 [1] : vector<1x128xf32> to vector<1xf32>
    %29 = vector.shape_cast %28 : vector<1xf32> to vector<1x1xf32>
    %30 = arith.mulf %27, %27 : vector<1x128xf32>
    %cst_16 = arith.constant dense<0.000000e+00> : vector<1xf32>
    %31 = vector.multi_reduction <add>, %30, %cst_16 [1] : vector<1x128xf32> to vector<1xf32>
    %32 = vector.shape_cast %31 : vector<1xf32> to vector<1x1xf32>
    %cst_17 = arith.constant 3.125000e-02 : f32
    %33 = vector.broadcast %cst_17 : f32 to vector<1x1xf32>
    %34 = arith.mulf %29, %33 : vector<1x1xf32>
    %cst_18 = arith.constant 3.125000e-02 : f32
    %35 = vector.broadcast %cst_18 : f32 to vector<1x1xf32>
    %36 = arith.mulf %32, %35 : vector<1x1xf32>
    %37 = arith.mulf %34, %34 : vector<1x1xf32>
    %38 = arith.subf %36, %37 : vector<1x1xf32>
    %cst_19 = arith.constant 0.000000e+00 : f32
    %39 = vector.broadcast %cst_19 : f32 to vector<1x1xf32>
    %40 = arith.maximumf %38, %39 : vector<1x1xf32>
    %41 = vector.broadcast %34 : vector<1x1xf32> to vector<1x128xf32>
    %42 = arith.subf %27, %41 : vector<1x128xf32>
    %cst_20 = arith.constant 9.99999974E-6 : f32
    %43 = vector.broadcast %cst_20 : f32 to vector<1x1xf32>
    %44 = arith.addf %40, %43 : vector<1x1xf32>
    %45 = math.rsqrt %44 : vector<1x1xf32>
    %46 = vector.broadcast %45 : vector<1x1xf32> to vector<1x128xf32>
    %47 = arith.mulf %42, %46 : vector<1x128xf32>
    %c0_21 = arith.constant 0 : index
    %c0_22 = arith.constant 0 : index
    %48 = vector.load %arg6[%c0_21, %c0_22] : memref<1x128xf32, #tpu.memory_space<vmem>>, vector<1x128xf32>
    %49 = arith.mulf %47, %48 : vector<1x128xf32>
    %c0_23 = arith.constant 0 : index
    %c0_24 = arith.constant 0 : index
    %50 = vector.load %arg7[%c0_23, %c0_24] : memref<1x128xf32, #tpu.memory_space<vmem>>, vector<1x128xf32>
    %51 = arith.addf %49, %50 : vector<1x128xf32>
    %cst_25 = arith.constant 0.000000e+00 : f32
    %52 = vector.broadcast %cst_25 : f32 to vector<1x128xf32>
    %53 = arith.maximumf %51, %52 : vector<1x128xf32>
    %54 = arith.truncf %53 : vector<1x128xf32> to vector<1x128xbf16>
    %c0_26 = arith.constant 0 : index
    %c0_27 = arith.constant 0 : index
    %55 = vector.load %arg8[%c0_26, %c0_27] : memref<128x128xbf16, #tpu.memory_space<vmem>>, vector<128x128xbf16>
    %cst_28 = arith.constant dense<0.000000e+00> : vector<1x128xf32>
    %56 = tpu.matmul %54, %55, %cst_28 {dimension_numbers = #tpu.dot_dimension_numbers<[1], [0], [0], [1], [0, 0, 1, 1], [], []>} : vector<1x128xbf16>, vector<128x128xbf16>, vector<1x128xf32> -> vector<1x128xf32>
    %c0_29 = arith.constant 0 : index
    %c0_30 = arith.constant 0 : index
    %57 = vector.load %arg9[%c0_29, %c0_30] : memref<1x128xf32, #tpu.memory_space<vmem>>, vector<1x128xf32>
    %58 = arith.addf %56, %57 : vector<1x128xf32>
    %59 = vector.broadcast %58 : vector<1x128xf32> to vector<256x128xf32>
    %60 = arith.addf %4, %59 : vector<256x128xf32>
    %cst_31 = arith.constant dense<0.000000e+00> : vector<128xf32>
    %61 = vector.multi_reduction <add>, %60, %cst_31 [0] : vector<256x128xf32> to vector<128xf32>
    %62 = vector.shape_cast %61 : vector<128xf32> to vector<1x128xf32>
    %63 = arith.mulf %60, %60 : vector<256x128xf32>
    %cst_32 = arith.constant dense<0.000000e+00> : vector<128xf32>
    %64 = vector.multi_reduction <add>, %63, %cst_32 [0] : vector<256x128xf32> to vector<128xf32>
    %65 = vector.shape_cast %64 : vector<128xf32> to vector<1x128xf32>
    %cst_33 = arith.constant 3.906250e-03 : f32
    %66 = vector.broadcast %cst_33 : f32 to vector<1x128xf32>
    %67 = arith.mulf %62, %66 : vector<1x128xf32>
    %cst_34 = arith.constant 3.906250e-03 : f32
    %68 = vector.broadcast %cst_34 : f32 to vector<1x128xf32>
    %69 = arith.mulf %65, %68 : vector<1x128xf32>
    %70 = arith.mulf %67, %67 : vector<1x128xf32>
    %71 = arith.subf %69, %70 : vector<1x128xf32>
    %cst_35 = arith.constant 0.000000e+00 : f32
    %72 = vector.broadcast %cst_35 : f32 to vector<1x128xf32>
    %73 = arith.maximumf %71, %72 : vector<1x128xf32>
    %74 = vector.broadcast %67 : vector<1x128xf32> to vector<256x128xf32>
    %75 = arith.subf %60, %74 : vector<256x128xf32>
    %cst_36 = arith.constant 9.99999974E-6 : f32
    %76 = vector.broadcast %cst_36 : f32 to vector<1x128xf32>
    %77 = arith.addf %73, %76 : vector<1x128xf32>
    %78 = math.rsqrt %77 : vector<1x128xf32>
    %79 = vector.broadcast %78 : vector<1x128xf32> to vector<256x128xf32>
    %80 = arith.mulf %75, %79 : vector<256x128xf32>
    %cst_37 = arith.constant 0.000000e+00 : f32
    %81 = vector.broadcast %cst_37 : f32 to vector<256x128xf32>
    %82 = arith.maximumf %80, %81 : vector<256x128xf32>
    %83 = arith.truncf %82 : vector<256x128xf32> to vector<256x128xbf16>
    %c0_38 = arith.constant 0 : index
    %c0_39 = arith.constant 0 : index
    %84 = vector.load %arg10[%c0_38, %c0_39] : memref<128x128xbf16, #tpu.memory_space<vmem>>, vector<128x128xbf16>
    %cst_40 = arith.constant dense<0.000000e+00> : vector<256x128xf32>
    %85 = tpu.matmul %83, %84, %cst_40 {dimension_numbers = #tpu.dot_dimension_numbers<[1], [0], [0], [1], [0, 0, 1, 1], [], []>} : vector<256x128xbf16>, vector<128x128xbf16>, vector<256x128xf32> -> vector<256x128xf32>
    %cst_41 = arith.constant dense<0.000000e+00> : vector<128xf32>
    %86 = vector.multi_reduction <add>, %85, %cst_41 [0] : vector<256x128xf32> to vector<128xf32>
    %87 = vector.shape_cast %86 : vector<128xf32> to vector<1x128xf32>
    %88 = arith.mulf %85, %85 : vector<256x128xf32>
    %cst_42 = arith.constant dense<0.000000e+00> : vector<128xf32>
    %89 = vector.multi_reduction <add>, %88, %cst_42 [0] : vector<256x128xf32> to vector<128xf32>
    %90 = vector.shape_cast %89 : vector<128xf32> to vector<1x128xf32>
    %cst_43 = arith.constant 3.906250e-03 : f32
    %91 = vector.broadcast %cst_43 : f32 to vector<1x128xf32>
    %92 = arith.mulf %87, %91 : vector<1x128xf32>
    %cst_44 = arith.constant 3.906250e-03 : f32
    %93 = vector.broadcast %cst_44 : f32 to vector<1x128xf32>
    %94 = arith.mulf %90, %93 : vector<1x128xf32>
    %95 = arith.mulf %92, %92 : vector<1x128xf32>
    %96 = arith.subf %94, %95 : vector<1x128xf32>
    %cst_45 = arith.constant 0.000000e+00 : f32
    %97 = vector.broadcast %cst_45 : f32 to vector<1x128xf32>
    %98 = arith.maximumf %96, %97 : vector<1x128xf32>
    %cst_46 = arith.constant 9.99999974E-6 : f32
    %99 = vector.broadcast %cst_46 : f32 to vector<1x128xf32>
    %100 = arith.addf %98, %99 : vector<1x128xf32>
    %101 = math.rsqrt %100 : vector<1x128xf32>
    %cst_47 = arith.constant 9.99999974E-6 : f32
    %102 = vector.broadcast %cst_47 : f32 to vector<1x128xf32>
    %103 = arith.addf %98, %102 : vector<1x128xf32>
    %104 = arith.divf %98, %103 : vector<1x128xf32>
    %cst_48 = arith.constant 9.99999974E-6 : f32
    %105 = vector.broadcast %cst_48 : f32 to vector<1x128xf32>
    %106 = arith.addf %104, %105 : vector<1x128xf32>
    %107 = math.rsqrt %106 : vector<1x128xf32>
    %108 = arith.mulf %101, %107 : vector<1x128xf32>
    %109 = vector.broadcast %92 : vector<1x128xf32> to vector<256x128xf32>
    %110 = arith.subf %85, %109 : vector<256x128xf32>
    %111 = vector.broadcast %108 : vector<1x128xf32> to vector<256x128xf32>
    %112 = arith.mulf %110, %111 : vector<256x128xf32>
    %cst_49 = arith.constant 0.000000e+00 : f32
    %113 = vector.broadcast %cst_49 : f32 to vector<256x128xf32>
    %114 = arith.maximumf %112, %113 : vector<256x128xf32>
    %cst_50 = arith.constant 0.000000e+00 : f32
    %115 = vector.broadcast %cst_50 : f32 to vector<336x128xf32>
    %c0_51 = arith.constant 0 : index
    %c0_52 = arith.constant 0 : index
    %116 = vector.load %arg14[%c0_51, %c0_52] : memref<336x128xf32, #tpu.memory_space<vmem>>, vector<336x128xf32>
    tpu.vector_store %arg14[%c0_51, %c0_52], %115 {strides = array<i32>} : memref<336x128xf32, #tpu.memory_space<vmem>>, vector<336x128xf32>,
    %c40 = arith.constant 40 : index
    %c0_53 = arith.constant 0 : index
    %117 = vector.load %arg14[%c40, %c0_53] : memref<336x128xf32, #tpu.memory_space<vmem>>, vector<256x128xf32>
    tpu.vector_store %arg14[%c40, %c0_53], %114 {strides = array<i32>} : memref<336x128xf32, #tpu.memory_space<vmem>>, vector<256x128xf32>,
    %118 = tpu.iota {dimensions = array<i32: 0>} : vector<256x128xi32>
    %c16_i32 = arith.constant 16 : i32
    %c0_i32 = arith.constant 0 : i32
    %119 = arith.cmpi eq, %c16_i32, %c0_i32 : i32
    %c1_i32 = arith.constant 1 : i32
    %120 = arith.select %119, %c1_i32, %c16_i32 : i32
    %121 = vector.broadcast %120 : i32 to vector<256x128xi32>
    %122 = arith.remsi %118, %121 : vector<256x128xi32>
    %c0_i32_54 = arith.constant 0 : i32
    %123 = vector.broadcast %c0_i32_54 : i32 to vector<256x128xi32>
    %124 = arith.cmpi ne, %122, %123 : vector<256x128xi32>
    %c0_i32_55 = arith.constant 0 : i32
    %125 = vector.broadcast %c0_i32_55 : i32 to vector<256x128xi32>
    %126 = arith.cmpi slt, %122, %125 : vector<256x128xi32>
    %c0_i32_56 = arith.constant 0 : i32
    %127 = arith.cmpi slt, %120, %c0_i32_56 : i32
    %128 = vector.broadcast %127 : i1 to vector<256x128xi1>
    %129 = vector.broadcast %128 : vector<256x128xi1> to vector<256x128xi1>
    %130 = arith.xori %126, %129 : vector<256x128xi1>
    %131 = arith.andi %130, %124 : vector<256x128xi1>
    %132 = vector.broadcast %120 : i32 to vector<256x128xi32>
    %133 = arith.addi %122, %132 : vector<256x128xi32>
    %134 = arith.select %131, %133, %122 : vector<256x128xi1>, vector<256x128xi32>
    %cst_57 = arith.constant 0.000000e+00 : f32
    %135 = vector.broadcast %cst_57 : f32 to vector<256x128xf32>
    %c6 = arith.constant 6 : index
    %c0_58 = arith.constant 0 : index
    %136 = vector.load %arg14[%c6, %c0_58] : memref<336x128xf32, #tpu.memory_space<vmem>>, vector<256x128xf32>
    %c-2_i32 = arith.constant -2 : i32
    %137 = vector.broadcast %c-2_i32 : i32 to vector<256x128xi32>
    %138 = arith.addi %134, %137 : vector<256x128xi32>
    %c0_i32_59 = arith.constant 0 : i32
    %139 = vector.broadcast %c0_i32_59 : i32 to vector<256x128xi32>
    %140 = arith.cmpi sge, %138, %139 : vector<256x128xi32>
    %c-2_i32_60 = arith.constant -2 : i32
    %141 = vector.broadcast %c-2_i32_60 : i32 to vector<256x128xi32>
    %142 = arith.addi %134, %141 : vector<256x128xi32>
    %c16_i32_61 = arith.constant 16 : i32
    %143 = vector.broadcast %c16_i32_61 : i32 to vector<256x128xi32>
    %144 = arith.cmpi slt, %142, %143 : vector<256x128xi32>
    %145 = arith.andi %140, %144 : vector<256x128xi1>
    %cst_62 = arith.constant 0.000000e+00 : f32
    %146 = vector.broadcast %cst_62 : f32 to vector<256x128xf32>
    %147 = arith.select %145, %136, %146 : vector<256x128xi1>, vector<256x128xf32>
    %148 = arith.truncf %147 : vector<256x128xf32> to vector<256x128xbf16>
    %c0_63 = arith.constant 0 : index
    %c0_64 = arith.constant 0 : index
    %c0_65 = arith.constant 0 : index
    %149 = vector.load %arg11[%c0_63, %c0_64, %c0_65] : memref<9x128x128xbf16, #tpu.memory_space<vmem>>, vector<1x128x128xbf16>
    %150 = vector.shape_cast %149 : vector<1x128x128xbf16> to vector<128x128xbf16>
    %cst_66 = arith.constant dense<0.000000e+00> : vector<256x128xf32>
    %151 = tpu.matmul %148, %150, %cst_66 {dimension_numbers = #tpu.dot_dimension_numbers<[1], [0], [0], [1], [0, 0, 1, 1], [], []>} : vector<256x128xbf16>, vector<128x128xbf16>, vector<256x128xf32> -> vector<256x128xf32>
    %152 = arith.addf %135, %151 : vector<256x128xf32>
    %c8 = arith.constant 8 : index
    %c0_67 = arith.constant 0 : index
    %153 = vector.load %arg14[%c8, %c0_67] : memref<336x128xf32, #tpu.memory_space<vmem>>, vector<256x128xf32>
    %154 = arith.truncf %153 : vector<256x128xf32> to vector<256x128xbf16>
    %c1 = arith.constant 1 : index
    %c0_68 = arith.constant 0 : index
    %c0_69 = arith.constant 0 : index
    %155 = vector.load %arg11[%c1, %c0_68, %c0_69] : memref<9x128x128xbf16, #tpu.memory_space<vmem>>, vector<1x128x128xbf16>
    %156 = vector.shape_cast %155 : vector<1x128x128xbf16> to vector<128x128xbf16>
    %cst_70 = arith.constant dense<0.000000e+00> : vector<256x128xf32>
    %157 = tpu.matmul %154, %156, %cst_70 {dimension_numbers = #tpu.dot_dimension_numbers<[1], [0], [0], [1], [0, 0, 1, 1], [], []>} : vector<256x128xbf16>, vector<128x128xbf16>, vector<256x128xf32> -> vector<256x128xf32>
    %158 = arith.addf %152, %157 : vector<256x128xf32>
    %c10 = arith.constant 10 : index
    %c0_71 = arith.constant 0 : index
    %159 = vector.load %arg14[%c10, %c0_71] : memref<336x128xf32, #tpu.memory_space<vmem>>, vector<256x128xf32>
    %c2_i32 = arith.constant 2 : i32
    %160 = vector.broadcast %c2_i32 : i32 to vector<256x128xi32>
    %161 = arith.addi %134, %160 : vector<256x128xi32>
    %c0_i32_72 = arith.constant 0 : i32
    %162 = vector.broadcast %c0_i32_72 : i32 to vector<256x128xi32>
    %163 = arith.cmpi sge, %161, %162 : vector<256x128xi32>
    %c2_i32_73 = arith.constant 2 : i32
    %164 = vector.broadcast %c2_i32_73 : i32 to vector<256x128xi32>
    %165 = arith.addi %134, %164 : vector<256x128xi32>
    %c16_i32_74 = arith.constant 16 : i32
    %166 = vector.broadcast %c16_i32_74 : i32 to vector<256x128xi32>
    %167 = arith.cmpi slt, %165, %166 : vector<256x128xi32>
    %168 = arith.andi %163, %167 : vector<256x128xi1>
    %cst_75 = arith.constant 0.000000e+00 : f32
    %169 = vector.broadcast %cst_75 : f32 to vector<256x128xf32>
    %170 = arith.select %168, %159, %169 : vector<256x128xi1>, vector<256x128xf32>
    %171 = arith.truncf %170 : vector<256x128xf32> to vector<256x128xbf16>
    %c2 = arith.constant 2 : index
    %c0_76 = arith.constant 0 : index
    %c0_77 = arith.constant 0 : index
    %172 = vector.load %arg11[%c2, %c0_76, %c0_77] : memref<9x128x128xbf16, #tpu.memory_space<vmem>>, vector<1x128x128xbf16>
    %173 = vector.shape_cast %172 : vector<1x128x128xbf16> to vector<128x128xbf16>
    %cst_78 = arith.constant dense<0.000000e+00> : vector<256x128xf32>
    %174 = tpu.matmul %171, %173, %cst_78 {dimension_numbers = #tpu.dot_dimension_numbers<[1], [0], [0], [1], [0, 0, 1, 1], [], []>} : vector<256x128xbf16>, vector<128x128xbf16>, vector<256x128xf32> -> vector<256x128xf32>
    %175 = arith.addf %158, %174 : vector<256x128xf32>
    %c38 = arith.constant 38 : index
    %c0_79 = arith.constant 0 : index
    %176 = vector.load %arg14[%c38, %c0_79] : memref<336x128xf32, #tpu.memory_space<vmem>>, vector<256x128xf32>
    %c-2_i32_80 = arith.constant -2 : i32
    %177 = vector.broadcast %c-2_i32_80 : i32 to vector<256x128xi32>
    %178 = arith.addi %134, %177 : vector<256x128xi32>
    %c0_i32_81 = arith.constant 0 : i32
    %179 = vector.broadcast %c0_i32_81 : i32 to vector<256x128xi32>
    %180 = arith.cmpi sge, %178, %179 : vector<256x128xi32>
    %c-2_i32_82 = arith.constant -2 : i32
    %181 = vector.broadcast %c-2_i32_82 : i32 to vector<256x128xi32>
    %182 = arith.addi %134, %181 : vector<256x128xi32>
    %c16_i32_83 = arith.constant 16 : i32
    %183 = vector.broadcast %c16_i32_83 : i32 to vector<256x128xi32>
    %184 = arith.cmpi slt, %182, %183 : vector<256x128xi32>
    %185 = arith.andi %180, %184 : vector<256x128xi1>
    %cst_84 = arith.constant 0.000000e+00 : f32
    %186 = vector.broadcast %cst_84 : f32 to vector<256x128xf32>
    %187 = arith.select %185, %176, %186 : vector<256x128xi1>, vector<256x128xf32>
    %188 = arith.truncf %187 : vector<256x128xf32> to vector<256x128xbf16>
    %c3 = arith.constant 3 : index
    %c0_85 = arith.constant 0 : index
    %c0_86 = arith.constant 0 : index
    %189 = vector.load %arg11[%c3, %c0_85, %c0_86] : memref<9x128x128xbf16, #tpu.memory_space<vmem>>, vector<1x128x128xbf16>
    %190 = vector.shape_cast %189 : vector<1x128x128xbf16> to vector<128x128xbf16>
    %cst_87 = arith.constant dense<0.000000e+00> : vector<256x128xf32>
    %191 = tpu.matmul %188, %190, %cst_87 {dimension_numbers = #tpu.dot_dimension_numbers<[1], [0], [0], [1], [0, 0, 1, 1], [], []>} : vector<256x128xbf16>, vector<128x128xbf16>, vector<256x128xf32> -> vector<256x128xf32>
    %192 = arith.addf %175, %191 : vector<256x128xf32>
    %c40_88 = arith.constant 40 : index
    %c0_89 = arith.constant 0 : index
    %193 = vector.load %arg14[%c40_88, %c0_89] : memref<336x128xf32, #tpu.memory_space<vmem>>, vector<256x128xf32>
    %194 = arith.truncf %193 : vector<256x128xf32> to vector<256x128xbf16>
    %c4 = arith.constant 4 : index
    %c0_90 = arith.constant 0 : index
    %c0_91 = arith.constant 0 : index
    %195 = vector.load %arg11[%c4, %c0_90, %c0_91] : memref<9x128x128xbf16, #tpu.memory_space<vmem>>, vector<1x128x128xbf16>
    %196 = vector.shape_cast %195 : vector<1x128x128xbf16> to vector<128x128xbf16>
    %cst_92 = arith.constant dense<0.000000e+00> : vector<256x128xf32>
    %197 = tpu.matmul %194, %196, %cst_92 {dimension_numbers = #tpu.dot_dimension_numbers<[1], [0], [0], [1], [0, 0, 1, 1], [], []>} : vector<256x128xbf16>, vector<128x128xbf16>, vector<256x128xf32> -> vector<256x128xf32>
    %198 = arith.addf %192, %197 : vector<256x128xf32>
    %c42 = arith.constant 42 : index
    %c0_93 = arith.constant 0 : index
    %199 = vector.load %arg14[%c42, %c0_93] : memref<336x128xf32, #tpu.memory_space<vmem>>, vector<256x128xf32>
    %c2_i32_94 = arith.constant 2 : i32
    %200 = vector.broadcast %c2_i32_94 : i32 to vector<256x128xi32>
    %201 = arith.addi %134, %200 : vector<256x128xi32>
    %c0_i32_95 = arith.constant 0 : i32
    %202 = vector.broadcast %c0_i32_95 : i32 to vector<256x128xi32>
    %203 = arith.cmpi sge, %201, %202 : vector<256x128xi32>
    %c2_i32_96 = arith.constant 2 : i32
    %204 = vector.broadcast %c2_i32_96 : i32 to vector<256x128xi32>
    %205 = arith.addi %134, %204 : vector<256x128xi32>
    %c16_i32_97 = arith.constant 16 : i32
    %206 = vector.broadcast %c16_i32_97 : i32 to vector<256x128xi32>
    %207 = arith.cmpi slt, %205, %206 : vector<256x128xi32>
    %208 = arith.andi %203, %207 : vector<256x128xi1>
    %cst_98 = arith.constant 0.000000e+00 : f32
    %209 = vector.broadcast %cst_98 : f32 to vector<256x128xf32>
    %210 = arith.select %208, %199, %209 : vector<256x128xi1>, vector<256x128xf32>
    %211 = arith.truncf %210 : vector<256x128xf32> to vector<256x128xbf16>
    %c5 = arith.constant 5 : index
    %c0_99 = arith.constant 0 : index
    %c0_100 = arith.constant 0 : index
    %212 = vector.load %arg11[%c5, %c0_99, %c0_100] : memref<9x128x128xbf16, #tpu.memory_space<vmem>>, vector<1x128x128xbf16>
    %213 = vector.shape_cast %212 : vector<1x128x128xbf16> to vector<128x128xbf16>
    %cst_101 = arith.constant dense<0.000000e+00> : vector<256x128xf32>
    %214 = tpu.matmul %211, %213, %cst_101 {dimension_numbers = #tpu.dot_dimension_numbers<[1], [0], [0], [1], [0, 0, 1, 1], [], []>} : vector<256x128xbf16>, vector<128x128xbf16>, vector<256x128xf32> -> vector<256x128xf32>
    %215 = arith.addf %198, %214 : vector<256x128xf32>
    %c70 = arith.constant 70 : index
    %c0_102 = arith.constant 0 : index
    %216 = vector.load %arg14[%c70, %c0_102] : memref<336x128xf32, #tpu.memory_space<vmem>>, vector<256x128xf32>
    %c-2_i32_103 = arith.constant -2 : i32
    %217 = vector.broadcast %c-2_i32_103 : i32 to vector<256x128xi32>
    %218 = arith.addi %134, %217 : vector<256x128xi32>
    %c0_i32_104 = arith.constant 0 : i32
    %219 = vector.broadcast %c0_i32_104 : i32 to vector<256x128xi32>
    %220 = arith.cmpi sge, %218, %219 : vector<256x128xi32>
    %c-2_i32_105 = arith.constant -2 : i32
    %221 = vector.broadcast %c-2_i32_105 : i32 to vector<256x128xi32>
    %222 = arith.addi %134, %221 : vector<256x128xi32>
    %c16_i32_106 = arith.constant 16 : i32
    %223 = vector.broadcast %c16_i32_106 : i32 to vector<256x128xi32>
    %224 = arith.cmpi slt, %222, %223 : vector<256x128xi32>
    %225 = arith.andi %220, %224 : vector<256x128xi1>
    %cst_107 = arith.constant 0.000000e+00 : f32
    %226 = vector.broadcast %cst_107 : f32 to vector<256x128xf32>
    %227 = arith.select %225, %216, %226 : vector<256x128xi1>, vector<256x128xf32>
    %228 = arith.truncf %227 : vector<256x128xf32> to vector<256x128xbf16>
    %c6_108 = arith.constant 6 : index
    %c0_109 = arith.constant 0 : index
    %c0_110 = arith.constant 0 : index
    %229 = vector.load %arg11[%c6_108, %c0_109, %c0_110] : memref<9x128x128xbf16, #tpu.memory_space<vmem>>, vector<1x128x128xbf16>
    %230 = vector.shape_cast %229 : vector<1x128x128xbf16> to vector<128x128xbf16>
    %cst_111 = arith.constant dense<0.000000e+00> : vector<256x128xf32>
    %231 = tpu.matmul %228, %230, %cst_111 {dimension_numbers = #tpu.dot_dimension_numbers<[1], [0], [0], [1], [0, 0, 1, 1], [], []>} : vector<256x128xbf16>, vector<128x128xbf16>, vector<256x128xf32> -> vector<256x128xf32>
    %232 = arith.addf %215, %231 : vector<256x128xf32>
    %c72 = arith.constant 72 : index
    %c0_112 = arith.constant 0 : index
    %233 = vector.load %arg14[%c72, %c0_112] : memref<336x128xf32, #tpu.memory_space<vmem>>, vector<256x128xf32>
    %234 = arith.truncf %233 : vector<256x128xf32> to vector<256x128xbf16>
    %c7 = arith.constant 7 : index
    %c0_113 = arith.constant 0 : index
    %c0_114 = arith.constant 0 : index
    %235 = vector.load %arg11[%c7, %c0_113, %c0_114] : memref<9x128x128xbf16, #tpu.memory_space<vmem>>, vector<1x128x128xbf16>
    %236 = vector.shape_cast %235 : vector<1x128x128xbf16> to vector<128x128xbf16>
    %cst_115 = arith.constant dense<0.000000e+00> : vector<256x128xf32>
    %237 = tpu.matmul %234, %236, %cst_115 {dimension_numbers = #tpu.dot_dimension_numbers<[1], [0], [0], [1], [0, 0, 1, 1], [], []>} : vector<256x128xbf16>, vector<128x128xbf16>, vector<256x128xf32> -> vector<256x128xf32>
    %238 = arith.addf %232, %237 : vector<256x128xf32>
    %c74 = arith.constant 74 : index
    %c0_116 = arith.constant 0 : index
    %239 = vector.load %arg14[%c74, %c0_116] : memref<336x128xf32, #tpu.memory_space<vmem>>, vector<256x128xf32>
    %c2_i32_117 = arith.constant 2 : i32
    %240 = vector.broadcast %c2_i32_117 : i32 to vector<256x128xi32>
    %241 = arith.addi %134, %240 : vector<256x128xi32>
    %c0_i32_118 = arith.constant 0 : i32
    %242 = vector.broadcast %c0_i32_118 : i32 to vector<256x128xi32>
    %243 = arith.cmpi sge, %241, %242 : vector<256x128xi32>
    %c2_i32_119 = arith.constant 2 : i32
    %244 = vector.broadcast %c2_i32_119 : i32 to vector<256x128xi32>
    %245 = arith.addi %134, %244 : vector<256x128xi32>
    %c16_i32_120 = arith.constant 16 : i32
    %246 = vector.broadcast %c16_i32_120 : i32 to vector<256x128xi32>
    %247 = arith.cmpi slt, %245, %246 : vector<256x128xi32>
    %248 = arith.andi %243, %247 : vector<256x128xi1>
    %cst_121 = arith.constant 0.000000e+00 : f32
    %249 = vector.broadcast %cst_121 : f32 to vector<256x128xf32>
    %250 = arith.select %248, %239, %249 : vector<256x128xi1>, vector<256x128xf32>
    %251 = arith.truncf %250 : vector<256x128xf32> to vector<256x128xbf16>
    %c8_122 = arith.constant 8 : index
    %c0_123 = arith.constant 0 : index
    %c0_124 = arith.constant 0 : index
    %252 = vector.load %arg11[%c8_122, %c0_123, %c0_124] : memref<9x128x128xbf16, #tpu.memory_space<vmem>>, vector<1x128x128xbf16>
    %253 = vector.shape_cast %252 : vector<1x128x128xbf16> to vector<128x128xbf16>
    %cst_125 = arith.constant dense<0.000000e+00> : vector<256x128xf32>
    %254 = tpu.matmul %251, %253, %cst_125 {dimension_numbers = #tpu.dot_dimension_numbers<[1], [0], [0], [1], [0, 0, 1, 1], [], []>} : vector<256x128xbf16>, vector<128x128xbf16>, vector<256x128xf32> -> vector<256x128xf32>
    %255 = arith.addf %238, %254 : vector<256x128xf32>
    %cst_126 = arith.constant dense<0.000000e+00> : vector<128xf32>
    %256 = vector.multi_reduction <add>, %255, %cst_126 [0] : vector<256x128xf32> to vector<128xf32>
    %257 = vector.shape_cast %256 : vector<128xf32> to vector<1x128xf32>
    %258 = arith.mulf %255, %255 : vector<256x128xf32>
    %cst_127 = arith.constant dense<0.000000e+00> : vector<128xf32>
    %259 = vector.multi_reduction <add>, %258, %cst_127 [0] : vector<256x128xf32> to vector<128xf32>
    %260 = vector.shape_cast %259 : vector<128xf32> to vector<1x128xf32>
    %cst_128 = arith.constant 3.906250e-03 : f32
    %261 = vector.broadcast %cst_128 : f32 to vector<1x128xf32>
    %262 = arith.mulf %257, %261 : vector<1x128xf32>
    %cst_129 = arith.constant 3.906250e-03 : f32
    %263 = vector.broadcast %cst_129 : f32 to vector<1x128xf32>
    %264 = arith.mulf %260, %263 : vector<1x128xf32>
    %265 = arith.mulf %262, %262 : vector<1x128xf32>
    %266 = arith.subf %264, %265 : vector<1x128xf32>
    %cst_130 = arith.constant 0.000000e+00 : f32
    %267 = vector.broadcast %cst_130 : f32 to vector<1x128xf32>
    %268 = arith.maximumf %266, %267 : vector<1x128xf32>
    %269 = vector.broadcast %262 : vector<1x128xf32> to vector<256x128xf32>
    %270 = arith.subf %255, %269 : vector<256x128xf32>
    %cst_131 = arith.constant 9.99999974E-6 : f32
    %271 = vector.broadcast %cst_131 : f32 to vector<1x128xf32>
    %272 = arith.addf %268, %271 : vector<1x128xf32>
    %273 = math.rsqrt %272 : vector<1x128xf32>
    %274 = vector.broadcast %273 : vector<1x128xf32> to vector<256x128xf32>
    %275 = arith.mulf %270, %274 : vector<256x128xf32>
    %cst_132 = arith.constant 0.000000e+00 : f32
    %276 = vector.broadcast %cst_132 : f32 to vector<256x128xf32>
    %277 = arith.maximumf %275, %276 : vector<256x128xf32>
    %278 = arith.truncf %277 : vector<256x128xf32> to vector<256x128xbf16>
    %c0_133 = arith.constant 0 : index
    %c0_134 = arith.constant 0 : index
    %279 = vector.load %arg12[%c0_133, %c0_134] : memref<128x128xbf16, #tpu.memory_space<vmem>>, vector<128x128xbf16>
    %cst_135 = arith.constant dense<0.000000e+00> : vector<256x128xf32>
    %280 = tpu.matmul %278, %279, %cst_135 {dimension_numbers = #tpu.dot_dimension_numbers<[1], [0], [0], [1], [0, 0, 1, 1], [], []>} : vector<256x128xbf16>, vector<128x128xbf16>, vector<256x128xf32> -> vector<256x128xf32>
    %281 = arith.addf %280, %60 : vector<256x128xf32>
    %c0_136 = arith.constant 0 : index
    %c0_137 = arith.constant 0 : index
    %c0_138 = arith.constant 0 : index
    %282 = vector.load %arg13[%c0_136, %c0_137, %c0_138] : memref<1x256x128xf32, #tpu.memory_space<vmem>>, vector<1x256x128xf32>
    %283 = vector.shape_cast %282 : vector<1x256x128xf32> to vector<256x128xf32>
    %284 = vector.shape_cast %281 : vector<256x128xf32> to vector<1x256x128xf32>
    tpu.vector_store %arg13[%c0_136, %c0_137, %c0_138], %284 {strides = array<i32>} : memref<1x256x128xf32, #tpu.memory_space<vmem>>, vector<1x256x128xf32>,
    return
  }
  func.func @transform_0(%arg0: i32) -> (i32, i32, i32) {
    %c0_i32 = arith.constant 0 : i32
    %c0_i32_0 = arith.constant 0 : i32
    %c0_i32_1 = arith.constant 0 : i32
    return %arg0, %c0_i32, %c0_i32_0 : i32, i32, i32
  }
  func.func @transform_1(%arg0: i32) -> (i32, i32) {
    %c0_i32 = arith.constant 0 : i32
    %c0_i32_0 = arith.constant 0 : i32
    %c0_i32_1 = arith.constant 0 : i32
    return %c0_i32, %c0_i32_0 : i32, i32
  }
  func.func @transform_2(%arg0: i32) -> (i32, i32) {
    %c0_i32 = arith.constant 0 : i32
    %c0_i32_0 = arith.constant 0 : i32
    %c0_i32_1 = arith.constant 0 : i32
    return %c0_i32, %c0_i32_0 : i32, i32
  }
  func.func @transform_3(%arg0: i32) -> (i32, i32) {
    %c0_i32 = arith.constant 0 : i32
    %c0_i32_0 = arith.constant 0 : i32
    %c0_i32_1 = arith.constant 0 : i32
    return %c0_i32, %c0_i32_0 : i32, i32
  }
  func.func @transform_4(%arg0: i32) -> (i32, i32) {
    %c0_i32 = arith.constant 0 : i32
    %c0_i32_0 = arith.constant 0 : i32
    %c0_i32_1 = arith.constant 0 : i32
    return %c0_i32, %c0_i32_0 : i32, i32
  }
  func.func @transform_5(%arg0: i32) -> (i32, i32) {
    %c0_i32 = arith.constant 0 : i32
    %c0_i32_0 = arith.constant 0 : i32
    %c0_i32_1 = arith.constant 0 : i32
    return %c0_i32, %c0_i32_0 : i32, i32
  }
  func.func @transform_6(%arg0: i32) -> (i32, i32) {
    %c0_i32 = arith.constant 0 : i32
    %c0_i32_0 = arith.constant 0 : i32
    %c0_i32_1 = arith.constant 0 : i32
    return %c0_i32, %c0_i32_0 : i32, i32
  }
  func.func @transform_7(%arg0: i32) -> (i32, i32) {
    %c0_i32 = arith.constant 0 : i32
    %c0_i32_0 = arith.constant 0 : i32
    %c0_i32_1 = arith.constant 0 : i32
    return %c0_i32, %c0_i32_0 : i32, i32
  }
  func.func @transform_8(%arg0: i32) -> (i32, i32) {
    %c0_i32 = arith.constant 0 : i32
    %c0_i32_0 = arith.constant 0 : i32
    %c0_i32_1 = arith.constant 0 : i32
    return %c0_i32, %c0_i32_0 : i32, i32
  }
  func.func @transform_9(%arg0: i32) -> (i32, i32) {
    %c0_i32 = arith.constant 0 : i32
    %c0_i32_0 = arith.constant 0 : i32
    %c0_i32_1 = arith.constant 0 : i32
    return %c0_i32, %c0_i32_0 : i32, i32
  }
  func.func @transform_10(%arg0: i32) -> (i32, i32, i32) {
    %c0_i32 = arith.constant 0 : i32
    %c0_i32_0 = arith.constant 0 : i32
    %c0_i32_1 = arith.constant 0 : i32
    %c0_i32_2 = arith.constant 0 : i32
    return %c0_i32, %c0_i32_0, %c0_i32_1 : i32, i32, i32
  }
  func.func @transform_11(%arg0: i32) -> (i32, i32) {
    %c0_i32 = arith.constant 0 : i32
    %c0_i32_0 = arith.constant 0 : i32
    %c0_i32_1 = arith.constant 0 : i32
    return %c0_i32, %c0_i32_0 : i32, i32
  }
  func.func @transform_12(%arg0: i32) -> (i32, i32, i32) {
    %c0_i32 = arith.constant 0 : i32
    %c0_i32_0 = arith.constant 0 : i32
    %c0_i32_1 = arith.constant 0 : i32
    return %arg0, %c0_i32, %c0_i32_0 : i32, i32, i32
  }
}

</mosaic_0001>

<llo_original>
// kernel: rn_msgcb_u2_v2.1
$region0: #{rn_msgcb_u2_v2.1}
  #allocation0 [shape = 'u32[]', space=smem, size = 0x4, offset = 0x4, fixed_abs, tag = 'smem constant byte address 0x4 - core index']
  #allocation1 [shape = 'u32[144,128]{1,0:T(1,128)}', space=vmem, size = 0x12000, scoped, tag = 'internal scratch']
  #allocation2 [shape = 'f32[336,128]{1,0:T(8,128)}', space=vmem, size = 0x2a000, scoped, tag = 'scratch operand']
  %s0 = inlined_call_operand.vmem [shape: f32[2,256,128], index: 0, kind: input, shape index: {}]
  %s1 = inlined_call_operand.vmem [shape: bf16[128,128], index: 1, kind: input, shape index: {}]
  %s2 = inlined_call_operand.vmem [shape: f32[1,128], index: 2, kind: input, shape index: {}]
  %s3 = inlined_call_operand.vmem [shape: bf16[128,128], index: 3, kind: input, shape index: {}]
  %s4 = inlined_call_operand.vmem [shape: f32[1,128], index: 4, kind: input, shape index: {}]
  %s5 = inlined_call_operand.vmem [shape: f32[1,128], index: 5, kind: input, shape index: {}]
  %s6 = inlined_call_operand.vmem [shape: f32[1,128], index: 6, kind: input, shape index: {}]
  %s7 = inlined_call_operand.vmem [shape: bf16[128,128], index: 7, kind: input, shape index: {}]
  %s8 = inlined_call_operand.vmem [shape: f32[1,128], index: 8, kind: input, shape index: {}]
  %s9 = inlined_call_operand.vmem [shape: bf16[128,128], index: 9, kind: input, shape index: {}]
  %s10 = inlined_call_operand.vmem [shape: bf16[9,128,128], index: 10, kind: input, shape index: {}]
  %s11 = inlined_call_operand.vmem [shape: bf16[128,128], index: 11, kind: input, shape index: {}]
  %s12 = inlined_call_operand.hbm [shape: f32[2,256,128], index: 12, kind: output, shape index: {}]
  %s13 = sld [smem:[#allocation0]]
  $region81: #{rn_msgcb_u2_v2.1} parent=0
    _
  %s15 = ssub.s32 1, %s13
  %s16 = scalar_select 0, %s15, %s13
  $region1: #{rn_msgcb_u2_v2.1} parent=0
    #allocation3 [shape = 'u8[262144]{0}', space=vmem, size = 0x40000, scoped, tag = 'output window, operand 0']
    #allocation4 [shape = 's32[2]{0}', space=sflag, size = 0x8, scoped, tag = 'scoped memory for rn_msgcb_u2_v2.1']
    %17 = vsyncpa [#allocation4], 0
    %s18 = scalar_lea.sflag [#allocation4], 1
    %19 = vsyncpa %s18, 0
    loop: start=0, step=1, limit=4
    $region2: #{rn_msgcb_u2_v2.1} parent=1 // loop_pre_header
      _
    $region3: #{rn_msgcb_u2_v2.1} parent=1 // loop_header
      %s21 = sphi 0, %s25
      %p22 = scmp.ge.s32.totalorder %s21, 4
      %s31 = sphi 0, %s33
      %s34 = sphi 0, %s31
      %s35 = sphi 0, %s34
      %s51 = sphi 0, %s35
      %s55 = sphi 0, %s55
      %s57 = sphi 0, %s55
      %s58 = sphi 0, %s57
      %s72 = sphi 0, %s58
      %s76 = sphi 0, %s76
      %s78 = sphi 0, %s76
      %s79 = sphi 0, %s78
      %s93 = sphi 0, %s79
      %s97 = sphi 0, %s97
      %s99 = sphi 0, %s97
      %s100 = sphi 0, %s99
      %s114 = sphi 0, %s100
      %s118 = sphi 0, %s118
      %s120 = sphi 0, %s118
      %s121 = sphi 0, %s120
      %s135 = sphi 0, %s121
      %s139 = sphi 0, %s139
      %s141 = sphi 0, %s139
      %s142 = sphi 0, %s141
      %s156 = sphi 0, %s142
      %s160 = sphi 0, %s160
      %s162 = sphi 0, %s160
      %s163 = sphi 0, %s162
      %s177 = sphi 0, %s163
      %s181 = sphi 0, %s181
      %s183 = sphi 0, %s181
      %s184 = sphi 0, %s183
      %s198 = sphi 0, %s184
      %s202 = sphi 0, %s202
      %s204 = sphi 0, %s202
      %s205 = sphi 0, %s204
      %s219 = sphi 0, %s205
      %s223 = sphi 0, %s223
      %s225 = sphi 0, %s223
      %s226 = sphi 0, %s225
      %s240 = sphi 0, %s226
      %s244 = sphi 0, %s244
      %s246 = sphi 0, %s244
      %s247 = sphi 0, %s246
      %s261 = sphi 0, %s247
      %s265 = sphi 0, %s265
      %s267 = sphi 0, %s265
      %s268 = sphi 0, %s267
      %s282 = sphi 0, %s268
      %s288 = sphi 0, %s290
      %s291 = sphi 0, %s288
      %s292 = sphi 0, %s291
      %s308 = sphi 0, %s292
    $region4: #{rn_msgcb_u2_v2.1} parent=1 // loop_header_branch
      %24 = sbr.rel (%p22) target = $region8
    $region5: #{rn_msgcb_u2_v2.1} parent=1 // loop_body
      %s26 = ssub.s32 %s21, 1
      %s27 = ssub.s32 %s21, 2
      %s28 = sadd.s32 %s21, 1
      %s29 = ssub.s32 %s21, %s28
      %p30 = scmp.eq.s32.totalorder %s29, 0
      %s32 = sadd.s32 %s31, 1
      %s33 = scalar_select %p30, %s31, %s32
      %p36 = pneg %p30
      %p37 = scmp.eq.s32.totalorder %s21, 1
      %p38 = por %p36, %p37
      %p39 = scmp.ne.s32.totalorder %s31, %s34
      %p40 = scmp.eq.s32.totalorder %s21, 0
      %p41 = por %p39, %p40
      %p42 = scmp.ne.s32.totalorder %s31, %s34
      %p43 = scmp.eq.s32.totalorder %s26, 1
      %p44 = por %p42, %p43
      %p45 = scmp.ne.s32.totalorder %s34, %s35
      %p46 = scmp.eq.s32.totalorder %s26, 0
      %p47 = por %p45, %p46
      %p48 = scmp.ne.s32.totalorder %s34, %s35
      %p49 = scmp.eq.s32.totalorder %s27, 1
      %p50 = por %p48, %p49
      %p52 = scmp.ne.s32.totalorder %s35, %s51
      %p53 = scmp.eq.s32.totalorder %s27, 0
      %p54 = por %p52, %p53
      %s56 = sadd.s32 %s55, 1
      %p59 = scmp.eq.s32.totalorder %s21, 1
      %p60 = scmp.ne.s32.totalorder %s55, %s57
      %p61 = scmp.eq.s32.totalorder %s21, 0
      %p62 = por %p60, %p61
      %p63 = scmp.ne.s32.totalorder %s55, %s57
      %p64 = scmp.eq.s32.totalorder %s26, 1
      %p65 = por %p63, %p64
      %p66 = scmp.ne.s32.totalorder %s57, %s58
      %p67 = scmp.eq.s32.totalorder %s26, 0
      %p68 = por %p66, %p67
      %p69 = scmp.ne.s32.totalorder %s57, %s58
      %p70 = scmp.eq.s32.totalorder %s27, 1
      %p71 = por %p69, %p70
      %p73 = scmp.ne.s32.totalorder %s58, %s72
      %p74 = scmp.eq.s32.totalorder %s27, 0
      %p75 = por %p73, %p74
      %s77 = sadd.s32 %s76, 1
      %p80 = scmp.eq.s32.totalorder %s21, 1
      %p81 = scmp.ne.s32.totalorder %s76, %s78
      %p82 = scmp.eq.s32.totalorder %s21, 0
      %p83 = por %p81, %p82
      %p84 = scmp.ne.s32.totalorder %s76, %s78
      %p85 = scmp.eq.s32.totalorder %s26, 1
      %p86 = por %p84, %p85
      %p87 = scmp.ne.s32.totalorder %s78, %s79
      %p88 = scmp.eq.s32.totalorder %s26, 0
      %p89 = por %p87, %p88
      %p90 = scmp.ne.s32.totalorder %s78, %s79
      %p91 = scmp.eq.s32.totalorder %s27, 1
      %p92 = por %p90, %p91
      %p94 = scmp.ne.s32.totalorder %s79, %s93
      %p95 = scmp.eq.s32.totalorder %s27, 0
      %p96 = por %p94, %p95
      %s98 = sadd.s32 %s97, 1
      %p101 = scmp.eq.s32.totalorder %s21, 1
      %p102 = scmp.ne.s32.totalorder %s97, %s99
      %p103 = scmp.eq.s32.totalorder %s21, 0
      %p104 = por %p102, %p103
      %p105 = scmp.ne.s32.totalorder %s97, %s99
      %p106 = scmp.eq.s32.totalorder %s26, 1
      %p107 = por %p105, %p106
      %p108 = scmp.ne.s32.totalorder %s99, %s100
      %p109 = scmp.eq.s32.totalorder %s26, 0
      %p110 = por %p108, %p109
      %p111 = scmp.ne.s32.totalorder %s99, %s100
      %p112 = scmp.eq.s32.totalorder %s27, 1
      %p113 = por %p111, %p112
      %p115 = scmp.ne.s32.totalorder %s100, %s114
      %p116 = scmp.eq.s32.totalorder %s27, 0
      %p117 = por %p115, %p116
      %s119 = sadd.s32 %s118, 1
      %p122 = scmp.eq.s32.totalorder %s21, 1
      %p123 = scmp.ne.s32.totalorder %s118, %s120
      %p124 = scmp.eq.s32.totalorder %s21, 0
      %p125 = por %p123, %p124
      %p126 = scmp.ne.s32.totalorder %s118, %s120
      %p127 = scmp.eq.s32.totalorder %s26, 1
      %p128 = por %p126, %p127
      %p129 = scmp.ne.s32.totalorder %s120, %s121
      %p130 = scmp.eq.s32.totalorder %s26, 0
      %p131 = por %p129, %p130
      %p132 = scmp.ne.s32.totalorder %s120, %s121
      %p133 = scmp.eq.s32.totalorder %s27, 1
      %p134 = por %p132, %p133
      %p136 = scmp.ne.s32.totalorder %s121, %s135
      %p137 = scmp.eq.s32.totalorder %s27, 0
      %p138 = por %p136, %p137
      %s140 = sadd.s32 %s139, 1
      %p143 = scmp.eq.s32.totalorder %s21, 1
      %p144 = scmp.ne.s32.totalorder %s139, %s141
      %p145 = scmp.eq.s32.totalorder %s21, 0
      %p146 = por %p144, %p145
      %p147 = scmp.ne.s32.totalorder %s139, %s141
      %p148 = scmp.eq.s32.totalorder %s26, 1
      %p149 = por %p147, %p148
      %p150 = scmp.ne.s32.totalorder %s141, %s142
      %p151 = scmp.eq.s32.totalorder %s26, 0
      %p152 = por %p150, %p151
      %p153 = scmp.ne.s32.totalorder %s141, %s142
      %p154 = scmp.eq.s32.totalorder %s27, 1
      %p155 = por %p153, %p154
      %p157 = scmp.ne.s32.totalorder %s142, %s156
      %p158 = scmp.eq.s32.totalorder %s27, 0
      %p159 = por %p157, %p158
      %s161 = sadd.s32 %s160, 1
      %p164 = scmp.eq.s32.totalorder %s21, 1
      %p165 = scmp.ne.s32.totalorder %s160, %s162
      %p166 = scmp.eq.s32.totalorder %s21, 0
      %p167 = por %p165, %p166
      %p168 = scmp.ne.s32.totalorder %s160, %s162
      %p169 = scmp.eq.s32.totalorder %s26, 1
      %p170 = por %p168, %p169
      %p171 = scmp.ne.s32.totalorder %s162, %s163
      %p172 = scmp.eq.s32.totalorder %s26, 0
      %p173 = por %p171, %p172
      %p174 = scmp.ne.s32.totalorder %s162, %s163
      %p175 = scmp.eq.s32.totalorder %s27, 1
      %p176 = por %p174, %p175
      %p178 = scmp.ne.s32.totalorder %s163, %s177
      %p179 = scmp.eq.s32.totalorder %s27, 0
      %p180 = por %p178, %p179
      %s182 = sadd.s32 %s181, 1
      %p185 = scmp.eq.s32.totalorder %s21, 1
      %p186 = scmp.ne.s32.totalorder %s181, %s183
      %p187 = scmp.eq.s32.totalorder %s21, 0
      %p188 = por %p186, %p187
      %p189 = scmp.ne.s32.totalorder %s181, %s183
      %p190 = scmp.eq.s32.totalorder %s26, 1
      %p191 = por %p189, %p190
      %p192 = scmp.ne.s32.totalorder %s183, %s184
      %p193 = scmp.eq.s32.totalorder %s26, 0
      %p194 = por %p192, %p193
      %p195 = scmp.ne.s32.totalorder %s183, %s184
      %p196 = scmp.eq.s32.totalorder %s27, 1
      %p197 = por %p195, %p196
      %p199 = scmp.ne.s32.totalorder %s184, %s198
      %p200 = scmp.eq.s32.totalorder %s27, 0
      %p201 = por %p199, %p200
      %s203 = sadd.s32 %s202, 1
      %p206 = scmp.eq.s32.totalorder %s21, 1
      %p207 = scmp.ne.s32.totalorder %s202, %s204
      %p208 = scmp.eq.s32.totalorder %s21, 0
      %p209 = por %p207, %p208
      %p210 = scmp.ne.s32.totalorder %s202, %s204
      %p211 = scmp.eq.s32.totalorder %s26, 1
      %p212 = por %p210, %p211
      %p213 = scmp.ne.s32.totalorder %s204, %s205
      %p214 = scmp.eq.s32.totalorder %s26, 0
      %p215 = por %p213, %p214
      %p216 = scmp.ne.s32.totalorder %s204, %s205
      %p217 = scmp.eq.s32.totalorder %s27, 1
      %p218 = por %p216, %p217
      %p220 = scmp.ne.s32.totalorder %s205, %s219
      %p221 = scmp.eq.s32.totalorder %s27, 0
      %p222 = por %p220, %p221
      %s224 = sadd.s32 %s223, 1
      %p227 = scmp.eq.s32.totalorder %s21, 1
      %p228 = scmp.ne.s32.totalorder %s223, %s225
      %p229 = scmp.eq.s32.totalorder %s21, 0
      %p230 = por %p228, %p229
      %p231 = scmp.ne.s32.totalorder %s223, %s225
      %p232 = scmp.eq.s32.totalorder %s26, 1
      %p233 = por %p231, %p232
      %p234 = scmp.ne.s32.totalorder %s225, %s226
      %p235 = scmp.eq.s32.totalorder %s26, 0
      %p236 = por %p234, %p235
      %p237 = scmp.ne.s32.totalorder %s225, %s226
      %p238 = scmp.eq.s32.totalorder %s27, 1
      %p239 = por %p237, %p238
      %p241 = scmp.ne.s32.totalorder %s226, %s240
      %p242 = scmp.eq.s32.totalorder %s27, 0
      %p243 = por %p241, %p242
      %s245 = sadd.s32 %s244, 1
      %p248 = scmp.eq.s32.totalorder %s21, 1
      %p249 = scmp.ne.s32.totalorder %s244, %s246
      %p250 = scmp.eq.s32.totalorder %s21, 0
      %p251 = por %p249, %p250
      %p252 = scmp.ne.s32.totalorder %s244, %s246
      %p253 = scmp.eq.s32.totalorder %s26, 1
      %p254 = por %p252, %p253
      %p255 = scmp.ne.s32.totalorder %s246, %s247
      %p256 = scmp.eq.s32.totalorder %s26, 0
      %p257 = por %p255, %p256
      %p258 = scmp.ne.s32.totalorder %s246, %s247
      %p259 = scmp.eq.s32.totalorder %s27, 1
      %p260 = por %p258, %p259
      %p262 = scmp.ne.s32.totalorder %s247, %s261
      %p263 = scmp.eq.s32.totalorder %s27, 0
      %p264 = por %p262, %p263
      %s266 = sadd.s32 %s265, 1
      %p269 = scmp.eq.s32.totalorder %s21, 1
      %p270 = scmp.ne.s32.totalorder %s265, %s267
      %p271 = scmp.eq.s32.totalorder %s21, 0
      %p272 = por %p270, %p271
      %p273 = scmp.ne.s32.totalorder %s265, %s267
      %p274 = scmp.eq.s32.totalorder %s26, 1
      %p275 = por %p273, %p274
      %p276 = scmp.ne.s32.totalorder %s267, %s268
      %p277 = scmp.eq.s32.totalorder %s26, 0
      %p278 = por %p276, %p277
      %p279 = scmp.ne.s32.totalorder %s267, %s268
      %p280 = scmp.eq.s32.totalorder %s27, 1
      %p281 = por %p279, %p280
      %p283 = scmp.ne.s32.totalorder %s268, %s282
      %p284 = scmp.eq.s32.totalorder %s27, 0
      %p285 = por %p283, %p284
      %s286 = ssub.s32 %s21, %s28
      %p287 = scmp.eq.s32.totalorder %s286, 0
      %s289 = sadd.s32 %s288, 1
      %s290 = scalar_select %p287, %s288, %s289
      %p293 = pneg %p287
      %p294 = scmp.eq.s32.totalorder %s21, 1
      %p295 = por %p293, %p294
      %p296 = scmp.ne.s32.totalorder %s288, %s291
      %p297 = scmp.eq.s32.totalorder %s21, 0
      %p298 = por %p296, %p297
      %p299 = scmp.ne.s32.totalorder %s288, %s291
      %p300 = scmp.eq.s32.totalorder %s26, 1
      %p301 = por %p299, %p300
      %p302 = scmp.ne.s32.totalorder %s291, %s292
      %p303 = scmp.eq.s32.totalorder %s26, 0
      %p304 = por %p302, %p303
      %p305 = scmp.ne.s32.totalorder %s291, %s292
      %p306 = scmp.eq.s32.totalorder %s27, 1
      %p307 = por %p305, %p306
      %p309 = scmp.ne.s32.totalorder %s292, %s308
      %p310 = scmp.eq.s32.totalorder %s27, 0
      %p311 = por %p309, %p310
      %p312 = scmp.le.s32.totalorder 1, %s21
      %p313 = scmp.lt.s32.totalorder %s21, 3
      %p314 = pnand %p312, %p313
      %p315 = pneg %p314
      // Predicated region
      $region9: #{rn_msgcb_u2_v2.1} parent=5 // pred_check
        _
      $region10: #{rn_msgcb_u2_v2.1} parent=5 // pred_check_branch
        %317 = sbr.rel (%p314) target = $region12
      $region11: #{rn_msgcb_u2_v2.1} parent=5 // pred_region
        %s318 = ssub.s32 %s21, 1
        // Predicated region
        $region13: #{rn_msgcb_u2_v2.1} parent=11 // pred_check
          %p319 = pneg %p68
        $region14: #{rn_msgcb_u2_v2.1} parent=11 // pred_check_branch
          %321 = sbr.rel (%p319) target = $region16
        $region15: #{rn_msgcb_u2_v2.1} parent=11 // pred_region
          _
        $region16: #{rn_msgcb_u2_v2.1} parent=11 // pred_fallthru
          _
        // Predicated region
        $region17: #{rn_msgcb_u2_v2.1} parent=11 // pred_check
          %p322 = pneg %p89
        $region18: #{rn_msgcb_u2_v2.1} parent=11 // pred_check_branch
          %324 = sbr.rel (%p322) target = $region20
        $region19: #{rn_msgcb_u2_v2.1} parent=11 // pred_region
          _
        $region20: #{rn_msgcb_u2_v2.1} parent=11 // pred_fallthru
          _
        // Predicated region
        $region21: #{rn_msgcb_u2_v2.1} parent=11 // pred_check
          %p325 = pneg %p110
        $region22: #{rn_msgcb_u2_v2.1} parent=11 // pred_check_branch
          %327 = sbr.rel (%p325) target = $region24
        $region23: #{rn_msgcb_u2_v2.1} parent=11 // pred_region
          _
        $region24: #{rn_msgcb_u2_v2.1} parent=11 // pred_fallthru
          _
        // Predicated region
        $region25: #{rn_msgcb_u2_v2.1} parent=11 // pred_check
          %p328 = pneg %p131
        $region26: #{rn_msgcb_u2_v2.1} parent=11 // pred_check_branch
          %330 = sbr.rel (%p328) target = $region28
        $region27: #{rn_msgcb_u2_v2.1} parent=11 // pred_region
          _
        $region28: #{rn_msgcb_u2_v2.1} parent=11 // pred_fallthru
          _
        // Predicated region
        $region29: #{rn_msgcb_u2_v2.1} parent=11 // pred_check
          %p331 = pneg %p152
        $region30: #{rn_msgcb_u2_v2.1} parent=11 // pred_check_branch
          %333 = sbr.rel (%p331) target = $region32
        $region31: #{rn_msgcb_u2_v2.1} parent=11 // pred_region
          _
        $region32: #{rn_msgcb_u2_v2.1} parent=11 // pred_fallthru
          _
        // Predicated region
        $region33: #{rn_msgcb_u2_v2.1} parent=11 // pred_check
          %p334 = pneg %p173
        $region34: #{rn_msgcb_u2_v2.1} parent=11 // pred_check_branch
          %336 = sbr.rel (%p334) target = $region36
        $region35: #{rn_msgcb_u2_v2.1} parent=11 // pred_region
          _
        $region36: #{rn_msgcb_u2_v2.1} parent=11 // pred_fallthru
          _
        // Predicated region
        $region37: #{rn_msgcb_u2_v2.1} parent=11 // pred_check
          %p337 = pneg %p194
        $region38: #{rn_msgcb_u2_v2.1} parent=11 // pred_check_branch
          %339 = sbr.rel (%p337) target = $region40
        $region39: #{rn_msgcb_u2_v2.1} parent=11 // pred_region
          _
        $region40: #{rn_msgcb_u2_v2.1} parent=11 // pred_fallthru
          _
        // Predicated region
        $region41: #{rn_msgcb_u2_v2.1} parent=11 // pred_check
          %p340 = pneg %p215
        $region42: #{rn_msgcb_u2_v2.1} parent=11 // pred_check_branch
          %342 = sbr.rel (%p340) target = $region44
        $region43: #{rn_msgcb_u2_v2.1} parent=11 // pred_region
          _
        $region44: #{rn_msgcb_u2_v2.1} parent=11 // pred_fallthru
          _
        // Predicated region
        $region45: #{rn_msgcb_u2_v2.1} parent=11 // pred_check
          %p343 = pneg %p236
        $region46: #{rn_msgcb_u2_v2.1} parent=11 // pred_check_branch
          %345 = sbr.rel (%p343) target = $region48
        $region47: #{rn_msgcb_u2_v2.1} parent=11 // pred_region
          _
        $region48: #{rn_msgcb_u2_v2.1} parent=11 // pred_fallthru
          _
        // Predicated region
        $region49: #{rn_msgcb_u2_v2.1} parent=11 // pred_check
          %p346 = pneg %p257
        $region50: #{rn_msgcb_u2_v2.1} parent=11 // pred_check_branch
          %348 = sbr.rel (%p346) target = $region52
        $region51: #{rn_msgcb_u2_v2.1} parent=11 // pred_region
          _
        $region52: #{rn_msgcb_u2_v2.1} parent=11 // pred_fallthru
          _
        // Predicated region
        $region53: #{rn_msgcb_u2_v2.1} parent=11 // pred_check
          %p349 = pneg %p278
        $region54: #{rn_msgcb_u2_v2.1} parent=11 // pred_check_branch
          %351 = sbr.rel (%p349) target = $region56
        $region55: #{rn_msgcb_u2_v2.1} parent=11 // pred_region
          _
        $region56: #{rn_msgcb_u2_v2.1} parent=11 // pred_fallthru
          _
      $region12: #{rn_msgcb_u2_v2.1} parent=5 // pred_fallthru
        _
      %p352 = scmp.lt.s32.totalorder %s21, 2
      // Predicated region
      $region57: #{rn_msgcb_u2_v2.1} parent=5 // pred_check
        %p353 = pneg %p352
      $region58: #{rn_msgcb_u2_v2.1} parent=5 // pred_check_branch
        %355 = sbr.rel (%p353) target = $region60
      $region59: #{rn_msgcb_u2_v2.1} parent=5 // pred_region
        // Predicated region
        $region61: #{rn_msgcb_u2_v2.1} parent=59 // pred_check
          %p356 = pneg %p41
        $region62: #{rn_msgcb_u2_v2.1} parent=59 // pred_check_branch
          %358 = sbr.rel (%p356) target = $region64
        $region63: #{rn_msgcb_u2_v2.1} parent=59 // pred_region
          %p359 = scmp.lt.s32.totalorder %s21, 1
          %s360 = scalar_select %p359, %s21, 1
          %s361 = smul.addr %s360, 32
          %s362 = smul.addr %s361, 8
          %s363 = scalar_lea.vmem %s0, %s362
        $region64: #{rn_msgcb_u2_v2.1} parent=59 // pred_fallthru
          _
      $region60: #{rn_msgcb_u2_v2.1} parent=5 // pred_fallthru
        _
      %p364 = scmp.le.s32.totalorder 1, %s21
      %p365 = scmp.lt.s32.totalorder %s21, 3
      %p366 = pnand %p364, %p365
      %p367 = pneg %p366
      // Predicated region
      $region65: #{rn_msgcb_u2_v2.1} parent=5 // pred_check
        _
      $region66: #{rn_msgcb_u2_v2.1} parent=5 // pred_check_branch
        %369 = sbr.rel (%p366) target = $region68
      $region67: #{rn_msgcb_u2_v2.1} parent=5 // pred_region
        %s370 = ssub.s32 %s21, 1
        %p371 = scmp.lt.s32.totalorder %s26, 1
        %s372 = scalar_select %p371, %s26, 1
        %s373 = smul.addr %s372, 32
        %s374 = smul.addr %s373, 8
        %s375 = scalar_lea.vmem %s0, %s374
        %p376 = pneg %p47
        %p377 = pneg %p44
        %p378 = pneg %p68
        %p379 = pneg %p65
        %p380 = pneg %p89
        %p381 = pneg %p86
        %p382 = pneg %p110
        %p383 = pneg %p107
        %p384 = pneg %p131
        %p385 = pneg %p128
        %p386 = pneg %p152
        %p387 = pneg %p149
        %p388 = pneg %p173
        %p389 = pneg %p170
        %p390 = pneg %p194
        %p391 = pneg %p191
        %p392 = pneg %p215
        %p393 = pneg %p212
        %p394 = pneg %p236
        %p395 = pneg %p233
        %p396 = pneg %p257
        %p397 = pneg %p254
        %p398 = pneg %p278
        %p399 = pneg %p275
        %p400 = pneg %p304
        %p401 = pneg %p301
        %s402 = sand.u32 %s291, 1
        %s403 = scalar_lea.sflag [#allocation4], %s402
        %s404 = sand.u32 %s291, 1
        %s405 = smul.addr %s404, 256
        %s406 = scalar_lea.vmem [#allocation3], %s405
        %p407 = scmp.lt.s32.totalorder %s26, 1
        %s408 = scalar_select %p407, %s26, 1
        %s409 = smul.addr %s408, 32
        %s410 = smul.addr %s409, 8
        %s411 = scalar_lea.vmem %s0, %s410
        %v413 = vld [vmem:[%s411] sm:$0xff]
        %v414 = vld [vmem:[%s411 + $0x8] sm:$0xff]
        %v415 = vld [vmem:[%s411 + $0x10] sm:$0xff]
        %v416 = vld [vmem:[%s411 + $0x18] sm:$0xff]
        %v417 = vld [vmem:[%s411 + $0x20] sm:$0xff]
        %v418 = vld [vmem:[%s411 + $0x28] sm:$0xff]
        %v419 = vld [vmem:[%s411 + $0x30] sm:$0xff]
        %v420 = vld [vmem:[%s411 + $0x38] sm:$0xff]
        %v421 = vld [vmem:[%s411 + $0x40] sm:$0xff]
        %v422 = vld [vmem:[%s411 + $0x48] sm:$0xff]
        %v423 = vld [vmem:[%s411 + $0x50] sm:$0xff]
        %v424 = vld [vmem:[%s411 + $0x58] sm:$0xff]
        %v425 = vld [vmem:[%s411 + $0x60] sm:$0xff]
        %v426 = vld [vmem:[%s411 + $0x68] sm:$0xff]
        %v427 = vld [vmem:[%s411 + $0x70] sm:$0xff]
        %v428 = vld [vmem:[%s411 + $0x78] sm:$0xff]
        %v429 = vld [vmem:[%s411 + $0x80] sm:$0xff]
        %v430 = vld [vmem:[%s411 + $0x88] sm:$0xff]
        %v431 = vld [vmem:[%s411 + $0x90] sm:$0xff]
        %v432 = vld [vmem:[%s411 + $0x98] sm:$0xff]
        %v433 = vld [vmem:[%s411 + $0xa0] sm:$0xff]
        %v434 = vld [vmem:[%s411 + $0xa8] sm:$0xff]
        %v435 = vld [vmem:[%s411 + $0xb0] sm:$0xff]
        %v436 = vld [vmem:[%s411 + $0xb8] sm:$0xff]
        %v437 = vld [vmem:[%s411 + $0xc0] sm:$0xff]
        %v438 = vld [vmem:[%s411 + $0xc8] sm:$0xff]
        %v439 = vld [vmem:[%s411 + $0xd0] sm:$0xff]
        %v440 = vld [vmem:[%s411 + $0xd8] sm:$0xff]
        %v441 = vld [vmem:[%s411 + $0xe0] sm:$0xff]
        %v442 = vld [vmem:[%s411 + $0xe8] sm:$0xff]
        %v443 = vld [vmem:[%s411 + $0xf0] sm:$0xff]
        %v444 = vld [vmem:[%s411 + $0xf8] sm:$0xff]
        %v445 = vpack.c.bf16 %v414, %v413
        %v446 = vpack.c.bf16 %v416, %v415
        %v447 = vpack.c.bf16 %v418, %v417
        %v448 = vpack.c.bf16 %v420, %v419
        %v449 = vpack.c.bf16 %v422, %v421
        %v450 = vpack.c.bf16 %v424, %v423
        %v451 = vpack.c.bf16 %v426, %v425
        %v452 = vpack.c.bf16 %v428, %v427
        %v453 = vpack.c.bf16 %v430, %v429
        %v454 = vpack.c.bf16 %v432, %v431
        %v455 = vpack.c.bf16 %v434, %v433
        %v456 = vpack.c.bf16 %v436, %v435
        %v457 = vpack.c.bf16 %v438, %v437
        %v458 = vpack.c.bf16 %v440, %v439
        %v459 = vpack.c.bf16 %v442, %v441
        %v460 = vpack.c.bf16 %v444, %v443
        %v461 = vld [vmem:[%s1] sm:$0xf]
        %v462 = vld [vmem:[%s1 + $0x4] sm:$0xf]
        %v463 = vld [vmem:[%s1 + $0x8] sm:$0xf]
        %v464 = vld [vmem:[%s1 + $0xc] sm:$0xf]
        %v465 = vld [vmem:[%s1 + $0x10] sm:$0xf]
        %v466 = vld [vmem:[%s1 + $0x14] sm:$0xf]
        %v467 = vld [vmem:[%s1 + $0x18] sm:$0xf]
        %v468 = vld [vmem:[%s1 + $0x1c] sm:$0xf]
        %v469 = vld [vmem:[%s1 + $0x20] sm:$0xf]
        %v470 = vld [vmem:[%s1 + $0x24] sm:$0xf]
        %v471 = vld [vmem:[%s1 + $0x28] sm:$0xf]
        %v472 = vld [vmem:[%s1 + $0x2c] sm:$0xf]
        %v473 = vld [vmem:[%s1 + $0x30] sm:$0xf]
        %v474 = vld [vmem:[%s1 + $0x34] sm:$0xf]
        %v475 = vld [vmem:[%s1 + $0x38] sm:$0xf]
        %v476 = vld [vmem:[%s1 + $0x3c] sm:$0xf]
        %v493 = vunpack.c.l.b16 %v461
        %v494 = vunpack.c.l.b16 %v462
        %v495 = vunpack.c.l.b16 %v463
        %v496 = vunpack.c.l.b16 %v464
        %v497 = vunpack.c.l.b16 %v465
        %v498 = vunpack.c.l.b16 %v466
        %v499 = vunpack.c.l.b16 %v467
        %v500 = vunpack.c.l.b16 %v468
        %v501 = vunpack.c.l.b16 %v469
        %v502 = vunpack.c.l.b16 %v470
        %v503 = vunpack.c.l.b16 %v471
        %v504 = vunpack.c.l.b16 %v472
        %v505 = vunpack.c.l.b16 %v473
        %v506 = vunpack.c.l.b16 %v474
        %v507 = vunpack.c.l.b16 %v475
        %v508 = vunpack.c.l.b16 %v476
        %v509 = vpack.c.b16 %v494, %v493
        %v510 = vpack.c.b16 %v496, %v495
        %v511 = vpack.c.b16 %v498, %v497
        %v512 = vpack.c.b16 %v500, %v499
        %v513 = vpack.c.b16 %v502, %v501
        %v514 = vpack.c.b16 %v504, %v503
        %v515 = vpack.c.b16 %v506, %v505
        %v516 = vpack.c.b16 %v508, %v507
        %525 = vmatprep.subr.bf16.mxu0 0
        %526 = vmatpush1.bf16.msra.mxu0 %v516
        %527 = vmatprep.subr.bf16.mxu0 0
        %528 = vmatpush1.bf16.msra.mxu0 %v515
        %529 = vmatprep.subr.bf16.mxu0 0
        %530 = vmatpush1.bf16.msra.mxu0 %v514
        %531 = vmatprep.subr.bf16.mxu0 0
        %532 = vmatpush1.bf16.msra.mxu0 %v513
        %533 = vmatprep.subr.bf16.mxu0 0
        %534 = vmatpush1.bf16.msra.mxu0 %v512
        %535 = vmatprep.subr.bf16.mxu0 0
        %536 = vmatpush1.bf16.msra.mxu0 %v511
        %537 = vmatprep.subr.bf16.mxu0 0
        %538 = vmatpush1.bf16.msra.mxu0 %v510
        %539 = vmatprep.subr.bf16.mxu0 0
        %540 = vmatpush1.bf16.msra.mxu0 %v509
        %541 = vmatprep.subr.bf16.mxu0 0
        %542 = vmatpush2.bf16.msra.mxu0 0
        %543 = vmatprep.subr.bf16.mxu0 0
        %544 = vmatpush2.bf16.msra.mxu0 0
        %545 = vmatprep.subr.bf16.mxu0 0
        %546 = vmatpush2.bf16.msra.mxu0 0
        %547 = vmatprep.subr.bf16.mxu0 0
        %548 = vmatpush2.bf16.msra.mxu0 0
        %549 = vmatprep.subr.bf16.mxu0 0
        %550 = vmatpush2.bf16.msra.mxu0 0
        %551 = vmatprep.subr.bf16.mxu0 0
        %552 = vmatpush2.bf16.msra.mxu0 0
        %553 = vmatprep.subr.bf16.mxu0 0
        %554 = vmatpush2.bf16.msra.mxu0 0
        %555 = vmatprep.subr.bf16.mxu0 0
        %556 = vmatpush2.bf16.msra.mxu0 0
        %557 = vmatprep.mubr.bf16.mxu0 0
        %558 = vmatmul.mubr.bf16.gmra.mxu0 %v445
        %v559 = vpop.f32.mrf.mxu0
        %v560 = vadd.f32 0.0, %v559
        %v561 = vpop.f32.mrf.mxu0
        %v562 = vpop.f32.mrf.mxu0
        %v563 = vadd.f32 0.0, %v562
        %v564 = vpop.f32.mrf.mxu0
        %565 = vmatprep.mubr.bf16.mxu0 0
        %566 = vmatmul.mubr.bf16.gmra.mxu0 %v446
        %v567 = vpop.f32.mrf.mxu0
        %v568 = vadd.f32 0.0, %v567
        %v569 = vpop.f32.mrf.mxu0
        %v570 = vpop.f32.mrf.mxu0
        %v571 = vadd.f32 0.0, %v570
        %v572 = vpop.f32.mrf.mxu0
        %573 = vmatprep.mubr.bf16.mxu0 0
        %574 = vmatmul.mubr.bf16.gmra.mxu0 %v447
        %v575 = vpop.f32.mrf.mxu0
        %v576 = vadd.f32 0.0, %v575
        %v577 = vpop.f32.mrf.mxu0
        %v578 = vpop.f32.mrf.mxu0
        %v579 = vadd.f32 0.0, %v578
        %v580 = vpop.f32.mrf.mxu0
        %581 = vmatprep.mubr.bf16.mxu0 0
        %582 = vmatmul.mubr.bf16.gmra.mxu0 %v448
        %v583 = vpop.f32.mrf.mxu0
        %v584 = vadd.f32 0.0, %v583
        %v585 = vpop.f32.mrf.mxu0
        %v586 = vpop.f32.mrf.mxu0
        %v587 = vadd.f32 0.0, %v586
        %v588 = vpop.f32.mrf.mxu0
        %589 = vmatprep.mubr.bf16.mxu0 0
        %590 = vmatmul.mubr.bf16.gmra.mxu0 %v449
        %v591 = vpop.f32.mrf.mxu0
        %v592 = vadd.f32 0.0, %v591
        %v593 = vpop.f32.mrf.mxu0
        %v594 = vpop.f32.mrf.mxu0
        %v595 = vadd.f32 0.0, %v594
        %v596 = vpop.f32.mrf.mxu0
        %597 = vmatprep.mubr.bf16.mxu0 0
        %598 = vmatmul.mubr.bf16.gmra.mxu0 %v450
        %v599 = vpop.f32.mrf.mxu0
        %v600 = vadd.f32 0.0, %v599
        %v601 = vpop.f32.mrf.mxu0
        %v602 = vpop.f32.mrf.mxu0
        %v603 = vadd.f32 0.0, %v602
        %v604 = vpop.f32.mrf.mxu0
        %605 = vmatprep.mubr.bf16.mxu0 0
        %606 = vmatmul.mubr.bf16.gmra.mxu0 %v451
        %v607 = vpop.f32.mrf.mxu0
        %v608 = vadd.f32 0.0, %v607
        %v609 = vpop.f32.mrf.mxu0
        %v610 = vpop.f32.mrf.mxu0
        %v611 = vadd.f32 0.0, %v610
        %v612 = vpop.f32.mrf.mxu0
        %613 = vmatprep.mubr.bf16.mxu0 0
        %614 = vmatmul.mubr.bf16.gmra.mxu0 %v452
        %v615 = vpop.f32.mrf.mxu0
        %v616 = vadd.f32 0.0, %v615
        %v617 = vpop.f32.mrf.mxu0
        %v618 = vpop.f32.mrf.mxu0
        %v619 = vadd.f32 0.0, %v618
        %v620 = vpop.f32.mrf.mxu0
        %621 = vmatprep.mubr.bf16.mxu0 0
        %622 = vmatmul.mubr.bf16.gmra.mxu0 %v453
        %v623 = vpop.f32.mrf.mxu0
        %v624 = vadd.f32 0.0, %v623
        %v625 = vpop.f32.mrf.mxu0
        %v626 = vpop.f32.mrf.mxu0
        %v627 = vadd.f32 0.0, %v626
        %v628 = vpop.f32.mrf.mxu0
        %629 = vmatprep.mubr.bf16.mxu0 0
        %630 = vmatmul.mubr.bf16.gmra.mxu0 %v454
        %v631 = vpop.f32.mrf.mxu0
        %v632 = vadd.f32 0.0, %v631
        %v633 = vpop.f32.mrf.mxu0
        %v634 = vpop.f32.mrf.mxu0
        %v635 = vadd.f32 0.0, %v634
        %v636 = vpop.f32.mrf.mxu0
        %637 = vmatprep.mubr.bf16.mxu0 0
        %638 = vmatmul.mubr.bf16.gmra.mxu0 %v455
        %v639 = vpop.f32.mrf.mxu0
        %v640 = vadd.f32 0.0, %v639
        %v641 = vpop.f32.mrf.mxu0
        %v642 = vpop.f32.mrf.mxu0
        %v643 = vadd.f32 0.0, %v642
        %v644 = vpop.f32.mrf.mxu0
        %645 = vmatprep.mubr.bf16.mxu0 0
        %646 = vmatmul.mubr.bf16.gmra.mxu0 %v456
        %v647 = vpop.f32.mrf.mxu0
        %v648 = vadd.f32 0.0, %v647
        %v649 = vpop.f32.mrf.mxu0
        %v650 = vpop.f32.mrf.mxu0
        %v651 = vadd.f32 0.0, %v650
        %v652 = vpop.f32.mrf.mxu0
        %653 = vmatprep.mubr.bf16.mxu0 0
        %654 = vmatmul.mubr.bf16.gmra.mxu0 %v457
        %v655 = vpop.f32.mrf.mxu0
        %v656 = vadd.f32 0.0, %v655
        %v657 = vpop.f32.mrf.mxu0
        %v658 = vpop.f32.mrf.mxu0
        %v659 = vadd.f32 0.0, %v658
        %v660 = vpop.f32.mrf.mxu0
        %661 = vmatprep.mubr.bf16.mxu0 0
        %662 = vmatmul.mubr.bf16.gmra.mxu0 %v458
        %v663 = vpop.f32.mrf.mxu0
        %v664 = vadd.f32 0.0, %v663
        %v665 = vpop.f32.mrf.mxu0
        %v666 = vpop.f32.mrf.mxu0
        %v667 = vadd.f32 0.0, %v666
        %v668 = vpop.f32.mrf.mxu0
        %669 = vmatprep.mubr.bf16.mxu0 0
        %670 = vmatmul.mubr.bf16.gmra.mxu0 %v459
        %v671 = vpop.f32.mrf.mxu0
        %v672 = vadd.f32 0.0, %v671
        %v673 = vpop.f32.mrf.mxu0
        %v674 = vpop.f32.mrf.mxu0
        %v675 = vadd.f32 0.0, %v674
        %v676 = vpop.f32.mrf.mxu0
        %677 = vmatprep.mubr.bf16.mxu0 0
        %678 = vmatmul.mubr.bf16.gmra.mxu0 %v460
        %v679 = vpop.f32.mrf.mxu0
        %v680 = vadd.f32 0.0, %v679
        %v681 = vpop.f32.mrf.mxu0
        %v682 = vpop.f32.mrf.mxu0
        %v683 = vadd.f32 0.0, %v682
        %v684 = vpop.f32.mrf.mxu0
        %685 = vdwg.mxu0
        %v686 = vld [vmem:[%s2] sm:$0x1]
        %v688 = vlaneseq
        %v689 = vshrl.u32 %v688, 7
        %v690 = vsub.s32 0, %v689
        %v691 = vrot.slane %v686, %v690
        %v693 = vmul.f32 %v560, %v691
        %v694 = vmul.f32 %v563, %v691
        %v695 = vmul.f32 %v568, %v691
        %v696 = vmul.f32 %v571, %v691
        %v697 = vmul.f32 %v576, %v691
        %v698 = vmul.f32 %v579, %v691
        %v699 = vmul.f32 %v584, %v691
        %v700 = vmul.f32 %v587, %v691
        %v701 = vmul.f32 %v592, %v691
        %v702 = vmul.f32 %v595, %v691
        %v703 = vmul.f32 %v600, %v691
        %v704 = vmul.f32 %v603, %v691
        %v705 = vmul.f32 %v608, %v691
        %v706 = vmul.f32 %v611, %v691
        %v707 = vmul.f32 %v616, %v691
        %v708 = vmul.f32 %v619, %v691
        %v709 = vmul.f32 %v624, %v691
        %v710 = vmul.f32 %v627, %v691
        %v711 = vmul.f32 %v632, %v691
        %v712 = vmul.f32 %v635, %v691
        %v713 = vmul.f32 %v640, %v691
        %v714 = vmul.f32 %v643, %v691
        %v715 = vmul.f32 %v648, %v691
        %v716 = vmul.f32 %v651, %v691
        %v717 = vmul.f32 %v656, %v691
        %v718 = vmul.f32 %v659, %v691
        %v719 = vmul.f32 %v664, %v691
        %v720 = vmul.f32 %v667, %v691
        %v721 = vmul.f32 %v672, %v691
        %v722 = vmul.f32 %v675, %v691
        %v723 = vmul.f32 %v680, %v691
        %v724 = vmul.f32 %v683, %v691
        %725 = vadd.xlane.f32.xlu0 %v693
        %v726 = vpop.xlane.xlu0 %725
        %727 = vadd.xlane.f32.xlu0 %v694
        %v728 = vpop.xlane.xlu0 %727
        %729 = vadd.xlane.f32.xlu0 %v695
        %v730 = vpop.xlane.xlu0 %729
        %731 = vadd.xlane.f32.xlu0 %v696
        %v732 = vpop.xlane.xlu0 %731
        %733 = vadd.xlane.f32.xlu0 %v697
        %v734 = vpop.xlane.xlu0 %733
        %735 = vadd.xlane.f32.xlu0 %v698
        %v736 = vpop.xlane.xlu0 %735
        %737 = vadd.xlane.f32.xlu0 %v699
        %v738 = vpop.xlane.xlu0 %737
        %739 = vadd.xlane.f32.xlu0 %v700
        %v740 = vpop.xlane.xlu0 %739
        %741 = vadd.xlane.f32.xlu0 %v701
        %v742 = vpop.xlane.xlu0 %741
        %743 = vadd.xlane.f32.xlu0 %v702
        %v744 = vpop.xlane.xlu0 %743
        %745 = vadd.xlane.f32.xlu0 %v703
        %v746 = vpop.xlane.xlu0 %745
        %747 = vadd.xlane.f32.xlu0 %v704
        %v748 = vpop.xlane.xlu0 %747
        %749 = vadd.xlane.f32.xlu0 %v705
        %v750 = vpop.xlane.xlu0 %749
        %751 = vadd.xlane.f32.xlu0 %v706
        %v752 = vpop.xlane.xlu0 %751
        %753 = vadd.xlane.f32.xlu0 %v707
        %v754 = vpop.xlane.xlu0 %753
        %755 = vadd.xlane.f32.xlu0 %v708
        %v756 = vpop.xlane.xlu0 %755
        %757 = vadd.xlane.f32.xlu0 %v709
        %v758 = vpop.xlane.xlu0 %757
        %759 = vadd.xlane.f32.xlu0 %v710
        %v760 = vpop.xlane.xlu0 %759
        %761 = vadd.xlane.f32.xlu0 %v711
        %v762 = vpop.xlane.xlu0 %761
        %763 = vadd.xlane.f32.xlu0 %v712
        %v764 = vpop.xlane.xlu0 %763
        %765 = vadd.xlane.f32.xlu0 %v713
        %v766 = vpop.xlane.xlu0 %765
        %767 = vadd.xlane.f32.xlu0 %v714
        %v768 = vpop.xlane.xlu0 %767
        %769 = vadd.xlane.f32.xlu0 %v715
        %v770 = vpop.xlane.xlu0 %769
        %771 = vadd.xlane.f32.xlu0 %v716
        %v772 = vpop.xlane.xlu0 %771
        %773 = vadd.xlane.f32.xlu0 %v717
        %v774 = vpop.xlane.xlu0 %773
        %775 = vadd.xlane.f32.xlu0 %v718
        %v776 = vpop.xlane.xlu0 %775
        %777 = vadd.xlane.f32.xlu0 %v719
        %v778 = vpop.xlane.xlu0 %777
        %779 = vadd.xlane.f32.xlu0 %v720
        %v780 = vpop.xlane.xlu0 %779
        %781 = vadd.xlane.f32.xlu0 %v721
        %v782 = vpop.xlane.xlu0 %781
        %783 = vadd.xlane.f32.xlu0 %v722
        %v784 = vpop.xlane.xlu0 %783
        %785 = vadd.xlane.f32.xlu0 %v723
        %v786 = vpop.xlane.xlu0 %785
        %787 = vadd.xlane.f32.xlu0 %v724
        %v788 = vpop.xlane.xlu0 %787
        %v789 = vmax.f32 %v726, %v734
        %v790 = vmax.f32 %v728, %v736
        %v791 = vmax.f32 %v730, %v738
        %v792 = vmax.f32 %v732, %v740
        %v793 = vmax.f32 %v789, %v742
        %v794 = vmax.f32 %v790, %v744
        %v795 = vmax.f32 %v791, %v746
        %v796 = vmax.f32 %v792, %v748
        %v797 = vmax.f32 %v793, %v750
        %v798 = vmax.f32 %v794, %v752
        %v799 = vmax.f32 %v795, %v754
        %v800 = vmax.f32 %v796, %v756
        %v801 = vmax.f32 %v797, %v758
        %v802 = vmax.f32 %v798, %v760
        %v803 = vmax.f32 %v799, %v762
        %v804 = vmax.f32 %v800, %v764
        %v805 = vmax.f32 %v801, %v766
        %v806 = vmax.f32 %v802, %v768
        %v807 = vmax.f32 %v803, %v770
        %v808 = vmax.f32 %v804, %v772
        %v809 = vmax.f32 %v805, %v774
        %v810 = vmax.f32 %v806, %v776
        %v811 = vmax.f32 %v807, %v778
        %v812 = vmax.f32 %v808, %v780
        %v813 = vmax.f32 %v809, %v782
        %v814 = vmax.f32 %v810, %v784
        %v815 = vmax.f32 %v811, %v786
        %v816 = vmax.f32 %v812, %v788
        %v817 = vmax.f32 %v813, %v814
        %v818 = vmax.f32 %v815, %v816
        %v819 = vmax.f32 %v817, %v818
        %v820 = vrot.slane %v819, 4
        %v821 = vmax.f32 %v819, %v820
        %v822 = vrot.slane %v821, 2
        %v823 = vmax.f32 %v821, %v822
        %v824 = vrot.slane %v823, 1
        %v825 = vmax.f32 %v823, %v824
        %v826 = vsub.f32 %v726, %v825
        %v827 = vsub.f32 %v728, %v825
        %v828 = vsub.f32 %v730, %v825
        %v829 = vsub.f32 %v732, %v825
        %v830 = vsub.f32 %v734, %v825
        %v831 = vsub.f32 %v736, %v825
        %v832 = vsub.f32 %v738, %v825
        %v833 = vsub.f32 %v740, %v825
        %v834 = vsub.f32 %v742, %v825
        %v835 = vsub.f32 %v744, %v825
        %v836 = vsub.f32 %v746, %v825
        %v837 = vsub.f32 %v748, %v825
        %v838 = vsub.f32 %v750, %v825
        %v839 = vsub.f32 %v752, %v825
        %v840 = vsub.f32 %v754, %v825
        %v841 = vsub.f32 %v756, %v825
        %v842 = vsub.f32 %v758, %v825
        %v843 = vsub.f32 %v760, %v825
        %v844 = vsub.f32 %v762, %v825
        %v845 = vsub.f32 %v764, %v825
        %v846 = vsub.f32 %v766, %v825
        %v847 = vsub.f32 %v768, %v825
        %v848 = vsub.f32 %v770, %v825
        %v849 = vsub.f32 %v772, %v825
        %v850 = vsub.f32 %v774, %v825
        %v851 = vsub.f32 %v776, %v825
        %v852 = vsub.f32 %v778, %v825
        %v853 = vsub.f32 %v780, %v825
        %v854 = vsub.f32 %v782, %v825
        %v855 = vsub.f32 %v784, %v825
        %v856 = vsub.f32 %v786, %v825
        %v857 = vsub.f32 %v788, %v825
        %v858 = vmul.f32 %v826, 1.442695
        %v859 = vpow.pop %v858
        %v860 = vmul.f32 %v827, 1.442695
        %v861 = vpow.pop %v860
        %v862 = vmul.f32 %v828, 1.442695
        %v863 = vpow.pop %v862
        %v864 = vmul.f32 %v829, 1.442695
        %v865 = vpow.pop %v864
        %v866 = vmul.f32 %v830, 1.442695
        %v867 = vpow.pop %v866
        %v868 = vmul.f32 %v831, 1.442695
        %v869 = vpow.pop %v868
        %v870 = vmul.f32 %v832, 1.442695
        %v871 = vpow.pop %v870
        %v872 = vmul.f32 %v833, 1.442695
        %v873 = vpow.pop %v872
        %v874 = vmul.f32 %v834, 1.442695
        %v875 = vpow.pop %v874
        %v876 = vmul.f32 %v835, 1.442695
        %v877 = vpow.pop %v876
        %v878 = vmul.f32 %v836, 1.442695
        %v879 = vpow.pop %v878
        %v880 = vmul.f32 %v837, 1.442695
        %v881 = vpow.pop %v880
        %v882 = vmul.f32 %v838, 1.442695
        %v883 = vpow.pop %v882
        %v884 = vmul.f32 %v839, 1.442695
        %v885 = vpow.pop %v884
        %v886 = vmul.f32 %v840, 1.442695
        %v887 = vpow.pop %v886
        %v888 = vmul.f32 %v841, 1.442695
        %v889 = vpow.pop %v888
        %v890 = vmul.f32 %v842, 1.442695
        %v891 = vpow.pop %v890
        %v892 = vmul.f32 %v843, 1.442695
        %v893 = vpow.pop %v892
        %v894 = vmul.f32 %v844, 1.442695
        %v895 = vpow.pop %v894
        %v896 = vmul.f32 %v845, 1.442695
        %v897 = vpow.pop %v896
        %v898 = vmul.f32 %v846, 1.442695
        %v899 = vpow.pop %v898
        %v900 = vmul.f32 %v847, 1.442695
        %v901 = vpow.pop %v900
        %v902 = vmul.f32 %v848, 1.442695
        %v903 = vpow.pop %v902
        %v904 = vmul.f32 %v849, 1.442695
        %v905 = vpow.pop %v904
        %v906 = vmul.f32 %v850, 1.442695
        %v907 = vpow.pop %v906
        %v908 = vmul.f32 %v851, 1.442695
        %v909 = vpow.pop %v908
        %v910 = vmul.f32 %v852, 1.442695
        %v911 = vpow.pop %v910
        %v912 = vmul.f32 %v853, 1.442695
        %v913 = vpow.pop %v912
        %v914 = vmul.f32 %v854, 1.442695
        %v915 = vpow.pop %v914
        %v916 = vmul.f32 %v855, 1.442695
        %v917 = vpow.pop %v916
        %v918 = vmul.f32 %v856, 1.442695
        %v919 = vpow.pop %v918
        %v920 = vmul.f32 %v857, 1.442695
        %v921 = vpow.pop %v920
        %v922 = vadd.f32 %v859, %v861
        %v923 = vadd.f32 %v922, %v863
        %v924 = vadd.f32 %v923, %v865
        %v925 = vadd.f32 %v924, %v867
        %v926 = vadd.f32 %v925, %v869
        %v927 = vadd.f32 %v926, %v871
        %v928 = vadd.f32 %v927, %v873
        %v929 = vadd.f32 %v928, %v875
        %v930 = vadd.f32 %v929, %v877
        %v931 = vadd.f32 %v930, %v879
        %v932 = vadd.f32 %v931, %v881
        %v933 = vadd.f32 %v932, %v883
        %v934 = vadd.f32 %v933, %v885
        %v935 = vadd.f32 %v934, %v887
        %v936 = vadd.f32 %v935, %v889
        %v937 = vadd.f32 %v936, %v891
        %v938 = vadd.f32 %v937, %v893
        %v939 = vadd.f32 %v938, %v895
        %v940 = vadd.f32 %v939, %v897
        %v941 = vadd.f32 %v940, %v899
        %v942 = vadd.f32 %v941, %v901
        %v943 = vadd.f32 %v942, %v903
        %v944 = vadd.f32 %v943, %v905
        %v945 = vadd.f32 %v944, %v907
        %v946 = vadd.f32 %v945, %v909
        %v947 = vadd.f32 %v946, %v911
        %v948 = vadd.f32 %v947, %v913
        %v949 = vadd.f32 %v948, %v915
        %v950 = vadd.f32 %v949, %v917
        %v951 = vadd.f32 %v950, %v919
        %v952 = vadd.f32 %v951, %v921
        %v953 = vrot.slane %v952, 4
        %v954 = vadd.f32 %v952, %v953
        %v955 = vrot.slane %v954, 2
        %v956 = vadd.f32 %v954, %v955
        %v957 = vrot.slane %v956, 1
        %v958 = vadd.f32 %v956, %v957
        %v959 = vrcp.pop %v958
        %v960 = vmul.f32 %v859, %v959
        %v961 = vmul.f32 %v861, %v959
        %v962 = vmul.f32 %v863, %v959
        %v963 = vmul.f32 %v865, %v959
        %v964 = vmul.f32 %v867, %v959
        %v965 = vmul.f32 %v869, %v959
        %v966 = vmul.f32 %v871, %v959
        %v967 = vmul.f32 %v873, %v959
        %v968 = vmul.f32 %v875, %v959
        %v969 = vmul.f32 %v877, %v959
        %v970 = vmul.f32 %v879, %v959
        %v971 = vmul.f32 %v881, %v959
        %v972 = vmul.f32 %v883, %v959
        %v973 = vmul.f32 %v885, %v959
        %v974 = vmul.f32 %v887, %v959
        %v975 = vmul.f32 %v889, %v959
        %v976 = vmul.f32 %v891, %v959
        %v977 = vmul.f32 %v893, %v959
        %v978 = vmul.f32 %v895, %v959
        %v979 = vmul.f32 %v897, %v959
        %v980 = vmul.f32 %v899, %v959
        %v981 = vmul.f32 %v901, %v959
        %v982 = vmul.f32 %v903, %v959
        %v983 = vmul.f32 %v905, %v959
        %v984 = vmul.f32 %v907, %v959
        %v985 = vmul.f32 %v909, %v959
        %v986 = vmul.f32 %v911, %v959
        %v987 = vmul.f32 %v913, %v959
        %v988 = vmul.f32 %v915, %v959
        %v989 = vmul.f32 %v917, %v959
        %v990 = vmul.f32 %v919, %v959
        %v991 = vmul.f32 %v921, %v959
        %v992 = vmul.f32 %v560, %v960
        %v993 = vmul.f32 %v563, %v961
        %v994 = vmul.f32 %v568, %v962
        %v995 = vmul.f32 %v571, %v963
        %v996 = vmul.f32 %v576, %v964
        %v997 = vmul.f32 %v579, %v965
        %v998 = vmul.f32 %v584, %v966
        %v999 = vmul.f32 %v587, %v967
        %v1000 = vmul.f32 %v592, %v968
        %v1001 = vmul.f32 %v595, %v969
        %v1002 = vmul.f32 %v600, %v970
        %v1003 = vmul.f32 %v603, %v971
        %v1004 = vmul.f32 %v608, %v972
        %v1005 = vmul.f32 %v611, %v973
        %v1006 = vmul.f32 %v616, %v974
        %v1007 = vmul.f32 %v619, %v975
        %v1008 = vmul.f32 %v624, %v976
        %v1009 = vmul.f32 %v627, %v977
        %v1010 = vmul.f32 %v632, %v978
        %v1011 = vmul.f32 %v635, %v979
        %v1012 = vmul.f32 %v640, %v980
        %v1013 = vmul.f32 %v643, %v981
        %v1014 = vmul.f32 %v648, %v982
        %v1015 = vmul.f32 %v651, %v983
        %v1016 = vmul.f32 %v656, %v984
        %v1017 = vmul.f32 %v659, %v985
        %v1018 = vmul.f32 %v664, %v986
        %v1019 = vmul.f32 %v667, %v987
        %v1020 = vmul.f32 %v672, %v988
        %v1021 = vmul.f32 %v675, %v989
        %v1022 = vmul.f32 %v680, %v990
        %v1023 = vmul.f32 %v683, %v991
        %v1024 = vadd.f32 %v992, %v993
        %v1025 = vadd.f32 %v1024, %v994
        %v1026 = vadd.f32 %v1025, %v995
        %v1027 = vadd.f32 %v1026, %v996
        %v1028 = vadd.f32 %v1027, %v997
        %v1029 = vadd.f32 %v1028, %v998
        %v1030 = vadd.f32 %v1029, %v999
        %v1031 = vadd.f32 %v1030, %v1000
        %v1032 = vadd.f32 %v1031, %v1001
        %v1033 = vadd.f32 %v1032, %v1002
        %v1034 = vadd.f32 %v1033, %v1003
        %v1035 = vadd.f32 %v1034, %v1004
        %v1036 = vadd.f32 %v1035, %v1005
        %v1037 = vadd.f32 %v1036, %v1006
        %v1038 = vadd.f32 %v1037, %v1007
        %v1039 = vadd.f32 %v1038, %v1008
        %v1040 = vadd.f32 %v1039, %v1009
        %v1041 = vadd.f32 %v1040, %v1010
        %v1042 = vadd.f32 %v1041, %v1011
        %v1043 = vadd.f32 %v1042, %v1012
        %v1044 = vadd.f32 %v1043, %v1013
        %v1045 = vadd.f32 %v1044, %v1014
        %v1046 = vadd.f32 %v1045, %v1015
        %v1047 = vadd.f32 %v1046, %v1016
        %v1048 = vadd.f32 %v1047, %v1017
        %v1049 = vadd.f32 %v1048, %v1018
        %v1050 = vadd.f32 %v1049, %v1019
        %v1051 = vadd.f32 %v1050, %v1020
        %v1052 = vadd.f32 %v1051, %v1021
        %v1053 = vadd.f32 %v1052, %v1022
        %v1054 = vadd.f32 %v1053, %v1023
        %v1055 = vrot.slane %v1054, 4
        %v1056 = vadd.f32 %v1054, %v1055
        %v1057 = vrot.slane %v1056, 2
        %v1058 = vadd.f32 %v1056, %v1057
        %v1059 = vrot.slane %v1058, 1
        %v1060 = vadd.f32 %v1058, %v1059
        %v1061 = vpack.c.bf16 %v1060, %v1060
        %v1062 = vld [vmem:[%s3] sm:$0xf]
        %v1063 = vld [vmem:[%s3 + $0x4] sm:$0xf]
        %v1064 = vld [vmem:[%s3 + $0x8] sm:$0xf]
        %v1065 = vld [vmem:[%s3 + $0xc] sm:$0xf]
        %v1066 = vld [vmem:[%s3 + $0x10] sm:$0xf]
        %v1067 = vld [vmem:[%s3 + $0x14] sm:$0xf]
        %v1068 = vld [vmem:[%s3 + $0x18] sm:$0xf]
        %v1069 = vld [vmem:[%s3 + $0x1c] sm:$0xf]
        %v1070 = vld [vmem:[%s3 + $0x20] sm:$0xf]
        %v1071 = vld [vmem:[%s3 + $0x24] sm:$0xf]
        %v1072 = vld [vmem:[%s3 + $0x28] sm:$0xf]
        %v1073 = vld [vmem:[%s3 + $0x2c] sm:$0xf]
        %v1074 = vld [vmem:[%s3 + $0x30] sm:$0xf]
        %v1075 = vld [vmem:[%s3 + $0x34] sm:$0xf]
        %v1076 = vld [vmem:[%s3 + $0x38] sm:$0xf]
        %v1077 = vld [vmem:[%s3 + $0x3c] sm:$0xf]
        %v1078 = vld [vmem:[%s4] sm:$0x1]
        %v1095 = vunpack.c.l.b16 %v1062
        %v1096 = vunpack.c.l.b16 %v1063
        %v1097 = vunpack.c.l.b16 %v1064
        %v1098 = vunpack.c.l.b16 %v1065
        %v1099 = vunpack.c.l.b16 %v1066
        %v1100 = vunpack.c.l.b16 %v1067
        %v1101 = vunpack.c.l.b16 %v1068
        %v1102 = vunpack.c.l.b16 %v1069
        %v1103 = vunpack.c.l.b16 %v1070
        %v1104 = vunpack.c.l.b16 %v1071
        %v1105 = vunpack.c.l.b16 %v1072
        %v1106 = vunpack.c.l.b16 %v1073
        %v1107 = vunpack.c.l.b16 %v1074
        %v1108 = vunpack.c.l.b16 %v1075
        %v1109 = vunpack.c.l.b16 %v1076
        %v1110 = vunpack.c.l.b16 %v1077
        %v1111 = vpack.c.b16 %v1096, %v1095
        %v1112 = vpack.c.b16 %v1098, %v1097
        %v1113 = vpack.c.b16 %v1100, %v1099
        %v1114 = vpack.c.b16 %v1102, %v1101
        %v1115 = vpack.c.b16 %v1104, %v1103
        %v1116 = vpack.c.b16 %v1106, %v1105
        %v1117 = vpack.c.b16 %v1108, %v1107
        %v1118 = vpack.c.b16 %v1110, %v1109
        %1127 = vmatprep.subr.bf16.mxu0 0
        %1128 = vmatpush1.bf16.msra.mxu0 %v1118
        %1129 = vmatprep.subr.bf16.mxu0 0
        %1130 = vmatpush1.bf16.msra.mxu0 %v1117
        %1131 = vmatprep.subr.bf16.mxu0 0
        %1132 = vmatpush1.bf16.msra.mxu0 %v1116
        %1133 = vmatprep.subr.bf16.mxu0 0
        %1134 = vmatpush1.bf16.msra.mxu0 %v1115
        %1135 = vmatprep.subr.bf16.mxu0 0
        %1136 = vmatpush1.bf16.msra.mxu0 %v1114
        %1137 = vmatprep.subr.bf16.mxu0 0
        %1138 = vmatpush1.bf16.msra.mxu0 %v1113
        %1139 = vmatprep.subr.bf16.mxu0 0
        %1140 = vmatpush1.bf16.msra.mxu0 %v1112
        %1141 = vmatprep.subr.bf16.mxu0 0
        %1142 = vmatpush1.bf16.msra.mxu0 %v1111
        %1143 = vmatprep.subr.bf16.mxu0 0
        %1144 = vmatpush2.bf16.msra.mxu0 0
        %1145 = vmatprep.subr.bf16.mxu0 0
        %1146 = vmatpush2.bf16.msra.mxu0 0
        %1147 = vmatprep.subr.bf16.mxu0 0
        %1148 = vmatpush2.bf16.msra.mxu0 0
        %1149 = vmatprep.subr.bf16.mxu0 0
        %1150 = vmatpush2.bf16.msra.mxu0 0
        %1151 = vmatprep.subr.bf16.mxu0 0
        %1152 = vmatpush2.bf16.msra.mxu0 0
        %1153 = vmatprep.subr.bf16.mxu0 0
        %1154 = vmatpush2.bf16.msra.mxu0 0
        %1155 = vmatprep.subr.bf16.mxu0 0
        %1156 = vmatpush2.bf16.msra.mxu0 0
        %1157 = vmatprep.subr.bf16.mxu0 0
        %1158 = vmatpush2.bf16.msra.mxu0 0
        %1159 = vmatprep.mubr.bf16.mxu0 0
        %1160 = vmatmul.mubr.bf16.gmra.mxu0 %v1061
        %v1161 = vpop.f32.mrf.mxu0
        %v1162 = vadd.f32 %v1078, %v1161
        %v1163 = vpop.f32.mrf.mxu0
        %v1164 = vpop.f32.mrf.mxu0
        %v1165 = vpop.f32.mrf.mxu0
        %1166 = vdwg.mxu0
        %vm1167 = vcmask 1040384
        %v1168 = vsel %vm1167, %v1162, 0.0
        %1169 = vadd.xlane.f32.xlu0 %v1168
        %v1170 = vpop.xlane.xlu0 %1169
        %v1171 = vmul.f32 %v1162, %v1162
        %v1172 = vsel %vm1167, %v1171, 0.0
        %1173 = vadd.xlane.f32.xlu0 %v1172
        %v1174 = vpop.xlane.xlu0 %1173
        %v1175 = vmul.f32 %v1170, 0.03125
        %v1176 = vmul.f32 %v1174, 0.03125
        %v1177 = vmul.f32 %v1175, %v1175
        %v1178 = vsub.f32 %v1176, %v1177
        %v1179 = vmax.f32 %v1178, 0.0
        %v1180 = vsub.f32 %v1162, %v1175
        %v1181 = vadd.f32 %v1179, 1e-05
        %v1182 = vrsqrt.pop %v1181
        %v1183 = vmul.f32 %v1180, %v1182
        %v1184 = vld [vmem:[%s5] sm:$0x1]
        %v1185 = vmul.f32 %v1183, %v1184
        %v1186 = vld [vmem:[%s6] sm:$0x1]
        %v1187 = vadd.f32 %v1185, %v1186
        %v1188 = vmax.f32 %v1187, 0.0
        %v1189 = vpack.c.bf16 %v1188, %v1188
        %v1190 = vld [vmem:[%s7] sm:$0xf]
        %v1191 = vld [vmem:[%s7 + $0x4] sm:$0xf]
        %v1192 = vld [vmem:[%s7 + $0x8] sm:$0xf]
        %v1193 = vld [vmem:[%s7 + $0xc] sm:$0xf]
        %v1194 = vld [vmem:[%s7 + $0x10] sm:$0xf]
        %v1195 = vld [vmem:[%s7 + $0x14] sm:$0xf]
        %v1196 = vld [vmem:[%s7 + $0x18] sm:$0xf]
        %v1197 = vld [vmem:[%s7 + $0x1c] sm:$0xf]
        %v1198 = vld [vmem:[%s7 + $0x20] sm:$0xf]
        %v1199 = vld [vmem:[%s7 + $0x24] sm:$0xf]
        %v1200 = vld [vmem:[%s7 + $0x28] sm:$0xf]
        %v1201 = vld [vmem:[%s7 + $0x2c] sm:$0xf]
        %v1202 = vld [vmem:[%s7 + $0x30] sm:$0xf]
        %v1203 = vld [vmem:[%s7 + $0x34] sm:$0xf]
        %v1204 = vld [vmem:[%s7 + $0x38] sm:$0xf]
        %v1205 = vld [vmem:[%s7 + $0x3c] sm:$0xf]
        %v1206 = vld [vmem:[%s8] sm:$0x1]
        %v1223 = vunpack.c.l.b16 %v1190
        %v1224 = vunpack.c.l.b16 %v1191
        %v1225 = vunpack.c.l.b16 %v1192
        %v1226 = vunpack.c.l.b16 %v1193
        %v1227 = vunpack.c.l.b16 %v1194
        %v1228 = vunpack.c.l.b16 %v1195
        %v1229 = vunpack.c.l.b16 %v1196
        %v1230 = vunpack.c.l.b16 %v1197
        %v1231 = vunpack.c.l.b16 %v1198
        %v1232 = vunpack.c.l.b16 %v1199
        %v1233 = vunpack.c.l.b16 %v1200
        %v1234 = vunpack.c.l.b16 %v1201
        %v1235 = vunpack.c.l.b16 %v1202
        %v1236 = vunpack.c.l.b16 %v1203
        %v1237 = vunpack.c.l.b16 %v1204
        %v1238 = vunpack.c.l.b16 %v1205
        %v1239 = vpack.c.b16 %v1224, %v1223
        %v1240 = vpack.c.b16 %v1226, %v1225
        %v1241 = vpack.c.b16 %v1228, %v1227
        %v1242 = vpack.c.b16 %v1230, %v1229
        %v1243 = vpack.c.b16 %v1232, %v1231
        %v1244 = vpack.c.b16 %v1234, %v1233
        %v1245 = vpack.c.b16 %v1236, %v1235
        %v1246 = vpack.c.b16 %v1238, %v1237
        %1255 = vmatprep.subr.bf16.mxu0 0
        %1256 = vmatpush1.bf16.msra.mxu0 %v1246
        %1257 = vmatprep.subr.bf16.mxu0 0
        %1258 = vmatpush1.bf16.msra.mxu0 %v1245
        %1259 = vmatprep.subr.bf16.mxu0 0
        %1260 = vmatpush1.bf16.msra.mxu0 %v1244
        %1261 = vmatprep.subr.bf16.mxu0 0
        %1262 = vmatpush1.bf16.msra.mxu0 %v1243
        %1263 = vmatprep.subr.bf16.mxu0 0
        %1264 = vmatpush1.bf16.msra.mxu0 %v1242
        %1265 = vmatprep.subr.bf16.mxu0 0
        %1266 = vmatpush1.bf16.msra.mxu0 %v1241
        %1267 = vmatprep.subr.bf16.mxu0 0
        %1268 = vmatpush1.bf16.msra.mxu0 %v1240
        %1269 = vmatprep.subr.bf16.mxu0 0
        %1270 = vmatpush1.bf16.msra.mxu0 %v1239
        %1271 = vmatprep.subr.bf16.mxu0 0
        %1272 = vmatpush2.bf16.msra.mxu0 0
        %1273 = vmatprep.subr.bf16.mxu0 0
        %1274 = vmatpush2.bf16.msra.mxu0 0
        %1275 = vmatprep.subr.bf16.mxu0 0
        %1276 = vmatpush2.bf16.msra.mxu0 0
        %1277 = vmatprep.subr.bf16.mxu0 0
        %1278 = vmatpush2.bf16.msra.mxu0 0
        %1279 = vmatprep.subr.bf16.mxu0 0
        %1280 = vmatpush2.bf16.msra.mxu0 0
        %1281 = vmatprep.subr.bf16.mxu0 0
        %1282 = vmatpush2.bf16.msra.mxu0 0
        %1283 = vmatprep.subr.bf16.mxu0 0
        %1284 = vmatpush2.bf16.msra.mxu0 0
        %1285 = vmatprep.subr.bf16.mxu0 0
        %1286 = vmatpush2.bf16.msra.mxu0 0
        %1287 = vmatprep.mubr.bf16.mxu0 0
        %1288 = vmatmul.mubr.bf16.gmra.mxu0 %v1189
        %v1289 = vpop.f32.mrf.mxu0
        %v1290 = vadd.f32 %v1206, %v1289
        %v1291 = vpop.f32.mrf.mxu0
        %v1292 = vpop.f32.mrf.mxu0
        %v1293 = vpop.f32.mrf.mxu0
        %1294 = vdwg.mxu0
        %v1295 = vlaneseq
        %v1296 = vshrl.u32 %v1295, 7
        %v1297 = vsub.s32 0, %v1296
        %v1298 = vrot.slane %v1290, %v1297
        %v1299 = vadd.f32 %v560, %v1298
        %v1300 = vadd.f32 %v563, %v1298
        %v1301 = vadd.f32 %v568, %v1298
        %v1302 = vadd.f32 %v571, %v1298
        %v1303 = vadd.f32 %v576, %v1298
        %v1304 = vadd.f32 %v579, %v1298
        %v1305 = vadd.f32 %v584, %v1298
        %v1306 = vadd.f32 %v587, %v1298
        %v1307 = vadd.f32 %v592, %v1298
        %v1308 = vadd.f32 %v595, %v1298
        %v1309 = vadd.f32 %v600, %v1298
        %v1310 = vadd.f32 %v603, %v1298
        %v1311 = vadd.f32 %v608, %v1298
        %v1312 = vadd.f32 %v611, %v1298
        %v1313 = vadd.f32 %v616, %v1298
        %v1314 = vadd.f32 %v619, %v1298
        %v1315 = vadd.f32 %v624, %v1298
        %v1316 = vadd.f32 %v627, %v1298
        %v1317 = vadd.f32 %v632, %v1298
        %v1318 = vadd.f32 %v635, %v1298
        %v1319 = vadd.f32 %v640, %v1298
        %v1320 = vadd.f32 %v643, %v1298
        %v1321 = vadd.f32 %v648, %v1298
        %v1322 = vadd.f32 %v651, %v1298
        %v1323 = vadd.f32 %v656, %v1298
        %v1324 = vadd.f32 %v659, %v1298
        %v1325 = vadd.f32 %v664, %v1298
        %v1326 = vadd.f32 %v667, %v1298
        %v1327 = vadd.f32 %v672, %v1298
        %v1328 = vadd.f32 %v675, %v1298
        %v1329 = vadd.f32 %v680, %v1298
        %v1330 = vadd.f32 %v683, %v1298
        %v1331 = vadd.f32 %v1299, %v1300
        %v1332 = vadd.f32 %v1331, %v1301
        %v1333 = vadd.f32 %v1332, %v1302
        %v1334 = vadd.f32 %v1333, %v1303
        %v1335 = vadd.f32 %v1334, %v1304
        %v1336 = vadd.f32 %v1335, %v1305
        %v1337 = vadd.f32 %v1336, %v1306
        %v1338 = vadd.f32 %v1337, %v1307
        %v1339 = vadd.f32 %v1338, %v1308
        %v1340 = vadd.f32 %v1339, %v1309
        %v1341 = vadd.f32 %v1340, %v1310
        %v1342 = vadd.f32 %v1341, %v1311
        %v1343 = vadd.f32 %v1342, %v1312
        %v1344 = vadd.f32 %v1343, %v1313
        %v1345 = vadd.f32 %v1344, %v1314
        %v1346 = vadd.f32 %v1345, %v1315
        %v1347 = vadd.f32 %v1346, %v1316
        %v1348 = vadd.f32 %v1347, %v1317
        %v1349 = vadd.f32 %v1348, %v1318
        %v1350 = vadd.f32 %v1349, %v1319
        %v1351 = vadd.f32 %v1350, %v1320
        %v1352 = vadd.f32 %v1351, %v1321
        %v1353 = vadd.f32 %v1352, %v1322
        %v1354 = vadd.f32 %v1353, %v1323
        %v1355 = vadd.f32 %v1354, %v1324
        %v1356 = vadd.f32 %v1355, %v1325
        %v1357 = vadd.f32 %v1356, %v1326
        %v1358 = vadd.f32 %v1357, %v1327
        %v1359 = vadd.f32 %v1358, %v1328
        %v1360 = vadd.f32 %v1359, %v1329
        %v1361 = vadd.f32 %v1360, %v1330
        %v1362 = vrot.slane %v1361, 4
        %v1363 = vadd.f32 %v1361, %v1362
        %v1364 = vrot.slane %v1363, 2
        %v1365 = vadd.f32 %v1363, %v1364
        %v1366 = vrot.slane %v1365, 1
        %v1367 = vadd.f32 %v1365, %v1366
        %v1368 = vmul.f32 %v1299, %v1299
        %v1369 = vmul.f32 %v1300, %v1300
        %v1370 = vmul.f32 %v1301, %v1301
        %v1371 = vmul.f32 %v1302, %v1302
        %v1372 = vmul.f32 %v1303, %v1303
        %v1373 = vmul.f32 %v1304, %v1304
        %v1374 = vmul.f32 %v1305, %v1305
        %v1375 = vmul.f32 %v1306, %v1306
        %v1376 = vmul.f32 %v1307, %v1307
        %v1377 = vmul.f32 %v1308, %v1308
        %v1378 = vmul.f32 %v1309, %v1309
        %v1379 = vmul.f32 %v1310, %v1310
        %v1380 = vmul.f32 %v1311, %v1311
        %v1381 = vmul.f32 %v1312, %v1312
        %v1382 = vmul.f32 %v1313, %v1313
        %v1383 = vmul.f32 %v1314, %v1314
        %v1384 = vmul.f32 %v1315, %v1315
        %v1385 = vmul.f32 %v1316, %v1316
        %v1386 = vmul.f32 %v1317, %v1317
        %v1387 = vmul.f32 %v1318, %v1318
        %v1388 = vmul.f32 %v1319, %v1319
        %v1389 = vmul.f32 %v1320, %v1320
        %v1390 = vmul.f32 %v1321, %v1321
        %v1391 = vmul.f32 %v1322, %v1322
        %v1392 = vmul.f32 %v1323, %v1323
        %v1393 = vmul.f32 %v1324, %v1324
        %v1394 = vmul.f32 %v1325, %v1325
        %v1395 = vmul.f32 %v1326, %v1326
        %v1396 = vmul.f32 %v1327, %v1327
        %v1397 = vmul.f32 %v1328, %v1328
        %v1398 = vmul.f32 %v1329, %v1329
        %v1399 = vmul.f32 %v1330, %v1330
        %v1400 = vadd.f32 %v1368, %v1369
        %v1401 = vadd.f32 %v1400, %v1370
        %v1402 = vadd.f32 %v1401, %v1371
        %v1403 = vadd.f32 %v1402, %v1372
        %v1404 = vadd.f32 %v1403, %v1373
        %v1405 = vadd.f32 %v1404, %v1374
        %v1406 = vadd.f32 %v1405, %v1375
        %v1407 = vadd.f32 %v1406, %v1376
        %v1408 = vadd.f32 %v1407, %v1377
        %v1409 = vadd.f32 %v1408, %v1378
        %v1410 = vadd.f32 %v1409, %v1379
        %v1411 = vadd.f32 %v1410, %v1380
        %v1412 = vadd.f32 %v1411, %v1381
        %v1413 = vadd.f32 %v1412, %v1382
        %v1414 = vadd.f32 %v1413, %v1383
        %v1415 = vadd.f32 %v1414, %v1384
        %v1416 = vadd.f32 %v1415, %v1385
        %v1417 = vadd.f32 %v1416, %v1386
        %v1418 = vadd.f32 %v1417, %v1387
        %v1419 = vadd.f32 %v1418, %v1388
        %v1420 = vadd.f32 %v1419, %v1389
        %v1421 = vadd.f32 %v1420, %v1390
        %v1422 = vadd.f32 %v1421, %v1391
        %v1423 = vadd.f32 %v1422, %v1392
        %v1424 = vadd.f32 %v1423, %v1393
        %v1425 = vadd.f32 %v1424, %v1394
        %v1426 = vadd.f32 %v1425, %v1395
        %v1427 = vadd.f32 %v1426, %v1396
        %v1428 = vadd.f32 %v1427, %v1397
        %v1429 = vadd.f32 %v1428, %v1398
        %v1430 = vadd.f32 %v1429, %v1399
        %v1431 = vrot.slane %v1430, 4
        %v1432 = vadd.f32 %v1430, %v1431
        %v1433 = vrot.slane %v1432, 2
        %v1434 = vadd.f32 %v1432, %v1433
        %v1435 = vrot.slane %v1434, 1
        %v1436 = vadd.f32 %v1434, %v1435
        %v1437 = vmul.f32 %v1367, 0.00390625
        %v1438 = vmul.f32 %v1436, 0.00390625
        %v1439 = vmul.f32 %v1437, %v1437
        %v1440 = vsub.f32 %v1438, %v1439
        %v1441 = vmax.f32 %v1440, 0.0
        %v1442 = vsub.f32 %v1299, %v1437
        %v1443 = vsub.f32 %v1300, %v1437
        %v1444 = vsub.f32 %v1301, %v1437
        %v1445 = vsub.f32 %v1302, %v1437
        %v1446 = vsub.f32 %v1303, %v1437
        %v1447 = vsub.f32 %v1304, %v1437
        %v1448 = vsub.f32 %v1305, %v1437
        %v1449 = vsub.f32 %v1306, %v1437
        %v1450 = vsub.f32 %v1307, %v1437
        %v1451 = vsub.f32 %v1308, %v1437
        %v1452 = vsub.f32 %v1309, %v1437
        %v1453 = vsub.f32 %v1310, %v1437
        %v1454 = vsub.f32 %v1311, %v1437
        %v1455 = vsub.f32 %v1312, %v1437
        %v1456 = vsub.f32 %v1313, %v1437
        %v1457 = vsub.f32 %v1314, %v1437
        %v1458 = vsub.f32 %v1315, %v1437
        %v1459 = vsub.f32 %v1316, %v1437
        %v1460 = vsub.f32 %v1317, %v1437
        %v1461 = vsub.f32 %v1318, %v1437
        %v1462 = vsub.f32 %v1319, %v1437
        %v1463 = vsub.f32 %v1320, %v1437
        %v1464 = vsub.f32 %v1321, %v1437
        %v1465 = vsub.f32 %v1322, %v1437
        %v1466 = vsub.f32 %v1323, %v1437
        %v1467 = vsub.f32 %v1324, %v1437
        %v1468 = vsub.f32 %v1325, %v1437
        %v1469 = vsub.f32 %v1326, %v1437
        %v1470 = vsub.f32 %v1327, %v1437
        %v1471 = vsub.f32 %v1328, %v1437
        %v1472 = vsub.f32 %v1329, %v1437
        %v1473 = vsub.f32 %v1330, %v1437
        %v1474 = vadd.f32 %v1441, 1e-05
        %v1475 = vrsqrt.pop %v1474
        %v1476 = vmul.f32 %v1442, %v1475
        %v1477 = vmul.f32 %v1443, %v1475
        %v1478 = vmul.f32 %v1444, %v1475
        %v1479 = vmul.f32 %v1445, %v1475
        %v1480 = vmul.f32 %v1446, %v1475
        %v1481 = vmul.f32 %v1447, %v1475
        %v1482 = vmul.f32 %v1448, %v1475
        %v1483 = vmul.f32 %v1449, %v1475
        %v1484 = vmul.f32 %v1450, %v1475
        %v1485 = vmul.f32 %v1451, %v1475
        %v1486 = vmul.f32 %v1452, %v1475
        %v1487 = vmul.f32 %v1453, %v1475
        %v1488 = vmul.f32 %v1454, %v1475
        %v1489 = vmul.f32 %v1455, %v1475
        %v1490 = vmul.f32 %v1456, %v1475
        %v1491 = vmul.f32 %v1457, %v1475
        %v1492 = vmul.f32 %v1458, %v1475
        %v1493 = vmul.f32 %v1459, %v1475
        %v1494 = vmul.f32 %v1460, %v1475
        %v1495 = vmul.f32 %v1461, %v1475
        %v1496 = vmul.f32 %v1462, %v1475
        %v1497 = vmul.f32 %v1463, %v1475
        %v1498 = vmul.f32 %v1464, %v1475
        %v1499 = vmul.f32 %v1465, %v1475
        %v1500 = vmul.f32 %v1466, %v1475
        %v1501 = vmul.f32 %v1467, %v1475
        %v1502 = vmul.f32 %v1468, %v1475
        %v1503 = vmul.f32 %v1469, %v1475
        %v1504 = vmul.f32 %v1470, %v1475
        %v1505 = vmul.f32 %v1471, %v1475
        %v1506 = vmul.f32 %v1472, %v1475
        %v1507 = vmul.f32 %v1473, %v1475
        %v1508 = vmax.f32 %v1476, 0.0
        %v1509 = vmax.f32 %v1477, 0.0
        %v1510 = vmax.f32 %v1478, 0.0
        %v1511 = vmax.f32 %v1479, 0.0
        %v1512 = vmax.f32 %v1480, 0.0
        %v1513 = vmax.f32 %v1481, 0.0
        %v1514 = vmax.f32 %v1482, 0.0
        %v1515 = vmax.f32 %v1483, 0.0
        %v1516 = vmax.f32 %v1484, 0.0
        %v1517 = vmax.f32 %v1485, 0.0
        %v1518 = vmax.f32 %v1486, 0.0
        %v1519 = vmax.f32 %v1487, 0.0
        %v1520 = vmax.f32 %v1488, 0.0
        %v1521 = vmax.f32 %v1489, 0.0
        %v1522 = vmax.f32 %v1490, 0.0
        %v1523 = vmax.f32 %v1491, 0.0
        %v1524 = vmax.f32 %v1492, 0.0
        %v1525 = vmax.f32 %v1493, 0.0
        %v1526 = vmax.f32 %v1494, 0.0
        %v1527 = vmax.f32 %v1495, 0.0
        %v1528 = vmax.f32 %v1496, 0.0
        %v1529 = vmax.f32 %v1497, 0.0
        %v1530 = vmax.f32 %v1498, 0.0
        %v1531 = vmax.f32 %v1499, 0.0
        %v1532 = vmax.f32 %v1500, 0.0
        %v1533 = vmax.f32 %v1501, 0.0
        %v1534 = vmax.f32 %v1502, 0.0
        %v1535 = vmax.f32 %v1503, 0.0
        %v1536 = vmax.f32 %v1504, 0.0
        %v1537 = vmax.f32 %v1505, 0.0
        %v1538 = vmax.f32 %v1506, 0.0
        %v1539 = vmax.f32 %v1507, 0.0
        %v1540 = vpack.c.bf16 %v1509, %v1508
        %v1541 = vpack.c.bf16 %v1511, %v1510
        %v1542 = vpack.c.bf16 %v1513, %v1512
        %v1543 = vpack.c.bf16 %v1515, %v1514
        %v1544 = vpack.c.bf16 %v1517, %v1516
        %v1545 = vpack.c.bf16 %v1519, %v1518
        %v1546 = vpack.c.bf16 %v1521, %v1520
        %v1547 = vpack.c.bf16 %v1523, %v1522
        %v1548 = vpack.c.bf16 %v1525, %v1524
        %v1549 = vpack.c.bf16 %v1527, %v1526
        %v1550 = vpack.c.bf16 %v1529, %v1528
        %v1551 = vpack.c.bf16 %v1531, %v1530
        %v1552 = vpack.c.bf16 %v1533, %v1532
        %v1553 = vpack.c.bf16 %v1535, %v1534
        %v1554 = vpack.c.bf16 %v1537, %v1536
        %v1555 = vpack.c.bf16 %v1539, %v1538
        %v1556 = vld [vmem:[%s9] sm:$0xf]
        %v1557 = vld [vmem:[%s9 + $0x4] sm:$0xf]
        %v1558 = vld [vmem:[%s9 + $0x8] sm:$0xf]
        %v1559 = vld [vmem:[%s9 + $0xc] sm:$0xf]
        %v1560 = vld [vmem:[%s9 + $0x10] sm:$0xf]
        %v1561 = vld [vmem:[%s9 + $0x14] sm:$0xf]
        %v1562 = vld [vmem:[%s9 + $0x18] sm:$0xf]
        %v1563 = vld [vmem:[%s9 + $0x1c] sm:$0xf]
        %v1564 = vld [vmem:[%s9 + $0x20] sm:$0xf]
        %v1565 = vld [vmem:[%s9 + $0x24] sm:$0xf]
        %v1566 = vld [vmem:[%s9 + $0x28] sm:$0xf]
        %v1567 = vld [vmem:[%s9 + $0x2c] sm:$0xf]
        %v1568 = vld [vmem:[%s9 + $0x30] sm:$0xf]
        %v1569 = vld [vmem:[%s9 + $0x34] sm:$0xf]
        %v1570 = vld [vmem:[%s9 + $0x38] sm:$0xf]
        %v1571 = vld [vmem:[%s9 + $0x3c] sm:$0xf]
        %v1588 = vunpack.c.l.b16 %v1556
        %v1589 = vunpack.c.l.b16 %v1557
        %v1590 = vunpack.c.l.b16 %v1558
        %v1591 = vunpack.c.l.b16 %v1559
        %v1592 = vunpack.c.l.b16 %v1560
        %v1593 = vunpack.c.l.b16 %v1561
        %v1594 = vunpack.c.l.b16 %v1562
        %v1595 = vunpack.c.l.b16 %v1563
        %v1596 = vunpack.c.l.b16 %v1564
        %v1597 = vunpack.c.l.b16 %v1565
        %v1598 = vunpack.c.l.b16 %v1566
        %v1599 = vunpack.c.l.b16 %v1567
        %v1600 = vunpack.c.l.b16 %v1568
        %v1601 = vunpack.c.l.b16 %v1569
        %v1602 = vunpack.c.l.b16 %v1570
        %v1603 = vunpack.c.l.b16 %v1571
        %v1604 = vpack.c.b16 %v1589, %v1588
        %v1605 = vpack.c.b16 %v1591, %v1590
        %v1606 = vpack.c.b16 %v1593, %v1592
        %v1607 = vpack.c.b16 %v1595, %v1594
        %v1608 = vpack.c.b16 %v1597, %v1596
        %v1609 = vpack.c.b16 %v1599, %v1598
        %v1610 = vpack.c.b16 %v1601, %v1600
        %v1611 = vpack.c.b16 %v1603, %v1602
        %1620 = vmatprep.subr.bf16.mxu0 0
        %1621 = vmatpush1.bf16.msra.mxu0 %v1611
        %1622 = vmatprep.subr.bf16.mxu0 0
        %1623 = vmatpush1.bf16.msra.mxu0 %v1610
        %1624 = vmatprep.subr.bf16.mxu0 0
        %1625 = vmatpush1.bf16.msra.mxu0 %v1609
        %1626 = vmatprep.subr.bf16.mxu0 0
        %1627 = vmatpush1.bf16.msra.mxu0 %v1608
        %1628 = vmatprep.subr.bf16.mxu0 0
        %1629 = vmatpush1.bf16.msra.mxu0 %v1607
        %1630 = vmatprep.subr.bf16.mxu0 0
        %1631 = vmatpush1.bf16.msra.mxu0 %v1606
        %1632 = vmatprep.subr.bf16.mxu0 0
        %1633 = vmatpush1.bf16.msra.mxu0 %v1605
        %1634 = vmatprep.subr.bf16.mxu0 0
        %1635 = vmatpush1.bf16.msra.mxu0 %v1604
        %1636 = vmatprep.subr.bf16.mxu0 0
        %1637 = vmatpush2.bf16.msra.mxu0 0
        %1638 = vmatprep.subr.bf16.mxu0 0
        %1639 = vmatpush2.bf16.msra.mxu0 0
        %1640 = vmatprep.subr.bf16.mxu0 0
        %1641 = vmatpush2.bf16.msra.mxu0 0
        %1642 = vmatprep.subr.bf16.mxu0 0
        %1643 = vmatpush2.bf16.msra.mxu0 0
        %1644 = vmatprep.subr.bf16.mxu0 0
        %1645 = vmatpush2.bf16.msra.mxu0 0
        %1646 = vmatprep.subr.bf16.mxu0 0
        %1647 = vmatpush2.bf16.msra.mxu0 0
        %1648 = vmatprep.subr.bf16.mxu0 0
        %1649 = vmatpush2.bf16.msra.mxu0 0
        %1650 = vmatprep.subr.bf16.mxu0 0
        %1651 = vmatpush2.bf16.msra.mxu0 0
        %1652 = vmatprep.mubr.bf16.mxu0 0
        %1653 = vmatmul.mubr.bf16.gmra.mxu0 %v1540
        %v1654 = vpop.f32.mrf.mxu0
        %v1655 = vadd.f32 0.0, %v1654
        %v1656 = vpop.f32.mrf.mxu0
        %v1657 = vpop.f32.mrf.mxu0
        %v1658 = vadd.f32 0.0, %v1657
        %v1659 = vpop.f32.mrf.mxu0
        %1660 = vmatprep.mubr.bf16.mxu0 0
        %1661 = vmatmul.mubr.bf16.gmra.mxu0 %v1541
        %v1662 = vpop.f32.mrf.mxu0
        %v1663 = vadd.f32 0.0, %v1662
        %v1664 = vpop.f32.mrf.mxu0
        %v1665 = vpop.f32.mrf.mxu0
        %v1666 = vadd.f32 0.0, %v1665
        %v1667 = vpop.f32.mrf.mxu0
        %1668 = vmatprep.mubr.bf16.mxu0 0
        %1669 = vmatmul.mubr.bf16.gmra.mxu0 %v1542
        %v1670 = vpop.f32.mrf.mxu0
        %v1671 = vadd.f32 0.0, %v1670
        %v1672 = vpop.f32.mrf.mxu0
        %v1673 = vpop.f32.mrf.mxu0
        %v1674 = vadd.f32 0.0, %v1673
        %v1675 = vpop.f32.mrf.mxu0
        %1676 = vmatprep.mubr.bf16.mxu0 0
        %1677 = vmatmul.mubr.bf16.gmra.mxu0 %v1543
        %v1678 = vpop.f32.mrf.mxu0
        %v1679 = vadd.f32 0.0, %v1678
        %v1680 = vpop.f32.mrf.mxu0
        %v1681 = vpop.f32.mrf.mxu0
        %v1682 = vadd.f32 0.0, %v1681
        %v1683 = vpop.f32.mrf.mxu0
        %1684 = vmatprep.mubr.bf16.mxu0 0
        %1685 = vmatmul.mubr.bf16.gmra.mxu0 %v1544
        %v1686 = vpop.f32.mrf.mxu0
        %v1687 = vadd.f32 0.0, %v1686
        %v1688 = vpop.f32.mrf.mxu0
        %v1689 = vpop.f32.mrf.mxu0
        %v1690 = vadd.f32 0.0, %v1689
        %v1691 = vpop.f32.mrf.mxu0
        %1692 = vmatprep.mubr.bf16.mxu0 0
        %1693 = vmatmul.mubr.bf16.gmra.mxu0 %v1545
        %v1694 = vpop.f32.mrf.mxu0
        %v1695 = vadd.f32 0.0, %v1694
        %v1696 = vpop.f32.mrf.mxu0
        %v1697 = vpop.f32.mrf.mxu0
        %v1698 = vadd.f32 0.0, %v1697
        %v1699 = vpop.f32.mrf.mxu0
        %1700 = vmatprep.mubr.bf16.mxu0 0
        %1701 = vmatmul.mubr.bf16.gmra.mxu0 %v1546
        %v1702 = vpop.f32.mrf.mxu0
        %v1703 = vadd.f32 0.0, %v1702
        %v1704 = vpop.f32.mrf.mxu0
        %v1705 = vpop.f32.mrf.mxu0
        %v1706 = vadd.f32 0.0, %v1705
        %v1707 = vpop.f32.mrf.mxu0
        %1708 = vmatprep.mubr.bf16.mxu0 0
        %1709 = vmatmul.mubr.bf16.gmra.mxu0 %v1547
        %v1710 = vpop.f32.mrf.mxu0
        %v1711 = vadd.f32 0.0, %v1710
        %v1712 = vpop.f32.mrf.mxu0
        %v1713 = vpop.f32.mrf.mxu0
        %v1714 = vadd.f32 0.0, %v1713
        %v1715 = vpop.f32.mrf.mxu0
        %1716 = vmatprep.mubr.bf16.mxu0 0
        %1717 = vmatmul.mubr.bf16.gmra.mxu0 %v1548
        %v1718 = vpop.f32.mrf.mxu0
        %v1719 = vadd.f32 0.0, %v1718
        %v1720 = vpop.f32.mrf.mxu0
        %v1721 = vpop.f32.mrf.mxu0
        %v1722 = vadd.f32 0.0, %v1721
        %v1723 = vpop.f32.mrf.mxu0
        %1724 = vmatprep.mubr.bf16.mxu0 0
        %1725 = vmatmul.mubr.bf16.gmra.mxu0 %v1549
        %v1726 = vpop.f32.mrf.mxu0
        %v1727 = vadd.f32 0.0, %v1726
        %v1728 = vpop.f32.mrf.mxu0
        %v1729 = vpop.f32.mrf.mxu0
        %v1730 = vadd.f32 0.0, %v1729
        %v1731 = vpop.f32.mrf.mxu0
        %1732 = vmatprep.mubr.bf16.mxu0 0
        %1733 = vmatmul.mubr.bf16.gmra.mxu0 %v1550
        %v1734 = vpop.f32.mrf.mxu0
        %v1735 = vadd.f32 0.0, %v1734
        %v1736 = vpop.f32.mrf.mxu0
        %v1737 = vpop.f32.mrf.mxu0
        %v1738 = vadd.f32 0.0, %v1737
        %v1739 = vpop.f32.mrf.mxu0
        %1740 = vmatprep.mubr.bf16.mxu0 0
        %1741 = vmatmul.mubr.bf16.gmra.mxu0 %v1551
        %v1742 = vpop.f32.mrf.mxu0
        %v1743 = vadd.f32 0.0, %v1742
        %v1744 = vpop.f32.mrf.mxu0
        %v1745 = vpop.f32.mrf.mxu0
        %v1746 = vadd.f32 0.0, %v1745
        %v1747 = vpop.f32.mrf.mxu0
        %1748 = vmatprep.mubr.bf16.mxu0 0
        %1749 = vmatmul.mubr.bf16.gmra.mxu0 %v1552
        %v1750 = vpop.f32.mrf.mxu0
        %v1751 = vadd.f32 0.0, %v1750
        %v1752 = vpop.f32.mrf.mxu0
        %v1753 = vpop.f32.mrf.mxu0
        %v1754 = vadd.f32 0.0, %v1753
        %v1755 = vpop.f32.mrf.mxu0
        %1756 = vmatprep.mubr.bf16.mxu0 0
        %1757 = vmatmul.mubr.bf16.gmra.mxu0 %v1553
        %v1758 = vpop.f32.mrf.mxu0
        %v1759 = vadd.f32 0.0, %v1758
        %v1760 = vpop.f32.mrf.mxu0
        %v1761 = vpop.f32.mrf.mxu0
        %v1762 = vadd.f32 0.0, %v1761
        %v1763 = vpop.f32.mrf.mxu0
        %1764 = vmatprep.mubr.bf16.mxu0 0
        %1765 = vmatmul.mubr.bf16.gmra.mxu0 %v1554
        %v1766 = vpop.f32.mrf.mxu0
        %v1767 = vadd.f32 0.0, %v1766
        %v1768 = vpop.f32.mrf.mxu0
        %v1769 = vpop.f32.mrf.mxu0
        %v1770 = vadd.f32 0.0, %v1769
        %v1771 = vpop.f32.mrf.mxu0
        %1772 = vmatprep.mubr.bf16.mxu0 0
        %1773 = vmatmul.mubr.bf16.gmra.mxu0 %v1555
        %v1774 = vpop.f32.mrf.mxu0
        %v1775 = vadd.f32 0.0, %v1774
        %v1776 = vpop.f32.mrf.mxu0
        %v1777 = vpop.f32.mrf.mxu0
        %v1778 = vadd.f32 0.0, %v1777
        %v1779 = vpop.f32.mrf.mxu0
        %1780 = vdwg.mxu0
        %v1781 = vadd.f32 %v1655, %v1658
        %v1782 = vadd.f32 %v1781, %v1663
        %v1783 = vadd.f32 %v1782, %v1666
        %v1784 = vadd.f32 %v1783, %v1671
        %v1785 = vadd.f32 %v1784, %v1674
        %v1786 = vadd.f32 %v1785, %v1679
        %v1787 = vadd.f32 %v1786, %v1682
        %v1788 = vadd.f32 %v1787, %v1687
        %v1789 = vadd.f32 %v1788, %v1690
        %v1790 = vadd.f32 %v1789, %v1695
        %v1791 = vadd.f32 %v1790, %v1698
        %v1792 = vadd.f32 %v1791, %v1703
        %v1793 = vadd.f32 %v1792, %v1706
        %v1794 = vadd.f32 %v1793, %v1711
        %v1795 = vadd.f32 %v1794, %v1714
        %v1796 = vadd.f32 %v1795, %v1719
        %v1797 = vadd.f32 %v1796, %v1722
        %v1798 = vadd.f32 %v1797, %v1727
        %v1799 = vadd.f32 %v1798, %v1730
        %v1800 = vadd.f32 %v1799, %v1735
        %v1801 = vadd.f32 %v1800, %v1738
        %v1802 = vadd.f32 %v1801, %v1743
        %v1803 = vadd.f32 %v1802, %v1746
        %v1804 = vadd.f32 %v1803, %v1751
        %v1805 = vadd.f32 %v1804, %v1754
        %v1806 = vadd.f32 %v1805, %v1759
        %v1807 = vadd.f32 %v1806, %v1762
        %v1808 = vadd.f32 %v1807, %v1767
        %v1809 = vadd.f32 %v1808, %v1770
        %v1810 = vadd.f32 %v1809, %v1775
        %v1811 = vadd.f32 %v1810, %v1778
        %v1812 = vrot.slane %v1811, 4
        %v1813 = vadd.f32 %v1811, %v1812
        %v1814 = vrot.slane %v1813, 2
        %v1815 = vadd.f32 %v1813, %v1814
        %v1816 = vrot.slane %v1815, 1
        %v1817 = vadd.f32 %v1815, %v1816
        %v1818 = vmul.f32 %v1655, %v1655
        %v1819 = vmul.f32 %v1658, %v1658
        %v1820 = vmul.f32 %v1663, %v1663
        %v1821 = vmul.f32 %v1666, %v1666
        %v1822 = vmul.f32 %v1671, %v1671
        %v1823 = vmul.f32 %v1674, %v1674
        %v1824 = vmul.f32 %v1679, %v1679
        %v1825 = vmul.f32 %v1682, %v1682
        %v1826 = vmul.f32 %v1687, %v1687
        %v1827 = vmul.f32 %v1690, %v1690
        %v1828 = vmul.f32 %v1695, %v1695
        %v1829 = vmul.f32 %v1698, %v1698
        %v1830 = vmul.f32 %v1703, %v1703
        %v1831 = vmul.f32 %v1706, %v1706
        %v1832 = vmul.f32 %v1711, %v1711
        %v1833 = vmul.f32 %v1714, %v1714
        %v1834 = vmul.f32 %v1719, %v1719
        %v1835 = vmul.f32 %v1722, %v1722
        %v1836 = vmul.f32 %v1727, %v1727
        %v1837 = vmul.f32 %v1730, %v1730
        %v1838 = vmul.f32 %v1735, %v1735
        %v1839 = vmul.f32 %v1738, %v1738
        %v1840 = vmul.f32 %v1743, %v1743
        %v1841 = vmul.f32 %v1746, %v1746
        %v1842 = vmul.f32 %v1751, %v1751
        %v1843 = vmul.f32 %v1754, %v1754
        %v1844 = vmul.f32 %v1759, %v1759
        %v1845 = vmul.f32 %v1762, %v1762
        %v1846 = vmul.f32 %v1767, %v1767
        %v1847 = vmul.f32 %v1770, %v1770
        %v1848 = vmul.f32 %v1775, %v1775
        %v1849 = vmul.f32 %v1778, %v1778
        %v1850 = vadd.f32 %v1818, %v1819
        %v1851 = vadd.f32 %v1850, %v1820
        %v1852 = vadd.f32 %v1851, %v1821
        %v1853 = vadd.f32 %v1852, %v1822
        %v1854 = vadd.f32 %v1853, %v1823
        %v1855 = vadd.f32 %v1854, %v1824
        %v1856 = vadd.f32 %v1855, %v1825
        %v1857 = vadd.f32 %v1856, %v1826
        %v1858 = vadd.f32 %v1857, %v1827
        %v1859 = vadd.f32 %v1858, %v1828
        %v1860 = vadd.f32 %v1859, %v1829
        %v1861 = vadd.f32 %v1860, %v1830
        %v1862 = vadd.f32 %v1861, %v1831
        %v1863 = vadd.f32 %v1862, %v1832
        %v1864 = vadd.f32 %v1863, %v1833
        %v1865 = vadd.f32 %v1864, %v1834
        %v1866 = vadd.f32 %v1865, %v1835
        %v1867 = vadd.f32 %v1866, %v1836
        %v1868 = vadd.f32 %v1867, %v1837
        %v1869 = vadd.f32 %v1868, %v1838
        %v1870 = vadd.f32 %v1869, %v1839
        %v1871 = vadd.f32 %v1870, %v1840
        %v1872 = vadd.f32 %v1871, %v1841
        %v1873 = vadd.f32 %v1872, %v1842
        %v1874 = vadd.f32 %v1873, %v1843
        %v1875 = vadd.f32 %v1874, %v1844
        %v1876 = vadd.f32 %v1875, %v1845
        %v1877 = vadd.f32 %v1876, %v1846
        %v1878 = vadd.f32 %v1877, %v1847
        %v1879 = vadd.f32 %v1878, %v1848
        %v1880 = vadd.f32 %v1879, %v1849
        %v1881 = vrot.slane %v1880, 4
        %v1882 = vadd.f32 %v1880, %v1881
        %v1883 = vrot.slane %v1882, 2
        %v1884 = vadd.f32 %v1882, %v1883
        %v1885 = vrot.slane %v1884, 1
        %v1886 = vadd.f32 %v1884, %v1885
        %v1887 = vmul.f32 %v1817, 0.00390625
        %v1888 = vmul.f32 %v1886, 0.00390625
        %v1889 = vmul.f32 %v1887, %v1887
        %v1890 = vsub.f32 %v1888, %v1889
        %v1891 = vmax.f32 %v1890, 0.0
        %v1892 = vadd.f32 %v1891, 1e-05
        %v1893 = vrsqrt.pop %v1892
        %v1894 = vrcp.pop %v1892
        %v1895 = vmul.f32 %v1891, %v1894
        %v1896 = vadd.f32 %v1895, 1e-05
        %v1897 = vrsqrt.pop %v1896
        %v1898 = vmul.f32 %v1893, %v1897
        %v1899 = vsub.f32 %v1655, %v1887
        %v1900 = vsub.f32 %v1658, %v1887
        %v1901 = vsub.f32 %v1663, %v1887
        %v1902 = vsub.f32 %v1666, %v1887
        %v1903 = vsub.f32 %v1671, %v1887
        %v1904 = vsub.f32 %v1674, %v1887
        %v1905 = vsub.f32 %v1679, %v1887
        %v1906 = vsub.f32 %v1682, %v1887
        %v1907 = vsub.f32 %v1687, %v1887
        %v1908 = vsub.f32 %v1690, %v1887
        %v1909 = vsub.f32 %v1695, %v1887
        %v1910 = vsub.f32 %v1698, %v1887
        %v1911 = vsub.f32 %v1703, %v1887
        %v1912 = vsub.f32 %v1706, %v1887
        %v1913 = vsub.f32 %v1711, %v1887
        %v1914 = vsub.f32 %v1714, %v1887
        %v1915 = vsub.f32 %v1719, %v1887
        %v1916 = vsub.f32 %v1722, %v1887
        %v1917 = vsub.f32 %v1727, %v1887
        %v1918 = vsub.f32 %v1730, %v1887
        %v1919 = vsub.f32 %v1735, %v1887
        %v1920 = vsub.f32 %v1738, %v1887
        %v1921 = vsub.f32 %v1743, %v1887
        %v1922 = vsub.f32 %v1746, %v1887
        %v1923 = vsub.f32 %v1751, %v1887
        %v1924 = vsub.f32 %v1754, %v1887
        %v1925 = vsub.f32 %v1759, %v1887
        %v1926 = vsub.f32 %v1762, %v1887
        %v1927 = vsub.f32 %v1767, %v1887
        %v1928 = vsub.f32 %v1770, %v1887
        %v1929 = vsub.f32 %v1775, %v1887
        %v1930 = vsub.f32 %v1778, %v1887
        %v1931 = vmul.f32 %v1899, %v1898
        %v1932 = vmul.f32 %v1900, %v1898
        %v1933 = vmul.f32 %v1901, %v1898
        %v1934 = vmul.f32 %v1902, %v1898
        %v1935 = vmul.f32 %v1903, %v1898
        %v1936 = vmul.f32 %v1904, %v1898
        %v1937 = vmul.f32 %v1905, %v1898
        %v1938 = vmul.f32 %v1906, %v1898
        %v1939 = vmul.f32 %v1907, %v1898
        %v1940 = vmul.f32 %v1908, %v1898
        %v1941 = vmul.f32 %v1909, %v1898
        %v1942 = vmul.f32 %v1910, %v1898
        %v1943 = vmul.f32 %v1911, %v1898
        %v1944 = vmul.f32 %v1912, %v1898
        %v1945 = vmul.f32 %v1913, %v1898
        %v1946 = vmul.f32 %v1914, %v1898
        %v1947 = vmul.f32 %v1915, %v1898
        %v1948 = vmul.f32 %v1916, %v1898
        %v1949 = vmul.f32 %v1917, %v1898
        %v1950 = vmul.f32 %v1918, %v1898
        %v1951 = vmul.f32 %v1919, %v1898
        %v1952 = vmul.f32 %v1920, %v1898
        %v1953 = vmul.f32 %v1921, %v1898
        %v1954 = vmul.f32 %v1922, %v1898
        %v1955 = vmul.f32 %v1923, %v1898
        %v1956 = vmul.f32 %v1924, %v1898
        %v1957 = vmul.f32 %v1925, %v1898
        %v1958 = vmul.f32 %v1926, %v1898
        %v1959 = vmul.f32 %v1927, %v1898
        %v1960 = vmul.f32 %v1928, %v1898
        %v1961 = vmul.f32 %v1929, %v1898
        %v1962 = vmul.f32 %v1930, %v1898
        %v1963 = vmax.f32 %v1931, 0.0
        %v1964 = vmax.f32 %v1932, 0.0
        %v1965 = vmax.f32 %v1933, 0.0
        %v1966 = vmax.f32 %v1934, 0.0
        %v1967 = vmax.f32 %v1935, 0.0
        %v1968 = vmax.f32 %v1936, 0.0
        %v1969 = vmax.f32 %v1937, 0.0
        %v1970 = vmax.f32 %v1938, 0.0
        %v1971 = vmax.f32 %v1939, 0.0
        %v1972 = vmax.f32 %v1940, 0.0
        %v1973 = vmax.f32 %v1941, 0.0
        %v1974 = vmax.f32 %v1942, 0.0
        %v1975 = vmax.f32 %v1943, 0.0
        %v1976 = vmax.f32 %v1944, 0.0
        %v1977 = vmax.f32 %v1945, 0.0
        %v1978 = vmax.f32 %v1946, 0.0
        %v1979 = vmax.f32 %v1947, 0.0
        %v1980 = vmax.f32 %v1948, 0.0
        %v1981 = vmax.f32 %v1949, 0.0
        %v1982 = vmax.f32 %v1950, 0.0
        %v1983 = vmax.f32 %v1951, 0.0
        %v1984 = vmax.f32 %v1952, 0.0
        %v1985 = vmax.f32 %v1953, 0.0
        %v1986 = vmax.f32 %v1954, 0.0
        %v1987 = vmax.f32 %v1955, 0.0
        %v1988 = vmax.f32 %v1956, 0.0
        %v1989 = vmax.f32 %v1957, 0.0
        %v1990 = vmax.f32 %v1958, 0.0
        %v1991 = vmax.f32 %v1959, 0.0
        %v1992 = vmax.f32 %v1960, 0.0
        %v1993 = vmax.f32 %v1961, 0.0
        %v1994 = vmax.f32 %v1962, 0.0
        %1995 = vst [vmem:[#allocation2] sm:$0xff] 0.0
        %1996 = vst [vmem:[#allocation2 + $0x8] sm:$0xff] 0.0
        %1997 = vst [vmem:[#allocation2 + $0x10] sm:$0xff] 0.0
        %1998 = vst [vmem:[#allocation2 + $0x18] sm:$0xff] 0.0
        %1999 = vst [vmem:[#allocation2 + $0x20] sm:$0xff] 0.0
        %2000 = vst [vmem:[#allocation2 + $0x28] sm:$0xff] 0.0
        %2001 = vst [vmem:[#allocation2 + $0x30] sm:$0xff] 0.0
        %2002 = vst [vmem:[#allocation2 + $0x38] sm:$0xff] 0.0
        %2003 = vst [vmem:[#allocation2 + $0x40] sm:$0xff] 0.0
        %2004 = vst [vmem:[#allocation2 + $0x48] sm:$0xff] 0.0
        %2005 = vst [vmem:[#allocation2 + $0x50] sm:$0xff] 0.0
        %2006 = vst [vmem:[#allocation2 + $0x58] sm:$0xff] 0.0
        %2007 = vst [vmem:[#allocation2 + $0x60] sm:$0xff] 0.0
        %2008 = vst [vmem:[#allocation2 + $0x68] sm:$0xff] 0.0
        %2009 = vst [vmem:[#allocation2 + $0x70] sm:$0xff] 0.0
        %2010 = vst [vmem:[#allocation2 + $0x78] sm:$0xff] 0.0
        %2011 = vst [vmem:[#allocation2 + $0x80] sm:$0xff] 0.0
        %2012 = vst [vmem:[#allocation2 + $0x88] sm:$0xff] 0.0
        %2013 = vst [vmem:[#allocation2 + $0x90] sm:$0xff] 0.0
        %2014 = vst [vmem:[#allocation2 + $0x98] sm:$0xff] 0.0
        %2015 = vst [vmem:[#allocation2 + $0xa0] sm:$0xff] 0.0
        %2016 = vst [vmem:[#allocation2 + $0xa8] sm:$0xff] 0.0
        %2017 = vst [vmem:[#allocation2 + $0xb0] sm:$0xff] 0.0
        %2018 = vst [vmem:[#allocation2 + $0xb8] sm:$0xff] 0.0
        %2019 = vst [vmem:[#allocation2 + $0xc0] sm:$0xff] 0.0
        %2020 = vst [vmem:[#allocation2 + $0xc8] sm:$0xff] 0.0
        %2021 = vst [vmem:[#allocation2 + $0xd0] sm:$0xff] 0.0
        %2022 = vst [vmem:[#allocation2 + $0xd8] sm:$0xff] 0.0
        %2023 = vst [vmem:[#allocation2 + $0xe0] sm:$0xff] 0.0
        %2024 = vst [vmem:[#allocation2 + $0xe8] sm:$0xff] 0.0
        %2025 = vst [vmem:[#allocation2 + $0xf0] sm:$0xff] 0.0
        %2026 = vst [vmem:[#allocation2 + $0xf8] sm:$0xff] 0.0
        %2027 = vst [vmem:[#allocation2 + $0x100] sm:$0xff] 0.0
        %2028 = vst [vmem:[#allocation2 + $0x108] sm:$0xff] 0.0
        %2029 = vst [vmem:[#allocation2 + $0x110] sm:$0xff] 0.0
        %2030 = vst [vmem:[#allocation2 + $0x118] sm:$0xff] 0.0
        %2031 = vst [vmem:[#allocation2 + $0x120] sm:$0xff] 0.0
        %2032 = vst [vmem:[#allocation2 + $0x128] sm:$0xff] 0.0
        %2033 = vst [vmem:[#allocation2 + $0x130] sm:$0xff] 0.0
        %2034 = vst [vmem:[#allocation2 + $0x138] sm:$0xff] 0.0
        %2035 = vst [vmem:[#allocation2 + $0x140] sm:$0xff] 0.0
        %2036 = vst [vmem:[#allocation2 + $0x148] sm:$0xff] 0.0
        %2037 = vst [vmem:[#allocation2 + $0x28] sm:$0xff] %v1963
        %2038 = vst [vmem:[#allocation2 + $0x30] sm:$0xff] %v1964
        %2039 = vst [vmem:[#allocation2 + $0x38] sm:$0xff] %v1965
        %2040 = vst [vmem:[#allocation2 + $0x40] sm:$0xff] %v1966
        %2041 = vst [vmem:[#allocation2 + $0x48] sm:$0xff] %v1967
        %2042 = vst [vmem:[#allocation2 + $0x50] sm:$0xff] %v1968
        %2043 = vst [vmem:[#allocation2 + $0x58] sm:$0xff] %v1969
        %2044 = vst [vmem:[#allocation2 + $0x60] sm:$0xff] %v1970
        %2045 = vst [vmem:[#allocation2 + $0x68] sm:$0xff] %v1971
        %2046 = vst [vmem:[#allocation2 + $0x70] sm:$0xff] %v1972
        %2047 = vst [vmem:[#allocation2 + $0x78] sm:$0xff] %v1973
        %2048 = vst [vmem:[#allocation2 + $0x80] sm:$0xff] %v1974
        %2049 = vst [vmem:[#allocation2 + $0x88] sm:$0xff] %v1975
        %2050 = vst [vmem:[#allocation2 + $0x90] sm:$0xff] %v1976
        %2051 = vst [vmem:[#allocation2 + $0x98] sm:$0xff] %v1977
        %2052 = vst [vmem:[#allocation2 + $0xa0] sm:$0xff] %v1978
        %2053 = vst [vmem:[#allocation2 + $0xa8] sm:$0xff] %v1979
        %2054 = vst [vmem:[#allocation2 + $0xb0] sm:$0xff] %v1980
        %2055 = vst [vmem:[#allocation2 + $0xb8] sm:$0xff] %v1981
        %2056 = vst [vmem:[#allocation2 + $0xc0] sm:$0xff] %v1982
        %2057 = vst [vmem:[#allocation2 + $0xc8] sm:$0xff] %v1983
        %2058 = vst [vmem:[#allocation2 + $0xd0] sm:$0xff] %v1984
        %2059 = vst [vmem:[#allocation2 + $0xd8] sm:$0xff] %v1985
        %2060 = vst [vmem:[#allocation2 + $0xe0] sm:$0xff] %v1986
        %2061 = vst [vmem:[#allocation2 + $0xe8] sm:$0xff] %v1987
        %2062 = vst [vmem:[#allocation2 + $0xf0] sm:$0xff] %v1988
        %2063 = vst [vmem:[#allocation2 + $0xf8] sm:$0xff] %v1989
        %2064 = vst [vmem:[#allocation2 + $0x100] sm:$0xff] %v1990
        %2065 = vst [vmem:[#allocation2 + $0x108] sm:$0xff] %v1991
        %2066 = vst [vmem:[#allocation2 + $0x110] sm:$0xff] %v1992
        %2067 = vst [vmem:[#allocation2 + $0x118] sm:$0xff] %v1993
        %2068 = vst [vmem:[#allocation2 + $0x120] sm:$0xff] %v1994
        %v2069 = vlaneseq
        %v2070 = vshrl.u32 %v2069, 7
        %v2071 = vadd.s32 %v2070, 8
        %v2072 = vadd.s32 %v2070, 16
        %v2073 = vadd.s32 %v2070, 24
        %v2074 = vadd.s32 %v2070, 32
        %v2075 = vadd.s32 %v2070, 40
        %v2076 = vadd.s32 %v2070, 48
        %v2077 = vadd.s32 %v2070, 56
        %v2078 = vadd.s32 %v2070, 64
        %v2079 = vadd.s32 %v2070, 72
        %v2080 = vadd.s32 %v2070, 80
        %v2081 = vadd.s32 %v2070, 88
        %v2082 = vadd.s32 %v2070, 96
        %v2083 = vadd.s32 %v2070, 104
        %v2084 = vadd.s32 %v2070, 112
        %v2085 = vadd.s32 %v2070, 120
        %v2086 = vadd.s32 %v2070, 128
        %v2087 = vadd.s32 %v2070, 136
        %v2088 = vadd.s32 %v2070, 144
        %v2089 = vadd.s32 %v2070, 152
        %v2090 = vadd.s32 %v2070, 160
        %v2091 = vadd.s32 %v2070, 168
        %v2092 = vadd.s32 %v2070, 176
        %v2093 = vadd.s32 %v2070, 184
        %v2094 = vadd.s32 %v2070, 192
        %v2095 = vadd.s32 %v2070, 200
        %v2096 = vadd.s32 %v2070, 208
        %v2097 = vadd.s32 %v2070, 216
        %v2098 = vadd.s32 %v2070, 224
        %v2099 = vadd.s32 %v2070, 232
        %v2100 = vadd.s32 %v2070, 240
        %v2101 = vadd.s32 %v2070, 248
        %vm2102 = vcmp.lt.s32.totalorder %v2070, 0
        %v2103 = vsub.s32 0, %v2070
        %v2104 = vsel %vm2102, %v2103, %v2070
        %v2105 = vshrl.u32 %v2104, 4
        %v2106 = vand.u32 %v2104, 15
        %v2107 = vsub.s32 0, %v2106
        %v2108 = vsel %vm2102, %v2107, %v2106
        %vm2109 = vcmp.lt.s32.totalorder %v2071, 0
        %v2110 = vsub.s32 0, %v2071
        %v2111 = vsel %vm2109, %v2110, %v2071
        %v2112 = vshrl.u32 %v2111, 4
        %v2113 = vand.u32 %v2111, 15
        %v2114 = vsub.s32 0, %v2113
        %v2115 = vsel %vm2109, %v2114, %v2113
        %vm2116 = vcmp.lt.s32.totalorder %v2072, 0
        %v2117 = vsub.s32 0, %v2072
        %v2118 = vsel %vm2116, %v2117, %v2072
        %v2119 = vshrl.u32 %v2118, 4
        %v2120 = vand.u32 %v2118, 15
        %v2121 = vsub.s32 0, %v2120
        %v2122 = vsel %vm2116, %v2121, %v2120
        %vm2123 = vcmp.lt.s32.totalorder %v2073, 0
        %v2124 = vsub.s32 0, %v2073
        %v2125 = vsel %vm2123, %v2124, %v2073
        %v2126 = vshrl.u32 %v2125, 4
        %v2127 = vand.u32 %v2125, 15
        %v2128 = vsub.s32 0, %v2127
        %v2129 = vsel %vm2123, %v2128, %v2127
        %vm2130 = vcmp.lt.s32.totalorder %v2074, 0
        %v2131 = vsub.s32 0, %v2074
        %v2132 = vsel %vm2130, %v2131, %v2074
        %v2133 = vshrl.u32 %v2132, 4
        %v2134 = vand.u32 %v2132, 15
        %v2135 = vsub.s32 0, %v2134
        %v2136 = vsel %vm2130, %v2135, %v2134
        %vm2137 = vcmp.lt.s32.totalorder %v2075, 0
        %v2138 = vsub.s32 0, %v2075
        %v2139 = vsel %vm2137, %v2138, %v2075
        %v2140 = vshrl.u32 %v2139, 4
        %v2141 = vand.u32 %v2139, 15
        %v2142 = vsub.s32 0, %v2141
        %v2143 = vsel %vm2137, %v2142, %v2141
        %vm2144 = vcmp.lt.s32.totalorder %v2076, 0
        %v2145 = vsub.s32 0, %v2076
        %v2146 = vsel %vm2144, %v2145, %v2076
        %v2147 = vshrl.u32 %v2146, 4
        %v2148 = vand.u32 %v2146, 15
        %v2149 = vsub.s32 0, %v2148
        %v2150 = vsel %vm2144, %v2149, %v2148
        %vm2151 = vcmp.lt.s32.totalorder %v2077, 0
        %v2152 = vsub.s32 0, %v2077
        %v2153 = vsel %vm2151, %v2152, %v2077
        %v2154 = vshrl.u32 %v2153, 4
        %v2155 = vand.u32 %v2153, 15
        %v2156 = vsub.s32 0, %v2155
        %v2157 = vsel %vm2151, %v2156, %v2155
        %vm2158 = vcmp.lt.s32.totalorder %v2078, 0
        %v2159 = vsub.s32 0, %v2078
        %v2160 = vsel %vm2158, %v2159, %v2078
        %v2161 = vshrl.u32 %v2160, 4
        %v2162 = vand.u32 %v2160, 15
        %v2163 = vsub.s32 0, %v2162
        %v2164 = vsel %vm2158, %v2163, %v2162
        %vm2165 = vcmp.lt.s32.totalorder %v2079, 0
        %v2166 = vsub.s32 0, %v2079
        %v2167 = vsel %vm2165, %v2166, %v2079
        %v2168 = vshrl.u32 %v2167, 4
        %v2169 = vand.u32 %v2167, 15
        %v2170 = vsub.s32 0, %v2169
        %v2171 = vsel %vm2165, %v2170, %v2169
        %vm2172 = vcmp.lt.s32.totalorder %v2080, 0
        %v2173 = vsub.s32 0, %v2080
        %v2174 = vsel %vm2172, %v2173, %v2080
        %v2175 = vshrl.u32 %v2174, 4
        %v2176 = vand.u32 %v2174, 15
        %v2177 = vsub.s32 0, %v2176
        %v2178 = vsel %vm2172, %v2177, %v2176
        %vm2179 = vcmp.lt.s32.totalorder %v2081, 0
        %v2180 = vsub.s32 0, %v2081
        %v2181 = vsel %vm2179, %v2180, %v2081
        %v2182 = vshrl.u32 %v2181, 4
        %v2183 = vand.u32 %v2181, 15
        %v2184 = vsub.s32 0, %v2183
        %v2185 = vsel %vm2179, %v2184, %v2183
        %vm2186 = vcmp.lt.s32.totalorder %v2082, 0
        %v2187 = vsub.s32 0, %v2082
        %v2188 = vsel %vm2186, %v2187, %v2082
        %v2189 = vshrl.u32 %v2188, 4
        %v2190 = vand.u32 %v2188, 15
        %v2191 = vsub.s32 0, %v2190
        %v2192 = vsel %vm2186, %v2191, %v2190
        %vm2193 = vcmp.lt.s32.totalorder %v2083, 0
        %v2194 = vsub.s32 0, %v2083
        %v2195 = vsel %vm2193, %v2194, %v2083
        %v2196 = vshrl.u32 %v2195, 4
        %v2197 = vand.u32 %v2195, 15
        %v2198 = vsub.s32 0, %v2197
        %v2199 = vsel %vm2193, %v2198, %v2197
        %vm2200 = vcmp.lt.s32.totalorder %v2084, 0
        %v2201 = vsub.s32 0, %v2084
        %v2202 = vsel %vm2200, %v2201, %v2084
        %v2203 = vshrl.u32 %v2202, 4
        %v2204 = vand.u32 %v2202, 15
        %v2205 = vsub.s32 0, %v2204
        %v2206 = vsel %vm2200, %v2205, %v2204
        %vm2207 = vcmp.lt.s32.totalorder %v2085, 0
        %v2208 = vsub.s32 0, %v2085
        %v2209 = vsel %vm2207, %v2208, %v2085
        %v2210 = vshrl.u32 %v2209, 4
        %v2211 = vand.u32 %v2209, 15
        %v2212 = vsub.s32 0, %v2211
        %v2213 = vsel %vm2207, %v2212, %v2211
        %vm2214 = vcmp.lt.s32.totalorder %v2086, 0
        %v2215 = vsub.s32 0, %v2086
        %v2216 = vsel %vm2214, %v2215, %v2086
        %v2217 = vshrl.u32 %v2216, 4
        %v2218 = vand.u32 %v2216, 15
        %v2219 = vsub.s32 0, %v2218
        %v2220 = vsel %vm2214, %v2219, %v2218
        %vm2221 = vcmp.lt.s32.totalorder %v2087, 0
        %v2222 = vsub.s32 0, %v2087
        %v2223 = vsel %vm2221, %v2222, %v2087
        %v2224 = vshrl.u32 %v2223, 4
        %v2225 = vand.u32 %v2223, 15
        %v2226 = vsub.s32 0, %v2225
        %v2227 = vsel %vm2221, %v2226, %v2225
        %vm2228 = vcmp.lt.s32.totalorder %v2088, 0
        %v2229 = vsub.s32 0, %v2088
        %v2230 = vsel %vm2228, %v2229, %v2088
        %v2231 = vshrl.u32 %v2230, 4
        %v2232 = vand.u32 %v2230, 15
        %v2233 = vsub.s32 0, %v2232
        %v2234 = vsel %vm2228, %v2233, %v2232
        %vm2235 = vcmp.lt.s32.totalorder %v2089, 0
        %v2236 = vsub.s32 0, %v2089
        %v2237 = vsel %vm2235, %v2236, %v2089
        %v2238 = vshrl.u32 %v2237, 4
        %v2239 = vand.u32 %v2237, 15
        %v2240 = vsub.s32 0, %v2239
        %v2241 = vsel %vm2235, %v2240, %v2239
        %vm2242 = vcmp.lt.s32.totalorder %v2090, 0
        %v2243 = vsub.s32 0, %v2090
        %v2244 = vsel %vm2242, %v2243, %v2090
        %v2245 = vshrl.u32 %v2244, 4
        %v2246 = vand.u32 %v2244, 15
        %v2247 = vsub.s32 0, %v2246
        %v2248 = vsel %vm2242, %v2247, %v2246
        %vm2249 = vcmp.lt.s32.totalorder %v2091, 0
        %v2250 = vsub.s32 0, %v2091
        %v2251 = vsel %vm2249, %v2250, %v2091
        %v2252 = vshrl.u32 %v2251, 4
        %v2253 = vand.u32 %v2251, 15
        %v2254 = vsub.s32 0, %v2253
        %v2255 = vsel %vm2249, %v2254, %v2253
        %vm2256 = vcmp.lt.s32.totalorder %v2092, 0
        %v2257 = vsub.s32 0, %v2092
        %v2258 = vsel %vm2256, %v2257, %v2092
        %v2259 = vshrl.u32 %v2258, 4
        %v2260 = vand.u32 %v2258, 15
        %v2261 = vsub.s32 0, %v2260
        %v2262 = vsel %vm2256, %v2261, %v2260
        %vm2263 = vcmp.lt.s32.totalorder %v2093, 0
        %v2264 = vsub.s32 0, %v2093
        %v2265 = vsel %vm2263, %v2264, %v2093
        %v2266 = vshrl.u32 %v2265, 4
        %v2267 = vand.u32 %v2265, 15
        %v2268 = vsub.s32 0, %v2267
        %v2269 = vsel %vm2263, %v2268, %v2267
        %vm2270 = vcmp.lt.s32.totalorder %v2094, 0
        %v2271 = vsub.s32 0, %v2094
        %v2272 = vsel %vm2270, %v2271, %v2094
        %v2273 = vshrl.u32 %v2272, 4
        %v2274 = vand.u32 %v2272, 15
        %v2275 = vsub.s32 0, %v2274
        %v2276 = vsel %vm2270, %v2275, %v2274
        %vm2277 = vcmp.lt.s32.totalorder %v2095, 0
        %v2278 = vsub.s32 0, %v2095
        %v2279 = vsel %vm2277, %v2278, %v2095
        %v2280 = vshrl.u32 %v2279, 4
        %v2281 = vand.u32 %v2279, 15
        %v2282 = vsub.s32 0, %v2281
        %v2283 = vsel %vm2277, %v2282, %v2281
        %vm2284 = vcmp.lt.s32.totalorder %v2096, 0
        %v2285 = vsub.s32 0, %v2096
        %v2286 = vsel %vm2284, %v2285, %v2096
        %v2287 = vshrl.u32 %v2286, 4
        %v2288 = vand.u32 %v2286, 15
        %v2289 = vsub.s32 0, %v2288
        %v2290 = vsel %vm2284, %v2289, %v2288
        %vm2291 = vcmp.lt.s32.totalorder %v2097, 0
        %v2292 = vsub.s32 0, %v2097
        %v2293 = vsel %vm2291, %v2292, %v2097
        %v2294 = vshrl.u32 %v2293, 4
        %v2295 = vand.u32 %v2293, 15
        %v2296 = vsub.s32 0, %v2295
        %v2297 = vsel %vm2291, %v2296, %v2295
        %vm2298 = vcmp.lt.s32.totalorder %v2098, 0
        %v2299 = vsub.s32 0, %v2098
        %v2300 = vsel %vm2298, %v2299, %v2098
        %v2301 = vshrl.u32 %v2300, 4
        %v2302 = vand.u32 %v2300, 15
        %v2303 = vsub.s32 0, %v2302
        %v2304 = vsel %vm2298, %v2303, %v2302
        %vm2305 = vcmp.lt.s32.totalorder %v2099, 0
        %v2306 = vsub.s32 0, %v2099
        %v2307 = vsel %vm2305, %v2306, %v2099
        %v2308 = vshrl.u32 %v2307, 4
        %v2309 = vand.u32 %v2307, 15
        %v2310 = vsub.s32 0, %v2309
        %v2311 = vsel %vm2305, %v2310, %v2309
        %vm2312 = vcmp.lt.s32.totalorder %v2100, 0
        %v2313 = vsub.s32 0, %v2100
        %v2314 = vsel %vm2312, %v2313, %v2100
        %v2315 = vshrl.u32 %v2314, 4
        %v2316 = vand.u32 %v2314, 15
        %v2317 = vsub.s32 0, %v2316
        %v2318 = vsel %vm2312, %v2317, %v2316
        %vm2319 = vcmp.lt.s32.totalorder %v2101, 0
        %v2320 = vsub.s32 0, %v2101
        %v2321 = vsel %vm2319, %v2320, %v2101
        %v2322 = vshrl.u32 %v2321, 4
        %v2323 = vand.u32 %v2321, 15
        %v2324 = vsub.s32 0, %v2323
        %v2325 = vsel %vm2319, %v2324, %v2323
        %vm2326 = vcmp.ne.s32.totalorder %v2108, 0
        %vm2327 = vcmp.ne.s32.totalorder %v2115, 0
        %vm2328 = vcmp.ne.s32.totalorder %v2122, 0
        %vm2329 = vcmp.ne.s32.totalorder %v2129, 0
        %vm2330 = vcmp.ne.s32.totalorder %v2136, 0
        %vm2331 = vcmp.ne.s32.totalorder %v2143, 0
        %vm2332 = vcmp.ne.s32.totalorder %v2150, 0
        %vm2333 = vcmp.ne.s32.totalorder %v2157, 0
        %vm2334 = vcmp.ne.s32.totalorder %v2164, 0
        %vm2335 = vcmp.ne.s32.totalorder %v2171, 0
        %vm2336 = vcmp.ne.s32.totalorder %v2178, 0
        %vm2337 = vcmp.ne.s32.totalorder %v2185, 0
        %vm2338 = vcmp.ne.s32.totalorder %v2192, 0
        %vm2339 = vcmp.ne.s32.totalorder %v2199, 0
        %vm2340 = vcmp.ne.s32.totalorder %v2206, 0
        %vm2341 = vcmp.ne.s32.totalorder %v2213, 0
        %vm2342 = vcmp.ne.s32.totalorder %v2220, 0
        %vm2343 = vcmp.ne.s32.totalorder %v2227, 0
        %vm2344 = vcmp.ne.s32.totalorder %v2234, 0
        %vm2345 = vcmp.ne.s32.totalorder %v2241, 0
        %vm2346 = vcmp.ne.s32.totalorder %v2248, 0
        %vm2347 = vcmp.ne.s32.totalorder %v2255, 0
        %vm2348 = vcmp.ne.s32.totalorder %v2262, 0
        %vm2349 = vcmp.ne.s32.totalorder %v2269, 0
        %vm2350 = vcmp.ne.s32.totalorder %v2276, 0
        %vm2351 = vcmp.ne.s32.totalorder %v2283, 0
        %vm2352 = vcmp.ne.s32.totalorder %v2290, 0
        %vm2353 = vcmp.ne.s32.totalorder %v2297, 0
        %vm2354 = vcmp.ne.s32.totalorder %v2304, 0
        %vm2355 = vcmp.ne.s32.totalorder %v2311, 0
        %vm2356 = vcmp.ne.s32.totalorder %v2318, 0
        %vm2357 = vcmp.ne.s32.totalorder %v2325, 0
        %vm2358 = vcmp.lt.s32.totalorder %v2108, 0
        %vm2359 = vcmp.lt.s32.totalorder %v2115, 0
        %vm2360 = vcmp.lt.s32.totalorder %v2122, 0
        %vm2361 = vcmp.lt.s32.totalorder %v2129, 0
        %vm2362 = vcmp.lt.s32.totalorder %v2136, 0
        %vm2363 = vcmp.lt.s32.totalorder %v2143, 0
        %vm2364 = vcmp.lt.s32.totalorder %v2150, 0
        %vm2365 = vcmp.lt.s32.totalorder %v2157, 0
        %vm2366 = vcmp.lt.s32.totalorder %v2164, 0
        %vm2367 = vcmp.lt.s32.totalorder %v2171, 0
        %vm2368 = vcmp.lt.s32.totalorder %v2178, 0
        %vm2369 = vcmp.lt.s32.totalorder %v2185, 0
        %vm2370 = vcmp.lt.s32.totalorder %v2192, 0
        %vm2371 = vcmp.lt.s32.totalorder %v2199, 0
        %vm2372 = vcmp.lt.s32.totalorder %v2206, 0
        %vm2373 = vcmp.lt.s32.totalorder %v2213, 0
        %vm2374 = vcmp.lt.s32.totalorder %v2220, 0
        %vm2375 = vcmp.lt.s32.totalorder %v2227, 0
        %vm2376 = vcmp.lt.s32.totalorder %v2234, 0
        %vm2377 = vcmp.lt.s32.totalorder %v2241, 0
        %vm2378 = vcmp.lt.s32.totalorder %v2248, 0
        %vm2379 = vcmp.lt.s32.totalorder %v2255, 0
        %vm2380 = vcmp.lt.s32.totalorder %v2262, 0
        %vm2381 = vcmp.lt.s32.totalorder %v2269, 0
        %vm2382 = vcmp.lt.s32.totalorder %v2276, 0
        %vm2383 = vcmp.lt.s32.totalorder %v2283, 0
        %vm2384 = vcmp.lt.s32.totalorder %v2290, 0
        %vm2385 = vcmp.lt.s32.totalorder %v2297, 0
        %vm2386 = vcmp.lt.s32.totalorder %v2304, 0
        %vm2387 = vcmp.lt.s32.totalorder %v2311, 0
        %vm2388 = vcmp.lt.s32.totalorder %v2318, 0
        %vm2389 = vcmp.lt.s32.totalorder %v2325, 0
        %vm2390 = vmand %vm2358, %vm2326
        %vm2391 = vmand %vm2359, %vm2327
        %vm2392 = vmand %vm2360, %vm2328
        %vm2393 = vmand %vm2361, %vm2329
        %vm2394 = vmand %vm2362, %vm2330
        %vm2395 = vmand %vm2363, %vm2331
        %vm2396 = vmand %vm2364, %vm2332
        %vm2397 = vmand %vm2365, %vm2333
        %vm2398 = vmand %vm2366, %vm2334
        %vm2399 = vmand %vm2367, %vm2335
        %vm2400 = vmand %vm2368, %vm2336
        %vm2401 = vmand %vm2369, %vm2337
        %vm2402 = vmand %vm2370, %vm2338
        %vm2403 = vmand %vm2371, %vm2339
        %vm2404 = vmand %vm2372, %vm2340
        %vm2405 = vmand %vm2373, %vm2341
        %vm2406 = vmand %vm2374, %vm2342
        %vm2407 = vmand %vm2375, %vm2343
        %vm2408 = vmand %vm2376, %vm2344
        %vm2409 = vmand %vm2377, %vm2345
        %vm2410 = vmand %vm2378, %vm2346
        %vm2411 = vmand %vm2379, %vm2347
        %vm2412 = vmand %vm2380, %vm2348
        %vm2413 = vmand %vm2381, %vm2349
        %vm2414 = vmand %vm2382, %vm2350
        %vm2415 = vmand %vm2383, %vm2351
        %vm2416 = vmand %vm2384, %vm2352
        %vm2417 = vmand %vm2385, %vm2353
        %vm2418 = vmand %vm2386, %vm2354
        %vm2419 = vmand %vm2387, %vm2355
        %vm2420 = vmand %vm2388, %vm2356
        %vm2421 = vmand %vm2389, %vm2357
        %v2422 = vadd.s32 %v2108, 16
        %v2423 = vadd.s32 %v2115, 16
        %v2424 = vadd.s32 %v2122, 16
        %v2425 = vadd.s32 %v2129, 16
        %v2426 = vadd.s32 %v2136, 16
        %v2427 = vadd.s32 %v2143, 16
        %v2428 = vadd.s32 %v2150, 16
        %v2429 = vadd.s32 %v2157, 16
        %v2430 = vadd.s32 %v2164, 16
        %v2431 = vadd.s32 %v2171, 16
        %v2432 = vadd.s32 %v2178, 16
        %v2433 = vadd.s32 %v2185, 16
        %v2434 = vadd.s32 %v2192, 16
        %v2435 = vadd.s32 %v2199, 16
        %v2436 = vadd.s32 %v2206, 16
        %v2437 = vadd.s32 %v2213, 16
        %v2438 = vadd.s32 %v2220, 16
        %v2439 = vadd.s32 %v2227, 16
        %v2440 = vadd.s32 %v2234, 16
        %v2441 = vadd.s32 %v2241, 16
        %v2442 = vadd.s32 %v2248, 16
        %v2443 = vadd.s32 %v2255, 16
        %v2444 = vadd.s32 %v2262, 16
        %v2445 = vadd.s32 %v2269, 16
        %v2446 = vadd.s32 %v2276, 16
        %v2447 = vadd.s32 %v2283, 16
        %v2448 = vadd.s32 %v2290, 16
        %v2449 = vadd.s32 %v2297, 16
        %v2450 = vadd.s32 %v2304, 16
        %v2451 = vadd.s32 %v2311, 16
        %v2452 = vadd.s32 %v2318, 16
        %v2453 = vadd.s32 %v2325, 16
        %v2454 = vsel %vm2390, %v2422, %v2108
        %v2455 = vsel %vm2391, %v2423, %v2115
        %v2456 = vsel %vm2392, %v2424, %v2122
        %v2457 = vsel %vm2393, %v2425, %v2129
        %v2458 = vsel %vm2394, %v2426, %v2136
        %v2459 = vsel %vm2395, %v2427, %v2143
        %v2460 = vsel %vm2396, %v2428, %v2150
        %v2461 = vsel %vm2397, %v2429, %v2157
        %v2462 = vsel %vm2398, %v2430, %v2164
        %v2463 = vsel %vm2399, %v2431, %v2171
        %v2464 = vsel %vm2400, %v2432, %v2178
        %v2465 = vsel %vm2401, %v2433, %v2185
        %v2466 = vsel %vm2402, %v2434, %v2192
        %v2467 = vsel %vm2403, %v2435, %v2199
        %v2468 = vsel %vm2404, %v2436, %v2206
        %v2469 = vsel %vm2405, %v2437, %v2213
        %v2470 = vsel %vm2406, %v2438, %v2220
        %v2471 = vsel %vm2407, %v2439, %v2227
        %v2472 = vsel %vm2408, %v2440, %v2234
        %v2473 = vsel %vm2409, %v2441, %v2241
        %v2474 = vsel %vm2410, %v2442, %v2248
        %v2475 = vsel %vm2411, %v2443, %v2255
        %v2476 = vsel %vm2412, %v2444, %v2262
        %v2477 = vsel %vm2413, %v2445, %v2269
        %v2478 = vsel %vm2414, %v2446, %v2276
        %v2479 = vsel %vm2415, %v2447, %v2283
        %v2480 = vsel %vm2416, %v2448, %v2290
        %v2481 = vsel %vm2417, %v2449, %v2297
        %v2482 = vsel %vm2418, %v2450, %v2304
        %v2483 = vsel %vm2419, %v2451, %v2311
        %v2484 = vsel %vm2420, %v2452, %v2318
        %v2485 = vsel %vm2421, %v2453, %v2325
        %v2486 = vld [vmem:[#allocation2 + $0x6] sm:$0xff]
        %v2487 = vld [vmem:[#allocation2 + $0xe] sm:$0xff]
        %v2488 = vld [vmem:[#allocation2 + $0x16] sm:$0xff]
        %v2489 = vld [vmem:[#allocation2 + $0x1e] sm:$0xff]
        %v2490 = vld [vmem:[#allocation2 + $0x26] sm:$0xff]
        %v2491 = vld [vmem:[#allocation2 + $0x2e] sm:$0xff]
        %v2492 = vld [vmem:[#allocation2 + $0x36] sm:$0xff]
        %v2493 = vld [vmem:[#allocation2 + $0x3e] sm:$0xff]
        %v2494 = vld [vmem:[#allocation2 + $0x46] sm:$0xff]
        %v2495 = vld [vmem:[#allocation2 + $0x4e] sm:$0xff]
        %v2496 = vld [vmem:[#allocation2 + $0x56] sm:$0xff]
        %v2497 = vld [vmem:[#allocation2 + $0x5e] sm:$0xff]
        %v2498 = vld [vmem:[#allocation2 + $0x66] sm:$0xff]
        %v2499 = vld [vmem:[#allocation2 + $0x6e] sm:$0xff]
        %v2500 = vld [vmem:[#allocation2 + $0x76] sm:$0xff]
        %v2501 = vld [vmem:[#allocation2 + $0x7e] sm:$0xff]
        %v2502 = vld [vmem:[#allocation2 + $0x86] sm:$0xff]
        %v2503 = vld [vmem:[#allocation2 + $0x8e] sm:$0xff]
        %v2504 = vld [vmem:[#allocation2 + $0x96] sm:$0xff]
        %v2505 = vld [vmem:[#allocation2 + $0x9e] sm:$0xff]
        %v2506 = vld [vmem:[#allocation2 + $0xa6] sm:$0xff]
        %v2507 = vld [vmem:[#allocation2 + $0xae] sm:$0xff]
        %v2508 = vld [vmem:[#allocation2 + $0xb6] sm:$0xff]
        %v2509 = vld [vmem:[#allocation2 + $0xbe] sm:$0xff]
        %v2510 = vld [vmem:[#allocation2 + $0xc6] sm:$0xff]
        %v2511 = vld [vmem:[#allocation2 + $0xce] sm:$0xff]
        %v2512 = vld [vmem:[#allocation2 + $0xd6] sm:$0xff]
        %v2513 = vld [vmem:[#allocation2 + $0xde] sm:$0xff]
        %v2514 = vld [vmem:[#allocation2 + $0xe6] sm:$0xff]
        %v2515 = vld [vmem:[#allocation2 + $0xee] sm:$0xff]
        %v2516 = vld [vmem:[#allocation2 + $0xf6] sm:$0xff]
        %v2517 = vld [vmem:[#allocation2 + $0xfe] sm:$0xff]
        %v2518 = vadd.s32 %v2454, 4294967294
        %v2519 = vadd.s32 %v2455, 4294967294
        %v2520 = vadd.s32 %v2456, 4294967294
        %v2521 = vadd.s32 %v2457, 4294967294
        %v2522 = vadd.s32 %v2458, 4294967294
        %v2523 = vadd.s32 %v2459, 4294967294
        %v2524 = vadd.s32 %v2460, 4294967294
        %v2525 = vadd.s32 %v2461, 4294967294
        %v2526 = vadd.s32 %v2462, 4294967294
        %v2527 = vadd.s32 %v2463, 4294967294
        %v2528 = vadd.s32 %v2464, 4294967294
        %v2529 = vadd.s32 %v2465, 4294967294
        %v2530 = vadd.s32 %v2466, 4294967294
        %v2531 = vadd.s32 %v2467, 4294967294
        %v2532 = vadd.s32 %v2468, 4294967294
        %v2533 = vadd.s32 %v2469, 4294967294
        %v2534 = vadd.s32 %v2470, 4294967294
        %v2535 = vadd.s32 %v2471, 4294967294
        %v2536 = vadd.s32 %v2472, 4294967294
        %v2537 = vadd.s32 %v2473, 4294967294
        %v2538 = vadd.s32 %v2474, 4294967294
        %v2539 = vadd.s32 %v2475, 4294967294
        %v2540 = vadd.s32 %v2476, 4294967294
        %v2541 = vadd.s32 %v2477, 4294967294
        %v2542 = vadd.s32 %v2478, 4294967294
        %v2543 = vadd.s32 %v2479, 4294967294
        %v2544 = vadd.s32 %v2480, 4294967294
        %v2545 = vadd.s32 %v2481, 4294967294
        %v2546 = vadd.s32 %v2482, 4294967294
        %v2547 = vadd.s32 %v2483, 4294967294
        %v2548 = vadd.s32 %v2484, 4294967294
        %v2549 = vadd.s32 %v2485, 4294967294
        %vm2550 = vcmp.ge.s32.totalorder %v2518, 0
        %vm2551 = vcmp.ge.s32.totalorder %v2519, 0
        %vm2552 = vcmp.ge.s32.totalorder %v2520, 0
        %vm2553 = vcmp.ge.s32.totalorder %v2521, 0
        %vm2554 = vcmp.ge.s32.totalorder %v2522, 0
        %vm2555 = vcmp.ge.s32.totalorder %v2523, 0
        %vm2556 = vcmp.ge.s32.totalorder %v2524, 0
        %vm2557 = vcmp.ge.s32.totalorder %v2525, 0
        %vm2558 = vcmp.ge.s32.totalorder %v2526, 0
        %vm2559 = vcmp.ge.s32.totalorder %v2527, 0
        %vm2560 = vcmp.ge.s32.totalorder %v2528, 0
        %vm2561 = vcmp.ge.s32.totalorder %v2529, 0
        %vm2562 = vcmp.ge.s32.totalorder %v2530, 0
        %vm2563 = vcmp.ge.s32.totalorder %v2531, 0
        %vm2564 = vcmp.ge.s32.totalorder %v2532, 0
        %vm2565 = vcmp.ge.s32.totalorder %v2533, 0
        %vm2566 = vcmp.ge.s32.totalorder %v2534, 0
        %vm2567 = vcmp.ge.s32.totalorder %v2535, 0
        %vm2568 = vcmp.ge.s32.totalorder %v2536, 0
        %vm2569 = vcmp.ge.s32.totalorder %v2537, 0
        %vm2570 = vcmp.ge.s32.totalorder %v2538, 0
        %vm2571 = vcmp.ge.s32.totalorder %v2539, 0
        %vm2572 = vcmp.ge.s32.totalorder %v2540, 0
        %vm2573 = vcmp.ge.s32.totalorder %v2541, 0
        %vm2574 = vcmp.ge.s32.totalorder %v2542, 0
        %vm2575 = vcmp.ge.s32.totalorder %v2543, 0
        %vm2576 = vcmp.ge.s32.totalorder %v2544, 0
        %vm2577 = vcmp.ge.s32.totalorder %v2545, 0
        %vm2578 = vcmp.ge.s32.totalorder %v2546, 0
        %vm2579 = vcmp.ge.s32.totalorder %v2547, 0
        %vm2580 = vcmp.ge.s32.totalorder %v2548, 0
        %vm2581 = vcmp.ge.s32.totalorder %v2549, 0
        %vm2582 = vcmp.lt.s32.totalorder %v2518, 16
        %vm2583 = vcmp.lt.s32.totalorder %v2519, 16
        %vm2584 = vcmp.lt.s32.totalorder %v2520, 16
        %vm2585 = vcmp.lt.s32.totalorder %v2521, 16
        %vm2586 = vcmp.lt.s32.totalorder %v2522, 16
        %vm2587 = vcmp.lt.s32.totalorder %v2523, 16
        %vm2588 = vcmp.lt.s32.totalorder %v2524, 16
        %vm2589 = vcmp.lt.s32.totalorder %v2525, 16
        %vm2590 = vcmp.lt.s32.totalorder %v2526, 16
        %vm2591 = vcmp.lt.s32.totalorder %v2527, 16
        %vm2592 = vcmp.lt.s32.totalorder %v2528, 16
        %vm2593 = vcmp.lt.s32.totalorder %v2529, 16
        %vm2594 = vcmp.lt.s32.totalorder %v2530, 16
        %vm2595 = vcmp.lt.s32.totalorder %v2531, 16
        %vm2596 = vcmp.lt.s32.totalorder %v2532, 16
        %vm2597 = vcmp.lt.s32.totalorder %v2533, 16
        %vm2598 = vcmp.lt.s32.totalorder %v2534, 16
        %vm2599 = vcmp.lt.s32.totalorder %v2535, 16
        %vm2600 = vcmp.lt.s32.totalorder %v2536, 16
        %vm2601 = vcmp.lt.s32.totalorder %v2537, 16
        %vm2602 = vcmp.lt.s32.totalorder %v2538, 16
        %vm2603 = vcmp.lt.s32.totalorder %v2539, 16
        %vm2604 = vcmp.lt.s32.totalorder %v2540, 16
        %vm2605 = vcmp.lt.s32.totalorder %v2541, 16
        %vm2606 = vcmp.lt.s32.totalorder %v2542, 16
        %vm2607 = vcmp.lt.s32.totalorder %v2543, 16
        %vm2608 = vcmp.lt.s32.totalorder %v2544, 16
        %vm2609 = vcmp.lt.s32.totalorder %v2545, 16
        %vm2610 = vcmp.lt.s32.totalorder %v2546, 16
        %vm2611 = vcmp.lt.s32.totalorder %v2547, 16
        %vm2612 = vcmp.lt.s32.totalorder %v2548, 16
        %vm2613 = vcmp.lt.s32.totalorder %v2549, 16
        %vm2614 = vmand %vm2550, %vm2582
        %vm2615 = vmand %vm2551, %vm2583
        %vm2616 = vmand %vm2552, %vm2584
        %vm2617 = vmand %vm2553, %vm2585
        %vm2618 = vmand %vm2554, %vm2586
        %vm2619 = vmand %vm2555, %vm2587
        %vm2620 = vmand %vm2556, %vm2588
        %vm2621 = vmand %vm2557, %vm2589
        %vm2622 = vmand %vm2558, %vm2590
        %vm2623 = vmand %vm2559, %vm2591
        %vm2624 = vmand %vm2560, %vm2592
        %vm2625 = vmand %vm2561, %vm2593
        %vm2626 = vmand %vm2562, %vm2594
        %vm2627 = vmand %vm2563, %vm2595
        %vm2628 = vmand %vm2564, %vm2596
        %vm2629 = vmand %vm2565, %vm2597
        %vm2630 = vmand %vm2566, %vm2598
        %vm2631 = vmand %vm2567, %vm2599
        %vm2632 = vmand %vm2568, %vm2600
        %vm2633 = vmand %vm2569, %vm2601
        %vm2634 = vmand %vm2570, %vm2602
        %vm2635 = vmand %vm2571, %vm2603
        %vm2636 = vmand %vm2572, %vm2604
        %vm2637 = vmand %vm2573, %vm2605
        %vm2638 = vmand %vm2574, %vm2606
        %vm2639 = vmand %vm2575, %vm2607
        %vm2640 = vmand %vm2576, %vm2608
        %vm2641 = vmand %vm2577, %vm2609
        %vm2642 = vmand %vm2578, %vm2610
        %vm2643 = vmand %vm2579, %vm2611
        %vm2644 = vmand %vm2580, %vm2612
        %vm2645 = vmand %vm2581, %vm2613
        %v2646 = vsel %vm2614, %v2486, 0.0
        %v2647 = vsel %vm2615, %v2487, 0.0
        %v2648 = vsel %vm2616, %v2488, 0.0
        %v2649 = vsel %vm2617, %v2489, 0.0
        %v2650 = vsel %vm2618, %v2490, 0.0
        %v2651 = vsel %vm2619, %v2491, 0.0
        %v2652 = vsel %vm2620, %v2492, 0.0
        %v2653 = vsel %vm2621, %v2493, 0.0
        %v2654 = vsel %vm2622, %v2494, 0.0
        %v2655 = vsel %vm2623, %v2495, 0.0
        %v2656 = vsel %vm2624, %v2496, 0.0
        %v2657 = vsel %vm2625, %v2497, 0.0
        %v2658 = vsel %vm2626, %v2498, 0.0
        %v2659 = vsel %vm2627, %v2499, 0.0
        %v2660 = vsel %vm2628, %v2500, 0.0
        %v2661 = vsel %vm2629, %v2501, 0.0
        %v2662 = vsel %vm2630, %v2502, 0.0
        %v2663 = vsel %vm2631, %v2503, 0.0
        %v2664 = vsel %vm2632, %v2504, 0.0
        %v2665 = vsel %vm2633, %v2505, 0.0
        %v2666 = vsel %vm2634, %v2506, 0.0
        %v2667 = vsel %vm2635, %v2507, 0.0
        %v2668 = vsel %vm2636, %v2508, 0.0
        %v2669 = vsel %vm2637, %v2509, 0.0
        %v2670 = vsel %vm2638, %v2510, 0.0
        %v2671 = vsel %vm2639, %v2511, 0.0
        %v2672 = vsel %vm2640, %v2512, 0.0
        %v2673 = vsel %vm2641, %v2513, 0.0
        %v2674 = vsel %vm2642, %v2514, 0.0
        %v2675 = vsel %vm2643, %v2515, 0.0
        %v2676 = vsel %vm2644, %v2516, 0.0
        %v2677 = vsel %vm2645, %v2517, 0.0
        %v2678 = vpack.c.bf16 %v2647, %v2646
        %v2679 = vpack.c.bf16 %v2649, %v2648
        %v2680 = vpack.c.bf16 %v2651, %v2650
        %v2681 = vpack.c.bf16 %v2653, %v2652
        %v2682 = vpack.c.bf16 %v2655, %v2654
        %v2683 = vpack.c.bf16 %v2657, %v2656
        %v2684 = vpack.c.bf16 %v2659, %v2658
        %v2685 = vpack.c.bf16 %v2661, %v2660
        %v2686 = vpack.c.bf16 %v2663, %v2662
        %v2687 = vpack.c.bf16 %v2665, %v2664
        %v2688 = vpack.c.bf16 %v2667, %v2666
        %v2689 = vpack.c.bf16 %v2669, %v2668
        %v2690 = vpack.c.bf16 %v2671, %v2670
        %v2691 = vpack.c.bf16 %v2673, %v2672
        %v2692 = vpack.c.bf16 %v2675, %v2674
        %v2693 = vpack.c.bf16 %v2677, %v2676
        %v2694 = vld [vmem:[%s10] sm:$0xf]
        %v2695 = vld [vmem:[%s10 + $0x4] sm:$0xf]
        %v2696 = vld [vmem:[%s10 + $0x8] sm:$0xf]
        %v2697 = vld [vmem:[%s10 + $0xc] sm:$0xf]
        %v2698 = vld [vmem:[%s10 + $0x10] sm:$0xf]
        %v2699 = vld [vmem:[%s10 + $0x14] sm:$0xf]
        %v2700 = vld [vmem:[%s10 + $0x18] sm:$0xf]
        %v2701 = vld [vmem:[%s10 + $0x1c] sm:$0xf]
        %v2702 = vld [vmem:[%s10 + $0x20] sm:$0xf]
        %v2703 = vld [vmem:[%s10 + $0x24] sm:$0xf]
        %v2704 = vld [vmem:[%s10 + $0x28] sm:$0xf]
        %v2705 = vld [vmem:[%s10 + $0x2c] sm:$0xf]
        %v2706 = vld [vmem:[%s10 + $0x30] sm:$0xf]
        %v2707 = vld [vmem:[%s10 + $0x34] sm:$0xf]
        %v2708 = vld [vmem:[%s10 + $0x38] sm:$0xf]
        %v2709 = vld [vmem:[%s10 + $0x3c] sm:$0xf]
        %v2710 = vld [vmem:[#allocation2 + $0x8] sm:$0xff]
        %v2711 = vld [vmem:[#allocation2 + $0x10] sm:$0xff]
        %v2712 = vld [vmem:[#allocation2 + $0x18] sm:$0xff]
        %v2713 = vld [vmem:[#allocation2 + $0x20] sm:$0xff]
        %v2714 = vld [vmem:[#allocation2 + $0x28] sm:$0xff]
        %v2715 = vld [vmem:[#allocation2 + $0x30] sm:$0xff]
        %v2716 = vld [vmem:[#allocation2 + $0x38] sm:$0xff]
        %v2717 = vld [vmem:[#allocation2 + $0x40] sm:$0xff]
        %v2718 = vld [vmem:[#allocation2 + $0x48] sm:$0xff]
        %v2719 = vld [vmem:[#allocation2 + $0x50] sm:$0xff]
        %v2720 = vld [vmem:[#allocation2 + $0x58] sm:$0xff]
        %v2721 = vld [vmem:[#allocation2 + $0x60] sm:$0xff]
        %v2722 = vld [vmem:[#allocation2 + $0x68] sm:$0xff]
        %v2723 = vld [vmem:[#allocation2 + $0x70] sm:$0xff]
        %v2724 = vld [vmem:[#allocation2 + $0x78] sm:$0xff]
        %v2725 = vld [vmem:[#allocation2 + $0x80] sm:$0xff]
        %v2726 = vld [vmem:[#allocation2 + $0x88] sm:$0xff]
        %v2727 = vld [vmem:[#allocation2 + $0x90] sm:$0xff]
        %v2728 = vld [vmem:[#allocation2 + $0x98] sm:$0xff]
        %v2729 = vld [vmem:[#allocation2 + $0xa0] sm:$0xff]
        %v2730 = vld [vmem:[#allocation2 + $0xa8] sm:$0xff]
        %v2731 = vld [vmem:[#allocation2 + $0xb0] sm:$0xff]
        %v2732 = vld [vmem:[#allocation2 + $0xb8] sm:$0xff]
        %v2733 = vld [vmem:[#allocation2 + $0xc0] sm:$0xff]
        %v2734 = vld [vmem:[#allocation2 + $0xc8] sm:$0xff]
        %v2735 = vld [vmem:[#allocation2 + $0xd0] sm:$0xff]
        %v2736 = vld [vmem:[#allocation2 + $0xd8] sm:$0xff]
        %v2737 = vld [vmem:[#allocation2 + $0xe0] sm:$0xff]
        %v2738 = vld [vmem:[#allocation2 + $0xe8] sm:$0xff]
        %v2739 = vld [vmem:[#allocation2 + $0xf0] sm:$0xff]
        %v2740 = vld [vmem:[#allocation2 + $0xf8] sm:$0xff]
        %v2741 = vld [vmem:[#allocation2 + $0x100] sm:$0xff]
        %v2742 = vpack.c.bf16 %v2711, %v2710
        %v2743 = vpack.c.bf16 %v2713, %v2712
        %v2744 = vpack.c.bf16 %v2715, %v2714
        %v2745 = vpack.c.bf16 %v2717, %v2716
        %v2746 = vpack.c.bf16 %v2719, %v2718
        %v2747 = vpack.c.bf16 %v2721, %v2720
        %v2748 = vpack.c.bf16 %v2723, %v2722
        %v2749 = vpack.c.bf16 %v2725, %v2724
        %v2750 = vpack.c.bf16 %v2727, %v2726
        %v2751 = vpack.c.bf16 %v2729, %v2728
        %v2752 = vpack.c.bf16 %v2731, %v2730
        %v2753 = vpack.c.bf16 %v2733, %v2732
        %v2754 = vpack.c.bf16 %v2735, %v2734
        %v2755 = vpack.c.bf16 %v2737, %v2736
        %v2756 = vpack.c.bf16 %v2739, %v2738
        %v2757 = vpack.c.bf16 %v2741, %v2740
        %s2758 = scalar_lea.vmem %s10, 64
        %v2759 = vld [vmem:[%s2758] sm:$0xf]
        %v2760 = vld [vmem:[%s2758 + $0x4] sm:$0xf]
        %v2761 = vld [vmem:[%s2758 + $0x8] sm:$0xf]
        %v2762 = vld [vmem:[%s2758 + $0xc] sm:$0xf]
        %v2763 = vld [vmem:[%s2758 + $0x10] sm:$0xf]
        %v2764 = vld [vmem:[%s2758 + $0x14] sm:$0xf]
        %v2765 = vld [vmem:[%s2758 + $0x18] sm:$0xf]
        %v2766 = vld [vmem:[%s2758 + $0x1c] sm:$0xf]
        %v2767 = vld [vmem:[%s2758 + $0x20] sm:$0xf]
        %v2768 = vld [vmem:[%s2758 + $0x24] sm:$0xf]
        %v2769 = vld [vmem:[%s2758 + $0x28] sm:$0xf]
        %v2770 = vld [vmem:[%s2758 + $0x2c] sm:$0xf]
        %v2771 = vld [vmem:[%s2758 + $0x30] sm:$0xf]
        %v2772 = vld [vmem:[%s2758 + $0x34] sm:$0xf]
        %v2773 = vld [vmem:[%s2758 + $0x38] sm:$0xf]
        %v2774 = vld [vmem:[%s2758 + $0x3c] sm:$0xf]
        %v2791 = vunpack.c.l.b16 %v2759
        %v2792 = vunpack.c.l.b16 %v2760
        %v2793 = vunpack.c.l.b16 %v2761
        %v2794 = vunpack.c.l.b16 %v2762
        %v2795 = vunpack.c.l.b16 %v2763
        %v2796 = vunpack.c.l.b16 %v2764
        %v2797 = vunpack.c.l.b16 %v2765
        %v2798 = vunpack.c.l.b16 %v2766
        %v2799 = vunpack.c.l.b16 %v2767
        %v2800 = vunpack.c.l.b16 %v2768
        %v2801 = vunpack.c.l.b16 %v2769
        %v2802 = vunpack.c.l.b16 %v2770
        %v2803 = vunpack.c.l.b16 %v2771
        %v2804 = vunpack.c.l.b16 %v2772
        %v2805 = vunpack.c.l.b16 %v2773
        %v2806 = vunpack.c.l.b16 %v2774
        %v2807 = vpack.c.b16 %v2792, %v2791
        %v2808 = vpack.c.b16 %v2794, %v2793
        %v2809 = vpack.c.b16 %v2796, %v2795
        %v2810 = vpack.c.b16 %v2798, %v2797
        %v2811 = vpack.c.b16 %v2800, %v2799
        %v2812 = vpack.c.b16 %v2802, %v2801
        %v2813 = vpack.c.b16 %v2804, %v2803
        %v2814 = vpack.c.b16 %v2806, %v2805
        %2823 = vmatprep.subr.bf16.mxu0 0
        %2824 = vmatpush1.bf16.msra.mxu0 %v2814
        %2825 = vmatprep.subr.bf16.mxu0 0
        %2826 = vmatpush1.bf16.msra.mxu0 %v2813
        %2827 = vmatprep.subr.bf16.mxu0 0
        %2828 = vmatpush1.bf16.msra.mxu0 %v2812
        %2829 = vmatprep.subr.bf16.mxu0 0
        %2830 = vmatpush1.bf16.msra.mxu0 %v2811
        %2831 = vmatprep.subr.bf16.mxu0 0
        %2832 = vmatpush1.bf16.msra.mxu0 %v2810
        %2833 = vmatprep.subr.bf16.mxu0 0
        %2834 = vmatpush1.bf16.msra.mxu0 %v2809
        %2835 = vmatprep.subr.bf16.mxu0 0
        %2836 = vmatpush1.bf16.msra.mxu0 %v2808
        %2837 = vmatprep.subr.bf16.mxu0 0
        %2838 = vmatpush1.bf16.msra.mxu0 %v2807
        %2839 = vmatprep.subr.bf16.mxu0 0
        %2840 = vmatpush2.bf16.msra.mxu0 0
        %2841 = vmatprep.subr.bf16.mxu0 0
        %2842 = vmatpush2.bf16.msra.mxu0 0
        %2843 = vmatprep.subr.bf16.mxu0 0
        %2844 = vmatpush2.bf16.msra.mxu0 0
        %2845 = vmatprep.subr.bf16.mxu0 0
        %2846 = vmatpush2.bf16.msra.mxu0 0
        %2847 = vmatprep.subr.bf16.mxu0 0
        %2848 = vmatpush2.bf16.msra.mxu0 0
        %2849 = vmatprep.subr.bf16.mxu0 0
        %2850 = vmatpush2.bf16.msra.mxu0 0
        %2851 = vmatprep.subr.bf16.mxu0 0
        %2852 = vmatpush2.bf16.msra.mxu0 0
        %2853 = vmatprep.subr.bf16.mxu0 0
        %2854 = vmatpush2.bf16.msra.mxu0 0
        %2855 = vmatprep.mubr.bf16.mxu0 0
        %2856 = vmatmul.mubr.bf16.gmra.mxu0 %v2742
        %v2857 = vpop.f32.mrf.mxu0
        %v2858 = vadd.f32 0.0, %v2857
        %v2859 = vpop.f32.mrf.mxu0
        %v2860 = vpop.f32.mrf.mxu0
        %v2861 = vadd.f32 0.0, %v2860
        %v2862 = vpop.f32.mrf.mxu0
        %2863 = vmatprep.mubr.bf16.mxu0 0
        %2864 = vmatmul.mubr.bf16.gmra.mxu0 %v2743
        %v2865 = vpop.f32.mrf.mxu0
        %v2866 = vadd.f32 0.0, %v2865
        %v2867 = vpop.f32.mrf.mxu0
        %v2868 = vpop.f32.mrf.mxu0
        %v2869 = vadd.f32 0.0, %v2868
        %v2870 = vpop.f32.mrf.mxu0
        %2871 = vmatprep.mubr.bf16.mxu0 0
        %2872 = vmatmul.mubr.bf16.gmra.mxu0 %v2744
        %v2873 = vpop.f32.mrf.mxu0
        %v2874 = vadd.f32 0.0, %v2873
        %v2875 = vpop.f32.mrf.mxu0
        %v2876 = vpop.f32.mrf.mxu0
        %v2877 = vadd.f32 0.0, %v2876
        %v2878 = vpop.f32.mrf.mxu0
        %2879 = vmatprep.mubr.bf16.mxu0 0
        %2880 = vmatmul.mubr.bf16.gmra.mxu0 %v2745
        %v2881 = vpop.f32.mrf.mxu0
        %v2882 = vadd.f32 0.0, %v2881
        %v2883 = vpop.f32.mrf.mxu0
        %v2884 = vpop.f32.mrf.mxu0
        %v2885 = vadd.f32 0.0, %v2884
        %v2886 = vpop.f32.mrf.mxu0
        %2887 = vmatprep.mubr.bf16.mxu0 0
        %2888 = vmatmul.mubr.bf16.gmra.mxu0 %v2746
        %v2889 = vpop.f32.mrf.mxu0
        %v2890 = vadd.f32 0.0, %v2889
        %v2891 = vpop.f32.mrf.mxu0
        %v2892 = vpop.f32.mrf.mxu0
        %v2893 = vadd.f32 0.0, %v2892
        %v2894 = vpop.f32.mrf.mxu0
        %2895 = vmatprep.mubr.bf16.mxu0 0
        %2896 = vmatmul.mubr.bf16.gmra.mxu0 %v2747
        %v2897 = vpop.f32.mrf.mxu0
        %v2898 = vadd.f32 0.0, %v2897
        %v2899 = vpop.f32.mrf.mxu0
        %v2900 = vpop.f32.mrf.mxu0
        %v2901 = vadd.f32 0.0, %v2900
        %v2902 = vpop.f32.mrf.mxu0
        %2903 = vmatprep.mubr.bf16.mxu0 0
        %2904 = vmatmul.mubr.bf16.gmra.mxu0 %v2748
        %v2905 = vpop.f32.mrf.mxu0
        %v2906 = vadd.f32 0.0, %v2905
        %v2907 = vpop.f32.mrf.mxu0
        %v2908 = vpop.f32.mrf.mxu0
        %v2909 = vadd.f32 0.0, %v2908
        %v2910 = vpop.f32.mrf.mxu0
        %2911 = vmatprep.mubr.bf16.mxu0 0
        %2912 = vmatmul.mubr.bf16.gmra.mxu0 %v2749
        %v2913 = vpop.f32.mrf.mxu0
        %v2914 = vadd.f32 0.0, %v2913
        %v2915 = vpop.f32.mrf.mxu0
        %v2916 = vpop.f32.mrf.mxu0
        %v2917 = vadd.f32 0.0, %v2916
        %v2918 = vpop.f32.mrf.mxu0
        %2919 = vmatprep.mubr.bf16.mxu0 0
        %2920 = vmatmul.mubr.bf16.gmra.mxu0 %v2750
        %v2921 = vpop.f32.mrf.mxu0
        %v2922 = vadd.f32 0.0, %v2921
        %v2923 = vpop.f32.mrf.mxu0
        %v2924 = vpop.f32.mrf.mxu0
        %v2925 = vadd.f32 0.0, %v2924
        %v2926 = vpop.f32.mrf.mxu0
        %2927 = vmatprep.mubr.bf16.mxu0 0
        %2928 = vmatmul.mubr.bf16.gmra.mxu0 %v2751
        %v2929 = vpop.f32.mrf.mxu0
        %v2930 = vadd.f32 0.0, %v2929
        %v2931 = vpop.f32.mrf.mxu0
        %v2932 = vpop.f32.mrf.mxu0
        %v2933 = vadd.f32 0.0, %v2932
        %v2934 = vpop.f32.mrf.mxu0
        %2935 = vmatprep.mubr.bf16.mxu0 0
        %2936 = vmatmul.mubr.bf16.gmra.mxu0 %v2752
        %v2937 = vpop.f32.mrf.mxu0
        %v2938 = vadd.f32 0.0, %v2937
        %v2939 = vpop.f32.mrf.mxu0
        %v2940 = vpop.f32.mrf.mxu0
        %v2941 = vadd.f32 0.0, %v2940
        %v2942 = vpop.f32.mrf.mxu0
        %2943 = vmatprep.mubr.bf16.mxu0 0
        %2944 = vmatmul.mubr.bf16.gmra.mxu0 %v2753
        %v2945 = vpop.f32.mrf.mxu0
        %v2946 = vadd.f32 0.0, %v2945
        %v2947 = vpop.f32.mrf.mxu0
        %v2948 = vpop.f32.mrf.mxu0
        %v2949 = vadd.f32 0.0, %v2948
        %v2950 = vpop.f32.mrf.mxu0
        %2951 = vmatprep.mubr.bf16.mxu0 0
        %2952 = vmatmul.mubr.bf16.gmra.mxu0 %v2754
        %v2953 = vpop.f32.mrf.mxu0
        %v2954 = vadd.f32 0.0, %v2953
        %v2955 = vpop.f32.mrf.mxu0
        %v2956 = vpop.f32.mrf.mxu0
        %v2957 = vadd.f32 0.0, %v2956
        %v2958 = vpop.f32.mrf.mxu0
        %2959 = vmatprep.mubr.bf16.mxu0 0
        %2960 = vmatmul.mubr.bf16.gmra.mxu0 %v2755
        %v2961 = vpop.f32.mrf.mxu0
        %v2962 = vadd.f32 0.0, %v2961
        %v2963 = vpop.f32.mrf.mxu0
        %v2964 = vpop.f32.mrf.mxu0
        %v2965 = vadd.f32 0.0, %v2964
        %v2966 = vpop.f32.mrf.mxu0
        %2967 = vmatprep.mubr.bf16.mxu0 0
        %2968 = vmatmul.mubr.bf16.gmra.mxu0 %v2756
        %v2969 = vpop.f32.mrf.mxu0
        %v2970 = vadd.f32 0.0, %v2969
        %v2971 = vpop.f32.mrf.mxu0
        %v2972 = vpop.f32.mrf.mxu0
        %v2973 = vadd.f32 0.0, %v2972
        %v2974 = vpop.f32.mrf.mxu0
        %2975 = vmatprep.mubr.bf16.mxu0 0
        %2976 = vmatmul.mubr.bf16.gmra.mxu0 %v2757
        %v2977 = vpop.f32.mrf.mxu0
        %v2978 = vadd.f32 0.0, %v2977
        %v2979 = vpop.f32.mrf.mxu0
        %v2980 = vpop.f32.mrf.mxu0
        %v2981 = vadd.f32 0.0, %v2980
        %v2982 = vpop.f32.mrf.mxu0
        %2983 = vdwg.mxu0
        %v3000 = vunpack.c.l.b16 %v2694
        %v3001 = vunpack.c.l.b16 %v2695
        %v3002 = vunpack.c.l.b16 %v2696
        %v3003 = vunpack.c.l.b16 %v2697
        %v3004 = vunpack.c.l.b16 %v2698
        %v3005 = vunpack.c.l.b16 %v2699
        %v3006 = vunpack.c.l.b16 %v2700
        %v3007 = vunpack.c.l.b16 %v2701
        %v3008 = vunpack.c.l.b16 %v2702
        %v3009 = vunpack.c.l.b16 %v2703
        %v3010 = vunpack.c.l.b16 %v2704
        %v3011 = vunpack.c.l.b16 %v2705
        %v3012 = vunpack.c.l.b16 %v2706
        %v3013 = vunpack.c.l.b16 %v2707
        %v3014 = vunpack.c.l.b16 %v2708
        %v3015 = vunpack.c.l.b16 %v2709
        %v3016 = vpack.c.b16 %v3001, %v3000
        %v3017 = vpack.c.b16 %v3003, %v3002
        %v3018 = vpack.c.b16 %v3005, %v3004
        %v3019 = vpack.c.b16 %v3007, %v3006
        %v3020 = vpack.c.b16 %v3009, %v3008
        %v3021 = vpack.c.b16 %v3011, %v3010
        %v3022 = vpack.c.b16 %v3013, %v3012
        %v3023 = vpack.c.b16 %v3015, %v3014
        %3032 = vmatprep.subr.bf16.mxu0 0
        %3033 = vmatpush1.bf16.msra.mxu0 %v3023
        %3034 = vmatprep.subr.bf16.mxu0 0
        %3035 = vmatpush1.bf16.msra.mxu0 %v3022
        %3036 = vmatprep.subr.bf16.mxu0 0
        %3037 = vmatpush1.bf16.msra.mxu0 %v3021
        %3038 = vmatprep.subr.bf16.mxu0 0
        %3039 = vmatpush1.bf16.msra.mxu0 %v3020
        %3040 = vmatprep.subr.bf16.mxu0 0
        %3041 = vmatpush1.bf16.msra.mxu0 %v3019
        %3042 = vmatprep.subr.bf16.mxu0 0
        %3043 = vmatpush1.bf16.msra.mxu0 %v3018
        %3044 = vmatprep.subr.bf16.mxu0 0
        %3045 = vmatpush1.bf16.msra.mxu0 %v3017
        %3046 = vmatprep.subr.bf16.mxu0 0
        %3047 = vmatpush1.bf16.msra.mxu0 %v3016
        %3048 = vmatprep.subr.bf16.mxu0 0
        %3049 = vmatpush2.bf16.msra.mxu0 0
        %3050 = vmatprep.subr.bf16.mxu0 0
        %3051 = vmatpush2.bf16.msra.mxu0 0
        %3052 = vmatprep.subr.bf16.mxu0 0
        %3053 = vmatpush2.bf16.msra.mxu0 0
        %3054 = vmatprep.subr.bf16.mxu0 0
        %3055 = vmatpush2.bf16.msra.mxu0 0
        %3056 = vmatprep.subr.bf16.mxu0 0
        %3057 = vmatpush2.bf16.msra.mxu0 0
        %3058 = vmatprep.subr.bf16.mxu0 0
        %3059 = vmatpush2.bf16.msra.mxu0 0
        %3060 = vmatprep.subr.bf16.mxu0 0
        %3061 = vmatpush2.bf16.msra.mxu0 0
        %3062 = vmatprep.subr.bf16.mxu0 0
        %3063 = vmatpush2.bf16.msra.mxu0 0
        %3064 = vmatprep.mubr.bf16.mxu0 0
        %3065 = vmatmul.mubr.bf16.gmra.mxu0 %v2678
        %v3066 = vpop.f32.mrf.mxu0
        %v3067 = vadd.f32 %v2858, %v3066
        %v3068 = vpop.f32.mrf.mxu0
        %v3069 = vpop.f32.mrf.mxu0
        %v3070 = vadd.f32 %v2861, %v3069
        %v3071 = vpop.f32.mrf.mxu0
        %3072 = vmatprep.mubr.bf16.mxu0 0
        %3073 = vmatmul.mubr.bf16.gmra.mxu0 %v2679
        %v3074 = vpop.f32.mrf.mxu0
        %v3075 = vadd.f32 %v2866, %v3074
        %v3076 = vpop.f32.mrf.mxu0
        %v3077 = vpop.f32.mrf.mxu0
        %v3078 = vadd.f32 %v2869, %v3077
        %v3079 = vpop.f32.mrf.mxu0
        %3080 = vmatprep.mubr.bf16.mxu0 0
        %3081 = vmatmul.mubr.bf16.gmra.mxu0 %v2680
        %v3082 = vpop.f32.mrf.mxu0
        %v3083 = vadd.f32 %v2874, %v3082
        %v3084 = vpop.f32.mrf.mxu0
        %v3085 = vpop.f32.mrf.mxu0
        %v3086 = vadd.f32 %v2877, %v3085
        %v3087 = vpop.f32.mrf.mxu0
        %3088 = vmatprep.mubr.bf16.mxu0 0
        %3089 = vmatmul.mubr.bf16.gmra.mxu0 %v2681
        %v3090 = vpop.f32.mrf.mxu0
        %v3091 = vadd.f32 %v2882, %v3090
        %v3092 = vpop.f32.mrf.mxu0
        %v3093 = vpop.f32.mrf.mxu0
        %v3094 = vadd.f32 %v2885, %v3093
        %v3095 = vpop.f32.mrf.mxu0
        %3096 = vmatprep.mubr.bf16.mxu0 0
        %3097 = vmatmul.mubr.bf16.gmra.mxu0 %v2682
        %v3098 = vpop.f32.mrf.mxu0
        %v3099 = vadd.f32 %v2890, %v3098
        %v3100 = vpop.f32.mrf.mxu0
        %v3101 = vpop.f32.mrf.mxu0
        %v3102 = vadd.f32 %v2893, %v3101
        %v3103 = vpop.f32.mrf.mxu0
        %3104 = vmatprep.mubr.bf16.mxu0 0
        %3105 = vmatmul.mubr.bf16.gmra.mxu0 %v2683
        %v3106 = vpop.f32.mrf.mxu0
        %v3107 = vadd.f32 %v2898, %v3106
        %v3108 = vpop.f32.mrf.mxu0
        %v3109 = vpop.f32.mrf.mxu0
        %v3110 = vadd.f32 %v2901, %v3109
        %v3111 = vpop.f32.mrf.mxu0
        %3112 = vmatprep.mubr.bf16.mxu0 0
        %3113 = vmatmul.mubr.bf16.gmra.mxu0 %v2684
        %v3114 = vpop.f32.mrf.mxu0
        %v3115 = vadd.f32 %v2906, %v3114
        %v3116 = vpop.f32.mrf.mxu0
        %v3117 = vpop.f32.mrf.mxu0
        %v3118 = vadd.f32 %v2909, %v3117
        %v3119 = vpop.f32.mrf.mxu0
        %3120 = vmatprep.mubr.bf16.mxu0 0
        %3121 = vmatmul.mubr.bf16.gmra.mxu0 %v2685
        %v3122 = vpop.f32.mrf.mxu0
        %v3123 = vadd.f32 %v2914, %v3122
        %v3124 = vpop.f32.mrf.mxu0
        %v3125 = vpop.f32.mrf.mxu0
        %v3126 = vadd.f32 %v2917, %v3125
        %v3127 = vpop.f32.mrf.mxu0
        %3128 = vmatprep.mubr.bf16.mxu0 0
        %3129 = vmatmul.mubr.bf16.gmra.mxu0 %v2686
        %v3130 = vpop.f32.mrf.mxu0
        %v3131 = vadd.f32 %v2922, %v3130
        %v3132 = vpop.f32.mrf.mxu0
        %v3133 = vpop.f32.mrf.mxu0
        %v3134 = vadd.f32 %v2925, %v3133
        %v3135 = vpop.f32.mrf.mxu0
        %3136 = vmatprep.mubr.bf16.mxu0 0
        %3137 = vmatmul.mubr.bf16.gmra.mxu0 %v2687
        %v3138 = vpop.f32.mrf.mxu0
        %v3139 = vadd.f32 %v2930, %v3138
        %v3140 = vpop.f32.mrf.mxu0
        %v3141 = vpop.f32.mrf.mxu0
        %v3142 = vadd.f32 %v2933, %v3141
        %v3143 = vpop.f32.mrf.mxu0
        %3144 = vmatprep.mubr.bf16.mxu0 0
        %3145 = vmatmul.mubr.bf16.gmra.mxu0 %v2688
        %v3146 = vpop.f32.mrf.mxu0
        %v3147 = vadd.f32 %v2938, %v3146
        %v3148 = vpop.f32.mrf.mxu0
        %v3149 = vpop.f32.mrf.mxu0
        %v3150 = vadd.f32 %v2941, %v3149
        %v3151 = vpop.f32.mrf.mxu0
        %3152 = vmatprep.mubr.bf16.mxu0 0
        %3153 = vmatmul.mubr.bf16.gmra.mxu0 %v2689
        %v3154 = vpop.f32.mrf.mxu0
        %v3155 = vadd.f32 %v2946, %v3154
        %v3156 = vpop.f32.mrf.mxu0
        %v3157 = vpop.f32.mrf.mxu0
        %v3158 = vadd.f32 %v2949, %v3157
        %v3159 = vpop.f32.mrf.mxu0
        %3160 = vmatprep.mubr.bf16.mxu0 0
        %3161 = vmatmul.mubr.bf16.gmra.mxu0 %v2690
        %v3162 = vpop.f32.mrf.mxu0
        %v3163 = vadd.f32 %v2954, %v3162
        %v3164 = vpop.f32.mrf.mxu0
        %v3165 = vpop.f32.mrf.mxu0
        %v3166 = vadd.f32 %v2957, %v3165
        %v3167 = vpop.f32.mrf.mxu0
        %3168 = vmatprep.mubr.bf16.mxu0 0
        %3169 = vmatmul.mubr.bf16.gmra.mxu0 %v2691
        %v3170 = vpop.f32.mrf.mxu0
        %v3171 = vadd.f32 %v2962, %v3170
        %v3172 = vpop.f32.mrf.mxu0
        %v3173 = vpop.f32.mrf.mxu0
        %v3174 = vadd.f32 %v2965, %v3173
        %v3175 = vpop.f32.mrf.mxu0
        %3176 = vmatprep.mubr.bf16.mxu0 0
        %3177 = vmatmul.mubr.bf16.gmra.mxu0 %v2692
        %v3178 = vpop.f32.mrf.mxu0
        %v3179 = vadd.f32 %v2970, %v3178
        %v3180 = vpop.f32.mrf.mxu0
        %v3181 = vpop.f32.mrf.mxu0
        %v3182 = vadd.f32 %v2973, %v3181
        %v3183 = vpop.f32.mrf.mxu0
        %3184 = vmatprep.mubr.bf16.mxu0 0
        %3185 = vmatmul.mubr.bf16.gmra.mxu0 %v2693
        %v3186 = vpop.f32.mrf.mxu0
        %v3187 = vadd.f32 %v2978, %v3186
        %v3188 = vpop.f32.mrf.mxu0
        %v3189 = vpop.f32.mrf.mxu0
        %v3190 = vadd.f32 %v2981, %v3189
        %v3191 = vpop.f32.mrf.mxu0
        %3192 = vdwg.mxu0
        %v3193 = vld [vmem:[#allocation2 + $0xa] sm:$0xff]
        %v3194 = vld [vmem:[#allocation2 + $0x12] sm:$0xff]
        %v3195 = vld [vmem:[#allocation2 + $0x1a] sm:$0xff]
        %v3196 = vld [vmem:[#allocation2 + $0x22] sm:$0xff]
        %v3197 = vld [vmem:[#allocation2 + $0x2a] sm:$0xff]
        %v3198 = vld [vmem:[#allocation2 + $0x32] sm:$0xff]
        %v3199 = vld [vmem:[#allocation2 + $0x3a] sm:$0xff]
        %v3200 = vld [vmem:[#allocation2 + $0x42] sm:$0xff]
        %v3201 = vld [vmem:[#allocation2 + $0x4a] sm:$0xff]
        %v3202 = vld [vmem:[#allocation2 + $0x52] sm:$0xff]
        %v3203 = vld [vmem:[#allocation2 + $0x5a] sm:$0xff]
        %v3204 = vld [vmem:[#allocation2 + $0x62] sm:$0xff]
        %v3205 = vld [vmem:[#allocation2 + $0x6a] sm:$0xff]
        %v3206 = vld [vmem:[#allocation2 + $0x72] sm:$0xff]
        %v3207 = vld [vmem:[#allocation2 + $0x7a] sm:$0xff]
        %v3208 = vld [vmem:[#allocation2 + $0x82] sm:$0xff]
        %v3209 = vld [vmem:[#allocation2 + $0x8a] sm:$0xff]
        %v3210 = vld [vmem:[#allocation2 + $0x92] sm:$0xff]
        %v3211 = vld [vmem:[#allocation2 + $0x9a] sm:$0xff]
        %v3212 = vld [vmem:[#allocation2 + $0xa2] sm:$0xff]
        %v3213 = vld [vmem:[#allocation2 + $0xaa] sm:$0xff]
        %v3214 = vld [vmem:[#allocation2 + $0xb2] sm:$0xff]
        %v3215 = vld [vmem:[#allocation2 + $0xba] sm:$0xff]
        %v3216 = vld [vmem:[#allocation2 + $0xc2] sm:$0xff]
        %v3217 = vld [vmem:[#allocation2 + $0xca] sm:$0xff]
        %v3218 = vld [vmem:[#allocation2 + $0xd2] sm:$0xff]
        %v3219 = vld [vmem:[#allocation2 + $0xda] sm:$0xff]
        %v3220 = vld [vmem:[#allocation2 + $0xe2] sm:$0xff]
        %v3221 = vld [vmem:[#allocation2 + $0xea] sm:$0xff]
        %v3222 = vld [vmem:[#allocation2 + $0xf2] sm:$0xff]
        %v3223 = vld [vmem:[#allocation2 + $0xfa] sm:$0xff]
        %v3224 = vld [vmem:[#allocation2 + $0x102] sm:$0xff]
        %v3225 = vadd.s32 %v2454, 2
        %v3226 = vadd.s32 %v2455, 2
        %v3227 = vadd.s32 %v2456, 2
        %v3228 = vadd.s32 %v2457, 2
        %v3229 = vadd.s32 %v2458, 2
        %v3230 = vadd.s32 %v2459, 2
        %v3231 = vadd.s32 %v2460, 2
        %v3232 = vadd.s32 %v2461, 2
        %v3233 = vadd.s32 %v2462, 2
        %v3234 = vadd.s32 %v2463, 2
        %v3235 = vadd.s32 %v2464, 2
        %v3236 = vadd.s32 %v2465, 2
        %v3237 = vadd.s32 %v2466, 2
        %v3238 = vadd.s32 %v2467, 2
        %v3239 = vadd.s32 %v2468, 2
        %v3240 = vadd.s32 %v2469, 2
        %v3241 = vadd.s32 %v2470, 2
        %v3242 = vadd.s32 %v2471, 2
        %v3243 = vadd.s32 %v2472, 2
        %v3244 = vadd.s32 %v2473, 2
        %v3245 = vadd.s32 %v2474, 2
        %v3246 = vadd.s32 %v2475, 2
        %v3247 = vadd.s32 %v2476, 2
        %v3248 = vadd.s32 %v2477, 2
        %v3249 = vadd.s32 %v2478, 2
        %v3250 = vadd.s32 %v2479, 2
        %v3251 = vadd.s32 %v2480, 2
        %v3252 = vadd.s32 %v2481, 2
        %v3253 = vadd.s32 %v2482, 2
        %v3254 = vadd.s32 %v2483, 2
        %v3255 = vadd.s32 %v2484, 2
        %v3256 = vadd.s32 %v2485, 2
        %vm3257 = vcmp.ge.s32.totalorder %v3225, 0
        %vm3258 = vcmp.ge.s32.totalorder %v3226, 0
        %vm3259 = vcmp.ge.s32.totalorder %v3227, 0
        %vm3260 = vcmp.ge.s32.totalorder %v3228, 0
        %vm3261 = vcmp.ge.s32.totalorder %v3229, 0
        %vm3262 = vcmp.ge.s32.totalorder %v3230, 0
        %vm3263 = vcmp.ge.s32.totalorder %v3231, 0
        %vm3264 = vcmp.ge.s32.totalorder %v3232, 0
        %vm3265 = vcmp.ge.s32.totalorder %v3233, 0
        %vm3266 = vcmp.ge.s32.totalorder %v3234, 0
        %vm3267 = vcmp.ge.s32.totalorder %v3235, 0
        %vm3268 = vcmp.ge.s32.totalorder %v3236, 0
        %vm3269 = vcmp.ge.s32.totalorder %v3237, 0
        %vm3270 = vcmp.ge.s32.totalorder %v3238, 0
        %vm3271 = vcmp.ge.s32.totalorder %v3239, 0
        %vm3272 = vcmp.ge.s32.totalorder %v3240, 0
        %vm3273 = vcmp.ge.s32.totalorder %v3241, 0
        %vm3274 = vcmp.ge.s32.totalorder %v3242, 0
        %vm3275 = vcmp.ge.s32.totalorder %v3243, 0
        %vm3276 = vcmp.ge.s32.totalorder %v3244, 0
        %vm3277 = vcmp.ge.s32.totalorder %v3245, 0
        %vm3278 = vcmp.ge.s32.totalorder %v3246, 0
        %vm3279 = vcmp.ge.s32.totalorder %v3247, 0
        %vm3280 = vcmp.ge.s32.totalorder %v3248, 0
        %vm3281 = vcmp.ge.s32.totalorder %v3249, 0
        %vm3282 = vcmp.ge.s32.totalorder %v3250, 0
        %vm3283 = vcmp.ge.s32.totalorder %v3251, 0
        %vm3284 = vcmp.ge.s32.totalorder %v3252, 0
        %vm3285 = vcmp.ge.s32.totalorder %v3253, 0
        %vm3286 = vcmp.ge.s32.totalorder %v3254, 0
        %vm3287 = vcmp.ge.s32.totalorder %v3255, 0
        %vm3288 = vcmp.ge.s32.totalorder %v3256, 0
        %vm3289 = vcmp.lt.s32.totalorder %v3225, 16
        %vm3290 = vcmp.lt.s32.totalorder %v3226, 16
        %vm3291 = vcmp.lt.s32.totalorder %v3227, 16
        %vm3292 = vcmp.lt.s32.totalorder %v3228, 16
        %vm3293 = vcmp.lt.s32.totalorder %v3229, 16
        %vm3294 = vcmp.lt.s32.totalorder %v3230, 16
        %vm3295 = vcmp.lt.s32.totalorder %v3231, 16
        %vm3296 = vcmp.lt.s32.totalorder %v3232, 16
        %vm3297 = vcmp.lt.s32.totalorder %v3233, 16
        %vm3298 = vcmp.lt.s32.totalorder %v3234, 16
        %vm3299 = vcmp.lt.s32.totalorder %v3235, 16
        %vm3300 = vcmp.lt.s32.totalorder %v3236, 16
        %vm3301 = vcmp.lt.s32.totalorder %v3237, 16
        %vm3302 = vcmp.lt.s32.totalorder %v3238, 16
        %vm3303 = vcmp.lt.s32.totalorder %v3239, 16
        %vm3304 = vcmp.lt.s32.totalorder %v3240, 16
        %vm3305 = vcmp.lt.s32.totalorder %v3241, 16
        %vm3306 = vcmp.lt.s32.totalorder %v3242, 16
        %vm3307 = vcmp.lt.s32.totalorder %v3243, 16
        %vm3308 = vcmp.lt.s32.totalorder %v3244, 16
        %vm3309 = vcmp.lt.s32.totalorder %v3245, 16
        %vm3310 = vcmp.lt.s32.totalorder %v3246, 16
        %vm3311 = vcmp.lt.s32.totalorder %v3247, 16
        %vm3312 = vcmp.lt.s32.totalorder %v3248, 16
        %vm3313 = vcmp.lt.s32.totalorder %v3249, 16
        %vm3314 = vcmp.lt.s32.totalorder %v3250, 16
        %vm3315 = vcmp.lt.s32.totalorder %v3251, 16
        %vm3316 = vcmp.lt.s32.totalorder %v3252, 16
        %vm3317 = vcmp.lt.s32.totalorder %v3253, 16
        %vm3318 = vcmp.lt.s32.totalorder %v3254, 16
        %vm3319 = vcmp.lt.s32.totalorder %v3255, 16
        %vm3320 = vcmp.lt.s32.totalorder %v3256, 16
        %vm3321 = vmand %vm3257, %vm3289
        %vm3322 = vmand %vm3258, %vm3290
        %vm3323 = vmand %vm3259, %vm3291
        %vm3324 = vmand %vm3260, %vm3292
        %vm3325 = vmand %vm3261, %vm3293
        %vm3326 = vmand %vm3262, %vm3294
        %vm3327 = vmand %vm3263, %vm3295
        %vm3328 = vmand %vm3264, %vm3296
        %vm3329 = vmand %vm3265, %vm3297
        %vm3330 = vmand %vm3266, %vm3298
        %vm3331 = vmand %vm3267, %vm3299
        %vm3332 = vmand %vm3268, %vm3300
        %vm3333 = vmand %vm3269, %vm3301
        %vm3334 = vmand %vm3270, %vm3302
        %vm3335 = vmand %vm3271, %vm3303
        %vm3336 = vmand %vm3272, %vm3304
        %vm3337 = vmand %vm3273, %vm3305
        %vm3338 = vmand %vm3274, %vm3306
        %vm3339 = vmand %vm3275, %vm3307
        %vm3340 = vmand %vm3276, %vm3308
        %vm3341 = vmand %vm3277, %vm3309
        %vm3342 = vmand %vm3278, %vm3310
        %vm3343 = vmand %vm3279, %vm3311
        %vm3344 = vmand %vm3280, %vm3312
        %vm3345 = vmand %vm3281, %vm3313
        %vm3346 = vmand %vm3282, %vm3314
        %vm3347 = vmand %vm3283, %vm3315
        %vm3348 = vmand %vm3284, %vm3316
        %vm3349 = vmand %vm3285, %vm3317
        %vm3350 = vmand %vm3286, %vm3318
        %vm3351 = vmand %vm3287, %vm3319
        %vm3352 = vmand %vm3288, %vm3320
        %v3353 = vsel %vm3321, %v3193, 0.0
        %v3354 = vsel %vm3322, %v3194, 0.0
        %v3355 = vsel %vm3323, %v3195, 0.0
        %v3356 = vsel %vm3324, %v3196, 0.0
        %v3357 = vsel %vm3325, %v3197, 0.0
        %v3358 = vsel %vm3326, %v3198, 0.0
        %v3359 = vsel %vm3327, %v3199, 0.0
        %v3360 = vsel %vm3328, %v3200, 0.0
        %v3361 = vsel %vm3329, %v3201, 0.0
        %v3362 = vsel %vm3330, %v3202, 0.0
        %v3363 = vsel %vm3331, %v3203, 0.0
        %v3364 = vsel %vm3332, %v3204, 0.0
        %v3365 = vsel %vm3333, %v3205, 0.0
        %v3366 = vsel %vm3334, %v3206, 0.0
        %v3367 = vsel %vm3335, %v3207, 0.0
        %v3368 = vsel %vm3336, %v3208, 0.0
        %v3369 = vsel %vm3337, %v3209, 0.0
        %v3370 = vsel %vm3338, %v3210, 0.0
        %v3371 = vsel %vm3339, %v3211, 0.0
        %v3372 = vsel %vm3340, %v3212, 0.0
        %v3373 = vsel %vm3341, %v3213, 0.0
        %v3374 = vsel %vm3342, %v3214, 0.0
        %v3375 = vsel %vm3343, %v3215, 0.0
        %v3376 = vsel %vm3344, %v3216, 0.0
        %v3377 = vsel %vm3345, %v3217, 0.0
        %v3378 = vsel %vm3346, %v3218, 0.0
        %v3379 = vsel %vm3347, %v3219, 0.0
        %v3380 = vsel %vm3348, %v3220, 0.0
        %v3381 = vsel %vm3349, %v3221, 0.0
        %v3382 = vsel %vm3350, %v3222, 0.0
        %v3383 = vsel %vm3351, %v3223, 0.0
        %v3384 = vsel %vm3352, %v3224, 0.0
        %v3385 = vpack.c.bf16 %v3354, %v3353
        %v3386 = vpack.c.bf16 %v3356, %v3355
        %v3387 = vpack.c.bf16 %v3358, %v3357
        %v3388 = vpack.c.bf16 %v3360, %v3359
        %v3389 = vpack.c.bf16 %v3362, %v3361
        %v3390 = vpack.c.bf16 %v3364, %v3363
        %v3391 = vpack.c.bf16 %v3366, %v3365
        %v3392 = vpack.c.bf16 %v3368, %v3367
        %v3393 = vpack.c.bf16 %v3370, %v3369
        %v3394 = vpack.c.bf16 %v3372, %v3371
        %v3395 = vpack.c.bf16 %v3374, %v3373
        %v3396 = vpack.c.bf16 %v3376, %v3375
        %v3397 = vpack.c.bf16 %v3378, %v3377
        %v3398 = vpack.c.bf16 %v3380, %v3379
        %v3399 = vpack.c.bf16 %v3382, %v3381
        %v3400 = vpack.c.bf16 %v3384, %v3383
        %s3401 = scalar_lea.vmem %s10, 128
        %v3402 = vld [vmem:[%s3401] sm:$0xf]
        %v3403 = vld [vmem:[%s3401 + $0x4] sm:$0xf]
        %v3404 = vld [vmem:[%s3401 + $0x8] sm:$0xf]
        %v3405 = vld [vmem:[%s3401 + $0xc] sm:$0xf]
        %v3406 = vld [vmem:[%s3401 + $0x10] sm:$0xf]
        %v3407 = vld [vmem:[%s3401 + $0x14] sm:$0xf]
        %v3408 = vld [vmem:[%s3401 + $0x18] sm:$0xf]
        %v3409 = vld [vmem:[%s3401 + $0x1c] sm:$0xf]
        %v3410 = vld [vmem:[%s3401 + $0x20] sm:$0xf]
        %v3411 = vld [vmem:[%s3401 + $0x24] sm:$0xf]
        %v3412 = vld [vmem:[%s3401 + $0x28] sm:$0xf]
        %v3413 = vld [vmem:[%s3401 + $0x2c] sm:$0xf]
        %v3414 = vld [vmem:[%s3401 + $0x30] sm:$0xf]
        %v3415 = vld [vmem:[%s3401 + $0x34] sm:$0xf]
        %v3416 = vld [vmem:[%s3401 + $0x38] sm:$0xf]
        %v3417 = vld [vmem:[%s3401 + $0x3c] sm:$0xf]
        %v3434 = vunpack.c.l.b16 %v3402
        %v3435 = vunpack.c.l.b16 %v3403
        %v3436 = vunpack.c.l.b16 %v3404
        %v3437 = vunpack.c.l.b16 %v3405
        %v3438 = vunpack.c.l.b16 %v3406
        %v3439 = vunpack.c.l.b16 %v3407
        %v3440 = vunpack.c.l.b16 %v3408
        %v3441 = vunpack.c.l.b16 %v3409
        %v3442 = vunpack.c.l.b16 %v3410
        %v3443 = vunpack.c.l.b16 %v3411
        %v3444 = vunpack.c.l.b16 %v3412
        %v3445 = vunpack.c.l.b16 %v3413
        %v3446 = vunpack.c.l.b16 %v3414
        %v3447 = vunpack.c.l.b16 %v3415
        %v3448 = vunpack.c.l.b16 %v3416
        %v3449 = vunpack.c.l.b16 %v3417
        %v3450 = vpack.c.b16 %v3435, %v3434
        %v3451 = vpack.c.b16 %v3437, %v3436
        %v3452 = vpack.c.b16 %v3439, %v3438
        %v3453 = vpack.c.b16 %v3441, %v3440
        %v3454 = vpack.c.b16 %v3443, %v3442
        %v3455 = vpack.c.b16 %v3445, %v3444
        %v3456 = vpack.c.b16 %v3447, %v3446
        %v3457 = vpack.c.b16 %v3449, %v3448
        %3466 = vmatprep.subr.bf16.mxu0 0
        %3467 = vmatpush1.bf16.msra.mxu0 %v3457
        %3468 = vmatprep.subr.bf16.mxu0 0
        %3469 = vmatpush1.bf16.msra.mxu0 %v3456
        %3470 = vmatprep.subr.bf16.mxu0 0
        %3471 = vmatpush1.bf16.msra.mxu0 %v3455
        %3472 = vmatprep.subr.bf16.mxu0 0
        %3473 = vmatpush1.bf16.msra.mxu0 %v3454
        %3474 = vmatprep.subr.bf16.mxu0 0
        %3475 = vmatpush1.bf16.msra.mxu0 %v3453
        %3476 = vmatprep.subr.bf16.mxu0 0
        %3477 = vmatpush1.bf16.msra.mxu0 %v3452
        %3478 = vmatprep.subr.bf16.mxu0 0
        %3479 = vmatpush1.bf16.msra.mxu0 %v3451
        %3480 = vmatprep.subr.bf16.mxu0 0
        %3481 = vmatpush1.bf16.msra.mxu0 %v3450
        %3482 = vmatprep.subr.bf16.mxu0 0
        %3483 = vmatpush2.bf16.msra.mxu0 0
        %3484 = vmatprep.subr.bf16.mxu0 0
        %3485 = vmatpush2.bf16.msra.mxu0 0
        %3486 = vmatprep.subr.bf16.mxu0 0
        %3487 = vmatpush2.bf16.msra.mxu0 0
        %3488 = vmatprep.subr.bf16.mxu0 0
        %3489 = vmatpush2.bf16.msra.mxu0 0
        %3490 = vmatprep.subr.bf16.mxu0 0
        %3491 = vmatpush2.bf16.msra.mxu0 0
        %3492 = vmatprep.subr.bf16.mxu0 0
        %3493 = vmatpush2.bf16.msra.mxu0 0
        %3494 = vmatprep.subr.bf16.mxu0 0
        %3495 = vmatpush2.bf16.msra.mxu0 0
        %3496 = vmatprep.subr.bf16.mxu0 0
        %3497 = vmatpush2.bf16.msra.mxu0 0
        %3498 = vmatprep.mubr.bf16.mxu0 0
        %3499 = vmatmul.mubr.bf16.gmra.mxu0 %v3385
        %v3500 = vpop.f32.mrf.mxu0
        %v3501 = vadd.f32 0.0, %v3500
        %v3502 = vpop.f32.mrf.mxu0
        %v3503 = vpop.f32.mrf.mxu0
        %v3504 = vadd.f32 0.0, %v3503
        %v3505 = vpop.f32.mrf.mxu0
        %3506 = vmatprep.mubr.bf16.mxu0 0
        %3507 = vmatmul.mubr.bf16.gmra.mxu0 %v3386
        %v3508 = vpop.f32.mrf.mxu0
        %v3509 = vadd.f32 0.0, %v3508
        %v3510 = vpop.f32.mrf.mxu0
        %v3511 = vpop.f32.mrf.mxu0
        %v3512 = vadd.f32 0.0, %v3511
        %v3513 = vpop.f32.mrf.mxu0
        %3514 = vmatprep.mubr.bf16.mxu0 0
        %3515 = vmatmul.mubr.bf16.gmra.mxu0 %v3387
        %v3516 = vpop.f32.mrf.mxu0
        %v3517 = vadd.f32 0.0, %v3516
        %v3518 = vpop.f32.mrf.mxu0
        %v3519 = vpop.f32.mrf.mxu0
        %v3520 = vadd.f32 0.0, %v3519
        %v3521 = vpop.f32.mrf.mxu0
        %3522 = vmatprep.mubr.bf16.mxu0 0
        %3523 = vmatmul.mubr.bf16.gmra.mxu0 %v3388
        %v3524 = vpop.f32.mrf.mxu0
        %v3525 = vadd.f32 0.0, %v3524
        %v3526 = vpop.f32.mrf.mxu0
        %v3527 = vpop.f32.mrf.mxu0
        %v3528 = vadd.f32 0.0, %v3527
        %v3529 = vpop.f32.mrf.mxu0
        %3530 = vmatprep.mubr.bf16.mxu0 0
        %3531 = vmatmul.mubr.bf16.gmra.mxu0 %v3389
        %v3532 = vpop.f32.mrf.mxu0
        %v3533 = vadd.f32 0.0, %v3532
        %v3534 = vpop.f32.mrf.mxu0
        %v3535 = vpop.f32.mrf.mxu0
        %v3536 = vadd.f32 0.0, %v3535
        %v3537 = vpop.f32.mrf.mxu0
        %3538 = vmatprep.mubr.bf16.mxu0 0
        %3539 = vmatmul.mubr.bf16.gmra.mxu0 %v3390
        %v3540 = vpop.f32.mrf.mxu0
        %v3541 = vadd.f32 0.0, %v3540
        %v3542 = vpop.f32.mrf.mxu0
        %v3543 = vpop.f32.mrf.mxu0
        %v3544 = vadd.f32 0.0, %v3543
        %v3545 = vpop.f32.mrf.mxu0
        %3546 = vmatprep.mubr.bf16.mxu0 0
        %3547 = vmatmul.mubr.bf16.gmra.mxu0 %v3391
        %v3548 = vpop.f32.mrf.mxu0
        %v3549 = vadd.f32 0.0, %v3548
        %v3550 = vpop.f32.mrf.mxu0
        %v3551 = vpop.f32.mrf.mxu0
        %v3552 = vadd.f32 0.0, %v3551
        %v3553 = vpop.f32.mrf.mxu0
        %3554 = vmatprep.mubr.bf16.mxu0 0
        %3555 = vmatmul.mubr.bf16.gmra.mxu0 %v3392
        %v3556 = vpop.f32.mrf.mxu0
        %v3557 = vadd.f32 0.0, %v3556
        %v3558 = vpop.f32.mrf.mxu0
        %v3559 = vpop.f32.mrf.mxu0
        %v3560 = vadd.f32 0.0, %v3559
        %v3561 = vpop.f32.mrf.mxu0
        %3562 = vmatprep.mubr.bf16.mxu0 0
        %3563 = vmatmul.mubr.bf16.gmra.mxu0 %v3393
        %v3564 = vpop.f32.mrf.mxu0
        %v3565 = vadd.f32 0.0, %v3564
        %v3566 = vpop.f32.mrf.mxu0
        %v3567 = vpop.f32.mrf.mxu0
        %v3568 = vadd.f32 0.0, %v3567
        %v3569 = vpop.f32.mrf.mxu0
        %3570 = vmatprep.mubr.bf16.mxu0 0
        %3571 = vmatmul.mubr.bf16.gmra.mxu0 %v3394
        %v3572 = vpop.f32.mrf.mxu0
        %v3573 = vadd.f32 0.0, %v3572
        %v3574 = vpop.f32.mrf.mxu0
        %v3575 = vpop.f32.mrf.mxu0
        %v3576 = vadd.f32 0.0, %v3575
        %v3577 = vpop.f32.mrf.mxu0
        %3578 = vmatprep.mubr.bf16.mxu0 0
        %3579 = vmatmul.mubr.bf16.gmra.mxu0 %v3395
        %v3580 = vpop.f32.mrf.mxu0
        %v3581 = vadd.f32 0.0, %v3580
        %v3582 = vpop.f32.mrf.mxu0
        %v3583 = vpop.f32.mrf.mxu0
        %v3584 = vadd.f32 0.0, %v3583
        %v3585 = vpop.f32.mrf.mxu0
        %3586 = vmatprep.mubr.bf16.mxu0 0
        %3587 = vmatmul.mubr.bf16.gmra.mxu0 %v3396
        %v3588 = vpop.f32.mrf.mxu0
        %v3589 = vadd.f32 0.0, %v3588
        %v3590 = vpop.f32.mrf.mxu0
        %v3591 = vpop.f32.mrf.mxu0
        %v3592 = vadd.f32 0.0, %v3591
        %v3593 = vpop.f32.mrf.mxu0
        %3594 = vmatprep.mubr.bf16.mxu0 0
        %3595 = vmatmul.mubr.bf16.gmra.mxu0 %v3397
        %v3596 = vpop.f32.mrf.mxu0
        %v3597 = vadd.f32 0.0, %v3596
        %v3598 = vpop.f32.mrf.mxu0
        %v3599 = vpop.f32.mrf.mxu0
        %v3600 = vadd.f32 0.0, %v3599
        %v3601 = vpop.f32.mrf.mxu0
        %3602 = vmatprep.mubr.bf16.mxu0 0
        %3603 = vmatmul.mubr.bf16.gmra.mxu0 %v3398
        %v3604 = vpop.f32.mrf.mxu0
        %v3605 = vadd.f32 0.0, %v3604
        %v3606 = vpop.f32.mrf.mxu0
        %v3607 = vpop.f32.mrf.mxu0
        %v3608 = vadd.f32 0.0, %v3607
        %v3609 = vpop.f32.mrf.mxu0
        %3610 = vmatprep.mubr.bf16.mxu0 0
        %3611 = vmatmul.mubr.bf16.gmra.mxu0 %v3399
        %v3612 = vpop.f32.mrf.mxu0
        %v3613 = vadd.f32 0.0, %v3612
        %v3614 = vpop.f32.mrf.mxu0
        %v3615 = vpop.f32.mrf.mxu0
        %v3616 = vadd.f32 0.0, %v3615
        %v3617 = vpop.f32.mrf.mxu0
        %3618 = vmatprep.mubr.bf16.mxu0 0
        %3619 = vmatmul.mubr.bf16.gmra.mxu0 %v3400
        %v3620 = vpop.f32.mrf.mxu0
        %v3621 = vadd.f32 0.0, %v3620
        %v3622 = vpop.f32.mrf.mxu0
        %v3623 = vpop.f32.mrf.mxu0
        %v3624 = vadd.f32 0.0, %v3623
        %v3625 = vpop.f32.mrf.mxu0
        %3626 = vdwg.mxu0
        %v3627 = vadd.f32 %v3067, %v3501
        %v3628 = vadd.f32 %v3070, %v3504
        %v3629 = vadd.f32 %v3075, %v3509
        %v3630 = vadd.f32 %v3078, %v3512
        %v3631 = vadd.f32 %v3083, %v3517
        %v3632 = vadd.f32 %v3086, %v3520
        %v3633 = vadd.f32 %v3091, %v3525
        %v3634 = vadd.f32 %v3094, %v3528
        %v3635 = vadd.f32 %v3099, %v3533
        %v3636 = vadd.f32 %v3102, %v3536
        %v3637 = vadd.f32 %v3107, %v3541
        %v3638 = vadd.f32 %v3110, %v3544
        %v3639 = vadd.f32 %v3115, %v3549
        %v3640 = vadd.f32 %v3118, %v3552
        %v3641 = vadd.f32 %v3123, %v3557
        %v3642 = vadd.f32 %v3126, %v3560
        %v3643 = vadd.f32 %v3131, %v3565
        %v3644 = vadd.f32 %v3134, %v3568
        %v3645 = vadd.f32 %v3139, %v3573
        %v3646 = vadd.f32 %v3142, %v3576
        %v3647 = vadd.f32 %v3147, %v3581
        %v3648 = vadd.f32 %v3150, %v3584
        %v3649 = vadd.f32 %v3155, %v3589
        %v3650 = vadd.f32 %v3158, %v3592
        %v3651 = vadd.f32 %v3163, %v3597
        %v3652 = vadd.f32 %v3166, %v3600
        %v3653 = vadd.f32 %v3171, %v3605
        %v3654 = vadd.f32 %v3174, %v3608
        %v3655 = vadd.f32 %v3179, %v3613
        %v3656 = vadd.f32 %v3182, %v3616
        %v3657 = vadd.f32 %v3187, %v3621
        %v3658 = vadd.f32 %v3190, %v3624
        %v3659 = vld [vmem:[#allocation2 + $0x26] sm:$0xff]
        %v3660 = vld [vmem:[#allocation2 + $0x2e] sm:$0xff]
        %v3661 = vld [vmem:[#allocation2 + $0x36] sm:$0xff]
        %v3662 = vld [vmem:[#allocation2 + $0x3e] sm:$0xff]
        %v3663 = vld [vmem:[#allocation2 + $0x46] sm:$0xff]
        %v3664 = vld [vmem:[#allocation2 + $0x4e] sm:$0xff]
        %v3665 = vld [vmem:[#allocation2 + $0x56] sm:$0xff]
        %v3666 = vld [vmem:[#allocation2 + $0x5e] sm:$0xff]
        %v3667 = vld [vmem:[#allocation2 + $0x66] sm:$0xff]
        %v3668 = vld [vmem:[#allocation2 + $0x6e] sm:$0xff]
        %v3669 = vld [vmem:[#allocation2 + $0x76] sm:$0xff]
        %v3670 = vld [vmem:[#allocation2 + $0x7e] sm:$0xff]
        %v3671 = vld [vmem:[#allocation2 + $0x86] sm:$0xff]
        %v3672 = vld [vmem:[#allocation2 + $0x8e] sm:$0xff]
        %v3673 = vld [vmem:[#allocation2 + $0x96] sm:$0xff]
        %v3674 = vld [vmem:[#allocation2 + $0x9e] sm:$0xff]
        %v3675 = vld [vmem:[#allocation2 + $0xa6] sm:$0xff]
        %v3676 = vld [vmem:[#allocation2 + $0xae] sm:$0xff]
        %v3677 = vld [vmem:[#allocation2 + $0xb6] sm:$0xff]
        %v3678 = vld [vmem:[#allocation2 + $0xbe] sm:$0xff]
        %v3679 = vld [vmem:[#allocation2 + $0xc6] sm:$0xff]
        %v3680 = vld [vmem:[#allocation2 + $0xce] sm:$0xff]
        %v3681 = vld [vmem:[#allocation2 + $0xd6] sm:$0xff]
        %v3682 = vld [vmem:[#allocation2 + $0xde] sm:$0xff]
        %v3683 = vld [vmem:[#allocation2 + $0xe6] sm:$0xff]
        %v3684 = vld [vmem:[#allocation2 + $0xee] sm:$0xff]
        %v3685 = vld [vmem:[#allocation2 + $0xf6] sm:$0xff]
        %v3686 = vld [vmem:[#allocation2 + $0xfe] sm:$0xff]
        %v3687 = vld [vmem:[#allocation2 + $0x106] sm:$0xff]
        %v3688 = vld [vmem:[#allocation2 + $0x10e] sm:$0xff]
        %v3689 = vld [vmem:[#allocation2 + $0x116] sm:$0xff]
        %v3690 = vld [vmem:[#allocation2 + $0x11e] sm:$0xff]
        %v3691 = vsel %vm2614, %v3659, 0.0
        %v3692 = vsel %vm2615, %v3660, 0.0
        %v3693 = vsel %vm2616, %v3661, 0.0
        %v3694 = vsel %vm2617, %v3662, 0.0
        %v3695 = vsel %vm2618, %v3663, 0.0
        %v3696 = vsel %vm2619, %v3664, 0.0
        %v3697 = vsel %vm2620, %v3665, 0.0
        %v3698 = vsel %vm2621, %v3666, 0.0
        %v3699 = vsel %vm2622, %v3667, 0.0
        %v3700 = vsel %vm2623, %v3668, 0.0
        %v3701 = vsel %vm2624, %v3669, 0.0
        %v3702 = vsel %vm2625, %v3670, 0.0
        %v3703 = vsel %vm2626, %v3671, 0.0
        %v3704 = vsel %vm2627, %v3672, 0.0
        %v3705 = vsel %vm2628, %v3673, 0.0
        %v3706 = vsel %vm2629, %v3674, 0.0
        %v3707 = vsel %vm2630, %v3675, 0.0
        %v3708 = vsel %vm2631, %v3676, 0.0
        %v3709 = vsel %vm2632, %v3677, 0.0
        %v3710 = vsel %vm2633, %v3678, 0.0
        %v3711 = vsel %vm2634, %v3679, 0.0
        %v3712 = vsel %vm2635, %v3680, 0.0
        %v3713 = vsel %vm2636, %v3681, 0.0
        %v3714 = vsel %vm2637, %v3682, 0.0
        %v3715 = vsel %vm2638, %v3683, 0.0
        %v3716 = vsel %vm2639, %v3684, 0.0
        %v3717 = vsel %vm2640, %v3685, 0.0
        %v3718 = vsel %vm2641, %v3686, 0.0
        %v3719 = vsel %vm2642, %v3687, 0.0
        %v3720 = vsel %vm2643, %v3688, 0.0
        %v3721 = vsel %vm2644, %v3689, 0.0
        %v3722 = vsel %vm2645, %v3690, 0.0
        %v3723 = vpack.c.bf16 %v3692, %v3691
        %v3724 = vpack.c.bf16 %v3694, %v3693
        %v3725 = vpack.c.bf16 %v3696, %v3695
        %v3726 = vpack.c.bf16 %v3698, %v3697
        %v3727 = vpack.c.bf16 %v3700, %v3699
        %v3728 = vpack.c.bf16 %v3702, %v3701
        %v3729 = vpack.c.bf16 %v3704, %v3703
        %v3730 = vpack.c.bf16 %v3706, %v3705
        %v3731 = vpack.c.bf16 %v3708, %v3707
        %v3732 = vpack.c.bf16 %v3710, %v3709
        %v3733 = vpack.c.bf16 %v3712, %v3711
        %v3734 = vpack.c.bf16 %v3714, %v3713
        %v3735 = vpack.c.bf16 %v3716, %v3715
        %v3736 = vpack.c.bf16 %v3718, %v3717
        %v3737 = vpack.c.bf16 %v3720, %v3719
        %v3738 = vpack.c.bf16 %v3722, %v3721
        %s3739 = scalar_lea.vmem %s10, 192
        %v3740 = vld [vmem:[%s3739] sm:$0xf]
        %v3741 = vld [vmem:[%s3739 + $0x4] sm:$0xf]
        %v3742 = vld [vmem:[%s3739 + $0x8] sm:$0xf]
        %v3743 = vld [vmem:[%s3739 + $0xc] sm:$0xf]
        %v3744 = vld [vmem:[%s3739 + $0x10] sm:$0xf]
        %v3745 = vld [vmem:[%s3739 + $0x14] sm:$0xf]
        %v3746 = vld [vmem:[%s3739 + $0x18] sm:$0xf]
        %v3747 = vld [vmem:[%s3739 + $0x1c] sm:$0xf]
        %v3748 = vld [vmem:[%s3739 + $0x20] sm:$0xf]
        %v3749 = vld [vmem:[%s3739 + $0x24] sm:$0xf]
        %v3750 = vld [vmem:[%s3739 + $0x28] sm:$0xf]
        %v3751 = vld [vmem:[%s3739 + $0x2c] sm:$0xf]
        %v3752 = vld [vmem:[%s3739 + $0x30] sm:$0xf]
        %v3753 = vld [vmem:[%s3739 + $0x34] sm:$0xf]
        %v3754 = vld [vmem:[%s3739 + $0x38] sm:$0xf]
        %v3755 = vld [vmem:[%s3739 + $0x3c] sm:$0xf]
        %v3772 = vunpack.c.l.b16 %v3740
        %v3773 = vunpack.c.l.b16 %v3741
        %v3774 = vunpack.c.l.b16 %v3742
        %v3775 = vunpack.c.l.b16 %v3743
        %v3776 = vunpack.c.l.b16 %v3744
        %v3777 = vunpack.c.l.b16 %v3745
        %v3778 = vunpack.c.l.b16 %v3746
        %v3779 = vunpack.c.l.b16 %v3747
        %v3780 = vunpack.c.l.b16 %v3748
        %v3781 = vunpack.c.l.b16 %v3749
        %v3782 = vunpack.c.l.b16 %v3750
        %v3783 = vunpack.c.l.b16 %v3751
        %v3784 = vunpack.c.l.b16 %v3752
        %v3785 = vunpack.c.l.b16 %v3753
        %v3786 = vunpack.c.l.b16 %v3754
        %v3787 = vunpack.c.l.b16 %v3755
        %v3788 = vpack.c.b16 %v3773, %v3772
        %v3789 = vpack.c.b16 %v3775, %v3774
        %v3790 = vpack.c.b16 %v3777, %v3776
        %v3791 = vpack.c.b16 %v3779, %v3778
        %v3792 = vpack.c.b16 %v3781, %v3780
        %v3793 = vpack.c.b16 %v3783, %v3782
        %v3794 = vpack.c.b16 %v3785, %v3784
        %v3795 = vpack.c.b16 %v3787, %v3786
        %3804 = vmatprep.subr.bf16.mxu0 0
        %3805 = vmatpush1.bf16.msra.mxu0 %v3795
        %3806 = vmatprep.subr.bf16.mxu0 0
        %3807 = vmatpush1.bf16.msra.mxu0 %v3794
        %3808 = vmatprep.subr.bf16.mxu0 0
        %3809 = vmatpush1.bf16.msra.mxu0 %v3793
        %3810 = vmatprep.subr.bf16.mxu0 0
        %3811 = vmatpush1.bf16.msra.mxu0 %v3792
        %3812 = vmatprep.subr.bf16.mxu0 0
        %3813 = vmatpush1.bf16.msra.mxu0 %v3791
        %3814 = vmatprep.subr.bf16.mxu0 0
        %3815 = vmatpush1.bf16.msra.mxu0 %v3790
        %3816 = vmatprep.subr.bf16.mxu0 0
        %3817 = vmatpush1.bf16.msra.mxu0 %v3789
        %3818 = vmatprep.subr.bf16.mxu0 0
        %3819 = vmatpush1.bf16.msra.mxu0 %v3788
        %3820 = vmatprep.subr.bf16.mxu0 0
        %3821 = vmatpush2.bf16.msra.mxu0 0
        %3822 = vmatprep.subr.bf16.mxu0 0
        %3823 = vmatpush2.bf16.msra.mxu0 0
        %3824 = vmatprep.subr.bf16.mxu0 0
        %3825 = vmatpush2.bf16.msra.mxu0 0
        %3826 = vmatprep.subr.bf16.mxu0 0
        %3827 = vmatpush2.bf16.msra.mxu0 0
        %3828 = vmatprep.subr.bf16.mxu0 0
        %3829 = vmatpush2.bf16.msra.mxu0 0
        %3830 = vmatprep.subr.bf16.mxu0 0
        %3831 = vmatpush2.bf16.msra.mxu0 0
        %3832 = vmatprep.subr.bf16.mxu0 0
        %3833 = vmatpush2.bf16.msra.mxu0 0
        %3834 = vmatprep.subr.bf16.mxu0 0
        %3835 = vmatpush2.bf16.msra.mxu0 0
        %3836 = vmatprep.mubr.bf16.mxu0 0
        %3837 = vmatmul.mubr.bf16.gmra.mxu0 %v3723
        %v3838 = vpop.f32.mrf.mxu0
        %v3839 = vadd.f32 0.0, %v3838
        %v3840 = vpop.f32.mrf.mxu0
        %v3841 = vpop.f32.mrf.mxu0
        %v3842 = vadd.f32 0.0, %v3841
        %v3843 = vpop.f32.mrf.mxu0
        %3844 = vmatprep.mubr.bf16.mxu0 0
        %3845 = vmatmul.mubr.bf16.gmra.mxu0 %v3724
        %v3846 = vpop.f32.mrf.mxu0
        %v3847 = vadd.f32 0.0, %v3846
        %v3848 = vpop.f32.mrf.mxu0
        %v3849 = vpop.f32.mrf.mxu0
        %v3850 = vadd.f32 0.0, %v3849
        %v3851 = vpop.f32.mrf.mxu0
        %3852 = vmatprep.mubr.bf16.mxu0 0
        %3853 = vmatmul.mubr.bf16.gmra.mxu0 %v3725
        %v3854 = vpop.f32.mrf.mxu0
        %v3855 = vadd.f32 0.0, %v3854
        %v3856 = vpop.f32.mrf.mxu0
        %v3857 = vpop.f32.mrf.mxu0
        %v3858 = vadd.f32 0.0, %v3857
        %v3859 = vpop.f32.mrf.mxu0
        %3860 = vmatprep.mubr.bf16.mxu0 0
        %3861 = vmatmul.mubr.bf16.gmra.mxu0 %v3726
        %v3862 = vpop.f32.mrf.mxu0
        %v3863 = vadd.f32 0.0, %v3862
        %v3864 = vpop.f32.mrf.mxu0
        %v3865 = vpop.f32.mrf.mxu0
        %v3866 = vadd.f32 0.0, %v3865
        %v3867 = vpop.f32.mrf.mxu0
        %3868 = vmatprep.mubr.bf16.mxu0 0
        %3869 = vmatmul.mubr.bf16.gmra.mxu0 %v3727
        %v3870 = vpop.f32.mrf.mxu0
        %v3871 = vadd.f32 0.0, %v3870
        %v3872 = vpop.f32.mrf.mxu0
        %v3873 = vpop.f32.mrf.mxu0
        %v3874 = vadd.f32 0.0, %v3873
        %v3875 = vpop.f32.mrf.mxu0
        %3876 = vmatprep.mubr.bf16.mxu0 0
        %3877 = vmatmul.mubr.bf16.gmra.mxu0 %v3728
        %v3878 = vpop.f32.mrf.mxu0
        %v3879 = vadd.f32 0.0, %v3878
        %v3880 = vpop.f32.mrf.mxu0
        %v3881 = vpop.f32.mrf.mxu0
        %v3882 = vadd.f32 0.0, %v3881
        %v3883 = vpop.f32.mrf.mxu0
        %3884 = vmatprep.mubr.bf16.mxu0 0
        %3885 = vmatmul.mubr.bf16.gmra.mxu0 %v3729
        %v3886 = vpop.f32.mrf.mxu0
        %v3887 = vadd.f32 0.0, %v3886
        %v3888 = vpop.f32.mrf.mxu0
        %v3889 = vpop.f32.mrf.mxu0
        %v3890 = vadd.f32 0.0, %v3889
        %v3891 = vpop.f32.mrf.mxu0
        %3892 = vmatprep.mubr.bf16.mxu0 0
        %3893 = vmatmul.mubr.bf16.gmra.mxu0 %v3730
        %v3894 = vpop.f32.mrf.mxu0
        %v3895 = vadd.f32 0.0, %v3894
        %v3896 = vpop.f32.mrf.mxu0
        %v3897 = vpop.f32.mrf.mxu0
        %v3898 = vadd.f32 0.0, %v3897
        %v3899 = vpop.f32.mrf.mxu0
        %3900 = vmatprep.mubr.bf16.mxu0 0
        %3901 = vmatmul.mubr.bf16.gmra.mxu0 %v3731
        %v3902 = vpop.f32.mrf.mxu0
        %v3903 = vadd.f32 0.0, %v3902
        %v3904 = vpop.f32.mrf.mxu0
        %v3905 = vpop.f32.mrf.mxu0
        %v3906 = vadd.f32 0.0, %v3905
        %v3907 = vpop.f32.mrf.mxu0
        %3908 = vmatprep.mubr.bf16.mxu0 0
        %3909 = vmatmul.mubr.bf16.gmra.mxu0 %v3732
        %v3910 = vpop.f32.mrf.mxu0
        %v3911 = vadd.f32 0.0, %v3910
        %v3912 = vpop.f32.mrf.mxu0
        %v3913 = vpop.f32.mrf.mxu0
        %v3914 = vadd.f32 0.0, %v3913
        %v3915 = vpop.f32.mrf.mxu0
        %3916 = vmatprep.mubr.bf16.mxu0 0
        %3917 = vmatmul.mubr.bf16.gmra.mxu0 %v3733
        %v3918 = vpop.f32.mrf.mxu0
        %v3919 = vadd.f32 0.0, %v3918
        %v3920 = vpop.f32.mrf.mxu0
        %v3921 = vpop.f32.mrf.mxu0
        %v3922 = vadd.f32 0.0, %v3921
        %v3923 = vpop.f32.mrf.mxu0
        %3924 = vmatprep.mubr.bf16.mxu0 0
        %3925 = vmatmul.mubr.bf16.gmra.mxu0 %v3734
        %v3926 = vpop.f32.mrf.mxu0
        %v3927 = vadd.f32 0.0, %v3926
        %v3928 = vpop.f32.mrf.mxu0
        %v3929 = vpop.f32.mrf.mxu0
        %v3930 = vadd.f32 0.0, %v3929
        %v3931 = vpop.f32.mrf.mxu0
        %3932 = vmatprep.mubr.bf16.mxu0 0
        %3933 = vmatmul.mubr.bf16.gmra.mxu0 %v3735
        %v3934 = vpop.f32.mrf.mxu0
        %v3935 = vadd.f32 0.0, %v3934
        %v3936 = vpop.f32.mrf.mxu0
        %v3937 = vpop.f32.mrf.mxu0
        %v3938 = vadd.f32 0.0, %v3937
        %v3939 = vpop.f32.mrf.mxu0
        %3940 = vmatprep.mubr.bf16.mxu0 0
        %3941 = vmatmul.mubr.bf16.gmra.mxu0 %v3736
        %v3942 = vpop.f32.mrf.mxu0
        %v3943 = vadd.f32 0.0, %v3942
        %v3944 = vpop.f32.mrf.mxu0
        %v3945 = vpop.f32.mrf.mxu0
        %v3946 = vadd.f32 0.0, %v3945
        %v3947 = vpop.f32.mrf.mxu0
        %3948 = vmatprep.mubr.bf16.mxu0 0
        %3949 = vmatmul.mubr.bf16.gmra.mxu0 %v3737
        %v3950 = vpop.f32.mrf.mxu0
        %v3951 = vadd.f32 0.0, %v3950
        %v3952 = vpop.f32.mrf.mxu0
        %v3953 = vpop.f32.mrf.mxu0
        %v3954 = vadd.f32 0.0, %v3953
        %v3955 = vpop.f32.mrf.mxu0
        %3956 = vmatprep.mubr.bf16.mxu0 0
        %3957 = vmatmul.mubr.bf16.gmra.mxu0 %v3738
        %v3958 = vpop.f32.mrf.mxu0
        %v3959 = vadd.f32 0.0, %v3958
        %v3960 = vpop.f32.mrf.mxu0
        %v3961 = vpop.f32.mrf.mxu0
        %v3962 = vadd.f32 0.0, %v3961
        %v3963 = vpop.f32.mrf.mxu0
        %3964 = vdwg.mxu0
        %v3965 = vadd.f32 %v3627, %v3839
        %v3966 = vadd.f32 %v3628, %v3842
        %v3967 = vadd.f32 %v3629, %v3847
        %v3968 = vadd.f32 %v3630, %v3850
        %v3969 = vadd.f32 %v3631, %v3855
        %v3970 = vadd.f32 %v3632, %v3858
        %v3971 = vadd.f32 %v3633, %v3863
        %v3972 = vadd.f32 %v3634, %v3866
        %v3973 = vadd.f32 %v3635, %v3871
        %v3974 = vadd.f32 %v3636, %v3874
        %v3975 = vadd.f32 %v3637, %v3879
        %v3976 = vadd.f32 %v3638, %v3882
        %v3977 = vadd.f32 %v3639, %v3887
        %v3978 = vadd.f32 %v3640, %v3890
        %v3979 = vadd.f32 %v3641, %v3895
        %v3980 = vadd.f32 %v3642, %v3898
        %v3981 = vadd.f32 %v3643, %v3903
        %v3982 = vadd.f32 %v3644, %v3906
        %v3983 = vadd.f32 %v3645, %v3911
        %v3984 = vadd.f32 %v3646, %v3914
        %v3985 = vadd.f32 %v3647, %v3919
        %v3986 = vadd.f32 %v3648, %v3922
        %v3987 = vadd.f32 %v3649, %v3927
        %v3988 = vadd.f32 %v3650, %v3930
        %v3989 = vadd.f32 %v3651, %v3935
        %v3990 = vadd.f32 %v3652, %v3938
        %v3991 = vadd.f32 %v3653, %v3943
        %v3992 = vadd.f32 %v3654, %v3946
        %v3993 = vadd.f32 %v3655, %v3951
        %v3994 = vadd.f32 %v3656, %v3954
        %v3995 = vadd.f32 %v3657, %v3959
        %v3996 = vadd.f32 %v3658, %v3962
        %v3997 = vld [vmem:[#allocation2 + $0x28] sm:$0xff]
        %v3998 = vld [vmem:[#allocation2 + $0x30] sm:$0xff]
        %v3999 = vld [vmem:[#allocation2 + $0x38] sm:$0xff]
        %v4000 = vld [vmem:[#allocation2 + $0x40] sm:$0xff]
        %v4001 = vld [vmem:[#allocation2 + $0x48] sm:$0xff]
        %v4002 = vld [vmem:[#allocation2 + $0x50] sm:$0xff]
        %v4003 = vld [vmem:[#allocation2 + $0x58] sm:$0xff]
        %v4004 = vld [vmem:[#allocation2 + $0x60] sm:$0xff]
        %v4005 = vld [vmem:[#allocation2 + $0x68] sm:$0xff]
        %v4006 = vld [vmem:[#allocation2 + $0x70] sm:$0xff]
        %v4007 = vld [vmem:[#allocation2 + $0x78] sm:$0xff]
        %v4008 = vld [vmem:[#allocation2 + $0x80] sm:$0xff]
        %v4009 = vld [vmem:[#allocation2 + $0x88] sm:$0xff]
        %v4010 = vld [vmem:[#allocation2 + $0x90] sm:$0xff]
        %v4011 = vld [vmem:[#allocation2 + $0x98] sm:$0xff]
        %v4012 = vld [vmem:[#allocation2 + $0xa0] sm:$0xff]
        %v4013 = vld [vmem:[#allocation2 + $0xa8] sm:$0xff]
        %v4014 = vld [vmem:[#allocation2 + $0xb0] sm:$0xff]
        %v4015 = vld [vmem:[#allocation2 + $0xb8] sm:$0xff]
        %v4016 = vld [vmem:[#allocation2 + $0xc0] sm:$0xff]
        %v4017 = vld [vmem:[#allocation2 + $0xc8] sm:$0xff]
        %v4018 = vld [vmem:[#allocation2 + $0xd0] sm:$0xff]
        %v4019 = vld [vmem:[#allocation2 + $0xd8] sm:$0xff]
        %v4020 = vld [vmem:[#allocation2 + $0xe0] sm:$0xff]
        %v4021 = vld [vmem:[#allocation2 + $0xe8] sm:$0xff]
        %v4022 = vld [vmem:[#allocation2 + $0xf0] sm:$0xff]
        %v4023 = vld [vmem:[#allocation2 + $0xf8] sm:$0xff]
        %v4024 = vld [vmem:[#allocation2 + $0x100] sm:$0xff]
        %v4025 = vld [vmem:[#allocation2 + $0x108] sm:$0xff]
        %v4026 = vld [vmem:[#allocation2 + $0x110] sm:$0xff]
        %v4027 = vld [vmem:[#allocation2 + $0x118] sm:$0xff]
        %v4028 = vld [vmem:[#allocation2 + $0x120] sm:$0xff]
        %v4029 = vpack.c.bf16 %v3998, %v3997
        %v4030 = vpack.c.bf16 %v4000, %v3999
        %v4031 = vpack.c.bf16 %v4002, %v4001
        %v4032 = vpack.c.bf16 %v4004, %v4003
        %v4033 = vpack.c.bf16 %v4006, %v4005
        %v4034 = vpack.c.bf16 %v4008, %v4007
        %v4035 = vpack.c.bf16 %v4010, %v4009
        %v4036 = vpack.c.bf16 %v4012, %v4011
        %v4037 = vpack.c.bf16 %v4014, %v4013
        %v4038 = vpack.c.bf16 %v4016, %v4015
        %v4039 = vpack.c.bf16 %v4018, %v4017
        %v4040 = vpack.c.bf16 %v4020, %v4019
        %v4041 = vpack.c.bf16 %v4022, %v4021
        %v4042 = vpack.c.bf16 %v4024, %v4023
        %v4043 = vpack.c.bf16 %v4026, %v4025
        %v4044 = vpack.c.bf16 %v4028, %v4027
        %s4045 = scalar_lea.vmem %s10, 256
        %v4046 = vld [vmem:[%s4045] sm:$0xf]
        %v4047 = vld [vmem:[%s4045 + $0x4] sm:$0xf]
        %v4048 = vld [vmem:[%s4045 + $0x8] sm:$0xf]
        %v4049 = vld [vmem:[%s4045 + $0xc] sm:$0xf]
        %v4050 = vld [vmem:[%s4045 + $0x10] sm:$0xf]
        %v4051 = vld [vmem:[%s4045 + $0x14] sm:$0xf]
        %v4052 = vld [vmem:[%s4045 + $0x18] sm:$0xf]
        %v4053 = vld [vmem:[%s4045 + $0x1c] sm:$0xf]
        %v4054 = vld [vmem:[%s4045 + $0x20] sm:$0xf]
        %v4055 = vld [vmem:[%s4045 + $0x24] sm:$0xf]
        %v4056 = vld [vmem:[%s4045 + $0x28] sm:$0xf]
        %v4057 = vld [vmem:[%s4045 + $0x2c] sm:$0xf]
        %v4058 = vld [vmem:[%s4045 + $0x30] sm:$0xf]
        %v4059 = vld [vmem:[%s4045 + $0x34] sm:$0xf]
        %v4060 = vld [vmem:[%s4045 + $0x38] sm:$0xf]
        %v4061 = vld [vmem:[%s4045 + $0x3c] sm:$0xf]
        %v4078 = vunpack.c.l.b16 %v4046
        %v4079 = vunpack.c.l.b16 %v4047
        %v4080 = vunpack.c.l.b16 %v4048
        %v4081 = vunpack.c.l.b16 %v4049
        %v4082 = vunpack.c.l.b16 %v4050
        %v4083 = vunpack.c.l.b16 %v4051
        %v4084 = vunpack.c.l.b16 %v4052
        %v4085 = vunpack.c.l.b16 %v4053
        %v4086 = vunpack.c.l.b16 %v4054
        %v4087 = vunpack.c.l.b16 %v4055
        %v4088 = vunpack.c.l.b16 %v4056
        %v4089 = vunpack.c.l.b16 %v4057
        %v4090 = vunpack.c.l.b16 %v4058
        %v4091 = vunpack.c.l.b16 %v4059
        %v4092 = vunpack.c.l.b16 %v4060
        %v4093 = vunpack.c.l.b16 %v4061
        %v4094 = vpack.c.b16 %v4079, %v4078
        %v4095 = vpack.c.b16 %v4081, %v4080
        %v4096 = vpack.c.b16 %v4083, %v4082
        %v4097 = vpack.c.b16 %v4085, %v4084
        %v4098 = vpack.c.b16 %v4087, %v4086
        %v4099 = vpack.c.b16 %v4089, %v4088
        %v4100 = vpack.c.b16 %v4091, %v4090
        %v4101 = vpack.c.b16 %v4093, %v4092
        %4110 = vmatprep.subr.bf16.mxu0 0
        %4111 = vmatpush1.bf16.msra.mxu0 %v4101
        %4112 = vmatprep.subr.bf16.mxu0 0
        %4113 = vmatpush1.bf16.msra.mxu0 %v4100
        %4114 = vmatprep.subr.bf16.mxu0 0
        %4115 = vmatpush1.bf16.msra.mxu0 %v4099
        %4116 = vmatprep.subr.bf16.mxu0 0
        %4117 = vmatpush1.bf16.msra.mxu0 %v4098
        %4118 = vmatprep.subr.bf16.mxu0 0
        %4119 = vmatpush1.bf16.msra.mxu0 %v4097
        %4120 = vmatprep.subr.bf16.mxu0 0
        %4121 = vmatpush1.bf16.msra.mxu0 %v4096
        %4122 = vmatprep.subr.bf16.mxu0 0
        %4123 = vmatpush1.bf16.msra.mxu0 %v4095
        %4124 = vmatprep.subr.bf16.mxu0 0
        %4125 = vmatpush1.bf16.msra.mxu0 %v4094
        %4126 = vmatprep.subr.bf16.mxu0 0
        %4127 = vmatpush2.bf16.msra.mxu0 0
        %4128 = vmatprep.subr.bf16.mxu0 0
        %4129 = vmatpush2.bf16.msra.mxu0 0
        %4130 = vmatprep.subr.bf16.mxu0 0
        %4131 = vmatpush2.bf16.msra.mxu0 0
        %4132 = vmatprep.subr.bf16.mxu0 0
        %4133 = vmatpush2.bf16.msra.mxu0 0
        %4134 = vmatprep.subr.bf16.mxu0 0
        %4135 = vmatpush2.bf16.msra.mxu0 0
        %4136 = vmatprep.subr.bf16.mxu0 0
        %4137 = vmatpush2.bf16.msra.mxu0 0
        %4138 = vmatprep.subr.bf16.mxu0 0
        %4139 = vmatpush2.bf16.msra.mxu0 0
        %4140 = vmatprep.subr.bf16.mxu0 0
        %4141 = vmatpush2.bf16.msra.mxu0 0
        %4142 = vmatprep.mubr.bf16.mxu0 0
        %4143 = vmatmul.mubr.bf16.gmra.mxu0 %v4029
        %v4144 = vpop.f32.mrf.mxu0
        %v4145 = vadd.f32 0.0, %v4144
        %v4146 = vpop.f32.mrf.mxu0
        %v4147 = vpop.f32.mrf.mxu0
        %v4148 = vadd.f32 0.0, %v4147
        %v4149 = vpop.f32.mrf.mxu0
        %4150 = vmatprep.mubr.bf16.mxu0 0
        %4151 = vmatmul.mubr.bf16.gmra.mxu0 %v4030
        %v4152 = vpop.f32.mrf.mxu0
        %v4153 = vadd.f32 0.0, %v4152
        %v4154 = vpop.f32.mrf.mxu0
        %v4155 = vpop.f32.mrf.mxu0
        %v4156 = vadd.f32 0.0, %v4155
        %v4157 = vpop.f32.mrf.mxu0
        %4158 = vmatprep.mubr.bf16.mxu0 0
        %4159 = vmatmul.mubr.bf16.gmra.mxu0 %v4031
        %v4160 = vpop.f32.mrf.mxu0
        %v4161 = vadd.f32 0.0, %v4160
        %v4162 = vpop.f32.mrf.mxu0
        %v4163 = vpop.f32.mrf.mxu0
        %v4164 = vadd.f32 0.0, %v4163
        %v4165 = vpop.f32.mrf.mxu0
        %4166 = vmatprep.mubr.bf16.mxu0 0
        %4167 = vmatmul.mubr.bf16.gmra.mxu0 %v4032
        %v4168 = vpop.f32.mrf.mxu0
        %v4169 = vadd.f32 0.0, %v4168
        %v4170 = vpop.f32.mrf.mxu0
        %v4171 = vpop.f32.mrf.mxu0
        %v4172 = vadd.f32 0.0, %v4171
        %v4173 = vpop.f32.mrf.mxu0
        %4174 = vmatprep.mubr.bf16.mxu0 0
        %4175 = vmatmul.mubr.bf16.gmra.mxu0 %v4033
        %v4176 = vpop.f32.mrf.mxu0
        %v4177 = vadd.f32 0.0, %v4176
        %v4178 = vpop.f32.mrf.mxu0
        %v4179 = vpop.f32.mrf.mxu0
        %v4180 = vadd.f32 0.0, %v4179
        %v4181 = vpop.f32.mrf.mxu0
        %4182 = vmatprep.mubr.bf16.mxu0 0
        %4183 = vmatmul.mubr.bf16.gmra.mxu0 %v4034
        %v4184 = vpop.f32.mrf.mxu0
        %v4185 = vadd.f32 0.0, %v4184
        %v4186 = vpop.f32.mrf.mxu0
        %v4187 = vpop.f32.mrf.mxu0
        %v4188 = vadd.f32 0.0, %v4187
        %v4189 = vpop.f32.mrf.mxu0
        %4190 = vmatprep.mubr.bf16.mxu0 0
        %4191 = vmatmul.mubr.bf16.gmra.mxu0 %v4035
        %v4192 = vpop.f32.mrf.mxu0
        %v4193 = vadd.f32 0.0, %v4192
        %v4194 = vpop.f32.mrf.mxu0
        %v4195 = vpop.f32.mrf.mxu0
        %v4196 = vadd.f32 0.0, %v4195
        %v4197 = vpop.f32.mrf.mxu0
        %4198 = vmatprep.mubr.bf16.mxu0 0
        %4199 = vmatmul.mubr.bf16.gmra.mxu0 %v4036
        %v4200 = vpop.f32.mrf.mxu0
        %v4201 = vadd.f32 0.0, %v4200
        %v4202 = vpop.f32.mrf.mxu0
        %v4203 = vpop.f32.mrf.mxu0
        %v4204 = vadd.f32 0.0, %v4203
        %v4205 = vpop.f32.mrf.mxu0
        %4206 = vmatprep.mubr.bf16.mxu0 0
        %4207 = vmatmul.mubr.bf16.gmra.mxu0 %v4037
        %v4208 = vpop.f32.mrf.mxu0
        %v4209 = vadd.f32 0.0, %v4208
        %v4210 = vpop.f32.mrf.mxu0
        %v4211 = vpop.f32.mrf.mxu0
        %v4212 = vadd.f32 0.0, %v4211
        %v4213 = vpop.f32.mrf.mxu0
        %4214 = vmatprep.mubr.bf16.mxu0 0
        %4215 = vmatmul.mubr.bf16.gmra.mxu0 %v4038
        %v4216 = vpop.f32.mrf.mxu0
        %v4217 = vadd.f32 0.0, %v4216
        %v4218 = vpop.f32.mrf.mxu0
        %v4219 = vpop.f32.mrf.mxu0
        %v4220 = vadd.f32 0.0, %v4219
        %v4221 = vpop.f32.mrf.mxu0
        %4222 = vmatprep.mubr.bf16.mxu0 0
        %4223 = vmatmul.mubr.bf16.gmra.mxu0 %v4039
        %v4224 = vpop.f32.mrf.mxu0
        %v4225 = vadd.f32 0.0, %v4224
        %v4226 = vpop.f32.mrf.mxu0
        %v4227 = vpop.f32.mrf.mxu0
        %v4228 = vadd.f32 0.0, %v4227
        %v4229 = vpop.f32.mrf.mxu0
        %4230 = vmatprep.mubr.bf16.mxu0 0
        %4231 = vmatmul.mubr.bf16.gmra.mxu0 %v4040
        %v4232 = vpop.f32.mrf.mxu0
        %v4233 = vadd.f32 0.0, %v4232
        %v4234 = vpop.f32.mrf.mxu0
        %v4235 = vpop.f32.mrf.mxu0
        %v4236 = vadd.f32 0.0, %v4235
        %v4237 = vpop.f32.mrf.mxu0
        %4238 = vmatprep.mubr.bf16.mxu0 0
        %4239 = vmatmul.mubr.bf16.gmra.mxu0 %v4041
        %v4240 = vpop.f32.mrf.mxu0
        %v4241 = vadd.f32 0.0, %v4240
        %v4242 = vpop.f32.mrf.mxu0
        %v4243 = vpop.f32.mrf.mxu0
        %v4244 = vadd.f32 0.0, %v4243
        %v4245 = vpop.f32.mrf.mxu0
        %4246 = vmatprep.mubr.bf16.mxu0 0
        %4247 = vmatmul.mubr.bf16.gmra.mxu0 %v4042
        %v4248 = vpop.f32.mrf.mxu0
        %v4249 = vadd.f32 0.0, %v4248
        %v4250 = vpop.f32.mrf.mxu0
        %v4251 = vpop.f32.mrf.mxu0
        %v4252 = vadd.f32 0.0, %v4251
        %v4253 = vpop.f32.mrf.mxu0
        %4254 = vmatprep.mubr.bf16.mxu0 0
        %4255 = vmatmul.mubr.bf16.gmra.mxu0 %v4043
        %v4256 = vpop.f32.mrf.mxu0
        %v4257 = vadd.f32 0.0, %v4256
        %v4258 = vpop.f32.mrf.mxu0
        %v4259 = vpop.f32.mrf.mxu0
        %v4260 = vadd.f32 0.0, %v4259
        %v4261 = vpop.f32.mrf.mxu0
        %4262 = vmatprep.mubr.bf16.mxu0 0
        %4263 = vmatmul.mubr.bf16.gmra.mxu0 %v4044
        %v4264 = vpop.f32.mrf.mxu0
        %v4265 = vadd.f32 0.0, %v4264
        %v4266 = vpop.f32.mrf.mxu0
        %v4267 = vpop.f32.mrf.mxu0
        %v4268 = vadd.f32 0.0, %v4267
        %v4269 = vpop.f32.mrf.mxu0
        %4270 = vdwg.mxu0
        %v4271 = vadd.f32 %v3965, %v4145
        %v4272 = vadd.f32 %v3966, %v4148
        %v4273 = vadd.f32 %v3967, %v4153
        %v4274 = vadd.f32 %v3968, %v4156
        %v4275 = vadd.f32 %v3969, %v4161
        %v4276 = vadd.f32 %v3970, %v4164
        %v4277 = vadd.f32 %v3971, %v4169
        %v4278 = vadd.f32 %v3972, %v4172
        %v4279 = vadd.f32 %v3973, %v4177
        %v4280 = vadd.f32 %v3974, %v4180
        %v4281 = vadd.f32 %v3975, %v4185
        %v4282 = vadd.f32 %v3976, %v4188
        %v4283 = vadd.f32 %v3977, %v4193
        %v4284 = vadd.f32 %v3978, %v4196
        %v4285 = vadd.f32 %v3979, %v4201
        %v4286 = vadd.f32 %v3980, %v4204
        %v4287 = vadd.f32 %v3981, %v4209
        %v4288 = vadd.f32 %v3982, %v4212
        %v4289 = vadd.f32 %v3983, %v4217
        %v4290 = vadd.f32 %v3984, %v4220
        %v4291 = vadd.f32 %v3985, %v4225
        %v4292 = vadd.f32 %v3986, %v4228
        %v4293 = vadd.f32 %v3987, %v4233
        %v4294 = vadd.f32 %v3988, %v4236
        %v4295 = vadd.f32 %v3989, %v4241
        %v4296 = vadd.f32 %v3990, %v4244
        %v4297 = vadd.f32 %v3991, %v4249
        %v4298 = vadd.f32 %v3992, %v4252
        %v4299 = vadd.f32 %v3993, %v4257
        %v4300 = vadd.f32 %v3994, %v4260
        %v4301 = vadd.f32 %v3995, %v4265
        %v4302 = vadd.f32 %v3996, %v4268
        %v4303 = vld [vmem:[#allocation2 + $0x2a] sm:$0xff]
        %v4304 = vld [vmem:[#allocation2 + $0x32] sm:$0xff]
        %v4305 = vld [vmem:[#allocation2 + $0x3a] sm:$0xff]
        %v4306 = vld [vmem:[#allocation2 + $0x42] sm:$0xff]
        %v4307 = vld [vmem:[#allocation2 + $0x4a] sm:$0xff]
        %v4308 = vld [vmem:[#allocation2 + $0x52] sm:$0xff]
        %v4309 = vld [vmem:[#allocation2 + $0x5a] sm:$0xff]
        %v4310 = vld [vmem:[#allocation2 + $0x62] sm:$0xff]
        %v4311 = vld [vmem:[#allocation2 + $0x6a] sm:$0xff]
        %v4312 = vld [vmem:[#allocation2 + $0x72] sm:$0xff]
        %v4313 = vld [vmem:[#allocation2 + $0x7a] sm:$0xff]
        %v4314 = vld [vmem:[#allocation2 + $0x82] sm:$0xff]
        %v4315 = vld [vmem:[#allocation2 + $0x8a] sm:$0xff]
        %v4316 = vld [vmem:[#allocation2 + $0x92] sm:$0xff]
        %v4317 = vld [vmem:[#allocation2 + $0x9a] sm:$0xff]
        %v4318 = vld [vmem:[#allocation2 + $0xa2] sm:$0xff]
        %v4319 = vld [vmem:[#allocation2 + $0xaa] sm:$0xff]
        %v4320 = vld [vmem:[#allocation2 + $0xb2] sm:$0xff]
        %v4321 = vld [vmem:[#allocation2 + $0xba] sm:$0xff]
        %v4322 = vld [vmem:[#allocation2 + $0xc2] sm:$0xff]
        %v4323 = vld [vmem:[#allocation2 + $0xca] sm:$0xff]
        %v4324 = vld [vmem:[#allocation2 + $0xd2] sm:$0xff]
        %v4325 = vld [vmem:[#allocation2 + $0xda] sm:$0xff]
        %v4326 = vld [vmem:[#allocation2 + $0xe2] sm:$0xff]
        %v4327 = vld [vmem:[#allocation2 + $0xea] sm:$0xff]
        %v4328 = vld [vmem:[#allocation2 + $0xf2] sm:$0xff]
        %v4329 = vld [vmem:[#allocation2 + $0xfa] sm:$0xff]
        %v4330 = vld [vmem:[#allocation2 + $0x102] sm:$0xff]
        %v4331 = vld [vmem:[#allocation2 + $0x10a] sm:$0xff]
        %v4332 = vld [vmem:[#allocation2 + $0x112] sm:$0xff]
        %v4333 = vld [vmem:[#allocation2 + $0x11a] sm:$0xff]
        %v4334 = vld [vmem:[#allocation2 + $0x122] sm:$0xff]
        %v4335 = vsel %vm3321, %v4303, 0.0
        %v4336 = vsel %vm3322, %v4304, 0.0
        %v4337 = vsel %vm3323, %v4305, 0.0
        %v4338 = vsel %vm3324, %v4306, 0.0
        %v4339 = vsel %vm3325, %v4307, 0.0
        %v4340 = vsel %vm3326, %v4308, 0.0
        %v4341 = vsel %vm3327, %v4309, 0.0
        %v4342 = vsel %vm3328, %v4310, 0.0
        %v4343 = vsel %vm3329, %v4311, 0.0
        %v4344 = vsel %vm3330, %v4312, 0.0
        %v4345 = vsel %vm3331, %v4313, 0.0
        %v4346 = vsel %vm3332, %v4314, 0.0
        %v4347 = vsel %vm3333, %v4315, 0.0
        %v4348 = vsel %vm3334, %v4316, 0.0
        %v4349 = vsel %vm3335, %v4317, 0.0
        %v4350 = vsel %vm3336, %v4318, 0.0
        %v4351 = vsel %vm3337, %v4319, 0.0
        %v4352 = vsel %vm3338, %v4320, 0.0
        %v4353 = vsel %vm3339, %v4321, 0.0
        %v4354 = vsel %vm3340, %v4322, 0.0
        %v4355 = vsel %vm3341, %v4323, 0.0
        %v4356 = vsel %vm3342, %v4324, 0.0
        %v4357 = vsel %vm3343, %v4325, 0.0
        %v4358 = vsel %vm3344, %v4326, 0.0
        %v4359 = vsel %vm3345, %v4327, 0.0
        %v4360 = vsel %vm3346, %v4328, 0.0
        %v4361 = vsel %vm3347, %v4329, 0.0
        %v4362 = vsel %vm3348, %v4330, 0.0
        %v4363 = vsel %vm3349, %v4331, 0.0
        %v4364 = vsel %vm3350, %v4332, 0.0
        %v4365 = vsel %vm3351, %v4333, 0.0
        %v4366 = vsel %vm3352, %v4334, 0.0
        %v4367 = vpack.c.bf16 %v4336, %v4335
        %v4368 = vpack.c.bf16 %v4338, %v4337
        %v4369 = vpack.c.bf16 %v4340, %v4339
        %v4370 = vpack.c.bf16 %v4342, %v4341
        %v4371 = vpack.c.bf16 %v4344, %v4343
        %v4372 = vpack.c.bf16 %v4346, %v4345
        %v4373 = vpack.c.bf16 %v4348, %v4347
        %v4374 = vpack.c.bf16 %v4350, %v4349
        %v4375 = vpack.c.bf16 %v4352, %v4351
        %v4376 = vpack.c.bf16 %v4354, %v4353
        %v4377 = vpack.c.bf16 %v4356, %v4355
        %v4378 = vpack.c.bf16 %v4358, %v4357
        %v4379 = vpack.c.bf16 %v4360, %v4359
        %v4380 = vpack.c.bf16 %v4362, %v4361
        %v4381 = vpack.c.bf16 %v4364, %v4363
        %v4382 = vpack.c.bf16 %v4366, %v4365
        %s4383 = scalar_lea.vmem %s10, 320
        %v4384 = vld [vmem:[%s4383] sm:$0xf]
        %v4385 = vld [vmem:[%s4383 + $0x4] sm:$0xf]
        %v4386 = vld [vmem:[%s4383 + $0x8] sm:$0xf]
        %v4387 = vld [vmem:[%s4383 + $0xc] sm:$0xf]
        %v4388 = vld [vmem:[%s4383 + $0x10] sm:$0xf]
        %v4389 = vld [vmem:[%s4383 + $0x14] sm:$0xf]
        %v4390 = vld [vmem:[%s4383 + $0x18] sm:$0xf]
        %v4391 = vld [vmem:[%s4383 + $0x1c] sm:$0xf]
        %v4392 = vld [vmem:[%s4383 + $0x20] sm:$0xf]
        %v4393 = vld [vmem:[%s4383 + $0x24] sm:$0xf]
        %v4394 = vld [vmem:[%s4383 + $0x28] sm:$0xf]
        %v4395 = vld [vmem:[%s4383 + $0x2c] sm:$0xf]
        %v4396 = vld [vmem:[%s4383 + $0x30] sm:$0xf]
        %v4397 = vld [vmem:[%s4383 + $0x34] sm:$0xf]
        %v4398 = vld [vmem:[%s4383 + $0x38] sm:$0xf]
        %v4399 = vld [vmem:[%s4383 + $0x3c] sm:$0xf]
        %v4416 = vunpack.c.l.b16 %v4384
        %v4417 = vunpack.c.l.b16 %v4385
        %v4418 = vunpack.c.l.b16 %v4386
        %v4419 = vunpack.c.l.b16 %v4387
        %v4420 = vunpack.c.l.b16 %v4388
        %v4421 = vunpack.c.l.b16 %v4389
        %v4422 = vunpack.c.l.b16 %v4390
        %v4423 = vunpack.c.l.b16 %v4391
        %v4424 = vunpack.c.l.b16 %v4392
        %v4425 = vunpack.c.l.b16 %v4393
        %v4426 = vunpack.c.l.b16 %v4394
        %v4427 = vunpack.c.l.b16 %v4395
        %v4428 = vunpack.c.l.b16 %v4396
        %v4429 = vunpack.c.l.b16 %v4397
        %v4430 = vunpack.c.l.b16 %v4398
        %v4431 = vunpack.c.l.b16 %v4399
        %v4432 = vpack.c.b16 %v4417, %v4416
        %v4433 = vpack.c.b16 %v4419, %v4418
        %v4434 = vpack.c.b16 %v4421, %v4420
        %v4435 = vpack.c.b16 %v4423, %v4422
        %v4436 = vpack.c.b16 %v4425, %v4424
        %v4437 = vpack.c.b16 %v4427, %v4426
        %v4438 = vpack.c.b16 %v4429, %v4428
        %v4439 = vpack.c.b16 %v4431, %v4430
        %4448 = vmatprep.subr.bf16.mxu0 0
        %4449 = vmatpush1.bf16.msra.mxu0 %v4439
        %4450 = vmatprep.subr.bf16.mxu0 0
        %4451 = vmatpush1.bf16.msra.mxu0 %v4438
        %4452 = vmatprep.subr.bf16.mxu0 0
        %4453 = vmatpush1.bf16.msra.mxu0 %v4437
        %4454 = vmatprep.subr.bf16.mxu0 0
        %4455 = vmatpush1.bf16.msra.mxu0 %v4436
        %4456 = vmatprep.subr.bf16.mxu0 0
        %4457 = vmatpush1.bf16.msra.mxu0 %v4435
        %4458 = vmatprep.subr.bf16.mxu0 0
        %4459 = vmatpush1.bf16.msra.mxu0 %v4434
        %4460 = vmatprep.subr.bf16.mxu0 0
        %4461 = vmatpush1.bf16.msra.mxu0 %v4433
        %4462 = vmatprep.subr.bf16.mxu0 0
        %4463 = vmatpush1.bf16.msra.mxu0 %v4432
        %4464 = vmatprep.subr.bf16.mxu0 0
        %4465 = vmatpush2.bf16.msra.mxu0 0
        %4466 = vmatprep.subr.bf16.mxu0 0
        %4467 = vmatpush2.bf16.msra.mxu0 0
        %4468 = vmatprep.subr.bf16.mxu0 0
        %4469 = vmatpush2.bf16.msra.mxu0 0
        %4470 = vmatprep.subr.bf16.mxu0 0
        %4471 = vmatpush2.bf16.msra.mxu0 0
        %4472 = vmatprep.subr.bf16.mxu0 0
        %4473 = vmatpush2.bf16.msra.mxu0 0
        %4474 = vmatprep.subr.bf16.mxu0 0
        %4475 = vmatpush2.bf16.msra.mxu0 0
        %4476 = vmatprep.subr.bf16.mxu0 0
        %4477 = vmatpush2.bf16.msra.mxu0 0
        %4478 = vmatprep.subr.bf16.mxu0 0
        %4479 = vmatpush2.bf16.msra.mxu0 0
        %4480 = vmatprep.mubr.bf16.mxu0 0
        %4481 = vmatmul.mubr.bf16.gmra.mxu0 %v4367
        %v4482 = vpop.f32.mrf.mxu0
        %v4483 = vadd.f32 0.0, %v4482
        %v4484 = vpop.f32.mrf.mxu0
        %v4485 = vpop.f32.mrf.mxu0
        %v4486 = vadd.f32 0.0, %v4485
        %v4487 = vpop.f32.mrf.mxu0
        %4488 = vmatprep.mubr.bf16.mxu0 0
        %4489 = vmatmul.mubr.bf16.gmra.mxu0 %v4368
        %v4490 = vpop.f32.mrf.mxu0
        %v4491 = vadd.f32 0.0, %v4490
        %v4492 = vpop.f32.mrf.mxu0
        %v4493 = vpop.f32.mrf.mxu0
        %v4494 = vadd.f32 0.0, %v4493
        %v4495 = vpop.f32.mrf.mxu0
        %4496 = vmatprep.mubr.bf16.mxu0 0
        %4497 = vmatmul.mubr.bf16.gmra.mxu0 %v4369
        %v4498 = vpop.f32.mrf.mxu0
        %v4499 = vadd.f32 0.0, %v4498
        %v4500 = vpop.f32.mrf.mxu0
        %v4501 = vpop.f32.mrf.mxu0
        %v4502 = vadd.f32 0.0, %v4501
        %v4503 = vpop.f32.mrf.mxu0
        %4504 = vmatprep.mubr.bf16.mxu0 0
        %4505 = vmatmul.mubr.bf16.gmra.mxu0 %v4370
        %v4506 = vpop.f32.mrf.mxu0
        %v4507 = vadd.f32 0.0, %v4506
        %v4508 = vpop.f32.mrf.mxu0
        %v4509 = vpop.f32.mrf.mxu0
        %v4510 = vadd.f32 0.0, %v4509
        %v4511 = vpop.f32.mrf.mxu0
        %4512 = vmatprep.mubr.bf16.mxu0 0
        %4513 = vmatmul.mubr.bf16.gmra.mxu0 %v4371
        %v4514 = vpop.f32.mrf.mxu0
        %v4515 = vadd.f32 0.0, %v4514
        %v4516 = vpop.f32.mrf.mxu0
        %v4517 = vpop.f32.mrf.mxu0
        %v4518 = vadd.f32 0.0, %v4517
        %v4519 = vpop.f32.mrf.mxu0
        %4520 = vmatprep.mubr.bf16.mxu0 0
        %4521 = vmatmul.mubr.bf16.gmra.mxu0 %v4372
        %v4522 = vpop.f32.mrf.mxu0
        %v4523 = vadd.f32 0.0, %v4522
        %v4524 = vpop.f32.mrf.mxu0
        %v4525 = vpop.f32.mrf.mxu0
        %v4526 = vadd.f32 0.0, %v4525
        %v4527 = vpop.f32.mrf.mxu0
        %4528 = vmatprep.mubr.bf16.mxu0 0
        %4529 = vmatmul.mubr.bf16.gmra.mxu0 %v4373
        %v4530 = vpop.f32.mrf.mxu0
        %v4531 = vadd.f32 0.0, %v4530
        %v4532 = vpop.f32.mrf.mxu0
        %v4533 = vpop.f32.mrf.mxu0
        %v4534 = vadd.f32 0.0, %v4533
        %v4535 = vpop.f32.mrf.mxu0
        %4536 = vmatprep.mubr.bf16.mxu0 0
        %4537 = vmatmul.mubr.bf16.gmra.mxu0 %v4374
        %v4538 = vpop.f32.mrf.mxu0
        %v4539 = vadd.f32 0.0, %v4538
        %v4540 = vpop.f32.mrf.mxu0
        %v4541 = vpop.f32.mrf.mxu0
        %v4542 = vadd.f32 0.0, %v4541
        %v4543 = vpop.f32.mrf.mxu0
        %4544 = vmatprep.mubr.bf16.mxu0 0
        %4545 = vmatmul.mubr.bf16.gmra.mxu0 %v4375
        %v4546 = vpop.f32.mrf.mxu0
        %v4547 = vadd.f32 0.0, %v4546
        %v4548 = vpop.f32.mrf.mxu0
        %v4549 = vpop.f32.mrf.mxu0
        %v4550 = vadd.f32 0.0, %v4549
        %v4551 = vpop.f32.mrf.mxu0
        %4552 = vmatprep.mubr.bf16.mxu0 0
        %4553 = vmatmul.mubr.bf16.gmra.mxu0 %v4376
        %v4554 = vpop.f32.mrf.mxu0
        %v4555 = vadd.f32 0.0, %v4554
        %v4556 = vpop.f32.mrf.mxu0
        %v4557 = vpop.f32.mrf.mxu0
        %v4558 = vadd.f32 0.0, %v4557
        %v4559 = vpop.f32.mrf.mxu0
        %4560 = vmatprep.mubr.bf16.mxu0 0
        %4561 = vmatmul.mubr.bf16.gmra.mxu0 %v4377
        %v4562 = vpop.f32.mrf.mxu0
        %v4563 = vadd.f32 0.0, %v4562
        %v4564 = vpop.f32.mrf.mxu0
        %v4565 = vpop.f32.mrf.mxu0
        %v4566 = vadd.f32 0.0, %v4565
        %v4567 = vpop.f32.mrf.mxu0
        %4568 = vmatprep.mubr.bf16.mxu0 0
        %4569 = vmatmul.mubr.bf16.gmra.mxu0 %v4378
        %v4570 = vpop.f32.mrf.mxu0
        %v4571 = vadd.f32 0.0, %v4570
        %v4572 = vpop.f32.mrf.mxu0
        %v4573 = vpop.f32.mrf.mxu0
        %v4574 = vadd.f32 0.0, %v4573
        %v4575 = vpop.f32.mrf.mxu0
        %4576 = vmatprep.mubr.bf16.mxu0 0
        %4577 = vmatmul.mubr.bf16.gmra.mxu0 %v4379
        %v4578 = vpop.f32.mrf.mxu0
        %v4579 = vadd.f32 0.0, %v4578
        %v4580 = vpop.f32.mrf.mxu0
        %v4581 = vpop.f32.mrf.mxu0
        %v4582 = vadd.f32 0.0, %v4581
        %v4583 = vpop.f32.mrf.mxu0
        %4584 = vmatprep.mubr.bf16.mxu0 0
        %4585 = vmatmul.mubr.bf16.gmra.mxu0 %v4380
        %v4586 = vpop.f32.mrf.mxu0
        %v4587 = vadd.f32 0.0, %v4586
        %v4588 = vpop.f32.mrf.mxu0
        %v4589 = vpop.f32.mrf.mxu0
        %v4590 = vadd.f32 0.0, %v4589
        %v4591 = vpop.f32.mrf.mxu0
        %4592 = vmatprep.mubr.bf16.mxu0 0
        %4593 = vmatmul.mubr.bf16.gmra.mxu0 %v4381
        %v4594 = vpop.f32.mrf.mxu0
        %v4595 = vadd.f32 0.0, %v4594
        %v4596 = vpop.f32.mrf.mxu0
        %v4597 = vpop.f32.mrf.mxu0
        %v4598 = vadd.f32 0.0, %v4597
        %v4599 = vpop.f32.mrf.mxu0
        %4600 = vmatprep.mubr.bf16.mxu0 0
        %4601 = vmatmul.mubr.bf16.gmra.mxu0 %v4382
        %v4602 = vpop.f32.mrf.mxu0
        %v4603 = vadd.f32 0.0, %v4602
        %v4604 = vpop.f32.mrf.mxu0
        %v4605 = vpop.f32.mrf.mxu0
        %v4606 = vadd.f32 0.0, %v4605
        %v4607 = vpop.f32.mrf.mxu0
        %4608 = vdwg.mxu0
        %v4609 = vadd.f32 %v4271, %v4483
        %v4610 = vadd.f32 %v4272, %v4486
        %v4611 = vadd.f32 %v4273, %v4491
        %v4612 = vadd.f32 %v4274, %v4494
        %v4613 = vadd.f32 %v4275, %v4499
        %v4614 = vadd.f32 %v4276, %v4502
        %v4615 = vadd.f32 %v4277, %v4507
        %v4616 = vadd.f32 %v4278, %v4510
        %v4617 = vadd.f32 %v4279, %v4515
        %v4618 = vadd.f32 %v4280, %v4518
        %v4619 = vadd.f32 %v4281, %v4523
        %v4620 = vadd.f32 %v4282, %v4526
        %v4621 = vadd.f32 %v4283, %v4531
        %v4622 = vadd.f32 %v4284, %v4534
        %v4623 = vadd.f32 %v4285, %v4539
        %v4624 = vadd.f32 %v4286, %v4542
        %v4625 = vadd.f32 %v4287, %v4547
        %v4626 = vadd.f32 %v4288, %v4550
        %v4627 = vadd.f32 %v4289, %v4555
        %v4628 = vadd.f32 %v4290, %v4558
        %v4629 = vadd.f32 %v4291, %v4563
        %v4630 = vadd.f32 %v4292, %v4566
        %v4631 = vadd.f32 %v4293, %v4571
        %v4632 = vadd.f32 %v4294, %v4574
        %v4633 = vadd.f32 %v4295, %v4579
        %v4634 = vadd.f32 %v4296, %v4582
        %v4635 = vadd.f32 %v4297, %v4587
        %v4636 = vadd.f32 %v4298, %v4590
        %v4637 = vadd.f32 %v4299, %v4595
        %v4638 = vadd.f32 %v4300, %v4598
        %v4639 = vadd.f32 %v4301, %v4603
        %v4640 = vadd.f32 %v4302, %v4606
        %v4641 = vld [vmem:[#allocation2 + $0x46] sm:$0xff]
        %v4642 = vld [vmem:[#allocation2 + $0x4e] sm:$0xff]
        %v4643 = vld [vmem:[#allocation2 + $0x56] sm:$0xff]
        %v4644 = vld [vmem:[#allocation2 + $0x5e] sm:$0xff]
        %v4645 = vld [vmem:[#allocation2 + $0x66] sm:$0xff]
        %v4646 = vld [vmem:[#allocation2 + $0x6e] sm:$0xff]
        %v4647 = vld [vmem:[#allocation2 + $0x76] sm:$0xff]
        %v4648 = vld [vmem:[#allocation2 + $0x7e] sm:$0xff]
        %v4649 = vld [vmem:[#allocation2 + $0x86] sm:$0xff]
        %v4650 = vld [vmem:[#allocation2 + $0x8e] sm:$0xff]
        %v4651 = vld [vmem:[#allocation2 + $0x96] sm:$0xff]
        %v4652 = vld [vmem:[#allocation2 + $0x9e] sm:$0xff]
        %v4653 = vld [vmem:[#allocation2 + $0xa6] sm:$0xff]
        %v4654 = vld [vmem:[#allocation2 + $0xae] sm:$0xff]
        %v4655 = vld [vmem:[#allocation2 + $0xb6] sm:$0xff]
        %v4656 = vld [vmem:[#allocation2 + $0xbe] sm:$0xff]
        %v4657 = vld [vmem:[#allocation2 + $0xc6] sm:$0xff]
        %v4658 = vld [vmem:[#allocation2 + $0xce] sm:$0xff]
        %v4659 = vld [vmem:[#allocation2 + $0xd6] sm:$0xff]
        %v4660 = vld [vmem:[#allocation2 + $0xde] sm:$0xff]
        %v4661 = vld [vmem:[#allocation2 + $0xe6] sm:$0xff]
        %v4662 = vld [vmem:[#allocation2 + $0xee] sm:$0xff]
        %v4663 = vld [vmem:[#allocation2 + $0xf6] sm:$0xff]
        %v4664 = vld [vmem:[#allocation2 + $0xfe] sm:$0xff]
        %v4665 = vld [vmem:[#allocation2 + $0x106] sm:$0xff]
        %v4666 = vld [vmem:[#allocation2 + $0x10e] sm:$0xff]
        %v4667 = vld [vmem:[#allocation2 + $0x116] sm:$0xff]
        %v4668 = vld [vmem:[#allocation2 + $0x11e] sm:$0xff]
        %v4669 = vld [vmem:[#allocation2 + $0x126] sm:$0xff]
        %v4670 = vld [vmem:[#allocation2 + $0x12e] sm:$0xff]
        %v4671 = vld [vmem:[#allocation2 + $0x136] sm:$0xff]
        %v4672 = vld [vmem:[#allocation2 + $0x13e] sm:$0xff]
        %v4673 = vsel %vm2614, %v4641, 0.0
        %v4674 = vsel %vm2615, %v4642, 0.0
        %v4675 = vsel %vm2616, %v4643, 0.0
        %v4676 = vsel %vm2617, %v4644, 0.0
        %v4677 = vsel %vm2618, %v4645, 0.0
        %v4678 = vsel %vm2619, %v4646, 0.0
        %v4679 = vsel %vm2620, %v4647, 0.0
        %v4680 = vsel %vm2621, %v4648, 0.0
        %v4681 = vsel %vm2622, %v4649, 0.0
        %v4682 = vsel %vm2623, %v4650, 0.0
        %v4683 = vsel %vm2624, %v4651, 0.0
        %v4684 = vsel %vm2625, %v4652, 0.0
        %v4685 = vsel %vm2626, %v4653, 0.0
        %v4686 = vsel %vm2627, %v4654, 0.0
        %v4687 = vsel %vm2628, %v4655, 0.0
        %v4688 = vsel %vm2629, %v4656, 0.0
        %v4689 = vsel %vm2630, %v4657, 0.0
        %v4690 = vsel %vm2631, %v4658, 0.0
        %v4691 = vsel %vm2632, %v4659, 0.0
        %v4692 = vsel %vm2633, %v4660, 0.0
        %v4693 = vsel %vm2634, %v4661, 0.0
        %v4694 = vsel %vm2635, %v4662, 0.0
        %v4695 = vsel %vm2636, %v4663, 0.0
        %v4696 = vsel %vm2637, %v4664, 0.0
        %v4697 = vsel %vm2638, %v4665, 0.0
        %v4698 = vsel %vm2639, %v4666, 0.0
        %v4699 = vsel %vm2640, %v4667, 0.0
        %v4700 = vsel %vm2641, %v4668, 0.0
        %v4701 = vsel %vm2642, %v4669, 0.0
        %v4702 = vsel %vm2643, %v4670, 0.0
        %v4703 = vsel %vm2644, %v4671, 0.0
        %v4704 = vsel %vm2645, %v4672, 0.0
        %v4705 = vpack.c.bf16 %v4674, %v4673
        %v4706 = vpack.c.bf16 %v4676, %v4675
        %v4707 = vpack.c.bf16 %v4678, %v4677
        %v4708 = vpack.c.bf16 %v4680, %v4679
        %v4709 = vpack.c.bf16 %v4682, %v4681
        %v4710 = vpack.c.bf16 %v4684, %v4683
        %v4711 = vpack.c.bf16 %v4686, %v4685
        %v4712 = vpack.c.bf16 %v4688, %v4687
        %v4713 = vpack.c.bf16 %v4690, %v4689
        %v4714 = vpack.c.bf16 %v4692, %v4691
        %v4715 = vpack.c.bf16 %v4694, %v4693
        %v4716 = vpack.c.bf16 %v4696, %v4695
        %v4717 = vpack.c.bf16 %v4698, %v4697
        %v4718 = vpack.c.bf16 %v4700, %v4699
        %v4719 = vpack.c.bf16 %v4702, %v4701
        %v4720 = vpack.c.bf16 %v4704, %v4703
        %s4721 = scalar_lea.vmem %s10, 384
        %v4722 = vld [vmem:[%s4721] sm:$0xf]
        %v4723 = vld [vmem:[%s4721 + $0x4] sm:$0xf]
        %v4724 = vld [vmem:[%s4721 + $0x8] sm:$0xf]
        %v4725 = vld [vmem:[%s4721 + $0xc] sm:$0xf]
        %v4726 = vld [vmem:[%s4721 + $0x10] sm:$0xf]
        %v4727 = vld [vmem:[%s4721 + $0x14] sm:$0xf]
        %v4728 = vld [vmem:[%s4721 + $0x18] sm:$0xf]
        %v4729 = vld [vmem:[%s4721 + $0x1c] sm:$0xf]
        %v4730 = vld [vmem:[%s4721 + $0x20] sm:$0xf]
        %v4731 = vld [vmem:[%s4721 + $0x24] sm:$0xf]
        %v4732 = vld [vmem:[%s4721 + $0x28] sm:$0xf]
        %v4733 = vld [vmem:[%s4721 + $0x2c] sm:$0xf]
        %v4734 = vld [vmem:[%s4721 + $0x30] sm:$0xf]
        %v4735 = vld [vmem:[%s4721 + $0x34] sm:$0xf]
        %v4736 = vld [vmem:[%s4721 + $0x38] sm:$0xf]
        %v4737 = vld [vmem:[%s4721 + $0x3c] sm:$0xf]
        %v4754 = vunpack.c.l.b16 %v4722
        %v4755 = vunpack.c.l.b16 %v4723
        %v4756 = vunpack.c.l.b16 %v4724
        %v4757 = vunpack.c.l.b16 %v4725
        %v4758 = vunpack.c.l.b16 %v4726
        %v4759 = vunpack.c.l.b16 %v4727
        %v4760 = vunpack.c.l.b16 %v4728
        %v4761 = vunpack.c.l.b16 %v4729
        %v4762 = vunpack.c.l.b16 %v4730
        %v4763 = vunpack.c.l.b16 %v4731
        %v4764 = vunpack.c.l.b16 %v4732
        %v4765 = vunpack.c.l.b16 %v4733
        %v4766 = vunpack.c.l.b16 %v4734
        %v4767 = vunpack.c.l.b16 %v4735
        %v4768 = vunpack.c.l.b16 %v4736
        %v4769 = vunpack.c.l.b16 %v4737
        %v4770 = vpack.c.b16 %v4755, %v4754
        %v4771 = vpack.c.b16 %v4757, %v4756
        %v4772 = vpack.c.b16 %v4759, %v4758
        %v4773 = vpack.c.b16 %v4761, %v4760
        %v4774 = vpack.c.b16 %v4763, %v4762
        %v4775 = vpack.c.b16 %v4765, %v4764
        %v4776 = vpack.c.b16 %v4767, %v4766
        %v4777 = vpack.c.b16 %v4769, %v4768
        %4786 = vmatprep.subr.bf16.mxu0 0
        %4787 = vmatpush1.bf16.msra.mxu0 %v4777
        %4788 = vmatprep.subr.bf16.mxu0 0
        %4789 = vmatpush1.bf16.msra.mxu0 %v4776
        %4790 = vmatprep.subr.bf16.mxu0 0
        %4791 = vmatpush1.bf16.msra.mxu0 %v4775
        %4792 = vmatprep.subr.bf16.mxu0 0
        %4793 = vmatpush1.bf16.msra.mxu0 %v4774
        %4794 = vmatprep.subr.bf16.mxu0 0
        %4795 = vmatpush1.bf16.msra.mxu0 %v4773
        %4796 = vmatprep.subr.bf16.mxu0 0
        %4797 = vmatpush1.bf16.msra.mxu0 %v4772
        %4798 = vmatprep.subr.bf16.mxu0 0
        %4799 = vmatpush1.bf16.msra.mxu0 %v4771
        %4800 = vmatprep.subr.bf16.mxu0 0
        %4801 = vmatpush1.bf16.msra.mxu0 %v4770
        %4802 = vmatprep.subr.bf16.mxu0 0
        %4803 = vmatpush2.bf16.msra.mxu0 0
        %4804 = vmatprep.subr.bf16.mxu0 0
        %4805 = vmatpush2.bf16.msra.mxu0 0
        %4806 = vmatprep.subr.bf16.mxu0 0
        %4807 = vmatpush2.bf16.msra.mxu0 0
        %4808 = vmatprep.subr.bf16.mxu0 0
        %4809 = vmatpush2.bf16.msra.mxu0 0
        %4810 = vmatprep.subr.bf16.mxu0 0
        %4811 = vmatpush2.bf16.msra.mxu0 0
        %4812 = vmatprep.subr.bf16.mxu0 0
        %4813 = vmatpush2.bf16.msra.mxu0 0
        %4814 = vmatprep.subr.bf16.mxu0 0
        %4815 = vmatpush2.bf16.msra.mxu0 0
        %4816 = vmatprep.subr.bf16.mxu0 0
        %4817 = vmatpush2.bf16.msra.mxu0 0
        %4818 = vmatprep.mubr.bf16.mxu0 0
        %4819 = vmatmul.mubr.bf16.gmra.mxu0 %v4705
        %v4820 = vpop.f32.mrf.mxu0
        %v4821 = vadd.f32 0.0, %v4820
        %v4822 = vpop.f32.mrf.mxu0
        %v4823 = vpop.f32.mrf.mxu0
        %v4824 = vadd.f32 0.0, %v4823
        %v4825 = vpop.f32.mrf.mxu0
        %4826 = vmatprep.mubr.bf16.mxu0 0
        %4827 = vmatmul.mubr.bf16.gmra.mxu0 %v4706
        %v4828 = vpop.f32.mrf.mxu0
        %v4829 = vadd.f32 0.0, %v4828
        %v4830 = vpop.f32.mrf.mxu0
        %v4831 = vpop.f32.mrf.mxu0
        %v4832 = vadd.f32 0.0, %v4831
        %v4833 = vpop.f32.mrf.mxu0
        %4834 = vmatprep.mubr.bf16.mxu0 0
        %4835 = vmatmul.mubr.bf16.gmra.mxu0 %v4707
        %v4836 = vpop.f32.mrf.mxu0
        %v4837 = vadd.f32 0.0, %v4836
        %v4838 = vpop.f32.mrf.mxu0
        %v4839 = vpop.f32.mrf.mxu0
        %v4840 = vadd.f32 0.0, %v4839
        %v4841 = vpop.f32.mrf.mxu0
        %4842 = vmatprep.mubr.bf16.mxu0 0
        %4843 = vmatmul.mubr.bf16.gmra.mxu0 %v4708
        %v4844 = vpop.f32.mrf.mxu0
        %v4845 = vadd.f32 0.0, %v4844
        %v4846 = vpop.f32.mrf.mxu0
        %v4847 = vpop.f32.mrf.mxu0
        %v4848 = vadd.f32 0.0, %v4847
        %v4849 = vpop.f32.mrf.mxu0
        %4850 = vmatprep.mubr.bf16.mxu0 0
        %4851 = vmatmul.mubr.bf16.gmra.mxu0 %v4709
        %v4852 = vpop.f32.mrf.mxu0
        %v4853 = vadd.f32 0.0, %v4852
        %v4854 = vpop.f32.mrf.mxu0
        %v4855 = vpop.f32.mrf.mxu0
        %v4856 = vadd.f32 0.0, %v4855
        %v4857 = vpop.f32.mrf.mxu0
        %4858 = vmatprep.mubr.bf16.mxu0 0
        %4859 = vmatmul.mubr.bf16.gmra.mxu0 %v4710
        %v4860 = vpop.f32.mrf.mxu0
        %v4861 = vadd.f32 0.0, %v4860
        %v4862 = vpop.f32.mrf.mxu0
        %v4863 = vpop.f32.mrf.mxu0
        %v4864 = vadd.f32 0.0, %v4863
        %v4865 = vpop.f32.mrf.mxu0
        %4866 = vmatprep.mubr.bf16.mxu0 0
        %4867 = vmatmul.mubr.bf16.gmra.mxu0 %v4711
        %v4868 = vpop.f32.mrf.mxu0
        %v4869 = vadd.f32 0.0, %v4868
        %v4870 = vpop.f32.mrf.mxu0
        %v4871 = vpop.f32.mrf.mxu0
        %v4872 = vadd.f32 0.0, %v4871
        %v4873 = vpop.f32.mrf.mxu0
        %4874 = vmatprep.mubr.bf16.mxu0 0
        %4875 = vmatmul.mubr.bf16.gmra.mxu0 %v4712
        %v4876 = vpop.f32.mrf.mxu0
        %v4877 = vadd.f32 0.0, %v4876
        %v4878 = vpop.f32.mrf.mxu0
        %v4879 = vpop.f32.mrf.mxu0
        %v4880 = vadd.f32 0.0, %v4879
        %v4881 = vpop.f32.mrf.mxu0
        %4882 = vmatprep.mubr.bf16.mxu0 0
        %4883 = vmatmul.mubr.bf16.gmra.mxu0 %v4713
        %v4884 = vpop.f32.mrf.mxu0
        %v4885 = vadd.f32 0.0, %v4884
        %v4886 = vpop.f32.mrf.mxu0
        %v4887 = vpop.f32.mrf.mxu0
        %v4888 = vadd.f32 0.0, %v4887
        %v4889 = vpop.f32.mrf.mxu0
        %4890 = vmatprep.mubr.bf16.mxu0 0
        %4891 = vmatmul.mubr.bf16.gmra.mxu0 %v4714
        %v4892 = vpop.f32.mrf.mxu0
        %v4893 = vadd.f32 0.0, %v4892
        %v4894 = vpop.f32.mrf.mxu0
        %v4895 = vpop.f32.mrf.mxu0
        %v4896 = vadd.f32 0.0, %v4895
        %v4897 = vpop.f32.mrf.mxu0
        %4898 = vmatprep.mubr.bf16.mxu0 0
        %4899 = vmatmul.mubr.bf16.gmra.mxu0 %v4715
        %v4900 = vpop.f32.mrf.mxu0
        %v4901 = vadd.f32 0.0, %v4900
        %v4902 = vpop.f32.mrf.mxu0
        %v4903 = vpop.f32.mrf.mxu0
        %v4904 = vadd.f32 0.0, %v4903
        %v4905 = vpop.f32.mrf.mxu0
        %4906 = vmatprep.mubr.bf16.mxu0 0
        %4907 = vmatmul.mubr.bf16.gmra.mxu0 %v4716
        %v4908 = vpop.f32.mrf.mxu0
        %v4909 = vadd.f32 0.0, %v4908
        %v4910 = vpop.f32.mrf.mxu0
        %v4911 = vpop.f32.mrf.mxu0
        %v4912 = vadd.f32 0.0, %v4911
        %v4913 = vpop.f32.mrf.mxu0
        %4914 = vmatprep.mubr.bf16.mxu0 0
        %4915 = vmatmul.mubr.bf16.gmra.mxu0 %v4717
        %v4916 = vpop.f32.mrf.mxu0
        %v4917 = vadd.f32 0.0, %v4916
        %v4918 = vpop.f32.mrf.mxu0
        %v4919 = vpop.f32.mrf.mxu0
        %v4920 = vadd.f32 0.0, %v4919
        %v4921 = vpop.f32.mrf.mxu0
        %4922 = vmatprep.mubr.bf16.mxu0 0
        %4923 = vmatmul.mubr.bf16.gmra.mxu0 %v4718
        %v4924 = vpop.f32.mrf.mxu0
        %v4925 = vadd.f32 0.0, %v4924
        %v4926 = vpop.f32.mrf.mxu0
        %v4927 = vpop.f32.mrf.mxu0
        %v4928 = vadd.f32 0.0, %v4927
        %v4929 = vpop.f32.mrf.mxu0
        %4930 = vmatprep.mubr.bf16.mxu0 0
        %4931 = vmatmul.mubr.bf16.gmra.mxu0 %v4719
        %v4932 = vpop.f32.mrf.mxu0
        %v4933 = vadd.f32 0.0, %v4932
        %v4934 = vpop.f32.mrf.mxu0
        %v4935 = vpop.f32.mrf.mxu0
        %v4936 = vadd.f32 0.0, %v4935
        %v4937 = vpop.f32.mrf.mxu0
        %4938 = vmatprep.mubr.bf16.mxu0 0
        %4939 = vmatmul.mubr.bf16.gmra.mxu0 %v4720
        %v4940 = vpop.f32.mrf.mxu0
        %v4941 = vadd.f32 0.0, %v4940
        %v4942 = vpop.f32.mrf.mxu0
        %v4943 = vpop.f32.mrf.mxu0
        %v4944 = vadd.f32 0.0, %v4943
        %v4945 = vpop.f32.mrf.mxu0
        %4946 = vdwg.mxu0
        %v4947 = vadd.f32 %v4609, %v4821
        %v4948 = vadd.f32 %v4610, %v4824
        %v4949 = vadd.f32 %v4611, %v4829
        %v4950 = vadd.f32 %v4612, %v4832
        %v4951 = vadd.f32 %v4613, %v4837
        %v4952 = vadd.f32 %v4614, %v4840
        %v4953 = vadd.f32 %v4615, %v4845
        %v4954 = vadd.f32 %v4616, %v4848
        %v4955 = vadd.f32 %v4617, %v4853
        %v4956 = vadd.f32 %v4618, %v4856
        %v4957 = vadd.f32 %v4619, %v4861
        %v4958 = vadd.f32 %v4620, %v4864
        %v4959 = vadd.f32 %v4621, %v4869
        %v4960 = vadd.f32 %v4622, %v4872
        %v4961 = vadd.f32 %v4623, %v4877
        %v4962 = vadd.f32 %v4624, %v4880
        %v4963 = vadd.f32 %v4625, %v4885
        %v4964 = vadd.f32 %v4626, %v4888
        %v4965 = vadd.f32 %v4627, %v4893
        %v4966 = vadd.f32 %v4628, %v4896
        %v4967 = vadd.f32 %v4629, %v4901
        %v4968 = vadd.f32 %v4630, %v4904
        %v4969 = vadd.f32 %v4631, %v4909
        %v4970 = vadd.f32 %v4632, %v4912
        %v4971 = vadd.f32 %v4633, %v4917
        %v4972 = vadd.f32 %v4634, %v4920
        %v4973 = vadd.f32 %v4635, %v4925
        %v4974 = vadd.f32 %v4636, %v4928
        %v4975 = vadd.f32 %v4637, %v4933
        %v4976 = vadd.f32 %v4638, %v4936
        %v4977 = vadd.f32 %v4639, %v4941
        %v4978 = vadd.f32 %v4640, %v4944
        %v4979 = vld [vmem:[#allocation2 + $0x48] sm:$0xff]
        %v4980 = vld [vmem:[#allocation2 + $0x50] sm:$0xff]
        %v4981 = vld [vmem:[#allocation2 + $0x58] sm:$0xff]
        %v4982 = vld [vmem:[#allocation2 + $0x60] sm:$0xff]
        %v4983 = vld [vmem:[#allocation2 + $0x68] sm:$0xff]
        %v4984 = vld [vmem:[#allocation2 + $0x70] sm:$0xff]
        %v4985 = vld [vmem:[#allocation2 + $0x78] sm:$0xff]
        %v4986 = vld [vmem:[#allocation2 + $0x80] sm:$0xff]
        %v4987 = vld [vmem:[#allocation2 + $0x88] sm:$0xff]
        %v4988 = vld [vmem:[#allocation2 + $0x90] sm:$0xff]
        %v4989 = vld [vmem:[#allocation2 + $0x98] sm:$0xff]
        %v4990 = vld [vmem:[#allocation2 + $0xa0] sm:$0xff]
        %v4991 = vld [vmem:[#allocation2 + $0xa8] sm:$0xff]
        %v4992 = vld [vmem:[#allocation2 + $0xb0] sm:$0xff]
        %v4993 = vld [vmem:[#allocation2 + $0xb8] sm:$0xff]
        %v4994 = vld [vmem:[#allocation2 + $0xc0] sm:$0xff]
        %v4995 = vld [vmem:[#allocation2 + $0xc8] sm:$0xff]
        %v4996 = vld [vmem:[#allocation2 + $0xd0] sm:$0xff]
        %v4997 = vld [vmem:[#allocation2 + $0xd8] sm:$0xff]
        %v4998 = vld [vmem:[#allocation2 + $0xe0] sm:$0xff]
        %v4999 = vld [vmem:[#allocation2 + $0xe8] sm:$0xff]
        %v5000 = vld [vmem:[#allocation2 + $0xf0] sm:$0xff]
        %v5001 = vld [vmem:[#allocation2 + $0xf8] sm:$0xff]
        %v5002 = vld [vmem:[#allocation2 + $0x100] sm:$0xff]
        %v5003 = vld [vmem:[#allocation2 + $0x108] sm:$0xff]
        %v5004 = vld [vmem:[#allocation2 + $0x110] sm:$0xff]
        %v5005 = vld [vmem:[#allocation2 + $0x118] sm:$0xff]
        %v5006 = vld [vmem:[#allocation2 + $0x120] sm:$0xff]
        %v5007 = vld [vmem:[#allocation2 + $0x128] sm:$0xff]
        %v5008 = vld [vmem:[#allocation2 + $0x130] sm:$0xff]
        %v5009 = vld [vmem:[#allocation2 + $0x138] sm:$0xff]
        %v5010 = vld [vmem:[#allocation2 + $0x140] sm:$0xff]
        %v5011 = vpack.c.bf16 %v4980, %v4979
        %v5012 = vpack.c.bf16 %v4982, %v4981
        %v5013 = vpack.c.bf16 %v4984, %v4983
        %v5014 = vpack.c.bf16 %v4986, %v4985
        %v5015 = vpack.c.bf16 %v4988, %v4987
        %v5016 = vpack.c.bf16 %v4990, %v4989
        %v5017 = vpack.c.bf16 %v4992, %v4991
        %v5018 = vpack.c.bf16 %v4994, %v4993
        %v5019 = vpack.c.bf16 %v4996, %v4995
        %v5020 = vpack.c.bf16 %v4998, %v4997
        %v5021 = vpack.c.bf16 %v5000, %v4999
        %v5022 = vpack.c.bf16 %v5002, %v5001
        %v5023 = vpack.c.bf16 %v5004, %v5003
        %v5024 = vpack.c.bf16 %v5006, %v5005
        %v5025 = vpack.c.bf16 %v5008, %v5007
        %v5026 = vpack.c.bf16 %v5010, %v5009
        %s5027 = scalar_lea.vmem %s10, 448
        %v5028 = vld [vmem:[%s5027] sm:$0xf]
        %v5029 = vld [vmem:[%s5027 + $0x4] sm:$0xf]
        %v5030 = vld [vmem:[%s5027 + $0x8] sm:$0xf]
        %v5031 = vld [vmem:[%s5027 + $0xc] sm:$0xf]
        %v5032 = vld [vmem:[%s5027 + $0x10] sm:$0xf]
        %v5033 = vld [vmem:[%s5027 + $0x14] sm:$0xf]
        %v5034 = vld [vmem:[%s5027 + $0x18] sm:$0xf]
        %v5035 = vld [vmem:[%s5027 + $0x1c] sm:$0xf]
        %v5036 = vld [vmem:[%s5027 + $0x20] sm:$0xf]
        %v5037 = vld [vmem:[%s5027 + $0x24] sm:$0xf]
        %v5038 = vld [vmem:[%s5027 + $0x28] sm:$0xf]
        %v5039 = vld [vmem:[%s5027 + $0x2c] sm:$0xf]
        %v5040 = vld [vmem:[%s5027 + $0x30] sm:$0xf]
        %v5041 = vld [vmem:[%s5027 + $0x34] sm:$0xf]
        %v5042 = vld [vmem:[%s5027 + $0x38] sm:$0xf]
        %v5043 = vld [vmem:[%s5027 + $0x3c] sm:$0xf]
        %v5060 = vunpack.c.l.b16 %v5028
        %v5061 = vunpack.c.l.b16 %v5029
        %v5062 = vunpack.c.l.b16 %v5030
        %v5063 = vunpack.c.l.b16 %v5031
        %v5064 = vunpack.c.l.b16 %v5032
        %v5065 = vunpack.c.l.b16 %v5033
        %v5066 = vunpack.c.l.b16 %v5034
        %v5067 = vunpack.c.l.b16 %v5035
        %v5068 = vunpack.c.l.b16 %v5036
        %v5069 = vunpack.c.l.b16 %v5037
        %v5070 = vunpack.c.l.b16 %v5038
        %v5071 = vunpack.c.l.b16 %v5039
        %v5072 = vunpack.c.l.b16 %v5040
        %v5073 = vunpack.c.l.b16 %v5041
        %v5074 = vunpack.c.l.b16 %v5042
        %v5075 = vunpack.c.l.b16 %v5043
        %v5076 = vpack.c.b16 %v5061, %v5060
        %v5077 = vpack.c.b16 %v5063, %v5062
        %v5078 = vpack.c.b16 %v5065, %v5064
        %v5079 = vpack.c.b16 %v5067, %v5066
        %v5080 = vpack.c.b16 %v5069, %v5068
        %v5081 = vpack.c.b16 %v5071, %v5070
        %v5082 = vpack.c.b16 %v5073, %v5072
        %v5083 = vpack.c.b16 %v5075, %v5074
        %5092 = vmatprep.subr.bf16.mxu0 0
        %5093 = vmatpush1.bf16.msra.mxu0 %v5083
        %5094 = vmatprep.subr.bf16.mxu0 0
        %5095 = vmatpush1.bf16.msra.mxu0 %v5082
        %5096 = vmatprep.subr.bf16.mxu0 0
        %5097 = vmatpush1.bf16.msra.mxu0 %v5081
        %5098 = vmatprep.subr.bf16.mxu0 0
        %5099 = vmatpush1.bf16.msra.mxu0 %v5080
        %5100 = vmatprep.subr.bf16.mxu0 0
        %5101 = vmatpush1.bf16.msra.mxu0 %v5079
        %5102 = vmatprep.subr.bf16.mxu0 0
        %5103 = vmatpush1.bf16.msra.mxu0 %v5078
        %5104 = vmatprep.subr.bf16.mxu0 0
        %5105 = vmatpush1.bf16.msra.mxu0 %v5077
        %5106 = vmatprep.subr.bf16.mxu0 0
        %5107 = vmatpush1.bf16.msra.mxu0 %v5076
        %5108 = vmatprep.subr.bf16.mxu0 0
        %5109 = vmatpush2.bf16.msra.mxu0 0
        %5110 = vmatprep.subr.bf16.mxu0 0
        %5111 = vmatpush2.bf16.msra.mxu0 0
        %5112 = vmatprep.subr.bf16.mxu0 0
        %5113 = vmatpush2.bf16.msra.mxu0 0
        %5114 = vmatprep.subr.bf16.mxu0 0
        %5115 = vmatpush2.bf16.msra.mxu0 0
        %5116 = vmatprep.subr.bf16.mxu0 0
        %5117 = vmatpush2.bf16.msra.mxu0 0
        %5118 = vmatprep.subr.bf16.mxu0 0
        %5119 = vmatpush2.bf16.msra.mxu0 0
        %5120 = vmatprep.subr.bf16.mxu0 0
        %5121 = vmatpush2.bf16.msra.mxu0 0
        %5122 = vmatprep.subr.bf16.mxu0 0
        %5123 = vmatpush2.bf16.msra.mxu0 0
        %5124 = vmatprep.mubr.bf16.mxu0 0
        %5125 = vmatmul.mubr.bf16.gmra.mxu0 %v5011
        %v5126 = vpop.f32.mrf.mxu0
        %v5127 = vadd.f32 0.0, %v5126
        %v5128 = vpop.f32.mrf.mxu0
        %v5129 = vpop.f32.mrf.mxu0
        %v5130 = vadd.f32 0.0, %v5129
        %v5131 = vpop.f32.mrf.mxu0
        %5132 = vmatprep.mubr.bf16.mxu0 0
        %5133 = vmatmul.mubr.bf16.gmra.mxu0 %v5012
        %v5134 = vpop.f32.mrf.mxu0
        %v5135 = vadd.f32 0.0, %v5134
        %v5136 = vpop.f32.mrf.mxu0
        %v5137 = vpop.f32.mrf.mxu0
        %v5138 = vadd.f32 0.0, %v5137
        %v5139 = vpop.f32.mrf.mxu0
        %5140 = vmatprep.mubr.bf16.mxu0 0
        %5141 = vmatmul.mubr.bf16.gmra.mxu0 %v5013
        %v5142 = vpop.f32.mrf.mxu0
        %v5143 = vadd.f32 0.0, %v5142
        %v5144 = vpop.f32.mrf.mxu0
        %v5145 = vpop.f32.mrf.mxu0
        %v5146 = vadd.f32 0.0, %v5145
        %v5147 = vpop.f32.mrf.mxu0
        %5148 = vmatprep.mubr.bf16.mxu0 0
        %5149 = vmatmul.mubr.bf16.gmra.mxu0 %v5014
        %v5150 = vpop.f32.mrf.mxu0
        %v5151 = vadd.f32 0.0, %v5150
        %v5152 = vpop.f32.mrf.mxu0
        %v5153 = vpop.f32.mrf.mxu0
        %v5154 = vadd.f32 0.0, %v5153
        %v5155 = vpop.f32.mrf.mxu0
        %5156 = vmatprep.mubr.bf16.mxu0 0
        %5157 = vmatmul.mubr.bf16.gmra.mxu0 %v5015
        %v5158 = vpop.f32.mrf.mxu0
        %v5159 = vadd.f32 0.0, %v5158
        %v5160 = vpop.f32.mrf.mxu0
        %v5161 = vpop.f32.mrf.mxu0
        %v5162 = vadd.f32 0.0, %v5161
        %v5163 = vpop.f32.mrf.mxu0
        %5164 = vmatprep.mubr.bf16.mxu0 0
        %5165 = vmatmul.mubr.bf16.gmra.mxu0 %v5016
        %v5166 = vpop.f32.mrf.mxu0
        %v5167 = vadd.f32 0.0, %v5166
        %v5168 = vpop.f32.mrf.mxu0
        %v5169 = vpop.f32.mrf.mxu0
        %v5170 = vadd.f32 0.0, %v5169
        %v5171 = vpop.f32.mrf.mxu0
        %5172 = vmatprep.mubr.bf16.mxu0 0
        %5173 = vmatmul.mubr.bf16.gmra.mxu0 %v5017
        %v5174 = vpop.f32.mrf.mxu0
        %v5175 = vadd.f32 0.0, %v5174
        %v5176 = vpop.f32.mrf.mxu0
        %v5177 = vpop.f32.mrf.mxu0
        %v5178 = vadd.f32 0.0, %v5177
        %v5179 = vpop.f32.mrf.mxu0
        %5180 = vmatprep.mubr.bf16.mxu0 0
        %5181 = vmatmul.mubr.bf16.gmra.mxu0 %v5018
        %v5182 = vpop.f32.mrf.mxu0
        %v5183 = vadd.f32 0.0, %v5182
        %v5184 = vpop.f32.mrf.mxu0
        %v5185 = vpop.f32.mrf.mxu0
        %v5186 = vadd.f32 0.0, %v5185
        %v5187 = vpop.f32.mrf.mxu0
        %5188 = vmatprep.mubr.bf16.mxu0 0
        %5189 = vmatmul.mubr.bf16.gmra.mxu0 %v5019
        %v5190 = vpop.f32.mrf.mxu0
        %v5191 = vadd.f32 0.0, %v5190
        %v5192 = vpop.f32.mrf.mxu0
        %v5193 = vpop.f32.mrf.mxu0
        %v5194 = vadd.f32 0.0, %v5193
        %v5195 = vpop.f32.mrf.mxu0
        %5196 = vmatprep.mubr.bf16.mxu0 0
        %5197 = vmatmul.mubr.bf16.gmra.mxu0 %v5020
        %v5198 = vpop.f32.mrf.mxu0
        %v5199 = vadd.f32 0.0, %v5198
        %v5200 = vpop.f32.mrf.mxu0
        %v5201 = vpop.f32.mrf.mxu0
        %v5202 = vadd.f32 0.0, %v5201
        %v5203 = vpop.f32.mrf.mxu0
        %5204 = vmatprep.mubr.bf16.mxu0 0
        %5205 = vmatmul.mubr.bf16.gmra.mxu0 %v5021
        %v5206 = vpop.f32.mrf.mxu0
        %v5207 = vadd.f32 0.0, %v5206
        %v5208 = vpop.f32.mrf.mxu0
        %v5209 = vpop.f32.mrf.mxu0
        %v5210 = vadd.f32 0.0, %v5209
        %v5211 = vpop.f32.mrf.mxu0
        %5212 = vmatprep.mubr.bf16.mxu0 0
        %5213 = vmatmul.mubr.bf16.gmra.mxu0 %v5022
        %v5214 = vpop.f32.mrf.mxu0
        %v5215 = vadd.f32 0.0, %v5214
        %v5216 = vpop.f32.mrf.mxu0
        %v5217 = vpop.f32.mrf.mxu0
        %v5218 = vadd.f32 0.0, %v5217
        %v5219 = vpop.f32.mrf.mxu0
        %5220 = vmatprep.mubr.bf16.mxu0 0
        %5221 = vmatmul.mubr.bf16.gmra.mxu0 %v5023
        %v5222 = vpop.f32.mrf.mxu0
        %v5223 = vadd.f32 0.0, %v5222
        %v5224 = vpop.f32.mrf.mxu0
        %v5225 = vpop.f32.mrf.mxu0
        %v5226 = vadd.f32 0.0, %v5225
        %v5227 = vpop.f32.mrf.mxu0
        %5228 = vmatprep.mubr.bf16.mxu0 0
        %5229 = vmatmul.mubr.bf16.gmra.mxu0 %v5024
        %v5230 = vpop.f32.mrf.mxu0
        %v5231 = vadd.f32 0.0, %v5230
        %v5232 = vpop.f32.mrf.mxu0
        %v5233 = vpop.f32.mrf.mxu0
        %v5234 = vadd.f32 0.0, %v5233
        %v5235 = vpop.f32.mrf.mxu0
        %5236 = vmatprep.mubr.bf16.mxu0 0
        %5237 = vmatmul.mubr.bf16.gmra.mxu0 %v5025
        %v5238 = vpop.f32.mrf.mxu0
        %v5239 = vadd.f32 0.0, %v5238
        %v5240 = vpop.f32.mrf.mxu0
        %v5241 = vpop.f32.mrf.mxu0
        %v5242 = vadd.f32 0.0, %v5241
        %v5243 = vpop.f32.mrf.mxu0
        %5244 = vmatprep.mubr.bf16.mxu0 0
        %5245 = vmatmul.mubr.bf16.gmra.mxu0 %v5026
        %v5246 = vpop.f32.mrf.mxu0
        %v5247 = vadd.f32 0.0, %v5246
        %v5248 = vpop.f32.mrf.mxu0
        %v5249 = vpop.f32.mrf.mxu0
        %v5250 = vadd.f32 0.0, %v5249
        %v5251 = vpop.f32.mrf.mxu0
        %5252 = vdwg.mxu0
        %v5253 = vadd.f32 %v4947, %v5127
        %v5254 = vadd.f32 %v4948, %v5130
        %v5255 = vadd.f32 %v4949, %v5135
        %v5256 = vadd.f32 %v4950, %v5138
        %v5257 = vadd.f32 %v4951, %v5143
        %v5258 = vadd.f32 %v4952, %v5146
        %v5259 = vadd.f32 %v4953, %v5151
        %v5260 = vadd.f32 %v4954, %v5154
        %v5261 = vadd.f32 %v4955, %v5159
        %v5262 = vadd.f32 %v4956, %v5162
        %v5263 = vadd.f32 %v4957, %v5167
        %v5264 = vadd.f32 %v4958, %v5170
        %v5265 = vadd.f32 %v4959, %v5175
        %v5266 = vadd.f32 %v4960, %v5178
        %v5267 = vadd.f32 %v4961, %v5183
        %v5268 = vadd.f32 %v4962, %v5186
        %v5269 = vadd.f32 %v4963, %v5191
        %v5270 = vadd.f32 %v4964, %v5194
        %v5271 = vadd.f32 %v4965, %v5199
        %v5272 = vadd.f32 %v4966, %v5202
        %v5273 = vadd.f32 %v4967, %v5207
        %v5274 = vadd.f32 %v4968, %v5210
        %v5275 = vadd.f32 %v4969, %v5215
        %v5276 = vadd.f32 %v4970, %v5218
        %v5277 = vadd.f32 %v4971, %v5223
        %v5278 = vadd.f32 %v4972, %v5226
        %v5279 = vadd.f32 %v4973, %v5231
        %v5280 = vadd.f32 %v4974, %v5234
        %v5281 = vadd.f32 %v4975, %v5239
        %v5282 = vadd.f32 %v4976, %v5242
        %v5283 = vadd.f32 %v4977, %v5247
        %v5284 = vadd.f32 %v4978, %v5250
        %v5285 = vld [vmem:[#allocation2 + $0x4a] sm:$0xff]
        %v5286 = vld [vmem:[#allocation2 + $0x52] sm:$0xff]
        %v5287 = vld [vmem:[#allocation2 + $0x5a] sm:$0xff]
        %v5288 = vld [vmem:[#allocation2 + $0x62] sm:$0xff]
        %v5289 = vld [vmem:[#allocation2 + $0x6a] sm:$0xff]
        %v5290 = vld [vmem:[#allocation2 + $0x72] sm:$0xff]
        %v5291 = vld [vmem:[#allocation2 + $0x7a] sm:$0xff]
        %v5292 = vld [vmem:[#allocation2 + $0x82] sm:$0xff]
        %v5293 = vld [vmem:[#allocation2 + $0x8a] sm:$0xff]
        %v5294 = vld [vmem:[#allocation2 + $0x92] sm:$0xff]
        %v5295 = vld [vmem:[#allocation2 + $0x9a] sm:$0xff]
        %v5296 = vld [vmem:[#allocation2 + $0xa2] sm:$0xff]
        %v5297 = vld [vmem:[#allocation2 + $0xaa] sm:$0xff]
        %v5298 = vld [vmem:[#allocation2 + $0xb2] sm:$0xff]
        %v5299 = vld [vmem:[#allocation2 + $0xba] sm:$0xff]
        %v5300 = vld [vmem:[#allocation2 + $0xc2] sm:$0xff]
        %v5301 = vld [vmem:[#allocation2 + $0xca] sm:$0xff]
        %v5302 = vld [vmem:[#allocation2 + $0xd2] sm:$0xff]
        %v5303 = vld [vmem:[#allocation2 + $0xda] sm:$0xff]
        %v5304 = vld [vmem:[#allocation2 + $0xe2] sm:$0xff]
        %v5305 = vld [vmem:[#allocation2 + $0xea] sm:$0xff]
        %v5306 = vld [vmem:[#allocation2 + $0xf2] sm:$0xff]
        %v5307 = vld [vmem:[#allocation2 + $0xfa] sm:$0xff]
        %v5308 = vld [vmem:[#allocation2 + $0x102] sm:$0xff]
        %v5309 = vld [vmem:[#allocation2 + $0x10a] sm:$0xff]
        %v5310 = vld [vmem:[#allocation2 + $0x112] sm:$0xff]
        %v5311 = vld [vmem:[#allocation2 + $0x11a] sm:$0xff]
        %v5312 = vld [vmem:[#allocation2 + $0x122] sm:$0xff]
        %v5313 = vld [vmem:[#allocation2 + $0x12a] sm:$0xff]
        %v5314 = vld [vmem:[#allocation2 + $0x132] sm:$0xff]
        %v5315 = vld [vmem:[#allocation2 + $0x13a] sm:$0xff]
        %v5316 = vld [vmem:[#allocation2 + $0x142] sm:$0xff]
        %v5317 = vsel %vm3321, %v5285, 0.0
        %v5318 = vsel %vm3322, %v5286, 0.0
        %v5319 = vsel %vm3323, %v5287, 0.0
        %v5320 = vsel %vm3324, %v5288, 0.0
        %v5321 = vsel %vm3325, %v5289, 0.0
        %v5322 = vsel %vm3326, %v5290, 0.0
        %v5323 = vsel %vm3327, %v5291, 0.0
        %v5324 = vsel %vm3328, %v5292, 0.0
        %v5325 = vsel %vm3329, %v5293, 0.0
        %v5326 = vsel %vm3330, %v5294, 0.0
        %v5327 = vsel %vm3331, %v5295, 0.0
        %v5328 = vsel %vm3332, %v5296, 0.0
        %v5329 = vsel %vm3333, %v5297, 0.0
        %v5330 = vsel %vm3334, %v5298, 0.0
        %v5331 = vsel %vm3335, %v5299, 0.0
        %v5332 = vsel %vm3336, %v5300, 0.0
        %v5333 = vsel %vm3337, %v5301, 0.0
        %v5334 = vsel %vm3338, %v5302, 0.0
        %v5335 = vsel %vm3339, %v5303, 0.0
        %v5336 = vsel %vm3340, %v5304, 0.0
        %v5337 = vsel %vm3341, %v5305, 0.0
        %v5338 = vsel %vm3342, %v5306, 0.0
        %v5339 = vsel %vm3343, %v5307, 0.0
        %v5340 = vsel %vm3344, %v5308, 0.0
        %v5341 = vsel %vm3345, %v5309, 0.0
        %v5342 = vsel %vm3346, %v5310, 0.0
        %v5343 = vsel %vm3347, %v5311, 0.0
        %v5344 = vsel %vm3348, %v5312, 0.0
        %v5345 = vsel %vm3349, %v5313, 0.0
        %v5346 = vsel %vm3350, %v5314, 0.0
        %v5347 = vsel %vm3351, %v5315, 0.0
        %v5348 = vsel %vm3352, %v5316, 0.0
        %v5349 = vpack.c.bf16 %v5318, %v5317
        %v5350 = vpack.c.bf16 %v5320, %v5319
        %v5351 = vpack.c.bf16 %v5322, %v5321
        %v5352 = vpack.c.bf16 %v5324, %v5323
        %v5353 = vpack.c.bf16 %v5326, %v5325
        %v5354 = vpack.c.bf16 %v5328, %v5327
        %v5355 = vpack.c.bf16 %v5330, %v5329
        %v5356 = vpack.c.bf16 %v5332, %v5331
        %v5357 = vpack.c.bf16 %v5334, %v5333
        %v5358 = vpack.c.bf16 %v5336, %v5335
        %v5359 = vpack.c.bf16 %v5338, %v5337
        %v5360 = vpack.c.bf16 %v5340, %v5339
        %v5361 = vpack.c.bf16 %v5342, %v5341
        %v5362 = vpack.c.bf16 %v5344, %v5343
        %v5363 = vpack.c.bf16 %v5346, %v5345
        %v5364 = vpack.c.bf16 %v5348, %v5347
        %s5365 = scalar_lea.vmem %s10, 512
        %v5366 = vld [vmem:[%s5365] sm:$0xf]
        %v5367 = vld [vmem:[%s5365 + $0x4] sm:$0xf]
        %v5368 = vld [vmem:[%s5365 + $0x8] sm:$0xf]
        %v5369 = vld [vmem:[%s5365 + $0xc] sm:$0xf]
        %v5370 = vld [vmem:[%s5365 + $0x10] sm:$0xf]
        %v5371 = vld [vmem:[%s5365 + $0x14] sm:$0xf]
        %v5372 = vld [vmem:[%s5365 + $0x18] sm:$0xf]
        %v5373 = vld [vmem:[%s5365 + $0x1c] sm:$0xf]
        %v5374 = vld [vmem:[%s5365 + $0x20] sm:$0xf]
        %v5375 = vld [vmem:[%s5365 + $0x24] sm:$0xf]
        %v5376 = vld [vmem:[%s5365 + $0x28] sm:$0xf]
        %v5377 = vld [vmem:[%s5365 + $0x2c] sm:$0xf]
        %v5378 = vld [vmem:[%s5365 + $0x30] sm:$0xf]
        %v5379 = vld [vmem:[%s5365 + $0x34] sm:$0xf]
        %v5380 = vld [vmem:[%s5365 + $0x38] sm:$0xf]
        %v5381 = vld [vmem:[%s5365 + $0x3c] sm:$0xf]
        %v5398 = vunpack.c.l.b16 %v5366
        %v5399 = vunpack.c.l.b16 %v5367
        %v5400 = vunpack.c.l.b16 %v5368
        %v5401 = vunpack.c.l.b16 %v5369
        %v5402 = vunpack.c.l.b16 %v5370
        %v5403 = vunpack.c.l.b16 %v5371
        %v5404 = vunpack.c.l.b16 %v5372
        %v5405 = vunpack.c.l.b16 %v5373
        %v5406 = vunpack.c.l.b16 %v5374
        %v5407 = vunpack.c.l.b16 %v5375
        %v5408 = vunpack.c.l.b16 %v5376
        %v5409 = vunpack.c.l.b16 %v5377
        %v5410 = vunpack.c.l.b16 %v5378
        %v5411 = vunpack.c.l.b16 %v5379
        %v5412 = vunpack.c.l.b16 %v5380
        %v5413 = vunpack.c.l.b16 %v5381
        %v5414 = vpack.c.b16 %v5399, %v5398
        %v5415 = vpack.c.b16 %v5401, %v5400
        %v5416 = vpack.c.b16 %v5403, %v5402
        %v5417 = vpack.c.b16 %v5405, %v5404
        %v5418 = vpack.c.b16 %v5407, %v5406
        %v5419 = vpack.c.b16 %v5409, %v5408
        %v5420 = vpack.c.b16 %v5411, %v5410
        %v5421 = vpack.c.b16 %v5413, %v5412
        %5430 = vmatprep.subr.bf16.mxu0 0
        %5431 = vmatpush1.bf16.msra.mxu0 %v5421
        %5432 = vmatprep.subr.bf16.mxu0 0
        %5433 = vmatpush1.bf16.msra.mxu0 %v5420
        %5434 = vmatprep.subr.bf16.mxu0 0
        %5435 = vmatpush1.bf16.msra.mxu0 %v5419
        %5436 = vmatprep.subr.bf16.mxu0 0
        %5437 = vmatpush1.bf16.msra.mxu0 %v5418
        %5438 = vmatprep.subr.bf16.mxu0 0
        %5439 = vmatpush1.bf16.msra.mxu0 %v5417
        %5440 = vmatprep.subr.bf16.mxu0 0
        %5441 = vmatpush1.bf16.msra.mxu0 %v5416
        %5442 = vmatprep.subr.bf16.mxu0 0
        %5443 = vmatpush1.bf16.msra.mxu0 %v5415
        %5444 = vmatprep.subr.bf16.mxu0 0
        %5445 = vmatpush1.bf16.msra.mxu0 %v5414
        %5446 = vmatprep.subr.bf16.mxu0 0
        %5447 = vmatpush2.bf16.msra.mxu0 0
        %5448 = vmatprep.subr.bf16.mxu0 0
        %5449 = vmatpush2.bf16.msra.mxu0 0
        %5450 = vmatprep.subr.bf16.mxu0 0
        %5451 = vmatpush2.bf16.msra.mxu0 0
        %5452 = vmatprep.subr.bf16.mxu0 0
        %5453 = vmatpush2.bf16.msra.mxu0 0
        %5454 = vmatprep.subr.bf16.mxu0 0
        %5455 = vmatpush2.bf16.msra.mxu0 0
        %5456 = vmatprep.subr.bf16.mxu0 0
        %5457 = vmatpush2.bf16.msra.mxu0 0
        %5458 = vmatprep.subr.bf16.mxu0 0
        %5459 = vmatpush2.bf16.msra.mxu0 0
        %5460 = vmatprep.subr.bf16.mxu0 0
        %5461 = vmatpush2.bf16.msra.mxu0 0
        %5462 = vmatprep.mubr.bf16.mxu0 0
        %5463 = vmatmul.mubr.bf16.gmra.mxu0 %v5349
        %v5464 = vpop.f32.mrf.mxu0
        %v5465 = vadd.f32 0.0, %v5464
        %v5466 = vpop.f32.mrf.mxu0
        %v5467 = vpop.f32.mrf.mxu0
        %v5468 = vadd.f32 0.0, %v5467
        %v5469 = vpop.f32.mrf.mxu0
        %5470 = vmatprep.mubr.bf16.mxu0 0
        %5471 = vmatmul.mubr.bf16.gmra.mxu0 %v5350
        %v5472 = vpop.f32.mrf.mxu0
        %v5473 = vadd.f32 0.0, %v5472
        %v5474 = vpop.f32.mrf.mxu0
        %v5475 = vpop.f32.mrf.mxu0
        %v5476 = vadd.f32 0.0, %v5475
        %v5477 = vpop.f32.mrf.mxu0
        %5478 = vmatprep.mubr.bf16.mxu0 0
        %5479 = vmatmul.mubr.bf16.gmra.mxu0 %v5351
        %v5480 = vpop.f32.mrf.mxu0
        %v5481 = vadd.f32 0.0, %v5480
        %v5482 = vpop.f32.mrf.mxu0
        %v5483 = vpop.f32.mrf.mxu0
        %v5484 = vadd.f32 0.0, %v5483
        %v5485 = vpop.f32.mrf.mxu0
        %5486 = vmatprep.mubr.bf16.mxu0 0
        %5487 = vmatmul.mubr.bf16.gmra.mxu0 %v5352
        %v5488 = vpop.f32.mrf.mxu0
        %v5489 = vadd.f32 0.0, %v5488
        %v5490 = vpop.f32.mrf.mxu0
        %v5491 = vpop.f32.mrf.mxu0
        %v5492 = vadd.f32 0.0, %v5491
        %v5493 = vpop.f32.mrf.mxu0
        %5494 = vmatprep.mubr.bf16.mxu0 0
        %5495 = vmatmul.mubr.bf16.gmra.mxu0 %v5353
        %v5496 = vpop.f32.mrf.mxu0
        %v5497 = vadd.f32 0.0, %v5496
        %v5498 = vpop.f32.mrf.mxu0
        %v5499 = vpop.f32.mrf.mxu0
        %v5500 = vadd.f32 0.0, %v5499
        %v5501 = vpop.f32.mrf.mxu0
        %5502 = vmatprep.mubr.bf16.mxu0 0
        %5503 = vmatmul.mubr.bf16.gmra.mxu0 %v5354
        %v5504 = vpop.f32.mrf.mxu0
        %v5505 = vadd.f32 0.0, %v5504
        %v5506 = vpop.f32.mrf.mxu0
        %v5507 = vpop.f32.mrf.mxu0
        %v5508 = vadd.f32 0.0, %v5507
        %v5509 = vpop.f32.mrf.mxu0
        %5510 = vmatprep.mubr.bf16.mxu0 0
        %5511 = vmatmul.mubr.bf16.gmra.mxu0 %v5355
        %v5512 = vpop.f32.mrf.mxu0
        %v5513 = vadd.f32 0.0, %v5512
        %v5514 = vpop.f32.mrf.mxu0
        %v5515 = vpop.f32.mrf.mxu0
        %v5516 = vadd.f32 0.0, %v5515
        %v5517 = vpop.f32.mrf.mxu0
        %5518 = vmatprep.mubr.bf16.mxu0 0
        %5519 = vmatmul.mubr.bf16.gmra.mxu0 %v5356
        %v5520 = vpop.f32.mrf.mxu0
        %v5521 = vadd.f32 0.0, %v5520
        %v5522 = vpop.f32.mrf.mxu0
        %v5523 = vpop.f32.mrf.mxu0
        %v5524 = vadd.f32 0.0, %v5523
        %v5525 = vpop.f32.mrf.mxu0
        %5526 = vmatprep.mubr.bf16.mxu0 0
        %5527 = vmatmul.mubr.bf16.gmra.mxu0 %v5357
        %v5528 = vpop.f32.mrf.mxu0
        %v5529 = vadd.f32 0.0, %v5528
        %v5530 = vpop.f32.mrf.mxu0
        %v5531 = vpop.f32.mrf.mxu0
        %v5532 = vadd.f32 0.0, %v5531
        %v5533 = vpop.f32.mrf.mxu0
        %5534 = vmatprep.mubr.bf16.mxu0 0
        %5535 = vmatmul.mubr.bf16.gmra.mxu0 %v5358
        %v5536 = vpop.f32.mrf.mxu0
        %v5537 = vadd.f32 0.0, %v5536
        %v5538 = vpop.f32.mrf.mxu0
        %v5539 = vpop.f32.mrf.mxu0
        %v5540 = vadd.f32 0.0, %v5539
        %v5541 = vpop.f32.mrf.mxu0
        %5542 = vmatprep.mubr.bf16.mxu0 0
        %5543 = vmatmul.mubr.bf16.gmra.mxu0 %v5359
        %v5544 = vpop.f32.mrf.mxu0
        %v5545 = vadd.f32 0.0, %v5544
        %v5546 = vpop.f32.mrf.mxu0
        %v5547 = vpop.f32.mrf.mxu0
        %v5548 = vadd.f32 0.0, %v5547
        %v5549 = vpop.f32.mrf.mxu0
        %5550 = vmatprep.mubr.bf16.mxu0 0
        %5551 = vmatmul.mubr.bf16.gmra.mxu0 %v5360
        %v5552 = vpop.f32.mrf.mxu0
        %v5553 = vadd.f32 0.0, %v5552
        %v5554 = vpop.f32.mrf.mxu0
        %v5555 = vpop.f32.mrf.mxu0
        %v5556 = vadd.f32 0.0, %v5555
        %v5557 = vpop.f32.mrf.mxu0
        %5558 = vmatprep.mubr.bf16.mxu0 0
        %5559 = vmatmul.mubr.bf16.gmra.mxu0 %v5361
        %v5560 = vpop.f32.mrf.mxu0
        %v5561 = vadd.f32 0.0, %v5560
        %v5562 = vpop.f32.mrf.mxu0
        %v5563 = vpop.f32.mrf.mxu0
        %v5564 = vadd.f32 0.0, %v5563
        %v5565 = vpop.f32.mrf.mxu0
        %5566 = vmatprep.mubr.bf16.mxu0 0
        %5567 = vmatmul.mubr.bf16.gmra.mxu0 %v5362
        %v5568 = vpop.f32.mrf.mxu0
        %v5569 = vadd.f32 0.0, %v5568
        %v5570 = vpop.f32.mrf.mxu0
        %v5571 = vpop.f32.mrf.mxu0
        %v5572 = vadd.f32 0.0, %v5571
        %v5573 = vpop.f32.mrf.mxu0
        %5574 = vmatprep.mubr.bf16.mxu0 0
        %5575 = vmatmul.mubr.bf16.gmra.mxu0 %v5363
        %v5576 = vpop.f32.mrf.mxu0
        %v5577 = vadd.f32 0.0, %v5576
        %v5578 = vpop.f32.mrf.mxu0
        %v5579 = vpop.f32.mrf.mxu0
        %v5580 = vadd.f32 0.0, %v5579
        %v5581 = vpop.f32.mrf.mxu0
        %5582 = vmatprep.mubr.bf16.mxu0 0
        %5583 = vmatmul.mubr.bf16.gmra.mxu0 %v5364
        %v5584 = vpop.f32.mrf.mxu0
        %v5585 = vadd.f32 0.0, %v5584
        %v5586 = vpop.f32.mrf.mxu0
        %v5587 = vpop.f32.mrf.mxu0
        %v5588 = vadd.f32 0.0, %v5587
        %v5589 = vpop.f32.mrf.mxu0
        %5590 = vdwg.mxu0
        %v5591 = vadd.f32 %v5253, %v5465
        %v5592 = vadd.f32 %v5254, %v5468
        %v5593 = vadd.f32 %v5255, %v5473
        %v5594 = vadd.f32 %v5256, %v5476
        %v5595 = vadd.f32 %v5257, %v5481
        %v5596 = vadd.f32 %v5258, %v5484
        %v5597 = vadd.f32 %v5259, %v5489
        %v5598 = vadd.f32 %v5260, %v5492
        %v5599 = vadd.f32 %v5261, %v5497
        %v5600 = vadd.f32 %v5262, %v5500
        %v5601 = vadd.f32 %v5263, %v5505
        %v5602 = vadd.f32 %v5264, %v5508
        %v5603 = vadd.f32 %v5265, %v5513
        %v5604 = vadd.f32 %v5266, %v5516
        %v5605 = vadd.f32 %v5267, %v5521
        %v5606 = vadd.f32 %v5268, %v5524
        %v5607 = vadd.f32 %v5269, %v5529
        %v5608 = vadd.f32 %v5270, %v5532
        %v5609 = vadd.f32 %v5271, %v5537
        %v5610 = vadd.f32 %v5272, %v5540
        %v5611 = vadd.f32 %v5273, %v5545
        %v5612 = vadd.f32 %v5274, %v5548
        %v5613 = vadd.f32 %v5275, %v5553
        %v5614 = vadd.f32 %v5276, %v5556
        %v5615 = vadd.f32 %v5277, %v5561
        %v5616 = vadd.f32 %v5278, %v5564
        %v5617 = vadd.f32 %v5279, %v5569
        %v5618 = vadd.f32 %v5280, %v5572
        %v5619 = vadd.f32 %v5281, %v5577
        %v5620 = vadd.f32 %v5282, %v5580
        %v5621 = vadd.f32 %v5283, %v5585
        %v5622 = vadd.f32 %v5284, %v5588
        %v5623 = vadd.f32 %v5591, %v5592
        %v5624 = vadd.f32 %v5623, %v5593
        %v5625 = vadd.f32 %v5624, %v5594
        %v5626 = vadd.f32 %v5625, %v5595
        %v5627 = vadd.f32 %v5626, %v5596
        %v5628 = vadd.f32 %v5627, %v5597
        %v5629 = vadd.f32 %v5628, %v5598
        %v5630 = vadd.f32 %v5629, %v5599
        %v5631 = vadd.f32 %v5630, %v5600
        %v5632 = vadd.f32 %v5631, %v5601
        %v5633 = vadd.f32 %v5632, %v5602
        %v5634 = vadd.f32 %v5633, %v5603
        %v5635 = vadd.f32 %v5634, %v5604
        %v5636 = vadd.f32 %v5635, %v5605
        %v5637 = vadd.f32 %v5636, %v5606
        %v5638 = vadd.f32 %v5637, %v5607
        %v5639 = vadd.f32 %v5638, %v5608
        %v5640 = vadd.f32 %v5639, %v5609
        %v5641 = vadd.f32 %v5640, %v5610
        %v5642 = vadd.f32 %v5641, %v5611
        %v5643 = vadd.f32 %v5642, %v5612
        %v5644 = vadd.f32 %v5643, %v5613
        %v5645 = vadd.f32 %v5644, %v5614
        %v5646 = vadd.f32 %v5645, %v5615
        %v5647 = vadd.f32 %v5646, %v5616
        %v5648 = vadd.f32 %v5647, %v5617
        %v5649 = vadd.f32 %v5648, %v5618
        %v5650 = vadd.f32 %v5649, %v5619
        %v5651 = vadd.f32 %v5650, %v5620
        %v5652 = vadd.f32 %v5651, %v5621
        %v5653 = vadd.f32 %v5652, %v5622
        %v5654 = vrot.slane %v5653, 4
        %v5655 = vadd.f32 %v5653, %v5654
        %v5656 = vrot.slane %v5655, 2
        %v5657 = vadd.f32 %v5655, %v5656
        %v5658 = vrot.slane %v5657, 1
        %v5659 = vadd.f32 %v5657, %v5658
        %v5660 = vmul.f32 %v5591, %v5591
        %v5661 = vmul.f32 %v5592, %v5592
        %v5662 = vmul.f32 %v5593, %v5593
        %v5663 = vmul.f32 %v5594, %v5594
        %v5664 = vmul.f32 %v5595, %v5595
        %v5665 = vmul.f32 %v5596, %v5596
        %v5666 = vmul.f32 %v5597, %v5597
        %v5667 = vmul.f32 %v5598, %v5598
        %v5668 = vmul.f32 %v5599, %v5599
        %v5669 = vmul.f32 %v5600, %v5600
        %v5670 = vmul.f32 %v5601, %v5601
        %v5671 = vmul.f32 %v5602, %v5602
        %v5672 = vmul.f32 %v5603, %v5603
        %v5673 = vmul.f32 %v5604, %v5604
        %v5674 = vmul.f32 %v5605, %v5605
        %v5675 = vmul.f32 %v5606, %v5606
        %v5676 = vmul.f32 %v5607, %v5607
        %v5677 = vmul.f32 %v5608, %v5608
        %v5678 = vmul.f32 %v5609, %v5609
        %v5679 = vmul.f32 %v5610, %v5610
        %v5680 = vmul.f32 %v5611, %v5611
        %v5681 = vmul.f32 %v5612, %v5612
        %v5682 = vmul.f32 %v5613, %v5613
        %v5683 = vmul.f32 %v5614, %v5614
        %v5684 = vmul.f32 %v5615, %v5615
        %v5685 = vmul.f32 %v5616, %v5616
        %v5686 = vmul.f32 %v5617, %v5617
        %v5687 = vmul.f32 %v5618, %v5618
        %v5688 = vmul.f32 %v5619, %v5619
        %v5689 = vmul.f32 %v5620, %v5620
        %v5690 = vmul.f32 %v5621, %v5621
        %v5691 = vmul.f32 %v5622, %v5622
        %v5692 = vadd.f32 %v5660, %v5661
        %v5693 = vadd.f32 %v5692, %v5662
        %v5694 = vadd.f32 %v5693, %v5663
        %v5695 = vadd.f32 %v5694, %v5664
        %v5696 = vadd.f32 %v5695, %v5665
        %v5697 = vadd.f32 %v5696, %v5666
        %v5698 = vadd.f32 %v5697, %v5667
        %v5699 = vadd.f32 %v5698, %v5668
        %v5700 = vadd.f32 %v5699, %v5669
        %v5701 = vadd.f32 %v5700, %v5670
        %v5702 = vadd.f32 %v5701, %v5671
        %v5703 = vadd.f32 %v5702, %v5672
        %v5704 = vadd.f32 %v5703, %v5673
        %v5705 = vadd.f32 %v5704, %v5674
        %v5706 = vadd.f32 %v5705, %v5675
        %v5707 = vadd.f32 %v5706, %v5676
        %v5708 = vadd.f32 %v5707, %v5677
        %v5709 = vadd.f32 %v5708, %v5678
        %v5710 = vadd.f32 %v5709, %v5679
        %v5711 = vadd.f32 %v5710, %v5680
        %v5712 = vadd.f32 %v5711, %v5681
        %v5713 = vadd.f32 %v5712, %v5682
        %v5714 = vadd.f32 %v5713, %v5683
        %v5715 = vadd.f32 %v5714, %v5684
        %v5716 = vadd.f32 %v5715, %v5685
        %v5717 = vadd.f32 %v5716, %v5686
        %v5718 = vadd.f32 %v5717, %v5687
        %v5719 = vadd.f32 %v5718, %v5688
        %v5720 = vadd.f32 %v5719, %v5689
        %v5721 = vadd.f32 %v5720, %v5690
        %v5722 = vadd.f32 %v5721, %v5691
        %v5723 = vrot.slane %v5722, 4
        %v5724 = vadd.f32 %v5722, %v5723
        %v5725 = vrot.slane %v5724, 2
        %v5726 = vadd.f32 %v5724, %v5725
        %v5727 = vrot.slane %v5726, 1
        %v5728 = vadd.f32 %v5726, %v5727
        %v5729 = vmul.f32 %v5659, 0.00390625
        %v5730 = vmul.f32 %v5728, 0.00390625
        %v5731 = vmul.f32 %v5729, %v5729
        %v5732 = vsub.f32 %v5730, %v5731
        %v5733 = vmax.f32 %v5732, 0.0
        %v5734 = vsub.f32 %v5591, %v5729
        %v5735 = vsub.f32 %v5592, %v5729
        %v5736 = vsub.f32 %v5593, %v5729
        %v5737 = vsub.f32 %v5594, %v5729
        %v5738 = vsub.f32 %v5595, %v5729
        %v5739 = vsub.f32 %v5596, %v5729
        %v5740 = vsub.f32 %v5597, %v5729
        %v5741 = vsub.f32 %v5598, %v5729
        %v5742 = vsub.f32 %v5599, %v5729
        %v5743 = vsub.f32 %v5600, %v5729
        %v5744 = vsub.f32 %v5601, %v5729
        %v5745 = vsub.f32 %v5602, %v5729
        %v5746 = vsub.f32 %v5603, %v5729
        %v5747 = vsub.f32 %v5604, %v5729
        %v5748 = vsub.f32 %v5605, %v5729
        %v5749 = vsub.f32 %v5606, %v5729
        %v5750 = vsub.f32 %v5607, %v5729
        %v5751 = vsub.f32 %v5608, %v5729
        %v5752 = vsub.f32 %v5609, %v5729
        %v5753 = vsub.f32 %v5610, %v5729
        %v5754 = vsub.f32 %v5611, %v5729
        %v5755 = vsub.f32 %v5612, %v5729
        %v5756 = vsub.f32 %v5613, %v5729
        %v5757 = vsub.f32 %v5614, %v5729
        %v5758 = vsub.f32 %v5615, %v5729
        %v5759 = vsub.f32 %v5616, %v5729
        %v5760 = vsub.f32 %v5617, %v5729
        %v5761 = vsub.f32 %v5618, %v5729
        %v5762 = vsub.f32 %v5619, %v5729
        %v5763 = vsub.f32 %v5620, %v5729
        %v5764 = vsub.f32 %v5621, %v5729
        %v5765 = vsub.f32 %v5622, %v5729
        %v5766 = vadd.f32 %v5733, 1e-05
        %v5767 = vrsqrt.pop %v5766
        %v5768 = vmul.f32 %v5734, %v5767
        %v5769 = vmul.f32 %v5735, %v5767
        %v5770 = vmul.f32 %v5736, %v5767
        %v5771 = vmul.f32 %v5737, %v5767
        %v5772 = vmul.f32 %v5738, %v5767
        %v5773 = vmul.f32 %v5739, %v5767
        %v5774 = vmul.f32 %v5740, %v5767
        %v5775 = vmul.f32 %v5741, %v5767
        %v5776 = vmul.f32 %v5742, %v5767
        %v5777 = vmul.f32 %v5743, %v5767
        %v5778 = vmul.f32 %v5744, %v5767
        %v5779 = vmul.f32 %v5745, %v5767
        %v5780 = vmul.f32 %v5746, %v5767
        %v5781 = vmul.f32 %v5747, %v5767
        %v5782 = vmul.f32 %v5748, %v5767
        %v5783 = vmul.f32 %v5749, %v5767
        %v5784 = vmul.f32 %v5750, %v5767
        %v5785 = vmul.f32 %v5751, %v5767
        %v5786 = vmul.f32 %v5752, %v5767
        %v5787 = vmul.f32 %v5753, %v5767
        %v5788 = vmul.f32 %v5754, %v5767
        %v5789 = vmul.f32 %v5755, %v5767
        %v5790 = vmul.f32 %v5756, %v5767
        %v5791 = vmul.f32 %v5757, %v5767
        %v5792 = vmul.f32 %v5758, %v5767
        %v5793 = vmul.f32 %v5759, %v5767
        %v5794 = vmul.f32 %v5760, %v5767
        %v5795 = vmul.f32 %v5761, %v5767
        %v5796 = vmul.f32 %v5762, %v5767
        %v5797 = vmul.f32 %v5763, %v5767
        %v5798 = vmul.f32 %v5764, %v5767
        %v5799 = vmul.f32 %v5765, %v5767
        %v5800 = vmax.f32 %v5768, 0.0
        %v5801 = vmax.f32 %v5769, 0.0
        %v5802 = vmax.f32 %v5770, 0.0
        %v5803 = vmax.f32 %v5771, 0.0
        %v5804 = vmax.f32 %v5772, 0.0
        %v5805 = vmax.f32 %v5773, 0.0
        %v5806 = vmax.f32 %v5774, 0.0
        %v5807 = vmax.f32 %v5775, 0.0
        %v5808 = vmax.f32 %v5776, 0.0
        %v5809 = vmax.f32 %v5777, 0.0
        %v5810 = vmax.f32 %v5778, 0.0
        %v5811 = vmax.f32 %v5779, 0.0
        %v5812 = vmax.f32 %v5780, 0.0
        %v5813 = vmax.f32 %v5781, 0.0
        %v5814 = vmax.f32 %v5782, 0.0
        %v5815 = vmax.f32 %v5783, 0.0
        %v5816 = vmax.f32 %v5784, 0.0
        %v5817 = vmax.f32 %v5785, 0.0
        %v5818 = vmax.f32 %v5786, 0.0
        %v5819 = vmax.f32 %v5787, 0.0
        %v5820 = vmax.f32 %v5788, 0.0
        %v5821 = vmax.f32 %v5789, 0.0
        %v5822 = vmax.f32 %v5790, 0.0
        %v5823 = vmax.f32 %v5791, 0.0
        %v5824 = vmax.f32 %v5792, 0.0
        %v5825 = vmax.f32 %v5793, 0.0
        %v5826 = vmax.f32 %v5794, 0.0
        %v5827 = vmax.f32 %v5795, 0.0
        %v5828 = vmax.f32 %v5796, 0.0
        %v5829 = vmax.f32 %v5797, 0.0
        %v5830 = vmax.f32 %v5798, 0.0
        %v5831 = vmax.f32 %v5799, 0.0
        %v5832 = vpack.c.bf16 %v5801, %v5800
        %v5833 = vpack.c.bf16 %v5803, %v5802
        %v5834 = vpack.c.bf16 %v5805, %v5804
        %v5835 = vpack.c.bf16 %v5807, %v5806
        %v5836 = vpack.c.bf16 %v5809, %v5808
        %v5837 = vpack.c.bf16 %v5811, %v5810
        %v5838 = vpack.c.bf16 %v5813, %v5812
        %v5839 = vpack.c.bf16 %v5815, %v5814
        %v5840 = vpack.c.bf16 %v5817, %v5816
        %v5841 = vpack.c.bf16 %v5819, %v5818
        %v5842 = vpack.c.bf16 %v5821, %v5820
        %v5843 = vpack.c.bf16 %v5823, %v5822
        %v5844 = vpack.c.bf16 %v5825, %v5824
        %v5845 = vpack.c.bf16 %v5827, %v5826
        %v5846 = vpack.c.bf16 %v5829, %v5828
        %v5847 = vpack.c.bf16 %v5831, %v5830
        %v5848 = vld [vmem:[%s11] sm:$0xf]
        %v5849 = vld [vmem:[%s11 + $0x4] sm:$0xf]
        %v5850 = vld [vmem:[%s11 + $0x8] sm:$0xf]
        %v5851 = vld [vmem:[%s11 + $0xc] sm:$0xf]
        %v5852 = vld [vmem:[%s11 + $0x10] sm:$0xf]
        %v5853 = vld [vmem:[%s11 + $0x14] sm:$0xf]
        %v5854 = vld [vmem:[%s11 + $0x18] sm:$0xf]
        %v5855 = vld [vmem:[%s11 + $0x1c] sm:$0xf]
        %v5856 = vld [vmem:[%s11 + $0x20] sm:$0xf]
        %v5857 = vld [vmem:[%s11 + $0x24] sm:$0xf]
        %v5858 = vld [vmem:[%s11 + $0x28] sm:$0xf]
        %v5859 = vld [vmem:[%s11 + $0x2c] sm:$0xf]
        %v5860 = vld [vmem:[%s11 + $0x30] sm:$0xf]
        %v5861 = vld [vmem:[%s11 + $0x34] sm:$0xf]
        %v5862 = vld [vmem:[%s11 + $0x38] sm:$0xf]
        %v5863 = vld [vmem:[%s11 + $0x3c] sm:$0xf]
        %v5880 = vunpack.c.l.b16 %v5848
        %v5881 = vunpack.c.l.b16 %v5849
        %v5882 = vunpack.c.l.b16 %v5850
        %v5883 = vunpack.c.l.b16 %v5851
        %v5884 = vunpack.c.l.b16 %v5852
        %v5885 = vunpack.c.l.b16 %v5853
        %v5886 = vunpack.c.l.b16 %v5854
        %v5887 = vunpack.c.l.b16 %v5855
        %v5888 = vunpack.c.l.b16 %v5856
        %v5889 = vunpack.c.l.b16 %v5857
        %v5890 = vunpack.c.l.b16 %v5858
        %v5891 = vunpack.c.l.b16 %v5859
        %v5892 = vunpack.c.l.b16 %v5860
        %v5893 = vunpack.c.l.b16 %v5861
        %v5894 = vunpack.c.l.b16 %v5862
        %v5895 = vunpack.c.l.b16 %v5863
        %v5896 = vpack.c.b16 %v5881, %v5880
        %v5897 = vpack.c.b16 %v5883, %v5882
        %v5898 = vpack.c.b16 %v5885, %v5884
        %v5899 = vpack.c.b16 %v5887, %v5886
        %v5900 = vpack.c.b16 %v5889, %v5888
        %v5901 = vpack.c.b16 %v5891, %v5890
        %v5902 = vpack.c.b16 %v5893, %v5892
        %v5903 = vpack.c.b16 %v5895, %v5894
        %5912 = vmatprep.subr.bf16.mxu0 0
        %5913 = vmatpush1.bf16.msra.mxu0 %v5903
        %5914 = vmatprep.subr.bf16.mxu0 0
        %5915 = vmatpush1.bf16.msra.mxu0 %v5902
        %5916 = vmatprep.subr.bf16.mxu0 0
        %5917 = vmatpush1.bf16.msra.mxu0 %v5901
        %5918 = vmatprep.subr.bf16.mxu0 0
        %5919 = vmatpush1.bf16.msra.mxu0 %v5900
        %5920 = vmatprep.subr.bf16.mxu0 0
        %5921 = vmatpush1.bf16.msra.mxu0 %v5899
        %5922 = vmatprep.subr.bf16.mxu0 0
        %5923 = vmatpush1.bf16.msra.mxu0 %v5898
        %5924 = vmatprep.subr.bf16.mxu0 0
        %5925 = vmatpush1.bf16.msra.mxu0 %v5897
        %5926 = vmatprep.subr.bf16.mxu0 0
        %5927 = vmatpush1.bf16.msra.mxu0 %v5896
        %5928 = vmatprep.subr.bf16.mxu0 0
        %5929 = vmatpush2.bf16.msra.mxu0 0
        %5930 = vmatprep.subr.bf16.mxu0 0
        %5931 = vmatpush2.bf16.msra.mxu0 0
        %5932 = vmatprep.subr.bf16.mxu0 0
        %5933 = vmatpush2.bf16.msra.mxu0 0
        %5934 = vmatprep.subr.bf16.mxu0 0
        %5935 = vmatpush2.bf16.msra.mxu0 0
        %5936 = vmatprep.subr.bf16.mxu0 0
        %5937 = vmatpush2.bf16.msra.mxu0 0
        %5938 = vmatprep.subr.bf16.mxu0 0
        %5939 = vmatpush2.bf16.msra.mxu0 0
        %5940 = vmatprep.subr.bf16.mxu0 0
        %5941 = vmatpush2.bf16.msra.mxu0 0
        %5942 = vmatprep.subr.bf16.mxu0 0
        %5943 = vmatpush2.bf16.msra.mxu0 0
        %5944 = vmatprep.mubr.bf16.mxu0 0
        %5945 = vmatmul.mubr.bf16.gmra.mxu0 %v5832
        %v5946 = vpop.f32.mrf.mxu0
        %v5947 = vadd.f32 %v1299, %v5946
        %v5948 = vpop.f32.mrf.mxu0
        %v5949 = vpop.f32.mrf.mxu0
        %v5950 = vadd.f32 %v1300, %v5949
        %v5951 = vpop.f32.mrf.mxu0
        %5952 = vmatprep.mubr.bf16.mxu0 0
        %5953 = vmatmul.mubr.bf16.gmra.mxu0 %v5833
        %v5954 = vpop.f32.mrf.mxu0
        %v5955 = vadd.f32 %v1301, %v5954
        %v5956 = vpop.f32.mrf.mxu0
        %v5957 = vpop.f32.mrf.mxu0
        %v5958 = vadd.f32 %v1302, %v5957
        %v5959 = vpop.f32.mrf.mxu0
        %5960 = vmatprep.mubr.bf16.mxu0 0
        %5961 = vmatmul.mubr.bf16.gmra.mxu0 %v5834
        %v5962 = vpop.f32.mrf.mxu0
        %v5963 = vadd.f32 %v1303, %v5962
        %v5964 = vpop.f32.mrf.mxu0
        %v5965 = vpop.f32.mrf.mxu0
        %v5966 = vadd.f32 %v1304, %v5965
        %v5967 = vpop.f32.mrf.mxu0
        %5968 = vmatprep.mubr.bf16.mxu0 0
        %5969 = vmatmul.mubr.bf16.gmra.mxu0 %v5835
        %v5970 = vpop.f32.mrf.mxu0
        %v5971 = vadd.f32 %v1305, %v5970
        %v5972 = vpop.f32.mrf.mxu0
        %v5973 = vpop.f32.mrf.mxu0
        %v5974 = vadd.f32 %v1306, %v5973
        %v5975 = vpop.f32.mrf.mxu0
        %5976 = vmatprep.mubr.bf16.mxu0 0
        %5977 = vmatmul.mubr.bf16.gmra.mxu0 %v5836
        %v5978 = vpop.f32.mrf.mxu0
        %v5979 = vadd.f32 %v1307, %v5978
        %v5980 = vpop.f32.mrf.mxu0
        %v5981 = vpop.f32.mrf.mxu0
        %v5982 = vadd.f32 %v1308, %v5981
        %v5983 = vpop.f32.mrf.mxu0
        %5984 = vmatprep.mubr.bf16.mxu0 0
        %5985 = vmatmul.mubr.bf16.gmra.mxu0 %v5837
        %v5986 = vpop.f32.mrf.mxu0
        %v5987 = vadd.f32 %v1309, %v5986
        %v5988 = vpop.f32.mrf.mxu0
        %v5989 = vpop.f32.mrf.mxu0
        %v5990 = vadd.f32 %v1310, %v5989
        %v5991 = vpop.f32.mrf.mxu0
        %5992 = vmatprep.mubr.bf16.mxu0 0
        %5993 = vmatmul.mubr.bf16.gmra.mxu0 %v5838
        %v5994 = vpop.f32.mrf.mxu0
        %v5995 = vadd.f32 %v1311, %v5994
        %v5996 = vpop.f32.mrf.mxu0
        %v5997 = vpop.f32.mrf.mxu0
        %v5998 = vadd.f32 %v1312, %v5997
        %v5999 = vpop.f32.mrf.mxu0
        %6000 = vmatprep.mubr.bf16.mxu0 0
        %6001 = vmatmul.mubr.bf16.gmra.mxu0 %v5839
        %v6002 = vpop.f32.mrf.mxu0
        %v6003 = vadd.f32 %v1313, %v6002
        %v6004 = vpop.f32.mrf.mxu0
        %v6005 = vpop.f32.mrf.mxu0
        %v6006 = vadd.f32 %v1314, %v6005
        %v6007 = vpop.f32.mrf.mxu0
        %6008 = vmatprep.mubr.bf16.mxu0 0
        %6009 = vmatmul.mubr.bf16.gmra.mxu0 %v5840
        %v6010 = vpop.f32.mrf.mxu0
        %v6011 = vadd.f32 %v1315, %v6010
        %v6012 = vpop.f32.mrf.mxu0
        %v6013 = vpop.f32.mrf.mxu0
        %v6014 = vadd.f32 %v1316, %v6013
        %v6015 = vpop.f32.mrf.mxu0
        %6016 = vmatprep.mubr.bf16.mxu0 0
        %6017 = vmatmul.mubr.bf16.gmra.mxu0 %v5841
        %v6018 = vpop.f32.mrf.mxu0
        %v6019 = vadd.f32 %v1317, %v6018
        %v6020 = vpop.f32.mrf.mxu0
        %v6021 = vpop.f32.mrf.mxu0
        %v6022 = vadd.f32 %v1318, %v6021
        %v6023 = vpop.f32.mrf.mxu0
        %6024 = vmatprep.mubr.bf16.mxu0 0
        %6025 = vmatmul.mubr.bf16.gmra.mxu0 %v5842
        %v6026 = vpop.f32.mrf.mxu0
        %v6027 = vadd.f32 %v1319, %v6026
        %v6028 = vpop.f32.mrf.mxu0
        %v6029 = vpop.f32.mrf.mxu0
        %v6030 = vadd.f32 %v1320, %v6029
        %v6031 = vpop.f32.mrf.mxu0
        %6032 = vmatprep.mubr.bf16.mxu0 0
        %6033 = vmatmul.mubr.bf16.gmra.mxu0 %v5843
        %v6034 = vpop.f32.mrf.mxu0
        %v6035 = vadd.f32 %v1321, %v6034
        %v6036 = vpop.f32.mrf.mxu0
        %v6037 = vpop.f32.mrf.mxu0
        %v6038 = vadd.f32 %v1322, %v6037
        %v6039 = vpop.f32.mrf.mxu0
        %6040 = vmatprep.mubr.bf16.mxu0 0
        %6041 = vmatmul.mubr.bf16.gmra.mxu0 %v5844
        %v6042 = vpop.f32.mrf.mxu0
        %v6043 = vadd.f32 %v1323, %v6042
        %v6044 = vpop.f32.mrf.mxu0
        %v6045 = vpop.f32.mrf.mxu0
        %v6046 = vadd.f32 %v1324, %v6045
        %v6047 = vpop.f32.mrf.mxu0
        %6048 = vmatprep.mubr.bf16.mxu0 0
        %6049 = vmatmul.mubr.bf16.gmra.mxu0 %v5845
        %v6050 = vpop.f32.mrf.mxu0
        %v6051 = vadd.f32 %v1325, %v6050
        %v6052 = vpop.f32.mrf.mxu0
        %v6053 = vpop.f32.mrf.mxu0
        %v6054 = vadd.f32 %v1326, %v6053
        %v6055 = vpop.f32.mrf.mxu0
        %6056 = vmatprep.mubr.bf16.mxu0 0
        %6057 = vmatmul.mubr.bf16.gmra.mxu0 %v5846
        %v6058 = vpop.f32.mrf.mxu0
        %v6059 = vadd.f32 %v1327, %v6058
        %v6060 = vpop.f32.mrf.mxu0
        %v6061 = vpop.f32.mrf.mxu0
        %v6062 = vadd.f32 %v1328, %v6061
        %v6063 = vpop.f32.mrf.mxu0
        %6064 = vmatprep.mubr.bf16.mxu0 0
        %6065 = vmatmul.mubr.bf16.gmra.mxu0 %v5847
        %v6066 = vpop.f32.mrf.mxu0
        %v6067 = vadd.f32 %v1329, %v6066
        %v6068 = vpop.f32.mrf.mxu0
        %v6069 = vpop.f32.mrf.mxu0
        %v6070 = vadd.f32 %v1330, %v6069
        %v6071 = vpop.f32.mrf.mxu0
        %6072 = vdwg.mxu0
        %6073 = vst [vmem:[%s406] sm:$0xff] %v5947
        %6074 = vst [vmem:[%s406 + $0x8] sm:$0xff] %v5950
        %6075 = vst [vmem:[%s406 + $0x10] sm:$0xff] %v5955
        %6076 = vst [vmem:[%s406 + $0x18] sm:$0xff] %v5958
        %6077 = vst [vmem:[%s406 + $0x20] sm:$0xff] %v5963
        %6078 = vst [vmem:[%s406 + $0x28] sm:$0xff] %v5966
        %6079 = vst [vmem:[%s406 + $0x30] sm:$0xff] %v5971
        %6080 = vst [vmem:[%s406 + $0x38] sm:$0xff] %v5974
        %6081 = vst [vmem:[%s406 + $0x40] sm:$0xff] %v5979
        %6082 = vst [vmem:[%s406 + $0x48] sm:$0xff] %v5982
        %6083 = vst [vmem:[%s406 + $0x50] sm:$0xff] %v5987
        %6084 = vst [vmem:[%s406 + $0x58] sm:$0xff] %v5990
        %6085 = vst [vmem:[%s406 + $0x60] sm:$0xff] %v5995
        %6086 = vst [vmem:[%s406 + $0x68] sm:$0xff] %v5998
        %6087 = vst [vmem:[%s406 + $0x70] sm:$0xff] %v6003
        %6088 = vst [vmem:[%s406 + $0x78] sm:$0xff] %v6006
        %6089 = vst [vmem:[%s406 + $0x80] sm:$0xff] %v6011
        %6090 = vst [vmem:[%s406 + $0x88] sm:$0xff] %v6014
        %6091 = vst [vmem:[%s406 + $0x90] sm:$0xff] %v6019
        %6092 = vst [vmem:[%s406 + $0x98] sm:$0xff] %v6022
        %6093 = vst [vmem:[%s406 + $0xa0] sm:$0xff] %v6027
        %6094 = vst [vmem:[%s406 + $0xa8] sm:$0xff] %v6030
        %6095 = vst [vmem:[%s406 + $0xb0] sm:$0xff] %v6035
        %6096 = vst [vmem:[%s406 + $0xb8] sm:$0xff] %v6038
        %6097 = vst [vmem:[%s406 + $0xc0] sm:$0xff] %v6043
        %6098 = vst [vmem:[%s406 + $0xc8] sm:$0xff] %v6046
        %6099 = vst [vmem:[%s406 + $0xd0] sm:$0xff] %v6051
        %6100 = vst [vmem:[%s406 + $0xd8] sm:$0xff] %v6054
        %6101 = vst [vmem:[%s406 + $0xe0] sm:$0xff] %v6059
        %6102 = vst [vmem:[%s406 + $0xe8] sm:$0xff] %v6062
        %6103 = vst [vmem:[%s406 + $0xf0] sm:$0xff] %v6067
        %6104 = vst [vmem:[%s406 + $0xf8] sm:$0xff] %v6070
        %s6105 = sand.u32 %s291, 1
        %s6106 = scalar_lea.sflag [#allocation4], %s6105
        %s6107 = sand.u32 %s291, 1
        %s6108 = smul.addr %s6107, 256
        %s6109 = scalar_lea.vmem [#allocation3], %s6108
        // Predicated region
        $region69: #{rn_msgcb_u2_v2.1} parent=67 // pred_check
          %p6110 = pneg %p301
        $region70: #{rn_msgcb_u2_v2.1} parent=67 // pred_check_branch
          %6112 = sbr.rel (%p6110) target = $region72
        $region71: #{rn_msgcb_u2_v2.1} parent=67 // pred_region
          %s6114 = ssub.s32 4096, 4096
          %6115 = vsyncadd %s6106, %s6114
          %s6116 = smul.addr %s26, 32
          %s6117 = smul.addr %s6116, 128
          %s6118 = scalar_lea.hbm %s12, %s6117
          %s6119 = sshll.u32 %s6109, 4
          %s6120 = int_to_ptr.vmem [resolvable:$true] %s6119
          %6125 = dma.vmem_to_hbm [thread:$0]  %s6120, 4096, %s6118, %s6106, 128, 128, 8
        $region72: #{rn_msgcb_u2_v2.1} parent=67 // pred_fallthru
          _
      $region68: #{rn_msgcb_u2_v2.1} parent=5 // pred_fallthru
        _
      %p6126 = scmp.le.s32.totalorder 2, %s21
      // Predicated region
      $region73: #{rn_msgcb_u2_v2.1} parent=5 // pred_check
        %p6127 = pneg %p6126
      $region74: #{rn_msgcb_u2_v2.1} parent=5 // pred_check_branch
        %6129 = sbr.rel (%p6127) target = $region76
      $region75: #{rn_msgcb_u2_v2.1} parent=5 // pred_region
        %s6130 = ssub.s32 %s21, 2
        // Predicated region
        $region77: #{rn_msgcb_u2_v2.1} parent=75 // pred_check
          %p6131 = pneg %p307
        $region78: #{rn_msgcb_u2_v2.1} parent=75 // pred_check_branch
          %6133 = sbr.rel (%p6131) target = $region80
        $region79: #{rn_msgcb_u2_v2.1} parent=75 // pred_region
          %s6134 = sand.u32 %s292, 1
          %s6135 = scalar_lea.sflag [#allocation4], %s6134
          %s6136 = sand.u32 %s292, 1
          %s6137 = smul.addr %s6136, 256
          %s6138 = scalar_lea.vmem [#allocation3], %s6137
          %6139 = dma.done %s6135, 4096
        $region80: #{rn_msgcb_u2_v2.1} parent=75 // pred_fallthru
          _
      $region76: #{rn_msgcb_u2_v2.1} parent=5 // pred_fallthru
        _
    $region6: #{rn_msgcb_u2_v2.1} parent=1 // loop_footer
      %s25 = sadd.s32 1, %s21
    $region7: #{rn_msgcb_u2_v2.1} parent=1 // loop_footer_branch
      %20 = sbr.rel target = $region3
    $region8: #{rn_msgcb_u2_v2.1} parent=1 // loop_exit
      _
    %6140 = vsyncpa [#allocation4], 1
    %s6141 = scalar_lea.sflag [#allocation4], 1
    %6142 = vsyncpa %s6141, 1

</llo_original>
